<compile_context>
chip_gen: v7x
topology: tpu7x:2x2x1
jax: 0.10.0
libtpu: 0.0.40
codegen_flags: <defaults>
</compile_context>

<pallas_src>
import numpy as np

import jax
import jax.numpy as jnp
from jax.experimental import pallas as pl
from jax.experimental.pallas import tpu as pltpu


def _round_up(x, m):
    return (x + m - 1) // m * m


# ----------------------------------------------------------------------------
# Pallas kernel 1: full-K matmul (bf16 in, f32 acc) + fused bias / LeakyReLU
# ----------------------------------------------------------------------------
def _make_matmul_kernel(apply_leaky):
    def kernel(a_ref, b_ref, bias_ref, o_ref):
        y = jnp.dot(a_ref[...], b_ref[...], preferred_element_type=jnp.float32)
        y = y + bias_ref[...]
        if apply_leaky:
            y = jnp.where(y >= 0, y, 0.01 * y)
        o_ref[...] = y.astype(o_ref.dtype)
    return kernel


def matmul_bias_act(a, w, b, apply_leaky, tm=128):
    """a: (M, K), w: (K, N), b: (N,) -> (M, N) f32.

    K and N live in a single block (K <= ~1.3k, N <= 256 here), so the whole
    reduction is one MXU pass per row tile — no K grid axis, no accumulator.
    """
    M, K = a.shape
    _, N = w.shape
    a = a.astype(jnp.bfloat16)
    w = w.astype(jnp.bfloat16)
    tm = min(tm, _round_up(M, 8))
    Mp = _round_up(M, tm)
    if Mp != M:                      # avoid pad copies when already aligned
        a = jnp.pad(a, ((0, Mp - M), (0, 0)))
    bias2d = b.astype(jnp.float32).reshape(1, N)

    out = pl.pallas_call(
        _make_matmul_kernel(apply_leaky),
        out_shape=jax.ShapeDtypeStruct((Mp, N), jnp.float32),
        grid_spec=pltpu.PrefetchScalarGridSpec(
            num_scalar_prefetch=0,
            grid=(Mp // tm,),
            in_specs=[
                pl.BlockSpec((tm, K), lambda i: (i, 0)),
                pl.BlockSpec((K, N), lambda i: (0, 0)),
                pl.BlockSpec((1, N), lambda i: (0, 0)),
            ],
            out_specs=pl.BlockSpec((tm, N), lambda i: (i, 0)),
        ),
        compiler_params=pltpu.CompilerParams(
            dimension_semantics=("parallel",)),
    )(a, w, bias2d)
    return out[:M] if Mp != M else out


# ----------------------------------------------------------------------------
# Pallas kernel 2: per-channel sum / sum-of-squares reduction (BatchNorm stats)
# ----------------------------------------------------------------------------
def _bn_stats_kernel(x_ref, sum_ref, sq_ref):
    @pl.when(pl.program_id(0) == 0)
    def _():
        sum_ref[...] = jnp.zeros_like(sum_ref)
        sq_ref[...] = jnp.zeros_like(sq_ref)

    x = x_ref[...].astype(jnp.float32)
    sum_ref[...] += jnp.sum(x, axis=0, keepdims=True)
    sq_ref[...] += jnp.sum(x * x, axis=0, keepdims=True)


def bn_stats(x2d, tm=512):
    """Per-channel mean / biased variance over rows of x2d (M, C)."""
    M, C = x2d.shape
    tm = min(tm, _round_up(M, 8))
    Mp = _round_up(M, tm)
    xp = jnp.pad(x2d, ((0, Mp - M), (0, 0))) if Mp != M else x2d

    sums, sqs = pl.pallas_call(
        _bn_stats_kernel,
        out_shape=(jax.ShapeDtypeStruct((1, C), jnp.float32),
                   jax.ShapeDtypeStruct((1, C), jnp.float32)),
        grid=(Mp // tm,),
        in_specs=[pl.BlockSpec((tm, C), lambda i: (i, 0))],
        out_specs=(pl.BlockSpec((1, C), lambda i: (0, 0)),
                   pl.BlockSpec((1, C), lambda i: (0, 0))),
        compiler_params=pltpu.CompilerParams(
            dimension_semantics=("arbitrary",)),
    )(xp)

    mean = sums / M                                  # padded rows are zeros
    var = jnp.maximum(sqs / M - mean * mean, 0.0)    # biased var, PyTorch fwd
    return mean, var                                 # (1, C) each


def bn_scale_offset(mean, var, gamma, beta, eps=1e-5):
    scale = gamma.astype(jnp.float32).reshape(1, -1) / jnp.sqrt(var + eps)
    offset = beta.astype(jnp.float32).reshape(1, -1) - mean * scale
    return scale, offset


# ----------------------------------------------------------------------------
# Pallas kernel 3: elementwise x * scale + offset (BatchNorm apply)
# ----------------------------------------------------------------------------
def _bn_apply_kernel(x_ref, scale_ref, offset_ref, o_ref):
    y = x_ref[...].astype(jnp.float32) * scale_ref[...] + offset_ref[...]
    o_ref[...] = y.astype(o_ref.dtype)


def bn_apply(x2d, scale, offset, out_dtype=jnp.bfloat16, tm=512):
    M, C = x2d.shape
    tm = min(tm, _round_up(M, 8))
    Mp = _round_up(M, tm)
    xp = jnp.pad(x2d, ((0, Mp - M), (0, 0))) if Mp != M else x2d

    out = pl.pallas_call(
        _bn_apply_kernel,
        out_shape=jax.ShapeDtypeStruct((Mp, C), out_dtype),
        grid=(Mp // tm,),
        in_specs=[
            pl.BlockSpec((tm, C), lambda i: (i, 0)),
            pl.BlockSpec((1, C), lambda i: (0, 0)),
            pl.BlockSpec((1, C), lambda i: (0, 0)),
        ],
        out_specs=pl.BlockSpec((tm, C), lambda i: (i, 0)),
        compiler_params=pltpu.CompilerParams(
            dimension_semantics=("parallel",)),
    )(xp, scale, offset)
    return out[:M] if Mp != M else out


def batchnorm_train(x2d, gamma, beta, eps=1e-5, out_dtype=jnp.bfloat16):
    mean, var = bn_stats(x2d)
    scale, offset = bn_scale_offset(mean, var, gamma, beta, eps)
    return bn_apply(x2d, scale, offset, out_dtype)


# ----------------------------------------------------------------------------
# Plain-JAX glue: im2col (strided conv / stride-1 phase windows)
# ----------------------------------------------------------------------------
# TODO(synk): fuse the tap gather into the matmul kernel (read shifted windows
# of the padded NDHWC activation in-kernel) to avoid materializing im2col.
def im2col_3d(x, k, stride, pad):
    """x: (N, D, H, W, C) -> (N*Do*Ho*Wo, k^3*C), (N, Do, Ho, Wo)."""
    N, D, H, W, C = x.shape
    if pad:
        x = jnp.pad(x, ((0, 0), (pad, pad), (pad, pad), (pad, pad), (0, 0)))
    Do = (D + 2 * pad - k) // stride + 1
    Ho = (H + 2 * pad - k) // stride + 1
    Wo = (W + 2 * pad - k) // stride + 1
    cols = []
    for kd in range(k):
        for kh in range(k):
            for kw in range(k):
                cols.append(x[:,
                              kd:kd + stride * Do:stride,
                              kh:kh + stride * Ho:stride,
                              kw:kw + stride * Wo:stride, :])
    cols = jnp.stack(cols, axis=-2)                  # (N,Do,Ho,Wo,k^3,C)
    return cols.reshape(N * Do * Ho * Wo, k * k * k * C), (N, Do, Ho, Wo)


# ----------------------------------------------------------------------------
# Phase-decomposed ConvTranspose3d(k=4, s=2, p=1)
# out[od] <- sum over kd with od = 2*id - 1 + kd; per output parity only 2 of
# the 4 taps per dim contribute, reading a 3-wide stride-1 window of the
# 1-padded input.  _PHASE_SEL[p, t, k] = 1 iff output parity p uses kernel tap
# k at window offset t.
# ----------------------------------------------------------------------------
_PHASE_SEL = np.zeros((2, 3, 4), np.float32)
_PHASE_SEL[0, 0, 3] = 1.0   # even output, window offset 0 -> kernel tap 3
_PHASE_SEL[0, 1, 1] = 1.0   # even output, window offset 1 -> kernel tap 1
_PHASE_SEL[1, 1, 2] = 1.0   # odd  output, window offset 1 -> kernel tap 2
_PHASE_SEL[1, 2, 0] = 1.0   # odd  output, window offset 2 -> kernel tap 0


def deconv_phase_weights(w, b):
    """w: (4,4,4,cin,cout), b: (cout,) -> (27*cin, 8*cout), (8*cout,)."""
    cin, cout = w.shape[3], w.shape[4]
    S = jnp.asarray(_PHASE_SEL)
    # W_all[td,th,tw,ci,pd,ph,pw,co] = sum_{kd,kh,kw} S*S*S*w
    W_all = jnp.einsum('atd,bue,cvf,defio->tuviabco', S, S, S,
                       w.astype(jnp.float32))
    return W_all.reshape(27 * cin, 8 * cout), jnp.tile(b, 8)


def interleave_phases(y, shp, cout):
    """y: (N*D*H*W, 8*cout) phase-major -> (N, 2D, 2H, 2W, cout)."""
    N, D, H, W = shp
    y = y.reshape(N, D, H, W, 2, 2, 2, cout)
    y = jnp.transpose(y, (0, 1, 4, 2, 5, 3, 6, 7))
    return y.reshape(N, 2 * D, 2 * H, 2 * W, cout)


def conv_transpose_leaky(feat, w, b):
    """ConvTranspose3d(k4,s2,p1) + LeakyReLU, phase-stacked on the matmul N."""
    W_all, bias_all = deconv_phase_weights(w, b)
    cols, shp = im2col_3d(feat, 3, 1, 1)         # 27-tap stride-1 windows
    y = matmul_bias_act(cols, W_all, bias_all, apply_leaky=True)
    return interleave_phases(y, shp, w.shape[-1])   # f32, (N,2D,2H,2W,cout)


# ----------------------------------------------------------------------------
# Net3D parameters + forward
# ----------------------------------------------------------------------------
def init_params(key, in_channel, pred_dim, chans):
    down_in = [in_channel, chans, 2 * chans]
    down_out = [chans, 2 * chans, 4 * chans]
    up_in = [4 * chans, 6 * chans]
    up_out = [4 * chans, 2 * chans]
    up_bn = [6 * chans, 3 * chans]
    keys = jax.random.split(key, 12)
    ki = 0
    params = {'down': [], 'up': []}
    for cin, cout in zip(down_in, down_out):
        w = jax.random.normal(keys[ki], (4, 4, 4, cin, cout), jnp.float32)
        w = w / jnp.sqrt(float(cin * 64)); ki += 1
        b = 0.01 * jax.random.normal(keys[ki], (cout,), jnp.float32); ki += 1
        params['down'].append(dict(w=w, b=b,
                                   gamma=jnp.ones((cout,), jnp.float32),
                                   beta=jnp.zeros((cout,), jnp.float32)))
    for cin, cout, cbn in zip(up_in, up_out, up_bn):
        w = jax.random.normal(keys[ki], (4, 4, 4, cin, cout), jnp.float32)
        w = w / jnp.sqrt(float(cin * 64)); ki += 1
        b = 0.01 * jax.random.normal(keys[ki], (cout,), jnp.float32); ki += 1
        params['up'].append(dict(w=w, b=b,
                                 gamma=jnp.ones((cbn,), jnp.float32),
                                 beta=jnp.zeros((cbn,), jnp.float32)))
    wf = jax.random.normal(keys[ki], (3 * chans, pred_dim), jnp.float32)
    wf = wf / jnp.sqrt(float(3 * chans)); ki += 1
    bf = 0.01 * jax.random.normal(keys[ki], (pred_dim,), jnp.float32)
    params['final'] = dict(w=wf, b=bf)
    return params


@jax.jit
def net3d_forward(params, x_ncdhw):
    # NCDHW in/out (PyTorch convention); bf16 NDHWC internally.
    feat = jnp.transpose(x_ncdhw, (0, 2, 3, 4, 1)).astype(jnp.bfloat16)

    # ---- down path: Conv3d(k4,s2,p1) -> LeakyReLU -> BatchNorm3d ------------
    skips = []
    for p in params['down']:
        cols, shp = im2col_3d(feat, 4, 2, 1)
        cout = p['w'].shape[-1]
        y = matmul_bias_act(cols, p['w'].reshape(-1, cout), p['b'], True)
        y = batchnorm_train(y, p['gamma'], p['beta'])        # bf16
        feat = y.reshape(shp + (cout,))
        skips.append(feat)
    skips.pop()

    # ---- up layer 0: deconv -> LeakyReLU -> cat(skip) -> BN -----------------
    # BN is per-channel => apply it to each half separately (bit-identical)
    # and only concatenate once for the next conv's input.
    p = params['up'][0]
    y = conv_transpose_leaky(feat, p['w'], p['b'])           # f32
    skip = skips.pop()                                       # bf16
    Nb, D, H, Wd, c1 = y.shape
    c2 = skip.shape[-1]
    y_bn = batchnorm_train(y.reshape(-1, c1), p['gamma'][:c1], p['beta'][:c1])
    s_bn = batchnorm_train(skip.reshape(-1, c2),
                           p['gamma'][c1:], p['beta'][c1:])
    feat = jnp.concatenate([y_bn.reshape(Nb, D, H, Wd, c1),
                            s_bn.reshape(Nb, D, H, Wd, c2)], axis=-1)

    # ---- up layer 1: deconv -> LeakyReLU; BN folded into the final 1x1 conv -
    p = params['up'][1]
    y = conv_transpose_leaky(feat, p['w'], p['b'])           # f32
    skip = skips.pop()                                       # bf16
    Nb, D, H, Wd, c1 = y.shape
    c2 = skip.shape[-1]
    y2 = y.reshape(-1, c1)
    s2 = skip.reshape(-1, c2)
    m1, v1 = bn_stats(y2)
    m2, v2 = bn_stats(s2)
    sc1, of1 = bn_scale_offset(m1, v1, p['gamma'][:c1], p['beta'][:c1])
    sc2, of2 = bn_scale_offset(m2, v2, p['gamma'][c1:], p['beta'][c1:])

    # Exact fold of BN (scale, offset) into the 1x1x1 final conv (no padding):
    #   out = cat(y2, s2) * scale + offset) @ Wf + bf
    #       = y2 @ (sc1*Wf[:c1]) + s2 @ (sc2*Wf[c1:]) + (bf + of@Wf)
    wf = params['final']['w'].astype(jnp.float32)
    bf = params['final']['b'].astype(jnp.float32)
    w1 = sc1.reshape(-1, 1) * wf[:c1]
    w2 = sc2.reshape(-1, 1) * wf[c1:]
    b_fold = bf + of1.reshape(-1) @ wf[:c1] + of2.reshape(-1) @ wf[c1:]
    # Tiny contraction (K<=24, N=pred_dim): plain jnp beats a padded MXU tile.
    out = y2 @ w1 + s2.astype(jnp.float32) @ w2 + b_fold
    out = out.reshape(Nb, D, H, Wd, -1)

    # TODO(synk): do_quantize=True path (VectorQuantizer) not implemented.
    return jnp.transpose(out, (0, 4, 1, 2, 3))


if __name__ == "__main__":
    key = jax.random.PRNGKey(0)
    pkey, xkey = jax.random.split(key)
    batch, in_channel, spatial = 2, 4, 16
    chans, pred_dim = 8, 8

    params = init_params(pkey, in_channel, pred_dim, chans)
    x = jax.random.normal(xkey, (batch, in_channel, spatial, spatial, spatial),
                          jnp.float32)

    out = net3d_forward(params, x)
    jax.block_until_ready(out)
    assert out.shape == (batch, pred_dim, spatial // 2, spatial // 2, spatial // 2)
    assert bool(jnp.all(jnp.isfinite(out)))
    print("KERNEL_OK")
</pallas_src>

<mosaic_0001>
module attributes {stable_mosaic.version = 11 : i64} {
  func.func @kernel(%arg0: i32, %arg1: memref<128x256xbf16, #tpu.memory_space<vmem>>, %arg2: memref<256x8xbf16, #tpu.memory_space<vmem>>, %arg3: memref<1x8xf32, #tpu.memory_space<vmem>>, %arg4: memref<128x8xf32, #tpu.memory_space<vmem>>) attributes {dimension_semantics = [#tpu.dimension_semantics<parallel>], iteration_bounds = array<i64: 8>, scalar_prefetch = 0 : i64, scratch_operands = 0 : i64, tpu.core_type = #tpu.core_type<tc>, window_params = [{transform_indices = @transform_0, window_bounds = array<i64: 128, 256>}, {pipeline_mode = #tpu.pipeline_mode<synchronous>, transform_indices = @transform_1, window_bounds = array<i64: 256, 8>}, {pipeline_mode = #tpu.pipeline_mode<synchronous>, transform_indices = @transform_2, window_bounds = array<i64: 1, 8>}, {transform_indices = @transform_3, window_bounds = array<i64: 128, 8>}]} {
    %c0 = arith.constant 0 : index
    %c0_0 = arith.constant 0 : index
    %0 = vector.load %arg1[%c0, %c0_0] : memref<128x256xbf16, #tpu.memory_space<vmem>>, vector<128x256xbf16>
    %c0_1 = arith.constant 0 : index
    %c0_2 = arith.constant 0 : index
    %1 = vector.load %arg2[%c0_1, %c0_2] : memref<256x8xbf16, #tpu.memory_space<vmem>>, vector<256x8xbf16>
    %cst = arith.constant dense<0.000000e+00> : vector<128x8xf32>
    %2 = tpu.matmul %0, %1, %cst {dimension_numbers = #tpu.dot_dimension_numbers<[1], [0], [0], [1], [0, 0, 1, 1], [], []>} : vector<128x256xbf16>, vector<256x8xbf16>, vector<128x8xf32> -> vector<128x8xf32>
    %c0_3 = arith.constant 0 : index
    %c0_4 = arith.constant 0 : index
    %3 = vector.load %arg3[%c0_3, %c0_4] : memref<1x8xf32, #tpu.memory_space<vmem>>, vector<1x8xf32>
    %4 = vector.broadcast %3 : vector<1x8xf32> to vector<128x8xf32>
    %5 = arith.addf %2, %4 : vector<128x8xf32>
    %cst_5 = arith.constant 0.000000e+00 : f32
    %6 = vector.broadcast %cst_5 : f32 to vector<128x8xf32>
    %7 = arith.cmpf oge, %5, %6 : vector<128x8xf32>
    %cst_6 = arith.constant 0.00999999977 : f32
    %8 = vector.broadcast %cst_6 : f32 to vector<128x8xf32>
    %9 = arith.mulf %8, %5 : vector<128x8xf32>
    %10 = arith.select %7, %5, %9 : vector<128x8xi1>, vector<128x8xf32>
    %c0_7 = arith.constant 0 : index
    %c0_8 = arith.constant 0 : index
    %11 = vector.load %arg4[%c0_7, %c0_8] : memref<128x8xf32, #tpu.memory_space<vmem>>, vector<128x8xf32>
    tpu.vector_store %arg4[%c0_7, %c0_8], %10 {strides = array<i32>} : memref<128x8xf32, #tpu.memory_space<vmem>>, vector<128x8xf32>,
    return
  }
  func.func @transform_0(%arg0: i32) -> (i32, i32) {
    %c0_i32 = arith.constant 0 : i32
    %c0_i32_0 = arith.constant 0 : i32
    return %arg0, %c0_i32 : i32, i32
  }
  func.func @transform_1(%arg0: i32) -> (i32, i32) {
    %c0_i32 = arith.constant 0 : i32
    %c0_i32_0 = arith.constant 0 : i32
    %c0_i32_1 = arith.constant 0 : i32
    return %c0_i32, %c0_i32_0 : i32, i32
  }
  func.func @transform_2(%arg0: i32) -> (i32, i32) {
    %c0_i32 = arith.constant 0 : i32
    %c0_i32_0 = arith.constant 0 : i32
    %c0_i32_1 = arith.constant 0 : i32
    return %c0_i32, %c0_i32_0 : i32, i32
  }
  func.func @transform_3(%arg0: i32) -> (i32, i32) {
    %c0_i32 = arith.constant 0 : i32
    %c0_i32_0 = arith.constant 0 : i32
    return %arg0, %c0_i32 : i32, i32
  }
}

module attributes {stable_mosaic.version = 11 : i64} {
  func.func @_bn_stats_kernel(%arg0: i32, %arg1: memref<512x8xf32, #tpu.memory_space<vmem>>, %arg2: memref<1x8xf32, #tpu.memory_space<vmem>>, %arg3: memref<1x8xf32, #tpu.memory_space<vmem>>) attributes {dimension_semantics = [#tpu.dimension_semantics<arbitrary>], iteration_bounds = array<i64: 2>, scalar_prefetch = 0 : i64, scratch_operands = 0 : i64, tpu.core_type = #tpu.core_type<tc>, window_params = [{transform_indices = @transform_0, window_bounds = array<i64: 512, 8>}, {pipeline_mode = #tpu.pipeline_mode<synchronous>, transform_indices = @transform_1, window_bounds = array<i64: 1, 8>}, {pipeline_mode = #tpu.pipeline_mode<synchronous>, transform_indices = @transform_2, window_bounds = array<i64: 1, 8>}]} {
    %c0_i32 = arith.constant 0 : i32
    %0 = arith.cmpi eq, %arg0, %c0_i32 : i32
    %1 = arith.extui %0 : i1 to i32
    %c0_i32_0 = arith.constant 0 : i32
    %2 = arith.cmpi ne, %1, %c0_i32_0 : i32
    scf.if %2 {
      %cst_11 = arith.constant 0.000000e+00 : f32
      %15 = vector.broadcast %cst_11 : f32 to vector<1x8xf32>
      %c0_12 = arith.constant 0 : index
      %c0_13 = arith.constant 0 : index
      %16 = vector.load %arg2[%c0_12, %c0_13] : memref<1x8xf32, #tpu.memory_space<vmem>>, vector<1x8xf32>
      tpu.vector_store %arg2[%c0_12, %c0_13], %15 {strides = array<i32>} : memref<1x8xf32, #tpu.memory_space<vmem>>, vector<1x8xf32>,
      %cst_14 = arith.constant 0.000000e+00 : f32
      %17 = vector.broadcast %cst_14 : f32 to vector<1x8xf32>
      %c0_15 = arith.constant 0 : index
      %c0_16 = arith.constant 0 : index
      %18 = vector.load %arg3[%c0_15, %c0_16] : memref<1x8xf32, #tpu.memory_space<vmem>>, vector<1x8xf32>
      tpu.vector_store %arg3[%c0_15, %c0_16], %17 {strides = array<i32>} : memref<1x8xf32, #tpu.memory_space<vmem>>, vector<1x8xf32>,
    } else {
    }
    %c0 = arith.constant 0 : index
    %c0_1 = arith.constant 0 : index
    %3 = vector.load %arg1[%c0, %c0_1] : memref<512x8xf32, #tpu.memory_space<vmem>>, vector<512x8xf32>
    %c0_2 = arith.constant 0 : index
    %c0_3 = arith.constant 0 : index
    %4 = vector.load %arg2[%c0_2, %c0_3] : memref<1x8xf32, #tpu.memory_space<vmem>>, vector<1x8xf32>
    %cst = arith.constant dense<0.000000e+00> : vector<8xf32>
    %5 = vector.multi_reduction <add>, %3, %cst [0] : vector<512x8xf32> to vector<8xf32>
    %6 = vector.shape_cast %5 : vector<8xf32> to vector<1x8xf32>
    %7 = arith.addf %4, %6 : vector<1x8xf32>
    %c0_4 = arith.constant 0 : index
    %c0_5 = arith.constant 0 : index
    %8 = vector.load %arg2[%c0_4, %c0_5] : memref<1x8xf32, #tpu.memory_space<vmem>>, vector<1x8xf32>
    tpu.vector_store %arg2[%c0_4, %c0_5], %7 {strides = array<i32>} : memref<1x8xf32, #tpu.memory_space<vmem>>, vector<1x8xf32>,
    %c0_6 = arith.constant 0 : index
    %c0_7 = arith.constant 0 : index
    %9 = vector.load %arg3[%c0_6, %c0_7] : memref<1x8xf32, #tpu.memory_space<vmem>>, vector<1x8xf32>
    %10 = arith.mulf %3, %3 : vector<512x8xf32>
    %cst_8 = arith.constant dense<0.000000e+00> : vector<8xf32>
    %11 = vector.multi_reduction <add>, %10, %cst_8 [0] : vector<512x8xf32> to vector<8xf32>
    %12 = vector.shape_cast %11 : vector<8xf32> to vector<1x8xf32>
    %13 = arith.addf %9, %12 : vector<1x8xf32>
    %c0_9 = arith.constant 0 : index
    %c0_10 = arith.constant 0 : index
    %14 = vector.load %arg3[%c0_9, %c0_10] : memref<1x8xf32, #tpu.memory_space<vmem>>, vector<1x8xf32>
    tpu.vector_store %arg3[%c0_9, %c0_10], %13 {strides = array<i32>} : memref<1x8xf32, #tpu.memory_space<vmem>>, vector<1x8xf32>,
    return
  }
  func.func @transform_0(%arg0: i32) -> (i32, i32) {
    %c0_i32 = arith.constant 0 : i32
    %c0_i32_0 = arith.constant 0 : i32
    return %arg0, %c0_i32 : i32, i32
  }
  func.func @transform_1(%arg0: i32) -> (i32, i32) {
    %c0_i32 = arith.constant 0 : i32
    %c0_i32_0 = arith.constant 0 : i32
    %c0_i32_1 = arith.constant 0 : i32
    return %c0_i32, %c0_i32_0 : i32, i32
  }
  func.func @transform_2(%arg0: i32) -> (i32, i32) {
    %c0_i32 = arith.constant 0 : i32
    %c0_i32_0 = arith.constant 0 : i32
    %c0_i32_1 = arith.constant 0 : i32
    return %c0_i32, %c0_i32_0 : i32, i32
  }
}

module attributes {stable_mosaic.version = 11 : i64} {
  func.func @_bn_apply_kernel(%arg0: i32, %arg1: memref<512x8xf32, #tpu.memory_space<vmem>>, %arg2: memref<1x8xf32, #tpu.memory_space<vmem>>, %arg3: memref<1x8xf32, #tpu.memory_space<vmem>>, %arg4: memref<512x8xbf16, #tpu.memory_space<vmem>>) attributes {dimension_semantics = [#tpu.dimension_semantics<parallel>], iteration_bounds = array<i64: 2>, scalar_prefetch = 0 : i64, scratch_operands = 0 : i64, tpu.core_type = #tpu.core_type<tc>, window_params = [{transform_indices = @transform_0, window_bounds = array<i64: 512, 8>}, {pipeline_mode = #tpu.pipeline_mode<synchronous>, transform_indices = @transform_1, window_bounds = array<i64: 1, 8>}, {pipeline_mode = #tpu.pipeline_mode<synchronous>, transform_indices = @transform_2, window_bounds = array<i64: 1, 8>}, {transform_indices = @transform_3, window_bounds = array<i64: 512, 8>}]} {
    %c0 = arith.constant 0 : index
    %c0_0 = arith.constant 0 : index
    %0 = vector.load %arg1[%c0, %c0_0] : memref<512x8xf32, #tpu.memory_space<vmem>>, vector<512x8xf32>
    %c0_1 = arith.constant 0 : index
    %c0_2 = arith.constant 0 : index
    %1 = vector.load %arg2[%c0_1, %c0_2] : memref<1x8xf32, #tpu.memory_space<vmem>>, vector<1x8xf32>
    %2 = vector.broadcast %1 : vector<1x8xf32> to vector<512x8xf32>
    %3 = arith.mulf %0, %2 : vector<512x8xf32>
    %c0_3 = arith.constant 0 : index
    %c0_4 = arith.constant 0 : index
    %4 = vector.load %arg3[%c0_3, %c0_4] : memref<1x8xf32, #tpu.memory_space<vmem>>, vector<1x8xf32>
    %5 = vector.broadcast %4 : vector<1x8xf32> to vector<512x8xf32>
    %6 = arith.addf %3, %5 : vector<512x8xf32>
    %7 = arith.truncf %6 : vector<512x8xf32> to vector<512x8xbf16>
    %c0_5 = arith.constant 0 : index
    %c0_6 = arith.constant 0 : index
    %8 = vector.load %arg4[%c0_5, %c0_6] : memref<512x8xbf16, #tpu.memory_space<vmem>>, vector<512x8xbf16>
    tpu.vector_store %arg4[%c0_5, %c0_6], %7 {strides = array<i32>} : memref<512x8xbf16, #tpu.memory_space<vmem>>, vector<512x8xbf16>,
    return
  }
  func.func @transform_0(%arg0: i32) -> (i32, i32) {
    %c0_i32 = arith.constant 0 : i32
    %c0_i32_0 = arith.constant 0 : i32
    return %arg0, %c0_i32 : i32, i32
  }
  func.func @transform_1(%arg0: i32) -> (i32, i32) {
    %c0_i32 = arith.constant 0 : i32
    %c0_i32_0 = arith.constant 0 : i32
    %c0_i32_1 = arith.constant 0 : i32
    return %c0_i32, %c0_i32_0 : i32, i32
  }
  func.func @transform_2(%arg0: i32) -> (i32, i32) {
    %c0_i32 = arith.constant 0 : i32
    %c0_i32_0 = arith.constant 0 : i32
    %c0_i32_1 = arith.constant 0 : i32
    return %c0_i32, %c0_i32_0 : i32, i32
  }
  func.func @transform_3(%arg0: i32) -> (i32, i32) {
    %c0_i32 = arith.constant 0 : i32
    %c0_i32_0 = arith.constant 0 : i32
    return %arg0, %c0_i32 : i32, i32
  }
}

module attributes {stable_mosaic.version = 11 : i64} {
  func.func @_bn_stats_kernel(%arg0: i32, %arg1: memref<512x8xbf16, #tpu.memory_space<vmem>>, %arg2: memref<1x8xf32, #tpu.memory_space<vmem>>, %arg3: memref<1x8xf32, #tpu.memory_space<vmem>>) attributes {dimension_semantics = [#tpu.dimension_semantics<arbitrary>], iteration_bounds = array<i64: 2>, scalar_prefetch = 0 : i64, scratch_operands = 0 : i64, tpu.core_type = #tpu.core_type<tc>, window_params = [{transform_indices = @transform_0, window_bounds = array<i64: 512, 8>}, {pipeline_mode = #tpu.pipeline_mode<synchronous>, transform_indices = @transform_1, window_bounds = array<i64: 1, 8>}, {pipeline_mode = #tpu.pipeline_mode<synchronous>, transform_indices = @transform_2, window_bounds = array<i64: 1, 8>}]} {
    %c0_i32 = arith.constant 0 : i32
    %0 = arith.cmpi eq, %arg0, %c0_i32 : i32
    %1 = arith.extui %0 : i1 to i32
    %c0_i32_0 = arith.constant 0 : i32
    %2 = arith.cmpi ne, %1, %c0_i32_0 : i32
    scf.if %2 {
      %cst_11 = arith.constant 0.000000e+00 : f32
      %16 = vector.broadcast %cst_11 : f32 to vector<1x8xf32>
      %c0_12 = arith.constant 0 : index
      %c0_13 = arith.constant 0 : index
      %17 = vector.load %arg2[%c0_12, %c0_13] : memref<1x8xf32, #tpu.memory_space<vmem>>, vector<1x8xf32>
      tpu.vector_store %arg2[%c0_12, %c0_13], %16 {strides = array<i32>} : memref<1x8xf32, #tpu.memory_space<vmem>>, vector<1x8xf32>,
      %cst_14 = arith.constant 0.000000e+00 : f32
      %18 = vector.broadcast %cst_14 : f32 to vector<1x8xf32>
      %c0_15 = arith.constant 0 : index
      %c0_16 = arith.constant 0 : index
      %19 = vector.load %arg3[%c0_15, %c0_16] : memref<1x8xf32, #tpu.memory_space<vmem>>, vector<1x8xf32>
      tpu.vector_store %arg3[%c0_15, %c0_16], %18 {strides = array<i32>} : memref<1x8xf32, #tpu.memory_space<vmem>>, vector<1x8xf32>,
    } else {
    }
    %c0 = arith.constant 0 : index
    %c0_1 = arith.constant 0 : index
    %3 = vector.load %arg1[%c0, %c0_1] : memref<512x8xbf16, #tpu.memory_space<vmem>>, vector<512x8xbf16>
    %4 = arith.extf %3 : vector<512x8xbf16> to vector<512x8xf32>
    %c0_2 = arith.constant 0 : index
    %c0_3 = arith.constant 0 : index
    %5 = vector.load %arg2[%c0_2, %c0_3] : memref<1x8xf32, #tpu.memory_space<vmem>>, vector<1x8xf32>
    %cst = arith.constant dense<0.000000e+00> : vector<8xf32>
    %6 = vector.multi_reduction <add>, %4, %cst [0] : vector<512x8xf32> to vector<8xf32>
    %7 = vector.shape_cast %6 : vector<8xf32> to vector<1x8xf32>
    %8 = arith.addf %5, %7 : vector<1x8xf32>
    %c0_4 = arith.constant 0 : index
    %c0_5 = arith.constant 0 : index
    %9 = vector.load %arg2[%c0_4, %c0_5] : memref<1x8xf32, #tpu.memory_space<vmem>>, vector<1x8xf32>
    tpu.vector_store %arg2[%c0_4, %c0_5], %8 {strides = array<i32>} : memref<1x8xf32, #tpu.memory_space<vmem>>, vector<1x8xf32>,
    %c0_6 = arith.constant 0 : index
    %c0_7 = arith.constant 0 : index
    %10 = vector.load %arg3[%c0_6, %c0_7] : memref<1x8xf32, #tpu.memory_space<vmem>>, vector<1x8xf32>
    %11 = arith.mulf %4, %4 : vector<512x8xf32>
    %cst_8 = arith.constant dense<0.000000e+00> : vector<8xf32>
    %12 = vector.multi_reduction <add>, %11, %cst_8 [0] : vector<512x8xf32> to vector<8xf32>
    %13 = vector.shape_cast %12 : vector<8xf32> to vector<1x8xf32>
    %14 = arith.addf %10, %13 : vector<1x8xf32>
    %c0_9 = arith.constant 0 : index
    %c0_10 = arith.constant 0 : index
    %15 = vector.load %arg3[%c0_9, %c0_10] : memref<1x8xf32, #tpu.memory_space<vmem>>, vector<1x8xf32>
    tpu.vector_store %arg3[%c0_9, %c0_10], %14 {strides = array<i32>} : memref<1x8xf32, #tpu.memory_space<vmem>>, vector<1x8xf32>,
    return
  }
  func.func @transform_0(%arg0: i32) -> (i32, i32) {
    %c0_i32 = arith.constant 0 : i32
    %c0_i32_0 = arith.constant 0 : i32
    return %arg0, %c0_i32 : i32, i32
  }
  func.func @transform_1(%arg0: i32) -> (i32, i32) {
    %c0_i32 = arith.constant 0 : i32
    %c0_i32_0 = arith.constant 0 : i32
    %c0_i32_1 = arith.constant 0 : i32
    return %c0_i32, %c0_i32_0 : i32, i32
  }
  func.func @transform_2(%arg0: i32) -> (i32, i32) {
    %c0_i32 = arith.constant 0 : i32
    %c0_i32_0 = arith.constant 0 : i32
    %c0_i32_1 = arith.constant 0 : i32
    return %c0_i32, %c0_i32_0 : i32, i32
  }
}

module attributes {stable_mosaic.version = 11 : i64} {
  func.func @kernel(%arg0: i32, %arg1: memref<128x512xbf16, #tpu.memory_space<vmem>>, %arg2: memref<512x16xbf16, #tpu.memory_space<vmem>>, %arg3: memref<1x16xf32, #tpu.memory_space<vmem>>, %arg4: memref<128x16xf32, #tpu.memory_space<vmem>>) attributes {dimension_semantics = [#tpu.dimension_semantics<parallel>], iteration_bounds = array<i64: 1>, scalar_prefetch = 0 : i64, scratch_operands = 0 : i64, tpu.core_type = #tpu.core_type<tc>, window_params = [{transform_indices = @transform_0, window_bounds = array<i64: 128, 512>}, {pipeline_mode = #tpu.pipeline_mode<synchronous>, transform_indices = @transform_1, window_bounds = array<i64: 512, 16>}, {pipeline_mode = #tpu.pipeline_mode<synchronous>, transform_indices = @transform_2, window_bounds = array<i64: 1, 16>}, {transform_indices = @transform_3, window_bounds = array<i64: 128, 16>}]} {
    %c0 = arith.constant 0 : index
    %c0_0 = arith.constant 0 : index
    %0 = vector.load %arg1[%c0, %c0_0] : memref<128x512xbf16, #tpu.memory_space<vmem>>, vector<128x512xbf16>
    %c0_1 = arith.constant 0 : index
    %c0_2 = arith.constant 0 : index
    %1 = vector.load %arg2[%c0_1, %c0_2] : memref<512x16xbf16, #tpu.memory_space<vmem>>, vector<512x16xbf16>
    %cst = arith.constant dense<0.000000e+00> : vector<128x16xf32>
    %2 = tpu.matmul %0, %1, %cst {dimension_numbers = #tpu.dot_dimension_numbers<[1], [0], [0], [1], [0, 0, 1, 1], [], []>} : vector<128x512xbf16>, vector<512x16xbf16>, vector<128x16xf32> -> vector<128x16xf32>
    %c0_3 = arith.constant 0 : index
    %c0_4 = arith.constant 0 : index
    %3 = vector.load %arg3[%c0_3, %c0_4] : memref<1x16xf32, #tpu.memory_space<vmem>>, vector<1x16xf32>
    %4 = vector.broadcast %3 : vector<1x16xf32> to vector<128x16xf32>
    %5 = arith.addf %2, %4 : vector<128x16xf32>
    %cst_5 = arith.constant 0.000000e+00 : f32
    %6 = vector.broadcast %cst_5 : f32 to vector<128x16xf32>
    %7 = arith.cmpf oge, %5, %6 : vector<128x16xf32>
    %cst_6 = arith.constant 0.00999999977 : f32
    %8 = vector.broadcast %cst_6 : f32 to vector<128x16xf32>
    %9 = arith.mulf %8, %5 : vector<128x16xf32>
    %10 = arith.select %7, %5, %9 : vector<128x16xi1>, vector<128x16xf32>
    %c0_7 = arith.constant 0 : index
    %c0_8 = arith.constant 0 : index
    %11 = vector.load %arg4[%c0_7, %c0_8] : memref<128x16xf32, #tpu.memory_space<vmem>>, vector<128x16xf32>
    tpu.vector_store %arg4[%c0_7, %c0_8], %10 {strides = array<i32>} : memref<128x16xf32, #tpu.memory_space<vmem>>, vector<128x16xf32>,
    return
  }
  func.func @transform_0(%arg0: i32) -> (i32, i32) {
    %c0_i32 = arith.constant 0 : i32
    %c0_i32_0 = arith.constant 0 : i32
    return %arg0, %c0_i32 : i32, i32
  }
  func.func @transform_1(%arg0: i32) -> (i32, i32) {
    %c0_i32 = arith.constant 0 : i32
    %c0_i32_0 = arith.constant 0 : i32
    %c0_i32_1 = arith.constant 0 : i32
    return %c0_i32, %c0_i32_0 : i32, i32
  }
  func.func @transform_2(%arg0: i32) -> (i32, i32) {
    %c0_i32 = arith.constant 0 : i32
    %c0_i32_0 = arith.constant 0 : i32
    %c0_i32_1 = arith.constant 0 : i32
    return %c0_i32, %c0_i32_0 : i32, i32
  }
  func.func @transform_3(%arg0: i32) -> (i32, i32) {
    %c0_i32 = arith.constant 0 : i32
    %c0_i32_0 = arith.constant 0 : i32
    return %arg0, %c0_i32 : i32, i32
  }
}

module attributes {stable_mosaic.version = 11 : i64} {
  func.func @_bn_stats_kernel(%arg0: i32, %arg1: memref<128x16xf32, #tpu.memory_space<vmem>>, %arg2: memref<1x16xf32, #tpu.memory_space<vmem>>, %arg3: memref<1x16xf32, #tpu.memory_space<vmem>>) attributes {dimension_semantics = [#tpu.dimension_semantics<arbitrary>], iteration_bounds = array<i64: 1>, scalar_prefetch = 0 : i64, scratch_operands = 0 : i64, tpu.core_type = #tpu.core_type<tc>, window_params = [{transform_indices = @transform_0, window_bounds = array<i64: 128, 16>}, {pipeline_mode = #tpu.pipeline_mode<synchronous>, transform_indices = @transform_1, window_bounds = array<i64: 1, 16>}, {pipeline_mode = #tpu.pipeline_mode<synchronous>, transform_indices = @transform_2, window_bounds = array<i64: 1, 16>}]} {
    %c0_i32 = arith.constant 0 : i32
    %0 = arith.cmpi eq, %arg0, %c0_i32 : i32
    %1 = arith.extui %0 : i1 to i32
    %c0_i32_0 = arith.constant 0 : i32
    %2 = arith.cmpi ne, %1, %c0_i32_0 : i32
    scf.if %2 {
      %cst_11 = arith.constant 0.000000e+00 : f32
      %15 = vector.broadcast %cst_11 : f32 to vector<1x16xf32>
      %c0_12 = arith.constant 0 : index
      %c0_13 = arith.constant 0 : index
      %16 = vector.load %arg2[%c0_12, %c0_13] : memref<1x16xf32, #tpu.memory_space<vmem>>, vector<1x16xf32>
      tpu.vector_store %arg2[%c0_12, %c0_13], %15 {strides = array<i32>} : memref<1x16xf32, #tpu.memory_space<vmem>>, vector<1x16xf32>,
      %cst_14 = arith.constant 0.000000e+00 : f32
      %17 = vector.broadcast %cst_14 : f32 to vector<1x16xf32>
      %c0_15 = arith.constant 0 : index
      %c0_16 = arith.constant 0 : index
      %18 = vector.load %arg3[%c0_15, %c0_16] : memref<1x16xf32, #tpu.memory_space<vmem>>, vector<1x16xf32>
      tpu.vector_store %arg3[%c0_15, %c0_16], %17 {strides = array<i32>} : memref<1x16xf32, #tpu.memory_space<vmem>>, vector<1x16xf32>,
    } else {
    }
    %c0 = arith.constant 0 : index
    %c0_1 = arith.constant 0 : index
    %3 = vector.load %arg1[%c0, %c0_1] : memref<128x16xf32, #tpu.memory_space<vmem>>, vector<128x16xf32>
    %c0_2 = arith.constant 0 : index
    %c0_3 = arith.constant 0 : index
    %4 = vector.load %arg2[%c0_2, %c0_3] : memref<1x16xf32, #tpu.memory_space<vmem>>, vector<1x16xf32>
    %cst = arith.constant dense<0.000000e+00> : vector<16xf32>
    %5 = vector.multi_reduction <add>, %3, %cst [0] : vector<128x16xf32> to vector<16xf32>
    %6 = vector.shape_cast %5 : vector<16xf32> to vector<1x16xf32>
    %7 = arith.addf %4, %6 : vector<1x16xf32>
    %c0_4 = arith.constant 0 : index
    %c0_5 = arith.constant 0 : index
    %8 = vector.load %arg2[%c0_4, %c0_5] : memref<1x16xf32, #tpu.memory_space<vmem>>, vector<1x16xf32>
    tpu.vector_store %arg2[%c0_4, %c0_5], %7 {strides = array<i32>} : memref<1x16xf32, #tpu.memory_space<vmem>>, vector<1x16xf32>,
    %c0_6 = arith.constant 0 : index
    %c0_7 = arith.constant 0 : index
    %9 = vector.load %arg3[%c0_6, %c0_7] : memref<1x16xf32, #tpu.memory_space<vmem>>, vector<1x16xf32>
    %10 = arith.mulf %3, %3 : vector<128x16xf32>
    %cst_8 = arith.constant dense<0.000000e+00> : vector<16xf32>
    %11 = vector.multi_reduction <add>, %10, %cst_8 [0] : vector<128x16xf32> to vector<16xf32>
    %12 = vector.shape_cast %11 : vector<16xf32> to vector<1x16xf32>
    %13 = arith.addf %9, %12 : vector<1x16xf32>
    %c0_9 = arith.constant 0 : index
    %c0_10 = arith.constant 0 : index
    %14 = vector.load %arg3[%c0_9, %c0_10] : memref<1x16xf32, #tpu.memory_space<vmem>>, vector<1x16xf32>
    tpu.vector_store %arg3[%c0_9, %c0_10], %13 {strides = array<i32>} : memref<1x16xf32, #tpu.memory_space<vmem>>, vector<1x16xf32>,
    return
  }
  func.func @transform_0(%arg0: i32) -> (i32, i32) {
    %c0_i32 = arith.constant 0 : i32
    %c0_i32_0 = arith.constant 0 : i32
    return %arg0, %c0_i32 : i32, i32
  }
  func.func @transform_1(%arg0: i32) -> (i32, i32) {
    %c0_i32 = arith.constant 0 : i32
    %c0_i32_0 = arith.constant 0 : i32
    %c0_i32_1 = arith.constant 0 : i32
    return %c0_i32, %c0_i32_0 : i32, i32
  }
  func.func @transform_2(%arg0: i32) -> (i32, i32) {
    %c0_i32 = arith.constant 0 : i32
    %c0_i32_0 = arith.constant 0 : i32
    %c0_i32_1 = arith.constant 0 : i32
    return %c0_i32, %c0_i32_0 : i32, i32
  }
}

module attributes {stable_mosaic.version = 11 : i64} {
  func.func @_bn_apply_kernel(%arg0: i32, %arg1: memref<128x16xf32, #tpu.memory_space<vmem>>, %arg2: memref<1x16xf32, #tpu.memory_space<vmem>>, %arg3: memref<1x16xf32, #tpu.memory_space<vmem>>, %arg4: memref<128x16xbf16, #tpu.memory_space<vmem>>) attributes {dimension_semantics = [#tpu.dimension_semantics<parallel>], iteration_bounds = array<i64: 1>, scalar_prefetch = 0 : i64, scratch_operands = 0 : i64, tpu.core_type = #tpu.core_type<tc>, window_params = [{transform_indices = @transform_0, window_bounds = array<i64: 128, 16>}, {pipeline_mode = #tpu.pipeline_mode<synchronous>, transform_indices = @transform_1, window_bounds = array<i64: 1, 16>}, {pipeline_mode = #tpu.pipeline_mode<synchronous>, transform_indices = @transform_2, window_bounds = array<i64: 1, 16>}, {transform_indices = @transform_3, window_bounds = array<i64: 128, 16>}]} {
    %c0 = arith.constant 0 : index
    %c0_0 = arith.constant 0 : index
    %0 = vector.load %arg1[%c0, %c0_0] : memref<128x16xf32, #tpu.memory_space<vmem>>, vector<128x16xf32>
    %c0_1 = arith.constant 0 : index
    %c0_2 = arith.constant 0 : index
    %1 = vector.load %arg2[%c0_1, %c0_2] : memref<1x16xf32, #tpu.memory_space<vmem>>, vector<1x16xf32>
    %2 = vector.broadcast %1 : vector<1x16xf32> to vector<128x16xf32>
    %3 = arith.mulf %0, %2 : vector<128x16xf32>
    %c0_3 = arith.constant 0 : index
    %c0_4 = arith.constant 0 : index
    %4 = vector.load %arg3[%c0_3, %c0_4] : memref<1x16xf32, #tpu.memory_space<vmem>>, vector<1x16xf32>
    %5 = vector.broadcast %4 : vector<1x16xf32> to vector<128x16xf32>
    %6 = arith.addf %3, %5 : vector<128x16xf32>
    %7 = arith.truncf %6 : vector<128x16xf32> to vector<128x16xbf16>
    %c0_5 = arith.constant 0 : index
    %c0_6 = arith.constant 0 : index
    %8 = vector.load %arg4[%c0_5, %c0_6] : memref<128x16xbf16, #tpu.memory_space<vmem>>, vector<128x16xbf16>
    tpu.vector_store %arg4[%c0_5, %c0_6], %7 {strides = array<i32>} : memref<128x16xbf16, #tpu.memory_space<vmem>>, vector<128x16xbf16>,
    return
  }
  func.func @transform_0(%arg0: i32) -> (i32, i32) {
    %c0_i32 = arith.constant 0 : i32
    %c0_i32_0 = arith.constant 0 : i32
    return %arg0, %c0_i32 : i32, i32
  }
  func.func @transform_1(%arg0: i32) -> (i32, i32) {
    %c0_i32 = arith.constant 0 : i32
    %c0_i32_0 = arith.constant 0 : i32
    %c0_i32_1 = arith.constant 0 : i32
    return %c0_i32, %c0_i32_0 : i32, i32
  }
  func.func @transform_2(%arg0: i32) -> (i32, i32) {
    %c0_i32 = arith.constant 0 : i32
    %c0_i32_0 = arith.constant 0 : i32
    %c0_i32_1 = arith.constant 0 : i32
    return %c0_i32, %c0_i32_0 : i32, i32
  }
  func.func @transform_3(%arg0: i32) -> (i32, i32) {
    %c0_i32 = arith.constant 0 : i32
    %c0_i32_0 = arith.constant 0 : i32
    return %arg0, %c0_i32 : i32, i32
  }
}

module attributes {stable_mosaic.version = 11 : i64} {
  func.func @kernel(%arg0: i32, %arg1: memref<16x1024xbf16, #tpu.memory_space<vmem>>, %arg2: memref<1024x32xbf16, #tpu.memory_space<vmem>>, %arg3: memref<1x32xf32, #tpu.memory_space<vmem>>, %arg4: memref<16x32xf32, #tpu.memory_space<vmem>>) attributes {dimension_semantics = [#tpu.dimension_semantics<parallel>], iteration_bounds = array<i64: 1>, scalar_prefetch = 0 : i64, scratch_operands = 0 : i64, tpu.core_type = #tpu.core_type<tc>, window_params = [{transform_indices = @transform_0, window_bounds = array<i64: 16, 1024>}, {pipeline_mode = #tpu.pipeline_mode<synchronous>, transform_indices = @transform_1, window_bounds = array<i64: 1024, 32>}, {pipeline_mode = #tpu.pipeline_mode<synchronous>, transform_indices = @transform_2, window_bounds = array<i64: 1, 32>}, {transform_indices = @transform_3, window_bounds = array<i64: 16, 32>}]} {
    %c0 = arith.constant 0 : index
    %c0_0 = arith.constant 0 : index
    %0 = vector.load %arg1[%c0, %c0_0] : memref<16x1024xbf16, #tpu.memory_space<vmem>>, vector<16x1024xbf16>
    %c0_1 = arith.constant 0 : index
    %c0_2 = arith.constant 0 : index
    %1 = vector.load %arg2[%c0_1, %c0_2] : memref<1024x32xbf16, #tpu.memory_space<vmem>>, vector<1024x32xbf16>
    %cst = arith.constant dense<0.000000e+00> : vector<16x32xf32>
    %2 = tpu.matmul %0, %1, %cst {dimension_numbers = #tpu.dot_dimension_numbers<[1], [0], [0], [1], [0, 0, 1, 1], [], []>} : vector<16x1024xbf16>, vector<1024x32xbf16>, vector<16x32xf32> -> vector<16x32xf32>
    %c0_3 = arith.constant 0 : index
    %c0_4 = arith.constant 0 : index
    %3 = vector.load %arg3[%c0_3, %c0_4] : memref<1x32xf32, #tpu.memory_space<vmem>>, vector<1x32xf32>
    %4 = vector.broadcast %3 : vector<1x32xf32> to vector<16x32xf32>
    %5 = arith.addf %2, %4 : vector<16x32xf32>
    %cst_5 = arith.constant 0.000000e+00 : f32
    %6 = vector.broadcast %cst_5 : f32 to vector<16x32xf32>
    %7 = arith.cmpf oge, %5, %6 : vector<16x32xf32>
    %cst_6 = arith.constant 0.00999999977 : f32
    %8 = vector.broadcast %cst_6 : f32 to vector<16x32xf32>
    %9 = arith.mulf %8, %5 : vector<16x32xf32>
    %10 = arith.select %7, %5, %9 : vector<16x32xi1>, vector<16x32xf32>
    %c0_7 = arith.constant 0 : index
    %c0_8 = arith.constant 0 : index
    %11 = vector.load %arg4[%c0_7, %c0_8] : memref<16x32xf32, #tpu.memory_space<vmem>>, vector<16x32xf32>
    tpu.vector_store %arg4[%c0_7, %c0_8], %10 {strides = array<i32>} : memref<16x32xf32, #tpu.memory_space<vmem>>, vector<16x32xf32>,
    return
  }
  func.func @transform_0(%arg0: i32) -> (i32, i32) {
    %c0_i32 = arith.constant 0 : i32
    %c0_i32_0 = arith.constant 0 : i32
    return %arg0, %c0_i32 : i32, i32
  }
  func.func @transform_1(%arg0: i32) -> (i32, i32) {
    %c0_i32 = arith.constant 0 : i32
    %c0_i32_0 = arith.constant 0 : i32
    %c0_i32_1 = arith.constant 0 : i32
    return %c0_i32, %c0_i32_0 : i32, i32
  }
  func.func @transform_2(%arg0: i32) -> (i32, i32) {
    %c0_i32 = arith.constant 0 : i32
    %c0_i32_0 = arith.constant 0 : i32
    %c0_i32_1 = arith.constant 0 : i32
    return %c0_i32, %c0_i32_0 : i32, i32
  }
  func.func @transform_3(%arg0: i32) -> (i32, i32) {
    %c0_i32 = arith.constant 0 : i32
    %c0_i32_0 = arith.constant 0 : i32
    return %arg0, %c0_i32 : i32, i32
  }
}

module attributes {stable_mosaic.version = 11 : i64} {
  func.func @_bn_stats_kernel(%arg0: i32, %arg1: memref<16x32xf32, #tpu.memory_space<vmem>>, %arg2: memref<1x32xf32, #tpu.memory_space<vmem>>, %arg3: memref<1x32xf32, #tpu.memory_space<vmem>>) attributes {dimension_semantics = [#tpu.dimension_semantics<arbitrary>], iteration_bounds = array<i64: 1>, scalar_prefetch = 0 : i64, scratch_operands = 0 : i64, tpu.core_type = #tpu.core_type<tc>, window_params = [{transform_indices = @transform_0, window_bounds = array<i64: 16, 32>}, {pipeline_mode = #tpu.pipeline_mode<synchronous>, transform_indices = @transform_1, window_bounds = array<i64: 1, 32>}, {pipeline_mode = #tpu.pipeline_mode<synchronous>, transform_indices = @transform_2, window_bounds = array<i64: 1, 32>}]} {
    %c0_i32 = arith.constant 0 : i32
    %0 = arith.cmpi eq, %arg0, %c0_i32 : i32
    %1 = arith.extui %0 : i1 to i32
    %c0_i32_0 = arith.constant 0 : i32
    %2 = arith.cmpi ne, %1, %c0_i32_0 : i32
    scf.if %2 {
      %cst_11 = arith.constant 0.000000e+00 : f32
      %15 = vector.broadcast %cst_11 : f32 to vector<1x32xf32>
      %c0_12 = arith.constant 0 : index
      %c0_13 = arith.constant 0 : index
      %16 = vector.load %arg2[%c0_12, %c0_13] : memref<1x32xf32, #tpu.memory_space<vmem>>, vector<1x32xf32>
      tpu.vector_store %arg2[%c0_12, %c0_13], %15 {strides = array<i32>} : memref<1x32xf32, #tpu.memory_space<vmem>>, vector<1x32xf32>,
      %cst_14 = arith.constant 0.000000e+00 : f32
      %17 = vector.broadcast %cst_14 : f32 to vector<1x32xf32>
      %c0_15 = arith.constant 0 : index
      %c0_16 = arith.constant 0 : index
      %18 = vector.load %arg3[%c0_15, %c0_16] : memref<1x32xf32, #tpu.memory_space<vmem>>, vector<1x32xf32>
      tpu.vector_store %arg3[%c0_15, %c0_16], %17 {strides = array<i32>} : memref<1x32xf32, #tpu.memory_space<vmem>>, vector<1x32xf32>,
    } else {
    }
    %c0 = arith.constant 0 : index
    %c0_1 = arith.constant 0 : index
    %3 = vector.load %arg1[%c0, %c0_1] : memref<16x32xf32, #tpu.memory_space<vmem>>, vector<16x32xf32>
    %c0_2 = arith.constant 0 : index
    %c0_3 = arith.constant 0 : index
    %4 = vector.load %arg2[%c0_2, %c0_3] : memref<1x32xf32, #tpu.memory_space<vmem>>, vector<1x32xf32>
    %cst = arith.constant dense<0.000000e+00> : vector<32xf32>
    %5 = vector.multi_reduction <add>, %3, %cst [0] : vector<16x32xf32> to vector<32xf32>
    %6 = vector.shape_cast %5 : vector<32xf32> to vector<1x32xf32>
    %7 = arith.addf %4, %6 : vector<1x32xf32>
    %c0_4 = arith.constant 0 : index
    %c0_5 = arith.constant 0 : index
    %8 = vector.load %arg2[%c0_4, %c0_5] : memref<1x32xf32, #tpu.memory_space<vmem>>, vector<1x32xf32>
    tpu.vector_store %arg2[%c0_4, %c0_5], %7 {strides = array<i32>} : memref<1x32xf32, #tpu.memory_space<vmem>>, vector<1x32xf32>,
    %c0_6 = arith.constant 0 : index
    %c0_7 = arith.constant 0 : index
    %9 = vector.load %arg3[%c0_6, %c0_7] : memref<1x32xf32, #tpu.memory_space<vmem>>, vector<1x32xf32>
    %10 = arith.mulf %3, %3 : vector<16x32xf32>
    %cst_8 = arith.constant dense<0.000000e+00> : vector<32xf32>
    %11 = vector.multi_reduction <add>, %10, %cst_8 [0] : vector<16x32xf32> to vector<32xf32>
    %12 = vector.shape_cast %11 : vector<32xf32> to vector<1x32xf32>
    %13 = arith.addf %9, %12 : vector<1x32xf32>
    %c0_9 = arith.constant 0 : index
    %c0_10 = arith.constant 0 : index
    %14 = vector.load %arg3[%c0_9, %c0_10] : memref<1x32xf32, #tpu.memory_space<vmem>>, vector<1x32xf32>
    tpu.vector_store %arg3[%c0_9, %c0_10], %13 {strides = array<i32>} : memref<1x32xf32, #tpu.memory_space<vmem>>, vector<1x32xf32>,
    return
  }
  func.func @transform_0(%arg0: i32) -> (i32, i32) {
    %c0_i32 = arith.constant 0 : i32
    %c0_i32_0 = arith.constant 0 : i32
    return %arg0, %c0_i32 : i32, i32
  }
  func.func @transform_1(%arg0: i32) -> (i32, i32) {
    %c0_i32 = arith.constant 0 : i32
    %c0_i32_0 = arith.constant 0 : i32
    %c0_i32_1 = arith.constant 0 : i32
    return %c0_i32, %c0_i32_0 : i32, i32
  }
  func.func @transform_2(%arg0: i32) -> (i32, i32) {
    %c0_i32 = arith.constant 0 : i32
    %c0_i32_0 = arith.constant 0 : i32
    %c0_i32_1 = arith.constant 0 : i32
    return %c0_i32, %c0_i32_0 : i32, i32
  }
}

module attributes {stable_mosaic.version = 11 : i64} {
  func.func @_bn_apply_kernel(%arg0: i32, %arg1: memref<16x32xf32, #tpu.memory_space<vmem>>, %arg2: memref<1x32xf32, #tpu.memory_space<vmem>>, %arg3: memref<1x32xf32, #tpu.memory_space<vmem>>, %arg4: memref<16x32xbf16, #tpu.memory_space<vmem>>) attributes {dimension_semantics = [#tpu.dimension_semantics<parallel>], iteration_bounds = array<i64: 1>, scalar_prefetch = 0 : i64, scratch_operands = 0 : i64, tpu.core_type = #tpu.core_type<tc>, window_params = [{transform_indices = @transform_0, window_bounds = array<i64: 16, 32>}, {pipeline_mode = #tpu.pipeline_mode<synchronous>, transform_indices = @transform_1, window_bounds = array<i64: 1, 32>}, {pipeline_mode = #tpu.pipeline_mode<synchronous>, transform_indices = @transform_2, window_bounds = array<i64: 1, 32>}, {transform_indices = @transform_3, window_bounds = array<i64: 16, 32>}]} {
    %c0 = arith.constant 0 : index
    %c0_0 = arith.constant 0 : index
    %0 = vector.load %arg1[%c0, %c0_0] : memref<16x32xf32, #tpu.memory_space<vmem>>, vector<16x32xf32>
    %c0_1 = arith.constant 0 : index
    %c0_2 = arith.constant 0 : index
    %1 = vector.load %arg2[%c0_1, %c0_2] : memref<1x32xf32, #tpu.memory_space<vmem>>, vector<1x32xf32>
    %2 = vector.broadcast %1 : vector<1x32xf32> to vector<16x32xf32>
    %3 = arith.mulf %0, %2 : vector<16x32xf32>
    %c0_3 = arith.constant 0 : index
    %c0_4 = arith.constant 0 : index
    %4 = vector.load %arg3[%c0_3, %c0_4] : memref<1x32xf32, #tpu.memory_space<vmem>>, vector<1x32xf32>
    %5 = vector.broadcast %4 : vector<1x32xf32> to vector<16x32xf32>
    %6 = arith.addf %3, %5 : vector<16x32xf32>
    %7 = arith.truncf %6 : vector<16x32xf32> to vector<16x32xbf16>
    %c0_5 = arith.constant 0 : index
    %c0_6 = arith.constant 0 : index
    %8 = vector.load %arg4[%c0_5, %c0_6] : memref<16x32xbf16, #tpu.memory_space<vmem>>, vector<16x32xbf16>
    tpu.vector_store %arg4[%c0_5, %c0_6], %7 {strides = array<i32>} : memref<16x32xbf16, #tpu.memory_space<vmem>>, vector<16x32xbf16>,
    return
  }
  func.func @transform_0(%arg0: i32) -> (i32, i32) {
    %c0_i32 = arith.constant 0 : i32
    %c0_i32_0 = arith.constant 0 : i32
    return %arg0, %c0_i32 : i32, i32
  }
  func.func @transform_1(%arg0: i32) -> (i32, i32) {
    %c0_i32 = arith.constant 0 : i32
    %c0_i32_0 = arith.constant 0 : i32
    %c0_i32_1 = arith.constant 0 : i32
    return %c0_i32, %c0_i32_0 : i32, i32
  }
  func.func @transform_2(%arg0: i32) -> (i32, i32) {
    %c0_i32 = arith.constant 0 : i32
    %c0_i32_0 = arith.constant 0 : i32
    %c0_i32_1 = arith.constant 0 : i32
    return %c0_i32, %c0_i32_0 : i32, i32
  }
  func.func @transform_3(%arg0: i32) -> (i32, i32) {
    %c0_i32 = arith.constant 0 : i32
    %c0_i32_0 = arith.constant 0 : i32
    return %arg0, %c0_i32 : i32, i32
  }
}

module attributes {stable_mosaic.version = 11 : i64} {
  func.func @kernel(%arg0: i32, %arg1: memref<16x864xbf16, #tpu.memory_space<vmem>>, %arg2: memref<864x256xbf16, #tpu.memory_space<vmem>>, %arg3: memref<1x256xf32, #tpu.memory_space<vmem>>, %arg4: memref<16x256xf32, #tpu.memory_space<vmem>>) attributes {dimension_semantics = [#tpu.dimension_semantics<parallel>], iteration_bounds = array<i64: 1>, scalar_prefetch = 0 : i64, scratch_operands = 0 : i64, tpu.core_type = #tpu.core_type<tc>, window_params = [{transform_indices = @transform_0, window_bounds = array<i64: 16, 864>}, {pipeline_mode = #tpu.pipeline_mode<synchronous>, transform_indices = @transform_1, window_bounds = array<i64: 864, 256>}, {pipeline_mode = #tpu.pipeline_mode<synchronous>, transform_indices = @transform_2, window_bounds = array<i64: 1, 256>}, {transform_indices = @transform_3, window_bounds = array<i64: 16, 256>}]} {
    %c0 = arith.constant 0 : index
    %c0_0 = arith.constant 0 : index
    %0 = vector.load %arg1[%c0, %c0_0] : memref<16x864xbf16, #tpu.memory_space<vmem>>, vector<16x864xbf16>
    %c0_1 = arith.constant 0 : index
    %c0_2 = arith.constant 0 : index
    %1 = vector.load %arg2[%c0_1, %c0_2] : memref<864x256xbf16, #tpu.memory_space<vmem>>, vector<864x256xbf16>
    %cst = arith.constant dense<0.000000e+00> : vector<16x256xf32>
    %2 = tpu.matmul %0, %1, %cst {dimension_numbers = #tpu.dot_dimension_numbers<[1], [0], [0], [1], [0, 0, 1, 1], [], []>} : vector<16x864xbf16>, vector<864x256xbf16>, vector<16x256xf32> -> vector<16x256xf32>
    %c0_3 = arith.constant 0 : index
    %c0_4 = arith.constant 0 : index
    %3 = vector.load %arg3[%c0_3, %c0_4] : memref<1x256xf32, #tpu.memory_space<vmem>>, vector<1x256xf32>
    %4 = vector.broadcast %3 : vector<1x256xf32> to vector<16x256xf32>
    %5 = arith.addf %2, %4 : vector<16x256xf32>
    %cst_5 = arith.constant 0.000000e+00 : f32
    %6 = vector.broadcast %cst_5 : f32 to vector<16x256xf32>
    %7 = arith.cmpf oge, %5, %6 : vector<16x256xf32>
    %cst_6 = arith.constant 0.00999999977 : f32
    %8 = vector.broadcast %cst_6 : f32 to vector<16x256xf32>
    %9 = arith.mulf %8, %5 : vector<16x256xf32>
    %10 = arith.select %7, %5, %9 : vector<16x256xi1>, vector<16x256xf32>
    %c0_7 = arith.constant 0 : index
    %c0_8 = arith.constant 0 : index
    %11 = vector.load %arg4[%c0_7, %c0_8] : memref<16x256xf32, #tpu.memory_space<vmem>>, vector<16x256xf32>
    tpu.vector_store %arg4[%c0_7, %c0_8], %10 {strides = array<i32>} : memref<16x256xf32, #tpu.memory_space<vmem>>, vector<16x256xf32>,
    return
  }
  func.func @transform_0(%arg0: i32) -> (i32, i32) {
    %c0_i32 = arith.constant 0 : i32
    %c0_i32_0 = arith.constant 0 : i32
    return %arg0, %c0_i32 : i32, i32
  }
  func.func @transform_1(%arg0: i32) -> (i32, i32) {
    %c0_i32 = arith.constant 0 : i32
    %c0_i32_0 = arith.constant 0 : i32
    %c0_i32_1 = arith.constant 0 : i32
    return %c0_i32, %c0_i32_0 : i32, i32
  }
  func.func @transform_2(%arg0: i32) -> (i32, i32) {
    %c0_i32 = arith.constant 0 : i32
    %c0_i32_0 = arith.constant 0 : i32
    %c0_i32_1 = arith.constant 0 : i32
    return %c0_i32, %c0_i32_0 : i32, i32
  }
  func.func @transform_3(%arg0: i32) -> (i32, i32) {
    %c0_i32 = arith.constant 0 : i32
    %c0_i32_0 = arith.constant 0 : i32
    return %arg0, %c0_i32 : i32, i32
  }
}

module attributes {stable_mosaic.version = 11 : i64} {
  func.func @_bn_stats_kernel(%arg0: i32, %arg1: memref<128x32xf32, #tpu.memory_space<vmem>>, %arg2: memref<1x32xf32, #tpu.memory_space<vmem>>, %arg3: memref<1x32xf32, #tpu.memory_space<vmem>>) attributes {dimension_semantics = [#tpu.dimension_semantics<arbitrary>], iteration_bounds = array<i64: 1>, scalar_prefetch = 0 : i64, scratch_operands = 0 : i64, tpu.core_type = #tpu.core_type<tc>, window_params = [{transform_indices = @transform_0, window_bounds = array<i64: 128, 32>}, {pipeline_mode = #tpu.pipeline_mode<synchronous>, transform_indices = @transform_1, window_bounds = array<i64: 1, 32>}, {pipeline_mode = #tpu.pipeline_mode<synchronous>, transform_indices = @transform_2, window_bounds = array<i64: 1, 32>}]} {
    %c0_i32 = arith.constant 0 : i32
    %0 = arith.cmpi eq, %arg0, %c0_i32 : i32
    %1 = arith.extui %0 : i1 to i32
    %c0_i32_0 = arith.constant 0 : i32
    %2 = arith.cmpi ne, %1, %c0_i32_0 : i32
    scf.if %2 {
      %cst_11 = arith.constant 0.000000e+00 : f32
      %15 = vector.broadcast %cst_11 : f32 to vector<1x32xf32>
      %c0_12 = arith.constant 0 : index
      %c0_13 = arith.constant 0 : index
      %16 = vector.load %arg2[%c0_12, %c0_13] : memref<1x32xf32, #tpu.memory_space<vmem>>, vector<1x32xf32>
      tpu.vector_store %arg2[%c0_12, %c0_13], %15 {strides = array<i32>} : memref<1x32xf32, #tpu.memory_space<vmem>>, vector<1x32xf32>,
      %cst_14 = arith.constant 0.000000e+00 : f32
      %17 = vector.broadcast %cst_14 : f32 to vector<1x32xf32>
      %c0_15 = arith.constant 0 : index
      %c0_16 = arith.constant 0 : index
      %18 = vector.load %arg3[%c0_15, %c0_16] : memref<1x32xf32, #tpu.memory_space<vmem>>, vector<1x32xf32>
      tpu.vector_store %arg3[%c0_15, %c0_16], %17 {strides = array<i32>} : memref<1x32xf32, #tpu.memory_space<vmem>>, vector<1x32xf32>,
    } else {
    }
    %c0 = arith.constant 0 : index
    %c0_1 = arith.constant 0 : index
    %3 = vector.load %arg1[%c0, %c0_1] : memref<128x32xf32, #tpu.memory_space<vmem>>, vector<128x32xf32>
    %c0_2 = arith.constant 0 : index
    %c0_3 = arith.constant 0 : index
    %4 = vector.load %arg2[%c0_2, %c0_3] : memref<1x32xf32, #tpu.memory_space<vmem>>, vector<1x32xf32>
    %cst = arith.constant dense<0.000000e+00> : vector<32xf32>
    %5 = vector.multi_reduction <add>, %3, %cst [0] : vector<128x32xf32> to vector<32xf32>
    %6 = vector.shape_cast %5 : vector<32xf32> to vector<1x32xf32>
    %7 = arith.addf %4, %6 : vector<1x32xf32>
    %c0_4 = arith.constant 0 : index
    %c0_5 = arith.constant 0 : index
    %8 = vector.load %arg2[%c0_4, %c0_5] : memref<1x32xf32, #tpu.memory_space<vmem>>, vector<1x32xf32>
    tpu.vector_store %arg2[%c0_4, %c0_5], %7 {strides = array<i32>} : memref<1x32xf32, #tpu.memory_space<vmem>>, vector<1x32xf32>,
    %c0_6 = arith.constant 0 : index
    %c0_7 = arith.constant 0 : index
    %9 = vector.load %arg3[%c0_6, %c0_7] : memref<1x32xf32, #tpu.memory_space<vmem>>, vector<1x32xf32>
    %10 = arith.mulf %3, %3 : vector<128x32xf32>
    %cst_8 = arith.constant dense<0.000000e+00> : vector<32xf32>
    %11 = vector.multi_reduction <add>, %10, %cst_8 [0] : vector<128x32xf32> to vector<32xf32>
    %12 = vector.shape_cast %11 : vector<32xf32> to vector<1x32xf32>
    %13 = arith.addf %9, %12 : vector<1x32xf32>
    %c0_9 = arith.constant 0 : index
    %c0_10 = arith.constant 0 : index
    %14 = vector.load %arg3[%c0_9, %c0_10] : memref<1x32xf32, #tpu.memory_space<vmem>>, vector<1x32xf32>
    tpu.vector_store %arg3[%c0_9, %c0_10], %13 {strides = array<i32>} : memref<1x32xf32, #tpu.memory_space<vmem>>, vector<1x32xf32>,
    return
  }
  func.func @transform_0(%arg0: i32) -> (i32, i32) {
    %c0_i32 = arith.constant 0 : i32
    %c0_i32_0 = arith.constant 0 : i32
    return %arg0, %c0_i32 : i32, i32
  }
  func.func @transform_1(%arg0: i32) -> (i32, i32) {
    %c0_i32 = arith.constant 0 : i32
    %c0_i32_0 = arith.constant 0 : i32
    %c0_i32_1 = arith.constant 0 : i32
    return %c0_i32, %c0_i32_0 : i32, i32
  }
  func.func @transform_2(%arg0: i32) -> (i32, i32) {
    %c0_i32 = arith.constant 0 : i32
    %c0_i32_0 = arith.constant 0 : i32
    %c0_i32_1 = arith.constant 0 : i32
    return %c0_i32, %c0_i32_0 : i32, i32
  }
}

module attributes {stable_mosaic.version = 11 : i64} {
  func.func @_bn_apply_kernel(%arg0: i32, %arg1: memref<128x32xf32, #tpu.memory_space<vmem>>, %arg2: memref<1x32xf32, #tpu.memory_space<vmem>>, %arg3: memref<1x32xf32, #tpu.memory_space<vmem>>, %arg4: memref<128x32xbf16, #tpu.memory_space<vmem>>) attributes {dimension_semantics = [#tpu.dimension_semantics<parallel>], iteration_bounds = array<i64: 1>, scalar_prefetch = 0 : i64, scratch_operands = 0 : i64, tpu.core_type = #tpu.core_type<tc>, window_params = [{transform_indices = @transform_0, window_bounds = array<i64: 128, 32>}, {pipeline_mode = #tpu.pipeline_mode<synchronous>, transform_indices = @transform_1, window_bounds = array<i64: 1, 32>}, {pipeline_mode = #tpu.pipeline_mode<synchronous>, transform_indices = @transform_2, window_bounds = array<i64: 1, 32>}, {transform_indices = @transform_3, window_bounds = array<i64: 128, 32>}]} {
    %c0 = arith.constant 0 : index
    %c0_0 = arith.constant 0 : index
    %0 = vector.load %arg1[%c0, %c0_0] : memref<128x32xf32, #tpu.memory_space<vmem>>, vector<128x32xf32>
    %c0_1 = arith.constant 0 : index
    %c0_2 = arith.constant 0 : index
    %1 = vector.load %arg2[%c0_1, %c0_2] : memref<1x32xf32, #tpu.memory_space<vmem>>, vector<1x32xf32>
    %2 = vector.broadcast %1 : vector<1x32xf32> to vector<128x32xf32>
    %3 = arith.mulf %0, %2 : vector<128x32xf32>
    %c0_3 = arith.constant 0 : index
    %c0_4 = arith.constant 0 : index
    %4 = vector.load %arg3[%c0_3, %c0_4] : memref<1x32xf32, #tpu.memory_space<vmem>>, vector<1x32xf32>
    %5 = vector.broadcast %4 : vector<1x32xf32> to vector<128x32xf32>
    %6 = arith.addf %3, %5 : vector<128x32xf32>
    %7 = arith.truncf %6 : vector<128x32xf32> to vector<128x32xbf16>
    %c0_5 = arith.constant 0 : index
    %c0_6 = arith.constant 0 : index
    %8 = vector.load %arg4[%c0_5, %c0_6] : memref<128x32xbf16, #tpu.memory_space<vmem>>, vector<128x32xbf16>
    tpu.vector_store %arg4[%c0_5, %c0_6], %7 {strides = array<i32>} : memref<128x32xbf16, #tpu.memory_space<vmem>>, vector<128x32xbf16>,
    return
  }
  func.func @transform_0(%arg0: i32) -> (i32, i32) {
    %c0_i32 = arith.constant 0 : i32
    %c0_i32_0 = arith.constant 0 : i32
    return %arg0, %c0_i32 : i32, i32
  }
  func.func @transform_1(%arg0: i32) -> (i32, i32) {
    %c0_i32 = arith.constant 0 : i32
    %c0_i32_0 = arith.constant 0 : i32
    %c0_i32_1 = arith.constant 0 : i32
    return %c0_i32, %c0_i32_0 : i32, i32
  }
  func.func @transform_2(%arg0: i32) -> (i32, i32) {
    %c0_i32 = arith.constant 0 : i32
    %c0_i32_0 = arith.constant 0 : i32
    %c0_i32_1 = arith.constant 0 : i32
    return %c0_i32, %c0_i32_0 : i32, i32
  }
  func.func @transform_3(%arg0: i32) -> (i32, i32) {
    %c0_i32 = arith.constant 0 : i32
    %c0_i32_0 = arith.constant 0 : i32
    return %arg0, %c0_i32 : i32, i32
  }
}

module attributes {stable_mosaic.version = 11 : i64} {
  func.func @_bn_stats_kernel(%arg0: i32, %arg1: memref<128x16xbf16, #tpu.memory_space<vmem>>, %arg2: memref<1x16xf32, #tpu.memory_space<vmem>>, %arg3: memref<1x16xf32, #tpu.memory_space<vmem>>) attributes {dimension_semantics = [#tpu.dimension_semantics<arbitrary>], iteration_bounds = array<i64: 1>, scalar_prefetch = 0 : i64, scratch_operands = 0 : i64, tpu.core_type = #tpu.core_type<tc>, window_params = [{transform_indices = @transform_0, window_bounds = array<i64: 128, 16>}, {pipeline_mode = #tpu.pipeline_mode<synchronous>, transform_indices = @transform_1, window_bounds = array<i64: 1, 16>}, {pipeline_mode = #tpu.pipeline_mode<synchronous>, transform_indices = @transform_2, window_bounds = array<i64: 1, 16>}]} {
    %c0_i32 = arith.constant 0 : i32
    %0 = arith.cmpi eq, %arg0, %c0_i32 : i32
    %1 = arith.extui %0 : i1 to i32
    %c0_i32_0 = arith.constant 0 : i32
    %2 = arith.cmpi ne, %1, %c0_i32_0 : i32
    scf.if %2 {
      %cst_11 = arith.constant 0.000000e+00 : f32
      %16 = vector.broadcast %cst_11 : f32 to vector<1x16xf32>
      %c0_12 = arith.constant 0 : index
      %c0_13 = arith.constant 0 : index
      %17 = vector.load %arg2[%c0_12, %c0_13] : memref<1x16xf32, #tpu.memory_space<vmem>>, vector<1x16xf32>
      tpu.vector_store %arg2[%c0_12, %c0_13], %16 {strides = array<i32>} : memref<1x16xf32, #tpu.memory_space<vmem>>, vector<1x16xf32>,
      %cst_14 = arith.constant 0.000000e+00 : f32
      %18 = vector.broadcast %cst_14 : f32 to vector<1x16xf32>
      %c0_15 = arith.constant 0 : index
      %c0_16 = arith.constant 0 : index
      %19 = vector.load %arg3[%c0_15, %c0_16] : memref<1x16xf32, #tpu.memory_space<vmem>>, vector<1x16xf32>
      tpu.vector_store %arg3[%c0_15, %c0_16], %18 {strides = array<i32>} : memref<1x16xf32, #tpu.memory_space<vmem>>, vector<1x16xf32>,
    } else {
    }
    %c0 = arith.constant 0 : index
    %c0_1 = arith.constant 0 : index
    %3 = vector.load %arg1[%c0, %c0_1] : memref<128x16xbf16, #tpu.memory_space<vmem>>, vector<128x16xbf16>
    %4 = arith.extf %3 : vector<128x16xbf16> to vector<128x16xf32>
    %c0_2 = arith.constant 0 : index
    %c0_3 = arith.constant 0 : index
    %5 = vector.load %arg2[%c0_2, %c0_3] : memref<1x16xf32, #tpu.memory_space<vmem>>, vector<1x16xf32>
    %cst = arith.constant dense<0.000000e+00> : vector<16xf32>
    %6 = vector.multi_reduction <add>, %4, %cst [0] : vector<128x16xf32> to vector<16xf32>
    %7 = vector.shape_cast %6 : vector<16xf32> to vector<1x16xf32>
    %8 = arith.addf %5, %7 : vector<1x16xf32>
    %c0_4 = arith.constant 0 : index
    %c0_5 = arith.constant 0 : index
    %9 = vector.load %arg2[%c0_4, %c0_5] : memref<1x16xf32, #tpu.memory_space<vmem>>, vector<1x16xf32>
    tpu.vector_store %arg2[%c0_4, %c0_5], %8 {strides = array<i32>} : memref<1x16xf32, #tpu.memory_space<vmem>>, vector<1x16xf32>,
    %c0_6 = arith.constant 0 : index
    %c0_7 = arith.constant 0 : index
    %10 = vector.load %arg3[%c0_6, %c0_7] : memref<1x16xf32, #tpu.memory_space<vmem>>, vector<1x16xf32>
    %11 = arith.mulf %4, %4 : vector<128x16xf32>
    %cst_8 = arith.constant dense<0.000000e+00> : vector<16xf32>
    %12 = vector.multi_reduction <add>, %11, %cst_8 [0] : vector<128x16xf32> to vector<16xf32>
    %13 = vector.shape_cast %12 : vector<16xf32> to vector<1x16xf32>
    %14 = arith.addf %10, %13 : vector<1x16xf32>
    %c0_9 = arith.constant 0 : index
    %c0_10 = arith.constant 0 : index
    %15 = vector.load %arg3[%c0_9, %c0_10] : memref<1x16xf32, #tpu.memory_space<vmem>>, vector<1x16xf32>
    tpu.vector_store %arg3[%c0_9, %c0_10], %14 {strides = array<i32>} : memref<1x16xf32, #tpu.memory_space<vmem>>, vector<1x16xf32>,
    return
  }
  func.func @transform_0(%arg0: i32) -> (i32, i32) {
    %c0_i32 = arith.constant 0 : i32
    %c0_i32_0 = arith.constant 0 : i32
    return %arg0, %c0_i32 : i32, i32
  }
  func.func @transform_1(%arg0: i32) -> (i32, i32) {
    %c0_i32 = arith.constant 0 : i32
    %c0_i32_0 = arith.constant 0 : i32
    %c0_i32_1 = arith.constant 0 : i32
    return %c0_i32, %c0_i32_0 : i32, i32
  }
  func.func @transform_2(%arg0: i32) -> (i32, i32) {
    %c0_i32 = arith.constant 0 : i32
    %c0_i32_0 = arith.constant 0 : i32
    %c0_i32_1 = arith.constant 0 : i32
    return %c0_i32, %c0_i32_0 : i32, i32
  }
}

module attributes {stable_mosaic.version = 11 : i64} {
  func.func @_bn_apply_kernel(%arg0: i32, %arg1: memref<128x16xbf16, #tpu.memory_space<vmem>>, %arg2: memref<1x16xf32, #tpu.memory_space<vmem>>, %arg3: memref<1x16xf32, #tpu.memory_space<vmem>>, %arg4: memref<128x16xbf16, #tpu.memory_space<vmem>>) attributes {dimension_semantics = [#tpu.dimension_semantics<parallel>], iteration_bounds = array<i64: 1>, scalar_prefetch = 0 : i64, scratch_operands = 0 : i64, tpu.core_type = #tpu.core_type<tc>, window_params = [{transform_indices = @transform_0, window_bounds = array<i64: 128, 16>}, {pipeline_mode = #tpu.pipeline_mode<synchronous>, transform_indices = @transform_1, window_bounds = array<i64: 1, 16>}, {pipeline_mode = #tpu.pipeline_mode<synchronous>, transform_indices = @transform_2, window_bounds = array<i64: 1, 16>}, {transform_indices = @transform_3, window_bounds = array<i64: 128, 16>}]} {
    %c0 = arith.constant 0 : index
    %c0_0 = arith.constant 0 : index
    %0 = vector.load %arg1[%c0, %c0_0] : memref<128x16xbf16, #tpu.memory_space<vmem>>, vector<128x16xbf16>
    %1 = arith.extf %0 : vector<128x16xbf16> to vector<128x16xf32>
    %c0_1 = arith.constant 0 : index
    %c0_2 = arith.constant 0 : index
    %2 = vector.load %arg2[%c0_1, %c0_2] : memref<1x16xf32, #tpu.memory_space<vmem>>, vector<1x16xf32>
    %3 = vector.broadcast %2 : vector<1x16xf32> to vector<128x16xf32>
    %4 = arith.mulf %1, %3 : vector<128x16xf32>
    %c0_3 = arith.constant 0 : index
    %c0_4 = arith.constant 0 : index
    %5 = vector.load %arg3[%c0_3, %c0_4] : memref<1x16xf32, #tpu.memory_space<vmem>>, vector<1x16xf32>
    %6 = vector.broadcast %5 : vector<1x16xf32> to vector<128x16xf32>
    %7 = arith.addf %4, %6 : vector<128x16xf32>
    %8 = arith.truncf %7 : vector<128x16xf32> to vector<128x16xbf16>
    %c0_5 = arith.constant 0 : index
    %c0_6 = arith.constant 0 : index
    %9 = vector.load %arg4[%c0_5, %c0_6] : memref<128x16xbf16, #tpu.memory_space<vmem>>, vector<128x16xbf16>
    tpu.vector_store %arg4[%c0_5, %c0_6], %8 {strides = array<i32>} : memref<128x16xbf16, #tpu.memory_space<vmem>>, vector<128x16xbf16>,
    return
  }
  func.func @transform_0(%arg0: i32) -> (i32, i32) {
    %c0_i32 = arith.constant 0 : i32
    %c0_i32_0 = arith.constant 0 : i32
    return %arg0, %c0_i32 : i32, i32
  }
  func.func @transform_1(%arg0: i32) -> (i32, i32) {
    %c0_i32 = arith.constant 0 : i32
    %c0_i32_0 = arith.constant 0 : i32
    %c0_i32_1 = arith.constant 0 : i32
    return %c0_i32, %c0_i32_0 : i32, i32
  }
  func.func @transform_2(%arg0: i32) -> (i32, i32) {
    %c0_i32 = arith.constant 0 : i32
    %c0_i32_0 = arith.constant 0 : i32
    %c0_i32_1 = arith.constant 0 : i32
    return %c0_i32, %c0_i32_0 : i32, i32
  }
  func.func @transform_3(%arg0: i32) -> (i32, i32) {
    %c0_i32 = arith.constant 0 : i32
    %c0_i32_0 = arith.constant 0 : i32
    return %arg0, %c0_i32 : i32, i32
  }
}

module attributes {stable_mosaic.version = 11 : i64} {
  func.func @kernel(%arg0: i32, %arg1: memref<128x1296xbf16, #tpu.memory_space<vmem>>, %arg2: memref<1296x128xbf16, #tpu.memory_space<vmem>>, %arg3: memref<1x128xf32, #tpu.memory_space<vmem>>, %arg4: memref<128x128xf32, #tpu.memory_space<vmem>>) attributes {dimension_semantics = [#tpu.dimension_semantics<parallel>], iteration_bounds = array<i64: 1>, scalar_prefetch = 0 : i64, scratch_operands = 0 : i64, tpu.core_type = #tpu.core_type<tc>, window_params = [{transform_indices = @transform_0, window_bounds = array<i64: 128, 1296>}, {pipeline_mode = #tpu.pipeline_mode<synchronous>, transform_indices = @transform_1, window_bounds = array<i64: 1296, 128>}, {pipeline_mode = #tpu.pipeline_mode<synchronous>, transform_indices = @transform_2, window_bounds = array<i64: 1, 128>}, {transform_indices = @transform_3, window_bounds = array<i64: 128, 128>}]} {
    %c0 = arith.constant 0 : index
    %c0_0 = arith.constant 0 : index
    %0 = vector.load %arg1[%c0, %c0_0] : memref<128x1296xbf16, #tpu.memory_space<vmem>>, vector<128x1296xbf16>
    %c0_1 = arith.constant 0 : index
    %c0_2 = arith.constant 0 : index
    %1 = vector.load %arg2[%c0_1, %c0_2] : memref<1296x128xbf16, #tpu.memory_space<vmem>>, vector<1296x128xbf16>
    %cst = arith.constant dense<0.000000e+00> : vector<128x128xf32>
    %2 = tpu.matmul %0, %1, %cst {dimension_numbers = #tpu.dot_dimension_numbers<[1], [0], [0], [1], [0, 0, 1, 1], [], []>} : vector<128x1296xbf16>, vector<1296x128xbf16>, vector<128x128xf32> -> vector<128x128xf32>
    %c0_3 = arith.constant 0 : index
    %c0_4 = arith.constant 0 : index
    %3 = vector.load %arg3[%c0_3, %c0_4] : memref<1x128xf32, #tpu.memory_space<vmem>>, vector<1x128xf32>
    %4 = vector.broadcast %3 : vector<1x128xf32> to vector<128x128xf32>
    %5 = arith.addf %2, %4 : vector<128x128xf32>
    %cst_5 = arith.constant 0.000000e+00 : f32
    %6 = vector.broadcast %cst_5 : f32 to vector<128x128xf32>
    %7 = arith.cmpf oge, %5, %6 : vector<128x128xf32>
    %cst_6 = arith.constant 0.00999999977 : f32
    %8 = vector.broadcast %cst_6 : f32 to vector<128x128xf32>
    %9 = arith.mulf %8, %5 : vector<128x128xf32>
    %10 = arith.select %7, %5, %9 : vector<128x128xi1>, vector<128x128xf32>
    %c0_7 = arith.constant 0 : index
    %c0_8 = arith.constant 0 : index
    %11 = vector.load %arg4[%c0_7, %c0_8] : memref<128x128xf32, #tpu.memory_space<vmem>>, vector<128x128xf32>
    tpu.vector_store %arg4[%c0_7, %c0_8], %10 {strides = array<i32>} : memref<128x128xf32, #tpu.memory_space<vmem>>, vector<128x128xf32>,
    return
  }
  func.func @transform_0(%arg0: i32) -> (i32, i32) {
    %c0_i32 = arith.constant 0 : i32
    %c0_i32_0 = arith.constant 0 : i32
    return %arg0, %c0_i32 : i32, i32
  }
  func.func @transform_1(%arg0: i32) -> (i32, i32) {
    %c0_i32 = arith.constant 0 : i32
    %c0_i32_0 = arith.constant 0 : i32
    %c0_i32_1 = arith.constant 0 : i32
    return %c0_i32, %c0_i32_0 : i32, i32
  }
  func.func @transform_2(%arg0: i32) -> (i32, i32) {
    %c0_i32 = arith.constant 0 : i32
    %c0_i32_0 = arith.constant 0 : i32
    %c0_i32_1 = arith.constant 0 : i32
    return %c0_i32, %c0_i32_0 : i32, i32
  }
  func.func @transform_3(%arg0: i32) -> (i32, i32) {
    %c0_i32 = arith.constant 0 : i32
    %c0_i32_0 = arith.constant 0 : i32
    return %arg0, %c0_i32 : i32, i32
  }
}

module attributes {stable_mosaic.version = 11 : i64} {
  func.func @_bn_stats_kernel(%arg0: i32, %arg1: memref<512x16xf32, #tpu.memory_space<vmem>>, %arg2: memref<1x16xf32, #tpu.memory_space<vmem>>, %arg3: memref<1x16xf32, #tpu.memory_space<vmem>>) attributes {dimension_semantics = [#tpu.dimension_semantics<arbitrary>], iteration_bounds = array<i64: 2>, scalar_prefetch = 0 : i64, scratch_operands = 0 : i64, tpu.core_type = #tpu.core_type<tc>, window_params = [{transform_indices = @transform_0, window_bounds = array<i64: 512, 16>}, {pipeline_mode = #tpu.pipeline_mode<synchronous>, transform_indices = @transform_1, window_bounds = array<i64: 1, 16>}, {pipeline_mode = #tpu.pipeline_mode<synchronous>, transform_indices = @transform_2, window_bounds = array<i64: 1, 16>}]} {
    %c0_i32 = arith.constant 0 : i32
    %0 = arith.cmpi eq, %arg0, %c0_i32 : i32
    %1 = arith.extui %0 : i1 to i32
    %c0_i32_0 = arith.constant 0 : i32
    %2 = arith.cmpi ne, %1, %c0_i32_0 : i32
    scf.if %2 {
      %cst_11 = arith.constant 0.000000e+00 : f32
      %15 = vector.broadcast %cst_11 : f32 to vector<1x16xf32>
      %c0_12 = arith.constant 0 : index
      %c0_13 = arith.constant 0 : index
      %16 = vector.load %arg2[%c0_12, %c0_13] : memref<1x16xf32, #tpu.memory_space<vmem>>, vector<1x16xf32>
      tpu.vector_store %arg2[%c0_12, %c0_13], %15 {strides = array<i32>} : memref<1x16xf32, #tpu.memory_space<vmem>>, vector<1x16xf32>,
      %cst_14 = arith.constant 0.000000e+00 : f32
      %17 = vector.broadcast %cst_14 : f32 to vector<1x16xf32>
      %c0_15 = arith.constant 0 : index
      %c0_16 = arith.constant 0 : index
      %18 = vector.load %arg3[%c0_15, %c0_16] : memref<1x16xf32, #tpu.memory_space<vmem>>, vector<1x16xf32>
      tpu.vector_store %arg3[%c0_15, %c0_16], %17 {strides = array<i32>} : memref<1x16xf32, #tpu.memory_space<vmem>>, vector<1x16xf32>,
    } else {
    }
    %c0 = arith.constant 0 : index
    %c0_1 = arith.constant 0 : index
    %3 = vector.load %arg1[%c0, %c0_1] : memref<512x16xf32, #tpu.memory_space<vmem>>, vector<512x16xf32>
    %c0_2 = arith.constant 0 : index
    %c0_3 = arith.constant 0 : index
    %4 = vector.load %arg2[%c0_2, %c0_3] : memref<1x16xf32, #tpu.memory_space<vmem>>, vector<1x16xf32>
    %cst = arith.constant dense<0.000000e+00> : vector<16xf32>
    %5 = vector.multi_reduction <add>, %3, %cst [0] : vector<512x16xf32> to vector<16xf32>
    %6 = vector.shape_cast %5 : vector<16xf32> to vector<1x16xf32>
    %7 = arith.addf %4, %6 : vector<1x16xf32>
    %c0_4 = arith.constant 0 : index
    %c0_5 = arith.constant 0 : index
    %8 = vector.load %arg2[%c0_4, %c0_5] : memref<1x16xf32, #tpu.memory_space<vmem>>, vector<1x16xf32>
    tpu.vector_store %arg2[%c0_4, %c0_5], %7 {strides = array<i32>} : memref<1x16xf32, #tpu.memory_space<vmem>>, vector<1x16xf32>,
    %c0_6 = arith.constant 0 : index
    %c0_7 = arith.constant 0 : index
    %9 = vector.load %arg3[%c0_6, %c0_7] : memref<1x16xf32, #tpu.memory_space<vmem>>, vector<1x16xf32>
    %10 = arith.mulf %3, %3 : vector<512x16xf32>
    %cst_8 = arith.constant dense<0.000000e+00> : vector<16xf32>
    %11 = vector.multi_reduction <add>, %10, %cst_8 [0] : vector<512x16xf32> to vector<16xf32>
    %12 = vector.shape_cast %11 : vector<16xf32> to vector<1x16xf32>
    %13 = arith.addf %9, %12 : vector<1x16xf32>
    %c0_9 = arith.constant 0 : index
    %c0_10 = arith.constant 0 : index
    %14 = vector.load %arg3[%c0_9, %c0_10] : memref<1x16xf32, #tpu.memory_space<vmem>>, vector<1x16xf32>
    tpu.vector_store %arg3[%c0_9, %c0_10], %13 {strides = array<i32>} : memref<1x16xf32, #tpu.memory_space<vmem>>, vector<1x16xf32>,
    return
  }
  func.func @transform_0(%arg0: i32) -> (i32, i32) {
    %c0_i32 = arith.constant 0 : i32
    %c0_i32_0 = arith.constant 0 : i32
    return %arg0, %c0_i32 : i32, i32
  }
  func.func @transform_1(%arg0: i32) -> (i32, i32) {
    %c0_i32 = arith.constant 0 : i32
    %c0_i32_0 = arith.constant 0 : i32
    %c0_i32_1 = arith.constant 0 : i32
    return %c0_i32, %c0_i32_0 : i32, i32
  }
  func.func @transform_2(%arg0: i32) -> (i32, i32) {
    %c0_i32 = arith.constant 0 : i32
    %c0_i32_0 = arith.constant 0 : i32
    %c0_i32_1 = arith.constant 0 : i32
    return %c0_i32, %c0_i32_0 : i32, i32
  }
}

</mosaic_0001>

<llo_original>
// kernel: net3d_forward.18
$region0: #{net3d_forward.18}
  #allocation0 [shape = 'u32[]', space=smem, size = 0x4, offset = 0x4, fixed_abs, tag = 'smem constant byte address 0x4 - core index']
  #allocation1 [shape = 'u32[144,128]{1,0:T(1,128)}', space=vmem, size = 0x12000, scoped, tag = 'internal scratch']
  %s0 = inlined_call_operand.vmem [shape: f32[1024,8], index: 0, kind: input, shape index: {}]
  %s1 = inlined_call_operand.vmem [shape: f32[1,8], index: 1, kind: output, shape index: {0}]
  %s2 = inlined_call_operand.vmem [shape: f32[1,8], index: 2, kind: output, shape index: {1}]
  %3 = xla_tuple %s1, %s2
  %s4 = sld [smem:[#allocation0]]
  $region49: #{net3d_forward.18} parent=0
    _
  %s6 = ssub.s32 1, %s4
  %s7 = scalar_select 0, %s6, %s4
  loop: start=0, step=1, limit=4
  $region2: #{net3d_forward.18} parent=0 // loop_pre_header
    _
  $region3: #{net3d_forward.18} parent=0 // loop_header
    %s9 = sphi 0, %s13
    %p10 = scmp.ge.s32.totalorder %s9, 4
    %s19 = sphi 0, %s21
    %s22 = sphi 0, %s19
    %s23 = sphi 0, %s22
    %s39 = sphi 0, %s23
    %s43 = sphi 0, %s43
    %s45 = sphi 0, %s43
    %s46 = sphi 0, %s45
    %s60 = sphi 0, %s46
    %s64 = sphi 0, %s64
    %s66 = sphi 0, %s64
    %s67 = sphi 0, %s66
    %s81 = sphi 0, %s67
  $region4: #{net3d_forward.18} parent=0 // loop_header_branch
    %12 = sbr.rel (%p10) target = $region8
  $region5: #{net3d_forward.18} parent=0 // loop_body
    %s14 = ssub.s32 %s9, 1
    %s15 = ssub.s32 %s9, 2
    %s16 = sadd.s32 %s9, 1
    %s17 = ssub.s32 %s9, %s16
    %p18 = scmp.eq.s32.totalorder %s17, 0
    %s20 = sadd.s32 %s19, 1
    %s21 = scalar_select %p18, %s19, %s20
    %p24 = pneg %p18
    %p25 = scmp.eq.s32.totalorder %s9, 1
    %p26 = por %p24, %p25
    %p27 = scmp.ne.s32.totalorder %s19, %s22
    %p28 = scmp.eq.s32.totalorder %s9, 0
    %p29 = por %p27, %p28
    %p30 = scmp.ne.s32.totalorder %s19, %s22
    %p31 = scmp.eq.s32.totalorder %s14, 1
    %p32 = por %p30, %p31
    %p33 = scmp.ne.s32.totalorder %s22, %s23
    %p34 = scmp.eq.s32.totalorder %s14, 0
    %p35 = por %p33, %p34
    %p36 = scmp.ne.s32.totalorder %s22, %s23
    %p37 = scmp.eq.s32.totalorder %s15, 1
    %p38 = por %p36, %p37
    %p40 = scmp.ne.s32.totalorder %s23, %s39
    %p41 = scmp.eq.s32.totalorder %s15, 0
    %p42 = por %p40, %p41
    %s44 = sadd.s32 %s43, 1
    %p47 = scmp.eq.s32.totalorder %s9, 1
    %p48 = scmp.ne.s32.totalorder %s43, %s45
    %p49 = scmp.eq.s32.totalorder %s9, 0
    %p50 = por %p48, %p49
    %p51 = scmp.ne.s32.totalorder %s43, %s45
    %p52 = scmp.eq.s32.totalorder %s14, 1
    %p53 = por %p51, %p52
    %p54 = scmp.ne.s32.totalorder %s45, %s46
    %p55 = scmp.eq.s32.totalorder %s14, 0
    %p56 = por %p54, %p55
    %p57 = scmp.ne.s32.totalorder %s45, %s46
    %p58 = scmp.eq.s32.totalorder %s15, 1
    %p59 = por %p57, %p58
    %p61 = scmp.ne.s32.totalorder %s46, %s60
    %p62 = scmp.eq.s32.totalorder %s15, 0
    %p63 = por %p61, %p62
    %s65 = sadd.s32 %s64, 1
    %p68 = scmp.eq.s32.totalorder %s9, 1
    %p69 = scmp.ne.s32.totalorder %s64, %s66
    %p70 = scmp.eq.s32.totalorder %s9, 0
    %p71 = por %p69, %p70
    %p72 = scmp.ne.s32.totalorder %s64, %s66
    %p73 = scmp.eq.s32.totalorder %s14, 1
    %p74 = por %p72, %p73
    %p75 = scmp.ne.s32.totalorder %s66, %s67
    %p76 = scmp.eq.s32.totalorder %s14, 0
    %p77 = por %p75, %p76
    %p78 = scmp.ne.s32.totalorder %s66, %s67
    %p79 = scmp.eq.s32.totalorder %s15, 1
    %p80 = por %p78, %p79
    %p82 = scmp.ne.s32.totalorder %s67, %s81
    %p83 = scmp.eq.s32.totalorder %s15, 0
    %p84 = por %p82, %p83
    %p85 = scmp.le.s32.totalorder 1, %s9
    %p86 = scmp.lt.s32.totalorder %s9, 3
    %p87 = pnand %p85, %p86
    %p88 = pneg %p87
    // Predicated region
    $region9: #{net3d_forward.18} parent=5 // pred_check
      _
    $region10: #{net3d_forward.18} parent=5 // pred_check_branch
      %90 = sbr.rel (%p87) target = $region12
    $region11: #{net3d_forward.18} parent=5 // pred_region
      %s91 = ssub.s32 %s9, 1
    $region12: #{net3d_forward.18} parent=5 // pred_fallthru
      _
    %p92 = scmp.lt.s32.totalorder %s9, 2
    // Predicated region
    $region13: #{net3d_forward.18} parent=5 // pred_check
      %p93 = pneg %p92
    $region14: #{net3d_forward.18} parent=5 // pred_check_branch
      %95 = sbr.rel (%p93) target = $region16
    $region15: #{net3d_forward.18} parent=5 // pred_region
      // Predicated region
      $region17: #{net3d_forward.18} parent=15 // pred_check
        %p96 = pneg %p29
      $region18: #{net3d_forward.18} parent=15 // pred_check_branch
        %98 = sbr.rel (%p96) target = $region20
      $region19: #{net3d_forward.18} parent=15 // pred_region
        %s99 = smul.u32 64, %s9
        %p100 = scmp.lt.s32.totalorder %s99, 127
        %s101 = scalar_select %p100, %s99, 127
        %s102 = smul.addr %s101, 8
        %s103 = scalar_lea.vmem %s0, %s102
        %s104 = smul.u32 64, %s9
      $region20: #{net3d_forward.18} parent=15 // pred_fallthru
        _
    $region16: #{net3d_forward.18} parent=5 // pred_fallthru
      _
    %p105 = scmp.le.s32.totalorder 1, %s9
    %p106 = scmp.lt.s32.totalorder %s9, 3
    %p107 = pnand %p105, %p106
    %p108 = pneg %p107
    // Predicated region
    $region21: #{net3d_forward.18} parent=5 // pred_check
      _
    $region22: #{net3d_forward.18} parent=5 // pred_check_branch
      %110 = sbr.rel (%p107) target = $region24
    $region23: #{net3d_forward.18} parent=5 // pred_region
      %s111 = ssub.s32 %s9, 1
      %s112 = smul.u32 64, %s14
      %p113 = scmp.lt.s32.totalorder %s112, 127
      %s114 = scalar_select %p113, %s112, 127
      %s115 = smul.addr %s114, 8
      %s116 = scalar_lea.vmem %s0, %s115
      %p117 = pneg %p35
      %p118 = pneg %p32
      %p119 = pneg %p56
      %p120 = pneg %p53
      %p121 = pneg %p77
      %p122 = pneg %p74
      %s123 = smul.u32 64, %s14
      %p124 = scmp.lt.s32.totalorder %s123, 127
      %s125 = scalar_select %p124, %s123, 127
      %s126 = smul.addr %s125, 8
      %s127 = scalar_lea.vmem %s0, %s126
      %s128 = smul.u32 64, %s14
      %p129 = scmp.eq.s32.totalorder %s14, 0
      // Predicated region
      $region25: #{net3d_forward.18} parent=23 // pred_check
        %p130 = pneg %p129
      $region26: #{net3d_forward.18} parent=23 // pred_check_branch
        %132 = sbr.rel (%p130) target = $region28
      $region27: #{net3d_forward.18} parent=23 // pred_region
        %vm133 = vcmask 57344
        %134 = vst.msk [vmem:[%s1] sm:$0x1] %vm133, 0.0
        %135 = vst.msk [vmem:[%s2] sm:$0x1] %vm133, 0.0
      $region28: #{net3d_forward.18} parent=23 // pred_fallthru
        _
      %v136 = vld [vmem:[%s127] sm:$0xff]
      %v137 = vld [vmem:[%s127 + $0x8] sm:$0xff]
      %v138 = vld [vmem:[%s127 + $0x10] sm:$0xff]
      %v139 = vld [vmem:[%s127 + $0x18] sm:$0xff]
      %v140 = vld [vmem:[%s127 + $0x20] sm:$0xff]
      %v141 = vld [vmem:[%s127 + $0x28] sm:$0xff]
      %v142 = vld [vmem:[%s127 + $0x30] sm:$0xff]
      %v143 = vld [vmem:[%s127 + $0x38] sm:$0xff]
      %v144 = vld [vmem:[%s127 + $0x40] sm:$0xff]
      %v145 = vld [vmem:[%s127 + $0x48] sm:$0xff]
      %v146 = vld [vmem:[%s127 + $0x50] sm:$0xff]
      %v147 = vld [vmem:[%s127 + $0x58] sm:$0xff]
      %v148 = vld [vmem:[%s127 + $0x60] sm:$0xff]
      %v149 = vld [vmem:[%s127 + $0x68] sm:$0xff]
      %v150 = vld [vmem:[%s127 + $0x70] sm:$0xff]
      %v151 = vld [vmem:[%s127 + $0x78] sm:$0xff]
      %v152 = vld [vmem:[%s127 + $0x80] sm:$0xff]
      %v153 = vld [vmem:[%s127 + $0x88] sm:$0xff]
      %v154 = vld [vmem:[%s127 + $0x90] sm:$0xff]
      %v155 = vld [vmem:[%s127 + $0x98] sm:$0xff]
      %v156 = vld [vmem:[%s127 + $0xa0] sm:$0xff]
      %v157 = vld [vmem:[%s127 + $0xa8] sm:$0xff]
      %v158 = vld [vmem:[%s127 + $0xb0] sm:$0xff]
      %v159 = vld [vmem:[%s127 + $0xb8] sm:$0xff]
      %v160 = vld [vmem:[%s127 + $0xc0] sm:$0xff]
      %v161 = vld [vmem:[%s127 + $0xc8] sm:$0xff]
      %v162 = vld [vmem:[%s127 + $0xd0] sm:$0xff]
      %v163 = vld [vmem:[%s127 + $0xd8] sm:$0xff]
      %v164 = vld [vmem:[%s127 + $0xe0] sm:$0xff]
      %v165 = vld [vmem:[%s127 + $0xe8] sm:$0xff]
      %v166 = vld [vmem:[%s127 + $0xf0] sm:$0xff]
      %v167 = vld [vmem:[%s127 + $0xf8] sm:$0xff]
      %v168 = vld [vmem:[%s127 + $0x100] sm:$0xff]
      %v169 = vld [vmem:[%s127 + $0x108] sm:$0xff]
      %v170 = vld [vmem:[%s127 + $0x110] sm:$0xff]
      %v171 = vld [vmem:[%s127 + $0x118] sm:$0xff]
      %v172 = vld [vmem:[%s127 + $0x120] sm:$0xff]
      %v173 = vld [vmem:[%s127 + $0x128] sm:$0xff]
      %v174 = vld [vmem:[%s127 + $0x130] sm:$0xff]
      %v175 = vld [vmem:[%s127 + $0x138] sm:$0xff]
      %v176 = vld [vmem:[%s127 + $0x140] sm:$0xff]
      %v177 = vld [vmem:[%s127 + $0x148] sm:$0xff]
      %v178 = vld [vmem:[%s127 + $0x150] sm:$0xff]
      %v179 = vld [vmem:[%s127 + $0x158] sm:$0xff]
      %v180 = vld [vmem:[%s127 + $0x160] sm:$0xff]
      %v181 = vld [vmem:[%s127 + $0x168] sm:$0xff]
      %v182 = vld [vmem:[%s127 + $0x170] sm:$0xff]
      %v183 = vld [vmem:[%s127 + $0x178] sm:$0xff]
      %v184 = vld [vmem:[%s127 + $0x180] sm:$0xff]
      %v185 = vld [vmem:[%s127 + $0x188] sm:$0xff]
      %v186 = vld [vmem:[%s127 + $0x190] sm:$0xff]
      %v187 = vld [vmem:[%s127 + $0x198] sm:$0xff]
      %v188 = vld [vmem:[%s127 + $0x1a0] sm:$0xff]
      %v189 = vld [vmem:[%s127 + $0x1a8] sm:$0xff]
      %v190 = vld [vmem:[%s127 + $0x1b0] sm:$0xff]
      %v191 = vld [vmem:[%s127 + $0x1b8] sm:$0xff]
      %v192 = vld [vmem:[%s127 + $0x1c0] sm:$0xff]
      %v193 = vld [vmem:[%s127 + $0x1c8] sm:$0xff]
      %v194 = vld [vmem:[%s127 + $0x1d0] sm:$0xff]
      %v195 = vld [vmem:[%s127 + $0x1d8] sm:$0xff]
      %v196 = vld [vmem:[%s127 + $0x1e0] sm:$0xff]
      %v197 = vld [vmem:[%s127 + $0x1e8] sm:$0xff]
      %v198 = vld [vmem:[%s127 + $0x1f0] sm:$0xff]
      %v199 = vld [vmem:[%s127 + $0x1f8] sm:$0xff]
      %v200 = vld [vmem:[%s1] sm:$0x1]
      %vm201 = vcmask 64512
      %v202 = vsel %vm201, %v136, 0.0
      %v203 = vsel %vm201, %v137, 0.0
      %v204 = vadd.f32 %v202, %v203
      %v205 = vsel %vm201, %v138, 0.0
      %v206 = vadd.f32 %v204, %v205
      %v207 = vsel %vm201, %v139, 0.0
      %v208 = vadd.f32 %v206, %v207
      %v209 = vsel %vm201, %v140, 0.0
      %v210 = vadd.f32 %v208, %v209
      %v211 = vsel %vm201, %v141, 0.0
      %v212 = vadd.f32 %v210, %v211
      %v213 = vsel %vm201, %v142, 0.0
      %v214 = vadd.f32 %v212, %v213
      %v215 = vsel %vm201, %v143, 0.0
      %v216 = vadd.f32 %v214, %v215
      %v217 = vsel %vm201, %v144, 0.0
      %v218 = vadd.f32 %v216, %v217
      %v219 = vsel %vm201, %v145, 0.0
      %v220 = vadd.f32 %v218, %v219
      %v221 = vsel %vm201, %v146, 0.0
      %v222 = vadd.f32 %v220, %v221
      %v223 = vsel %vm201, %v147, 0.0
      %v224 = vadd.f32 %v222, %v223
      %v225 = vsel %vm201, %v148, 0.0
      %v226 = vadd.f32 %v224, %v225
      %v227 = vsel %vm201, %v149, 0.0
      %v228 = vadd.f32 %v226, %v227
      %v229 = vsel %vm201, %v150, 0.0
      %v230 = vadd.f32 %v228, %v229
      %v231 = vsel %vm201, %v151, 0.0
      %v232 = vadd.f32 %v230, %v231
      %v233 = vsel %vm201, %v152, 0.0
      %v234 = vadd.f32 %v232, %v233
      %v235 = vsel %vm201, %v153, 0.0
      %v236 = vadd.f32 %v234, %v235
      %v237 = vsel %vm201, %v154, 0.0
      %v238 = vadd.f32 %v236, %v237
      %v239 = vsel %vm201, %v155, 0.0
      %v240 = vadd.f32 %v238, %v239
      %v241 = vsel %vm201, %v156, 0.0
      %v242 = vadd.f32 %v240, %v241
      %v243 = vsel %vm201, %v157, 0.0
      %v244 = vadd.f32 %v242, %v243
      %v245 = vsel %vm201, %v158, 0.0
      %v246 = vadd.f32 %v244, %v245
      %v247 = vsel %vm201, %v159, 0.0
      %v248 = vadd.f32 %v246, %v247
      %v249 = vsel %vm201, %v160, 0.0
      %v250 = vadd.f32 %v248, %v249
      %v251 = vsel %vm201, %v161, 0.0
      %v252 = vadd.f32 %v250, %v251
      %v253 = vsel %vm201, %v162, 0.0
      %v254 = vadd.f32 %v252, %v253
      %v255 = vsel %vm201, %v163, 0.0
      %v256 = vadd.f32 %v254, %v255
      %v257 = vsel %vm201, %v164, 0.0
      %v258 = vadd.f32 %v256, %v257
      %v259 = vsel %vm201, %v165, 0.0
      %v260 = vadd.f32 %v258, %v259
      %v261 = vsel %vm201, %v166, 0.0
      %v262 = vadd.f32 %v260, %v261
      %v263 = vsel %vm201, %v167, 0.0
      %v264 = vadd.f32 %v262, %v263
      %v265 = vsel %vm201, %v168, 0.0
      %v266 = vadd.f32 %v264, %v265
      %v267 = vsel %vm201, %v169, 0.0
      %v268 = vadd.f32 %v266, %v267
      %v269 = vsel %vm201, %v170, 0.0
      %v270 = vadd.f32 %v268, %v269
      %v271 = vsel %vm201, %v171, 0.0
      %v272 = vadd.f32 %v270, %v271
      %v273 = vsel %vm201, %v172, 0.0
      %v274 = vadd.f32 %v272, %v273
      %v275 = vsel %vm201, %v173, 0.0
      %v276 = vadd.f32 %v274, %v275
      %v277 = vsel %vm201, %v174, 0.0
      %v278 = vadd.f32 %v276, %v277
      %v279 = vsel %vm201, %v175, 0.0
      %v280 = vadd.f32 %v278, %v279
      %v281 = vsel %vm201, %v176, 0.0
      %v282 = vadd.f32 %v280, %v281
      %v283 = vsel %vm201, %v177, 0.0
      %v284 = vadd.f32 %v282, %v283
      %v285 = vsel %vm201, %v178, 0.0
      %v286 = vadd.f32 %v284, %v285
      %v287 = vsel %vm201, %v179, 0.0
      %v288 = vadd.f32 %v286, %v287
      %v289 = vsel %vm201, %v180, 0.0
      %v290 = vadd.f32 %v288, %v289
      %v291 = vsel %vm201, %v181, 0.0
      %v292 = vadd.f32 %v290, %v291
      %v293 = vsel %vm201, %v182, 0.0
      %v294 = vadd.f32 %v292, %v293
      %v295 = vsel %vm201, %v183, 0.0
      %v296 = vadd.f32 %v294, %v295
      %v297 = vsel %vm201, %v184, 0.0
      %v298 = vadd.f32 %v296, %v297
      %v299 = vsel %vm201, %v185, 0.0
      %v300 = vadd.f32 %v298, %v299
      %v301 = vsel %vm201, %v186, 0.0
      %v302 = vadd.f32 %v300, %v301
      %v303 = vsel %vm201, %v187, 0.0
      %v304 = vadd.f32 %v302, %v303
      %v305 = vsel %vm201, %v188, 0.0
      %v306 = vadd.f32 %v304, %v305
      %v307 = vsel %vm201, %v189, 0.0
      %v308 = vadd.f32 %v306, %v307
      %v309 = vsel %vm201, %v190, 0.0
      %v310 = vadd.f32 %v308, %v309
      %v311 = vsel %vm201, %v191, 0.0
      %v312 = vadd.f32 %v310, %v311
      %v313 = vsel %vm201, %v192, 0.0
      %v314 = vadd.f32 %v312, %v313
      %v315 = vsel %vm201, %v193, 0.0
      %v316 = vadd.f32 %v314, %v315
      %v317 = vsel %vm201, %v194, 0.0
      %v318 = vadd.f32 %v316, %v317
      %v319 = vsel %vm201, %v195, 0.0
      %v320 = vadd.f32 %v318, %v319
      %v321 = vsel %vm201, %v196, 0.0
      %v322 = vadd.f32 %v320, %v321
      %v323 = vsel %vm201, %v197, 0.0
      %v324 = vadd.f32 %v322, %v323
      %v325 = vsel %vm201, %v198, 0.0
      %v326 = vadd.f32 %v324, %v325
      %v327 = vsel %vm201, %v199, 0.0
      %v328 = vadd.f32 %v326, %v327
      %v329 = vrot.slane %v328, 4
      %v330 = vadd.f32 %v328, %v329
      %v331 = vrot.slane %v330, 2
      %v332 = vadd.f32 %v330, %v331
      %v333 = vrot.slane %v332, 1
      %v334 = vadd.f32 %v332, %v333
      %v335 = vadd.f32 %v200, %v334
      %vm336 = vcmask 57344
      %337 = vst.msk [vmem:[%s1] sm:$0x1] %vm336, %v335
      %v338 = vld [vmem:[%s2] sm:$0x1]
      %v339 = vmul.f32 %v136, %v136
      %v340 = vmul.f32 %v137, %v137
      %v341 = vmul.f32 %v138, %v138
      %v342 = vmul.f32 %v139, %v139
      %v343 = vmul.f32 %v140, %v140
      %v344 = vmul.f32 %v141, %v141
      %v345 = vmul.f32 %v142, %v142
      %v346 = vmul.f32 %v143, %v143
      %v347 = vmul.f32 %v144, %v144
      %v348 = vmul.f32 %v145, %v145
      %v349 = vmul.f32 %v146, %v146
      %v350 = vmul.f32 %v147, %v147
      %v351 = vmul.f32 %v148, %v148
      %v352 = vmul.f32 %v149, %v149
      %v353 = vmul.f32 %v150, %v150
      %v354 = vmul.f32 %v151, %v151
      %v355 = vmul.f32 %v152, %v152
      %v356 = vmul.f32 %v153, %v153
      %v357 = vmul.f32 %v154, %v154
      %v358 = vmul.f32 %v155, %v155
      %v359 = vmul.f32 %v156, %v156
      %v360 = vmul.f32 %v157, %v157
      %v361 = vmul.f32 %v158, %v158
      %v362 = vmul.f32 %v159, %v159
      %v363 = vmul.f32 %v160, %v160
      %v364 = vmul.f32 %v161, %v161
      %v365 = vmul.f32 %v162, %v162
      %v366 = vmul.f32 %v163, %v163
      %v367 = vmul.f32 %v164, %v164
      %v368 = vmul.f32 %v165, %v165
      %v369 = vmul.f32 %v166, %v166
      %v370 = vmul.f32 %v167, %v167
      %v371 = vmul.f32 %v168, %v168
      %v372 = vmul.f32 %v169, %v169
      %v373 = vmul.f32 %v170, %v170
      %v374 = vmul.f32 %v171, %v171
      %v375 = vmul.f32 %v172, %v172
      %v376 = vmul.f32 %v173, %v173
      %v377 = vmul.f32 %v174, %v174
      %v378 = vmul.f32 %v175, %v175
      %v379 = vmul.f32 %v176, %v176
      %v380 = vmul.f32 %v177, %v177
      %v381 = vmul.f32 %v178, %v178
      %v382 = vmul.f32 %v179, %v179
      %v383 = vmul.f32 %v180, %v180
      %v384 = vmul.f32 %v181, %v181
      %v385 = vmul.f32 %v182, %v182
      %v386 = vmul.f32 %v183, %v183
      %v387 = vmul.f32 %v184, %v184
      %v388 = vmul.f32 %v185, %v185
      %v389 = vmul.f32 %v186, %v186
      %v390 = vmul.f32 %v187, %v187
      %v391 = vmul.f32 %v188, %v188
      %v392 = vmul.f32 %v189, %v189
      %v393 = vmul.f32 %v190, %v190
      %v394 = vmul.f32 %v191, %v191
      %v395 = vmul.f32 %v192, %v192
      %v396 = vmul.f32 %v193, %v193
      %v397 = vmul.f32 %v194, %v194
      %v398 = vmul.f32 %v195, %v195
      %v399 = vmul.f32 %v196, %v196
      %v400 = vmul.f32 %v197, %v197
      %v401 = vmul.f32 %v198, %v198
      %v402 = vmul.f32 %v199, %v199
      %v403 = vsel %vm201, %v339, 0.0
      %v404 = vsel %vm201, %v340, 0.0
      %v405 = vadd.f32 %v403, %v404
      %v406 = vsel %vm201, %v341, 0.0
      %v407 = vadd.f32 %v405, %v406
      %v408 = vsel %vm201, %v342, 0.0
      %v409 = vadd.f32 %v407, %v408
      %v410 = vsel %vm201, %v343, 0.0
      %v411 = vadd.f32 %v409, %v410
      %v412 = vsel %vm201, %v344, 0.0
      %v413 = vadd.f32 %v411, %v412
      %v414 = vsel %vm201, %v345, 0.0
      %v415 = vadd.f32 %v413, %v414
      %v416 = vsel %vm201, %v346, 0.0
      %v417 = vadd.f32 %v415, %v416
      %v418 = vsel %vm201, %v347, 0.0
      %v419 = vadd.f32 %v417, %v418
      %v420 = vsel %vm201, %v348, 0.0
      %v421 = vadd.f32 %v419, %v420
      %v422 = vsel %vm201, %v349, 0.0
      %v423 = vadd.f32 %v421, %v422
      %v424 = vsel %vm201, %v350, 0.0
      %v425 = vadd.f32 %v423, %v424
      %v426 = vsel %vm201, %v351, 0.0
      %v427 = vadd.f32 %v425, %v426
      %v428 = vsel %vm201, %v352, 0.0
      %v429 = vadd.f32 %v427, %v428
      %v430 = vsel %vm201, %v353, 0.0
      %v431 = vadd.f32 %v429, %v430
      %v432 = vsel %vm201, %v354, 0.0
      %v433 = vadd.f32 %v431, %v432
      %v434 = vsel %vm201, %v355, 0.0
      %v435 = vadd.f32 %v433, %v434
      %v436 = vsel %vm201, %v356, 0.0
      %v437 = vadd.f32 %v435, %v436
      %v438 = vsel %vm201, %v357, 0.0
      %v439 = vadd.f32 %v437, %v438
      %v440 = vsel %vm201, %v358, 0.0
      %v441 = vadd.f32 %v439, %v440
      %v442 = vsel %vm201, %v359, 0.0
      %v443 = vadd.f32 %v441, %v442
      %v444 = vsel %vm201, %v360, 0.0
      %v445 = vadd.f32 %v443, %v444
      %v446 = vsel %vm201, %v361, 0.0
      %v447 = vadd.f32 %v445, %v446
      %v448 = vsel %vm201, %v362, 0.0
      %v449 = vadd.f32 %v447, %v448
      %v450 = vsel %vm201, %v363, 0.0
      %v451 = vadd.f32 %v449, %v450
      %v452 = vsel %vm201, %v364, 0.0
      %v453 = vadd.f32 %v451, %v452
      %v454 = vsel %vm201, %v365, 0.0
      %v455 = vadd.f32 %v453, %v454
      %v456 = vsel %vm201, %v366, 0.0
      %v457 = vadd.f32 %v455, %v456
      %v458 = vsel %vm201, %v367, 0.0
      %v459 = vadd.f32 %v457, %v458
      %v460 = vsel %vm201, %v368, 0.0
      %v461 = vadd.f32 %v459, %v460
      %v462 = vsel %vm201, %v369, 0.0
      %v463 = vadd.f32 %v461, %v462
      %v464 = vsel %vm201, %v370, 0.0
      %v465 = vadd.f32 %v463, %v464
      %v466 = vsel %vm201, %v371, 0.0
      %v467 = vadd.f32 %v465, %v466
      %v468 = vsel %vm201, %v372, 0.0
      %v469 = vadd.f32 %v467, %v468
      %v470 = vsel %vm201, %v373, 0.0
      %v471 = vadd.f32 %v469, %v470
      %v472 = vsel %vm201, %v374, 0.0
      %v473 = vadd.f32 %v471, %v472
      %v474 = vsel %vm201, %v375, 0.0
      %v475 = vadd.f32 %v473, %v474
      %v476 = vsel %vm201, %v376, 0.0
      %v477 = vadd.f32 %v475, %v476
      %v478 = vsel %vm201, %v377, 0.0
      %v479 = vadd.f32 %v477, %v478
      %v480 = vsel %vm201, %v378, 0.0
      %v481 = vadd.f32 %v479, %v480
      %v482 = vsel %vm201, %v379, 0.0
      %v483 = vadd.f32 %v481, %v482
      %v484 = vsel %vm201, %v380, 0.0
      %v485 = vadd.f32 %v483, %v484
      %v486 = vsel %vm201, %v381, 0.0
      %v487 = vadd.f32 %v485, %v486
      %v488 = vsel %vm201, %v382, 0.0
      %v489 = vadd.f32 %v487, %v488
      %v490 = vsel %vm201, %v383, 0.0
      %v491 = vadd.f32 %v489, %v490
      %v492 = vsel %vm201, %v384, 0.0
      %v493 = vadd.f32 %v491, %v492
      %v494 = vsel %vm201, %v385, 0.0
      %v495 = vadd.f32 %v493, %v494
      %v496 = vsel %vm201, %v386, 0.0
      %v497 = vadd.f32 %v495, %v496
      %v498 = vsel %vm201, %v387, 0.0
      %v499 = vadd.f32 %v497, %v498
      %v500 = vsel %vm201, %v388, 0.0
      %v501 = vadd.f32 %v499, %v500
      %v502 = vsel %vm201, %v389, 0.0
      %v503 = vadd.f32 %v501, %v502
      %v504 = vsel %vm201, %v390, 0.0
      %v505 = vadd.f32 %v503, %v504
      %v506 = vsel %vm201, %v391, 0.0
      %v507 = vadd.f32 %v505, %v506
      %v508 = vsel %vm201, %v392, 0.0
      %v509 = vadd.f32 %v507, %v508
      %v510 = vsel %vm201, %v393, 0.0
      %v511 = vadd.f32 %v509, %v510
      %v512 = vsel %vm201, %v394, 0.0
      %v513 = vadd.f32 %v511, %v512
      %v514 = vsel %vm201, %v395, 0.0
      %v515 = vadd.f32 %v513, %v514
      %v516 = vsel %vm201, %v396, 0.0
      %v517 = vadd.f32 %v515, %v516
      %v518 = vsel %vm201, %v397, 0.0
      %v519 = vadd.f32 %v517, %v518
      %v520 = vsel %vm201, %v398, 0.0
      %v521 = vadd.f32 %v519, %v520
      %v522 = vsel %vm201, %v399, 0.0
      %v523 = vadd.f32 %v521, %v522
      %v524 = vsel %vm201, %v400, 0.0
      %v525 = vadd.f32 %v523, %v524
      %v526 = vsel %vm201, %v401, 0.0
      %v527 = vadd.f32 %v525, %v526
      %v528 = vsel %vm201, %v402, 0.0
      %v529 = vadd.f32 %v527, %v528
      %v530 = vrot.slane %v529, 4
      %v531 = vadd.f32 %v529, %v530
      %v532 = vrot.slane %v531, 2
      %v533 = vadd.f32 %v531, %v532
      %v534 = vrot.slane %v533, 1
      %v535 = vadd.f32 %v533, %v534
      %v536 = vadd.f32 %v338, %v535
      %537 = vst.msk [vmem:[%s2] sm:$0x1] %vm336, %v536
      // Predicated region
      $region29: #{net3d_forward.18} parent=23 // pred_check
        %p538 = pneg %p53
      $region30: #{net3d_forward.18} parent=23 // pred_check_branch
        %540 = sbr.rel (%p538) target = $region32
      $region31: #{net3d_forward.18} parent=23 // pred_region
        _
      $region32: #{net3d_forward.18} parent=23 // pred_fallthru
        _
      // Predicated region
      $region33: #{net3d_forward.18} parent=23 // pred_check
        %p541 = pneg %p74
      $region34: #{net3d_forward.18} parent=23 // pred_check_branch
        %543 = sbr.rel (%p541) target = $region36
      $region35: #{net3d_forward.18} parent=23 // pred_region
        _
      $region36: #{net3d_forward.18} parent=23 // pred_fallthru
        _
      // Predicated region
      $region37: #{net3d_forward.18} parent=23 // pred_check
        %p544 = pneg %p53
      $region38: #{net3d_forward.18} parent=23 // pred_check_branch
        %546 = sbr.rel (%p544) target = $region40
      $region39: #{net3d_forward.18} parent=23 // pred_region
        _
      $region40: #{net3d_forward.18} parent=23 // pred_fallthru
        _
      // Predicated region
      $region41: #{net3d_forward.18} parent=23 // pred_check
        %p547 = pneg %p74
      $region42: #{net3d_forward.18} parent=23 // pred_check_branch
        %549 = sbr.rel (%p547) target = $region44
      $region43: #{net3d_forward.18} parent=23 // pred_region
        _
      $region44: #{net3d_forward.18} parent=23 // pred_fallthru
        _
    $region24: #{net3d_forward.18} parent=5 // pred_fallthru
      _
    %p550 = scmp.le.s32.totalorder 2, %s9
    // Predicated region
    $region45: #{net3d_forward.18} parent=5 // pred_check
      %p551 = pneg %p550
    $region46: #{net3d_forward.18} parent=5 // pred_check_branch
      %553 = sbr.rel (%p551) target = $region48
    $region47: #{net3d_forward.18} parent=5 // pred_region
      %s554 = ssub.s32 %s9, 2
    $region48: #{net3d_forward.18} parent=5 // pred_fallthru
      _
  $region6: #{net3d_forward.18} parent=0 // loop_footer
    %s13 = sadd.s32 1, %s9
  $region7: #{net3d_forward.18} parent=0 // loop_footer_branch
    %8 = sbr.rel target = $region3
  $region8: #{net3d_forward.18} parent=0 // loop_exit
    _

// kernel: net3d_forward.17
$region0: #{net3d_forward.17}
  #allocation0 [shape = 'u32[]', space=smem, size = 0x4, offset = 0x4, fixed_abs, tag = 'smem constant byte address 0x4 - core index']
  #allocation1 [shape = 'u32[144,128]{1,0:T(1,128)}', space=vmem, size = 0x12000, scoped, tag = 'internal scratch']
  %s0 = inlined_call_operand.vmem [shape: bf16[1024,256], index: 0, kind: input, shape index: {}]
  %s1 = inlined_call_operand.vmem [shape: bf16[256,8], index: 1, kind: input, shape index: {}]
  %s2 = inlined_call_operand.vmem [shape: f32[1,8], index: 2, kind: input, shape index: {}]
  %s3 = inlined_call_operand.vmem [shape: f32[1024,8], index: 3, kind: output, shape index: {}]
  %s4 = sld [smem:[#allocation0]]
  $region45: #{net3d_forward.17} parent=0
    _
  %s6 = ssub.s32 1, %s4
  %s7 = scalar_select 0, %s6, %s4
  loop: start=0, step=1, limit=10
  $region2: #{net3d_forward.17} parent=0 // loop_pre_header
    _
  $region3: #{net3d_forward.17} parent=0 // loop_header
    %s9 = sphi 0, %s13
    %p10 = scmp.ge.s32.totalorder %s9, 10
    %s19 = sphi 0, %s21
    %s22 = sphi 0, %s19
    %s23 = sphi 0, %s22
    %s39 = sphi 0, %s23
    %s43 = sphi 0, %s43
    %s45 = sphi 0, %s43
    %s46 = sphi 0, %s45
    %s60 = sphi 0, %s46
    %s64 = sphi 0, %s64
    %s66 = sphi 0, %s64
    %s67 = sphi 0, %s66
    %s81 = sphi 0, %s67
    %s87 = sphi 0, %s89
    %s90 = sphi 0, %s87
    %s91 = sphi 0, %s90
    %s107 = sphi 0, %s91
  $region4: #{net3d_forward.17} parent=0 // loop_header_branch
    %12 = sbr.rel (%p10) target = $region8
  $region5: #{net3d_forward.17} parent=0 // loop_body
    %s14 = ssub.s32 %s9, 1
    %s15 = ssub.s32 %s9, 2
    %s16 = sadd.s32 %s9, 1
    %s17 = ssub.s32 %s9, %s16
    %p18 = scmp.eq.s32.totalorder %s17, 0
    %s20 = sadd.s32 %s19, 1
    %s21 = scalar_select %p18, %s19, %s20
    %p24 = pneg %p18
    %p25 = scmp.eq.s32.totalorder %s9, 7
    %p26 = por %p24, %p25
    %p27 = scmp.ne.s32.totalorder %s19, %s22
    %p28 = scmp.eq.s32.totalorder %s9, 0
    %p29 = por %p27, %p28
    %p30 = scmp.ne.s32.totalorder %s19, %s22
    %p31 = scmp.eq.s32.totalorder %s14, 7
    %p32 = por %p30, %p31
    %p33 = scmp.ne.s32.totalorder %s22, %s23
    %p34 = scmp.eq.s32.totalorder %s14, 0
    %p35 = por %p33, %p34
    %p36 = scmp.ne.s32.totalorder %s22, %s23
    %p37 = scmp.eq.s32.totalorder %s15, 7
    %p38 = por %p36, %p37
    %p40 = scmp.ne.s32.totalorder %s23, %s39
    %p41 = scmp.eq.s32.totalorder %s15, 0
    %p42 = por %p40, %p41
    %s44 = sadd.s32 %s43, 1
    %p47 = scmp.eq.s32.totalorder %s9, 7
    %p48 = scmp.ne.s32.totalorder %s43, %s45
    %p49 = scmp.eq.s32.totalorder %s9, 0
    %p50 = por %p48, %p49
    %p51 = scmp.ne.s32.totalorder %s43, %s45
    %p52 = scmp.eq.s32.totalorder %s14, 7
    %p53 = por %p51, %p52
    %p54 = scmp.ne.s32.totalorder %s45, %s46
    %p55 = scmp.eq.s32.totalorder %s14, 0
    %p56 = por %p54, %p55
    %p57 = scmp.ne.s32.totalorder %s45, %s46
    %p58 = scmp.eq.s32.totalorder %s15, 7
    %p59 = por %p57, %p58
    %p61 = scmp.ne.s32.totalorder %s46, %s60
    %p62 = scmp.eq.s32.totalorder %s15, 0
    %p63 = por %p61, %p62
    %s65 = sadd.s32 %s64, 1
    %p68 = scmp.eq.s32.totalorder %s9, 7
    %p69 = scmp.ne.s32.totalorder %s64, %s66
    %p70 = scmp.eq.s32.totalorder %s9, 0
    %p71 = por %p69, %p70
    %p72 = scmp.ne.s32.totalorder %s64, %s66
    %p73 = scmp.eq.s32.totalorder %s14, 7
    %p74 = por %p72, %p73
    %p75 = scmp.ne.s32.totalorder %s66, %s67
    %p76 = scmp.eq.s32.totalorder %s14, 0
    %p77 = por %p75, %p76
    %p78 = scmp.ne.s32.totalorder %s66, %s67
    %p79 = scmp.eq.s32.totalorder %s15, 7
    %p80 = por %p78, %p79
    %p82 = scmp.ne.s32.totalorder %s67, %s81
    %p83 = scmp.eq.s32.totalorder %s15, 0
    %p84 = por %p82, %p83
    %s85 = ssub.s32 %s9, %s16
    %p86 = scmp.eq.s32.totalorder %s85, 0
    %s88 = sadd.s32 %s87, 1
    %s89 = scalar_select %p86, %s87, %s88
    %p92 = pneg %p86
    %p93 = scmp.eq.s32.totalorder %s9, 7
    %p94 = por %p92, %p93
    %p95 = scmp.ne.s32.totalorder %s87, %s90
    %p96 = scmp.eq.s32.totalorder %s9, 0
    %p97 = por %p95, %p96
    %p98 = scmp.ne.s32.totalorder %s87, %s90
    %p99 = scmp.eq.s32.totalorder %s14, 7
    %p100 = por %p98, %p99
    %p101 = scmp.ne.s32.totalorder %s90, %s91
    %p102 = scmp.eq.s32.totalorder %s14, 0
    %p103 = por %p101, %p102
    %p104 = scmp.ne.s32.totalorder %s90, %s91
    %p105 = scmp.eq.s32.totalorder %s15, 7
    %p106 = por %p104, %p105
    %p108 = scmp.ne.s32.totalorder %s91, %s107
    %p109 = scmp.eq.s32.totalorder %s15, 0
    %p110 = por %p108, %p109
    %p111 = scmp.le.s32.totalorder 1, %s9
    %p112 = scmp.lt.s32.totalorder %s9, 9
    %p113 = pnand %p111, %p112
    %p114 = pneg %p113
    // Predicated region
    $region9: #{net3d_forward.17} parent=5 // pred_check
      _
    $region10: #{net3d_forward.17} parent=5 // pred_check_branch
      %116 = sbr.rel (%p113) target = $region12
    $region11: #{net3d_forward.17} parent=5 // pred_region
      %s117 = ssub.s32 %s9, 1
      // Predicated region
      $region13: #{net3d_forward.17} parent=11 // pred_check
        %p118 = pneg %p56
      $region14: #{net3d_forward.17} parent=11 // pred_check_branch
        %120 = sbr.rel (%p118) target = $region16
      $region15: #{net3d_forward.17} parent=11 // pred_region
        _
      $region16: #{net3d_forward.17} parent=11 // pred_fallthru
        _
      // Predicated region
      $region17: #{net3d_forward.17} parent=11 // pred_check
        %p121 = pneg %p77
      $region18: #{net3d_forward.17} parent=11 // pred_check_branch
        %123 = sbr.rel (%p121) target = $region20
      $region19: #{net3d_forward.17} parent=11 // pred_region
        _
      $region20: #{net3d_forward.17} parent=11 // pred_fallthru
        _
    $region12: #{net3d_forward.17} parent=5 // pred_fallthru
      _
    %p124 = scmp.lt.s32.totalorder %s9, 8
    // Predicated region
    $region21: #{net3d_forward.17} parent=5 // pred_check
      %p125 = pneg %p124
    $region22: #{net3d_forward.17} parent=5 // pred_check_branch
      %127 = sbr.rel (%p125) target = $region24
    $region23: #{net3d_forward.17} parent=5 // pred_region
      // Predicated region
      $region25: #{net3d_forward.17} parent=23 // pred_check
        %p128 = pneg %p29
      $region26: #{net3d_forward.17} parent=23 // pred_check_branch
        %130 = sbr.rel (%p128) target = $region28
      $region27: #{net3d_forward.17} parent=23 // pred_region
        %s131 = smul.u32 16, %s9
        %p132 = scmp.lt.s32.totalorder %s131, 127
        %s133 = scalar_select %p132, %s131, 127
        %s134 = smul.addr %s133, 2
        %s135 = smul.addr %s134, 4
        %s136 = scalar_lea.vmem %s0, %s135
        %s137 = smul.u32 16, %s9
      $region28: #{net3d_forward.17} parent=23 // pred_fallthru
        _
    $region24: #{net3d_forward.17} parent=5 // pred_fallthru
      _
    %p138 = scmp.le.s32.totalorder 1, %s9
    %p139 = scmp.lt.s32.totalorder %s9, 9
    %p140 = pnand %p138, %p139
    %p141 = pneg %p140
    // Predicated region
    $region29: #{net3d_forward.17} parent=5 // pred_check
      _
    $region30: #{net3d_forward.17} parent=5 // pred_check_branch
      %143 = sbr.rel (%p140) target = $region32
    $region31: #{net3d_forward.17} parent=5 // pred_region
      %s144 = ssub.s32 %s9, 1
      %s145 = smul.u32 16, %s14
      %p146 = scmp.lt.s32.totalorder %s145, 127
      %s147 = scalar_select %p146, %s145, 127
      %s148 = smul.addr %s147, 2
      %s149 = smul.addr %s148, 4
      %s150 = scalar_lea.vmem %s0, %s149
      %p151 = pneg %p35
      %p152 = pneg %p32
      %p153 = pneg %p56
      %p154 = pneg %p53
      %p155 = pneg %p77
      %p156 = pneg %p74
      %p157 = pneg %p103
      %p158 = pneg %p100
      %s159 = smul.u32 16, %s14
      %p160 = scmp.lt.s32.totalorder %s159, 127
      %s161 = scalar_select %p160, %s159, 127
      %s162 = smul.addr %s161, 8
      %s163 = scalar_lea.vmem %s3, %s162
      %s164 = smul.u32 16, %s14
      %p165 = scmp.lt.s32.totalorder %s164, 127
      %s166 = scalar_select %p165, %s164, 127
      %s167 = smul.addr %s166, 2
      %s168 = smul.addr %s167, 4
      %s169 = scalar_lea.vmem %s0, %s168
      %s170 = smul.u32 16, %s14
      %s171 = smul.u32 16, %s14
      %p172 = scmp.lt.s32.totalorder %s171, 127
      %s173 = scalar_select %p172, %s171, 127
      %s174 = smul.addr %s173, 8
      %s175 = scalar_lea.vmem %s3, %s174
      %s176 = smul.u32 16, %s14
      %v178 = vld [vmem:[%s169] sm:$0xff]
      %v179 = vld [vmem:[%s169 + $0x8] sm:$0xff]
      %v180 = vld [vmem:[%s169 + $0x10] sm:$0xff]
      %v181 = vld [vmem:[%s169 + $0x18] sm:$0xff]
      %v182 = vld [vmem:[%s169 + $0x20] sm:$0xff]
      %v183 = vld [vmem:[%s169 + $0x28] sm:$0xff]
      %v184 = vld [vmem:[%s169 + $0x30] sm:$0xff]
      %v185 = vld [vmem:[%s169 + $0x38] sm:$0xff]
      %v186 = vld [vmem:[%s169 + $0x40] sm:$0xff]
      %v187 = vld [vmem:[%s169 + $0x48] sm:$0xff]
      %v188 = vld [vmem:[%s169 + $0x50] sm:$0xff]
      %v189 = vld [vmem:[%s169 + $0x58] sm:$0xff]
      %v190 = vld [vmem:[%s169 + $0x60] sm:$0xff]
      %v191 = vld [vmem:[%s169 + $0x68] sm:$0xff]
      %v192 = vld [vmem:[%s169 + $0x70] sm:$0xff]
      %v193 = vld [vmem:[%s169 + $0x78] sm:$0xff]
      %v194 = vld [vmem:[%s1] sm:$0xf]
      %v195 = vld [vmem:[%s1 + $0x4] sm:$0xf]
      %v196 = vld [vmem:[%s1 + $0x8] sm:$0xf]
      %v197 = vld [vmem:[%s1 + $0xc] sm:$0xf]
      %v198 = vld [vmem:[%s1 + $0x10] sm:$0xf]
      %v199 = vld [vmem:[%s1 + $0x14] sm:$0xf]
      %v200 = vld [vmem:[%s1 + $0x18] sm:$0xf]
      %v201 = vld [vmem:[%s1 + $0x1c] sm:$0xf]
      %v202 = vld [vmem:[%s1 + $0x20] sm:$0xf]
      %v203 = vld [vmem:[%s1 + $0x24] sm:$0xf]
      %v204 = vld [vmem:[%s1 + $0x28] sm:$0xf]
      %v205 = vld [vmem:[%s1 + $0x2c] sm:$0xf]
      %v206 = vld [vmem:[%s1 + $0x30] sm:$0xf]
      %v207 = vld [vmem:[%s1 + $0x34] sm:$0xf]
      %v208 = vld [vmem:[%s1 + $0x38] sm:$0xf]
      %v209 = vld [vmem:[%s1 + $0x3c] sm:$0xf]
      %v210 = vld [vmem:[%s1 + $0x40] sm:$0xf]
      %v211 = vld [vmem:[%s1 + $0x44] sm:$0xf]
      %v212 = vld [vmem:[%s1 + $0x48] sm:$0xf]
      %v213 = vld [vmem:[%s1 + $0x4c] sm:$0xf]
      %v214 = vld [vmem:[%s1 + $0x50] sm:$0xf]
      %v215 = vld [vmem:[%s1 + $0x54] sm:$0xf]
      %v216 = vld [vmem:[%s1 + $0x58] sm:$0xf]
      %v217 = vld [vmem:[%s1 + $0x5c] sm:$0xf]
      %v218 = vld [vmem:[%s1 + $0x60] sm:$0xf]
      %v219 = vld [vmem:[%s1 + $0x64] sm:$0xf]
      %v220 = vld [vmem:[%s1 + $0x68] sm:$0xf]
      %v221 = vld [vmem:[%s1 + $0x6c] sm:$0xf]
      %v222 = vld [vmem:[%s1 + $0x70] sm:$0xf]
      %v223 = vld [vmem:[%s1 + $0x74] sm:$0xf]
      %v224 = vld [vmem:[%s1 + $0x78] sm:$0xf]
      %v225 = vld [vmem:[%s1 + $0x7c] sm:$0xf]
      %v226 = vld [vmem:[%s2] sm:$0x1]
      %v228 = vlaneseq
      %v229 = vshrl.u32 %v228, 7
      %v230 = vsub.s32 0, %v229
      %v231 = vrot.slane %v226, %v230
      %v249 = vunpack.c.l.b16 %v178
      %v250 = vunpack.c.h.b16 %v178
      %v251 = vunpack.c.l.b16 %v179
      %v252 = vunpack.c.h.b16 %v179
      %v253 = vunpack.c.l.b16 %v180
      %v254 = vunpack.c.h.b16 %v180
      %v255 = vunpack.c.l.b16 %v181
      %v256 = vunpack.c.h.b16 %v181
      %v257 = vunpack.c.l.b16 %v182
      %v258 = vunpack.c.h.b16 %v182
      %v259 = vunpack.c.l.b16 %v183
      %v260 = vunpack.c.h.b16 %v183
      %v261 = vunpack.c.l.b16 %v184
      %v262 = vunpack.c.h.b16 %v184
      %v263 = vunpack.c.l.b16 %v185
      %v264 = vunpack.c.h.b16 %v185
      %v265 = vunpack.c.l.b16 %v186
      %v266 = vunpack.c.h.b16 %v186
      %v267 = vunpack.c.l.b16 %v187
      %v268 = vunpack.c.h.b16 %v187
      %v269 = vunpack.c.l.b16 %v188
      %v270 = vunpack.c.h.b16 %v188
      %v271 = vunpack.c.l.b16 %v189
      %v272 = vunpack.c.h.b16 %v189
      %v273 = vunpack.c.l.b16 %v190
      %v274 = vunpack.c.h.b16 %v190
      %v275 = vunpack.c.l.b16 %v191
      %v276 = vunpack.c.h.b16 %v191
      %v277 = vunpack.c.l.b16 %v192
      %v278 = vunpack.c.h.b16 %v192
      %v279 = vunpack.c.l.b16 %v193
      %v280 = vunpack.c.h.b16 %v193
      %v281 = vpack.c.b16 %v251, %v249
      %v282 = vpack.c.b16 %v252, %v250
      %v283 = vpack.c.b16 %v255, %v253
      %v284 = vpack.c.b16 %v256, %v254
      %v285 = vpack.c.b16 %v259, %v257
      %v286 = vpack.c.b16 %v260, %v258
      %v287 = vpack.c.b16 %v263, %v261
      %v288 = vpack.c.b16 %v264, %v262
      %v289 = vpack.c.b16 %v267, %v265
      %v290 = vpack.c.b16 %v268, %v266
      %v291 = vpack.c.b16 %v271, %v269
      %v292 = vpack.c.b16 %v272, %v270
      %v293 = vpack.c.b16 %v275, %v273
      %v294 = vpack.c.b16 %v276, %v274
      %v295 = vpack.c.b16 %v279, %v277
      %v296 = vpack.c.b16 %v280, %v278
      %v345 = vunpack.c.l.b16 %v194
      %v346 = vunpack.c.l.b16 %v195
      %v347 = vunpack.c.l.b16 %v196
      %v348 = vunpack.c.l.b16 %v197
      %v349 = vunpack.c.l.b16 %v198
      %v350 = vunpack.c.l.b16 %v199
      %v351 = vunpack.c.l.b16 %v200
      %v352 = vunpack.c.l.b16 %v201
      %v353 = vunpack.c.l.b16 %v202
      %v354 = vunpack.c.l.b16 %v203
      %v355 = vunpack.c.l.b16 %v204
      %v356 = vunpack.c.l.b16 %v205
      %v357 = vunpack.c.l.b16 %v206
      %v358 = vunpack.c.l.b16 %v207
      %v359 = vunpack.c.l.b16 %v208
      %v360 = vunpack.c.l.b16 %v209
      %v361 = vunpack.c.l.b16 %v210
      %v362 = vunpack.c.l.b16 %v211
      %v363 = vunpack.c.l.b16 %v212
      %v364 = vunpack.c.l.b16 %v213
      %v365 = vunpack.c.l.b16 %v214
      %v366 = vunpack.c.l.b16 %v215
      %v367 = vunpack.c.l.b16 %v216
      %v368 = vunpack.c.l.b16 %v217
      %v369 = vunpack.c.l.b16 %v218
      %v370 = vunpack.c.l.b16 %v219
      %v371 = vunpack.c.l.b16 %v220
      %v372 = vunpack.c.l.b16 %v221
      %v373 = vunpack.c.l.b16 %v222
      %v374 = vunpack.c.l.b16 %v223
      %v375 = vunpack.c.l.b16 %v224
      %v376 = vunpack.c.l.b16 %v225
      %v377 = vpack.c.b16 %v346, %v345
      %v378 = vpack.c.b16 %v348, %v347
      %v379 = vpack.c.b16 %v350, %v349
      %v380 = vpack.c.b16 %v352, %v351
      %v381 = vpack.c.b16 %v354, %v353
      %v382 = vpack.c.b16 %v356, %v355
      %v383 = vpack.c.b16 %v358, %v357
      %v384 = vpack.c.b16 %v360, %v359
      %v385 = vpack.c.b16 %v362, %v361
      %v386 = vpack.c.b16 %v364, %v363
      %v387 = vpack.c.b16 %v366, %v365
      %v388 = vpack.c.b16 %v368, %v367
      %v389 = vpack.c.b16 %v370, %v369
      %v390 = vpack.c.b16 %v372, %v371
      %v391 = vpack.c.b16 %v374, %v373
      %v392 = vpack.c.b16 %v376, %v375
      %409 = vmatprep.subr.bf16.mxu0 0
      %410 = vmatpush1.bf16.msra.mxu0 %v377
      %411 = vmatprep.subr.bf16.mxu0 0
      %412 = vmatpush1.bf16.msra.mxu0 %v378
      %413 = vmatprep.subr.bf16.mxu0 0
      %414 = vmatpush1.bf16.msra.mxu0 %v379
      %415 = vmatprep.subr.bf16.mxu0 0
      %416 = vmatpush1.bf16.msra.mxu0 %v380
      %417 = vmatprep.subr.bf16.mxu0 0
      %418 = vmatpush1.bf16.msra.mxu0 %v381
      %419 = vmatprep.subr.bf16.mxu0 0
      %420 = vmatpush1.bf16.msra.mxu0 %v382
      %421 = vmatprep.subr.bf16.mxu0 0
      %422 = vmatpush1.bf16.msra.mxu0 %v383
      %423 = vmatprep.subr.bf16.mxu0 0
      %424 = vmatpush1.bf16.msra.mxu0 %v384
      %425 = vmatprep.subr.bf16.mxu0 0
      %426 = vmatpush1.bf16.msra.mxu0 %v385
      %427 = vmatprep.subr.bf16.mxu0 0
      %428 = vmatpush1.bf16.msra.mxu0 %v386
      %429 = vmatprep.subr.bf16.mxu0 0
      %430 = vmatpush1.bf16.msra.mxu0 %v387
      %431 = vmatprep.subr.bf16.mxu0 0
      %432 = vmatpush1.bf16.msra.mxu0 %v388
      %433 = vmatprep.subr.bf16.mxu0 0
      %434 = vmatpush1.bf16.msra.mxu0 %v389
      %435 = vmatprep.subr.bf16.mxu0 0
      %436 = vmatpush1.bf16.msra.mxu0 %v390
      %437 = vmatprep.subr.bf16.mxu0 0
      %438 = vmatpush1.bf16.msra.mxu0 %v391
      %439 = vmatprep.subr.bf16.mxu0 0
      %440 = vmatpush1.bf16.msra.mxu0 %v392
      %441 = vmatprep.mubr.bf16.mxu0 %v282
      %442 = vmatmul.mubr.bf16.gmra.mrb[0].mxu0 %v281
      %v443 = vpop.f32.mrb[0].mxu0
      %v444 = vadd.f32 %v231, %v443
      %v445 = vpop.f32.mrb[0].mxu0
      %v446 = vpop.f32.mrb[0].mxu0
      %v447 = vadd.f32 %v231, %v446
      %v448 = vpop.f32.mrb[0].mxu0
      %449 = vmatprep.mubr.bf16.mxu0 %v284
      %450 = vmatmul.mubr.bf16.gmra.mrb[0].mxu0 %v283
      %v451 = vpop.f32.mrb[0].mxu0
      %v452 = vadd.f32 %v231, %v451
      %v453 = vpop.f32.mrb[0].mxu0
      %v454 = vpop.f32.mrb[0].mxu0
      %v455 = vadd.f32 %v231, %v454
      %v456 = vpop.f32.mrb[0].mxu0
      %457 = vmatprep.mubr.bf16.mxu0 %v286
      %458 = vmatmul.mubr.bf16.gmra.mrb[0].mxu0 %v285
      %v459 = vpop.f32.mrb[0].mxu0
      %v460 = vadd.f32 %v231, %v459
      %v461 = vpop.f32.mrb[0].mxu0
      %v462 = vpop.f32.mrb[0].mxu0
      %v463 = vadd.f32 %v231, %v462
      %v464 = vpop.f32.mrb[0].mxu0
      %465 = vmatprep.mubr.bf16.mxu0 %v288
      %466 = vmatmul.mubr.bf16.gmra.mrb[0].mxu0 %v287
      %v467 = vpop.f32.mrb[0].mxu0
      %v468 = vadd.f32 %v231, %v467
      %v469 = vpop.f32.mrb[0].mxu0
      %v470 = vpop.f32.mrb[0].mxu0
      %v471 = vadd.f32 %v231, %v470
      %v472 = vpop.f32.mrb[0].mxu0
      %473 = vmatprep.mubr.bf16.mxu0 %v290
      %474 = vmatmul.mubr.bf16.gmra.mrb[0].mxu0 %v289
      %v475 = vpop.f32.mrb[0].mxu0
      %v476 = vadd.f32 %v231, %v475
      %v477 = vpop.f32.mrb[0].mxu0
      %v478 = vpop.f32.mrb[0].mxu0
      %v479 = vadd.f32 %v231, %v478
      %v480 = vpop.f32.mrb[0].mxu0
      %481 = vmatprep.mubr.bf16.mxu0 %v292
      %482 = vmatmul.mubr.bf16.gmra.mrb[0].mxu0 %v291
      %v483 = vpop.f32.mrb[0].mxu0
      %v484 = vadd.f32 %v231, %v483
      %v485 = vpop.f32.mrb[0].mxu0
      %v486 = vpop.f32.mrb[0].mxu0
      %v487 = vadd.f32 %v231, %v486
      %v488 = vpop.f32.mrb[0].mxu0
      %489 = vmatprep.mubr.bf16.mxu0 %v294
      %490 = vmatmul.mubr.bf16.gmra.mrb[0].mxu0 %v293
      %v491 = vpop.f32.mrb[0].mxu0
      %v492 = vadd.f32 %v231, %v491
      %v493 = vpop.f32.mrb[0].mxu0
      %v494 = vpop.f32.mrb[0].mxu0
      %v495 = vadd.f32 %v231, %v494
      %v496 = vpop.f32.mrb[0].mxu0
      %497 = vmatprep.mubr.bf16.mxu0 %v296
      %498 = vmatmul.mubr.bf16.gmra.mrb[0].mxu0 %v295
      %v499 = vpop.f32.mrb[0].mxu0
      %v500 = vadd.f32 %v231, %v499
      %v501 = vpop.f32.mrb[0].mxu0
      %v502 = vpop.f32.mrb[0].mxu0
      %v503 = vadd.f32 %v231, %v502
      %v504 = vpop.f32.mrb[0].mxu0
      %505 = vdwg.mxu0
      %vm506 = vcmp.ge.f32.partialorder %v444, 0.0
      %vm507 = vcmp.ge.f32.partialorder %v447, 0.0
      %vm508 = vcmp.ge.f32.partialorder %v452, 0.0
      %vm509 = vcmp.ge.f32.partialorder %v455, 0.0
      %vm510 = vcmp.ge.f32.partialorder %v460, 0.0
      %vm511 = vcmp.ge.f32.partialorder %v463, 0.0
      %vm512 = vcmp.ge.f32.partialorder %v468, 0.0
      %vm513 = vcmp.ge.f32.partialorder %v471, 0.0
      %vm514 = vcmp.ge.f32.partialorder %v476, 0.0
      %vm515 = vcmp.ge.f32.partialorder %v479, 0.0
      %vm516 = vcmp.ge.f32.partialorder %v484, 0.0
      %vm517 = vcmp.ge.f32.partialorder %v487, 0.0
      %vm518 = vcmp.ge.f32.partialorder %v492, 0.0
      %vm519 = vcmp.ge.f32.partialorder %v495, 0.0
      %vm520 = vcmp.ge.f32.partialorder %v500, 0.0
      %vm521 = vcmp.ge.f32.partialorder %v503, 0.0
      %v522 = vmul.f32 %v444, 0.01
      %v523 = vmul.f32 %v447, 0.01
      %v524 = vmul.f32 %v452, 0.01
      %v525 = vmul.f32 %v455, 0.01
      %v526 = vmul.f32 %v460, 0.01
      %v527 = vmul.f32 %v463, 0.01
      %v528 = vmul.f32 %v468, 0.01
      %v529 = vmul.f32 %v471, 0.01
      %v530 = vmul.f32 %v476, 0.01
      %v531 = vmul.f32 %v479, 0.01
      %v532 = vmul.f32 %v484, 0.01
      %v533 = vmul.f32 %v487, 0.01
      %v534 = vmul.f32 %v492, 0.01
      %v535 = vmul.f32 %v495, 0.01
      %v536 = vmul.f32 %v500, 0.01
      %v537 = vmul.f32 %v503, 0.01
      %v538 = vsel %vm506, %v444, %v522
      %v539 = vsel %vm507, %v447, %v523
      %v540 = vsel %vm508, %v452, %v524
      %v541 = vsel %vm509, %v455, %v525
      %v542 = vsel %vm510, %v460, %v526
      %v543 = vsel %vm511, %v463, %v527
      %v544 = vsel %vm512, %v468, %v528
      %v545 = vsel %vm513, %v471, %v529
      %v546 = vsel %vm514, %v476, %v530
      %v547 = vsel %vm515, %v479, %v531
      %v548 = vsel %vm516, %v484, %v532
      %v549 = vsel %vm517, %v487, %v533
      %v550 = vsel %vm518, %v492, %v534
      %v551 = vsel %vm519, %v495, %v535
      %v552 = vsel %vm520, %v500, %v536
      %v553 = vsel %vm521, %v503, %v537
      %vm554 = vcmask 64512
      %555 = vst.msk [vmem:[%s175] sm:$0xff] %vm554, %v538
      %556 = vst.msk [vmem:[%s175 + $0x8] sm:$0xff] %vm554, %v539
      %557 = vst.msk [vmem:[%s175 + $0x10] sm:$0xff] %vm554, %v540
      %558 = vst.msk [vmem:[%s175 + $0x18] sm:$0xff] %vm554, %v541
      %559 = vst.msk [vmem:[%s175 + $0x20] sm:$0xff] %vm554, %v542
      %560 = vst.msk [vmem:[%s175 + $0x28] sm:$0xff] %vm554, %v543
      %561 = vst.msk [vmem:[%s175 + $0x30] sm:$0xff] %vm554, %v544
      %562 = vst.msk [vmem:[%s175 + $0x38] sm:$0xff] %vm554, %v545
      %563 = vst.msk [vmem:[%s175 + $0x40] sm:$0xff] %vm554, %v546
      %564 = vst.msk [vmem:[%s175 + $0x48] sm:$0xff] %vm554, %v547
      %565 = vst.msk [vmem:[%s175 + $0x50] sm:$0xff] %vm554, %v548
      %566 = vst.msk [vmem:[%s175 + $0x58] sm:$0xff] %vm554, %v549
      %567 = vst.msk [vmem:[%s175 + $0x60] sm:$0xff] %vm554, %v550
      %568 = vst.msk [vmem:[%s175 + $0x68] sm:$0xff] %vm554, %v551
      %569 = vst.msk [vmem:[%s175 + $0x70] sm:$0xff] %vm554, %v552
      %570 = vst.msk [vmem:[%s175 + $0x78] sm:$0xff] %vm554, %v553
      %s571 = smul.u32 16, %s14
      %p572 = scmp.lt.s32.totalorder %s571, 127
      %s573 = scalar_select %p572, %s571, 127
      %s574 = smul.addr %s573, 8
      %s575 = scalar_lea.vmem %s3, %s574
      // Predicated region
      $region33: #{net3d_forward.17} parent=31 // pred_check
        %p576 = pneg %p100
      $region34: #{net3d_forward.17} parent=31 // pred_check_branch
        %578 = sbr.rel (%p576) target = $region36
      $region35: #{net3d_forward.17} parent=31 // pred_region
        %s579 = smul.u32 16, %s14
      $region36: #{net3d_forward.17} parent=31 // pred_fallthru
        _
    $region32: #{net3d_forward.17} parent=5 // pred_fallthru
      _
    %p580 = scmp.le.s32.totalorder 2, %s9
    // Predicated region
    $region37: #{net3d_forward.17} parent=5 // pred_check
      %p581 = pneg %p580
    $region38: #{net3d_forward.17} parent=5 // pred_check_branch
      %583 = sbr.rel (%p581) target = $region40
    $region39: #{net3d_forward.17} parent=5 // pred_region
      %s584 = ssub.s32 %s9, 2
      // Predicated region
      $region41: #{net3d_forward.17} parent=39 // pred_check
        %p585 = pneg %p106
      $region42: #{net3d_forward.17} parent=39 // pred_check_branch
        %587 = sbr.rel (%p585) target = $region44
      $region43: #{net3d_forward.17} parent=39 // pred_region
        %s588 = smul.u32 16, %s15
        %p589 = scmp.lt.s32.totalorder %s588, 127
        %s590 = scalar_select %p589, %s588, 127
        %s591 = smul.addr %s590, 8
        %s592 = scalar_lea.vmem %s3, %s591
      $region44: #{net3d_forward.17} parent=39 // pred_fallthru
        _
    $region40: #{net3d_forward.17} parent=5 // pred_fallthru
      _
  $region6: #{net3d_forward.17} parent=0 // loop_footer
    %s13 = sadd.s32 1, %s9
  $region7: #{net3d_forward.17} parent=0 // loop_footer_branch
    %8 = sbr.rel target = $region3
  $region8: #{net3d_forward.17} parent=0 // loop_exit
    _

// kernel: net3d_forward.33
$region0: #{net3d_forward.33}
  #allocation0 [shape = 'u32[]', space=smem, size = 0x4, offset = 0x4, fixed_abs, tag = 'smem constant byte address 0x4 - core index']
  #allocation1 [shape = 'u32[144,128]{1,0:T(1,128)}', space=vmem, size = 0x12000, scoped, tag = 'internal scratch']
  %s0 = inlined_call_operand.vmem [shape: bf16[1024,8], index: 0, kind: input, shape index: {}]
  %s1 = inlined_call_operand.vmem [shape: f32[1,8], index: 1, kind: output, shape index: {0}]
  %s2 = inlined_call_operand.vmem [shape: f32[1,8], index: 2, kind: output, shape index: {1}]
  %3 = xla_tuple %s1, %s2
  %s4 = sld [smem:[#allocation0]]
  $region49: #{net3d_forward.33} parent=0
    _
  %s6 = ssub.s32 1, %s4
  %s7 = scalar_select 0, %s6, %s4
  loop: start=0, step=1, limit=4
  $region2: #{net3d_forward.33} parent=0 // loop_pre_header
    _
  $region3: #{net3d_forward.33} parent=0 // loop_header
    %s9 = sphi 0, %s13
    %p10 = scmp.ge.s32.totalorder %s9, 4
    %s19 = sphi 0, %s21
    %s22 = sphi 0, %s19
    %s23 = sphi 0, %s22
    %s39 = sphi 0, %s23
    %s43 = sphi 0, %s43
    %s45 = sphi 0, %s43
    %s46 = sphi 0, %s45
    %s60 = sphi 0, %s46
    %s64 = sphi 0, %s64
    %s66 = sphi 0, %s64
    %s67 = sphi 0, %s66
    %s81 = sphi 0, %s67
  $region4: #{net3d_forward.33} parent=0 // loop_header_branch
    %12 = sbr.rel (%p10) target = $region8
  $region5: #{net3d_forward.33} parent=0 // loop_body
    %s14 = ssub.s32 %s9, 1
    %s15 = ssub.s32 %s9, 2
    %s16 = sadd.s32 %s9, 1
    %s17 = ssub.s32 %s9, %s16
    %p18 = scmp.eq.s32.totalorder %s17, 0
    %s20 = sadd.s32 %s19, 1
    %s21 = scalar_select %p18, %s19, %s20
    %p24 = pneg %p18
    %p25 = scmp.eq.s32.totalorder %s9, 1
    %p26 = por %p24, %p25
    %p27 = scmp.ne.s32.totalorder %s19, %s22
    %p28 = scmp.eq.s32.totalorder %s9, 0
    %p29 = por %p27, %p28
    %p30 = scmp.ne.s32.totalorder %s19, %s22
    %p31 = scmp.eq.s32.totalorder %s14, 1
    %p32 = por %p30, %p31
    %p33 = scmp.ne.s32.totalorder %s22, %s23
    %p34 = scmp.eq.s32.totalorder %s14, 0
    %p35 = por %p33, %p34
    %p36 = scmp.ne.s32.totalorder %s22, %s23
    %p37 = scmp.eq.s32.totalorder %s15, 1
    %p38 = por %p36, %p37
    %p40 = scmp.ne.s32.totalorder %s23, %s39
    %p41 = scmp.eq.s32.totalorder %s15, 0
    %p42 = por %p40, %p41
    %s44 = sadd.s32 %s43, 1
    %p47 = scmp.eq.s32.totalorder %s9, 1
    %p48 = scmp.ne.s32.totalorder %s43, %s45
    %p49 = scmp.eq.s32.totalorder %s9, 0
    %p50 = por %p48, %p49
    %p51 = scmp.ne.s32.totalorder %s43, %s45
    %p52 = scmp.eq.s32.totalorder %s14, 1
    %p53 = por %p51, %p52
    %p54 = scmp.ne.s32.totalorder %s45, %s46
    %p55 = scmp.eq.s32.totalorder %s14, 0
    %p56 = por %p54, %p55
    %p57 = scmp.ne.s32.totalorder %s45, %s46
    %p58 = scmp.eq.s32.totalorder %s15, 1
    %p59 = por %p57, %p58
    %p61 = scmp.ne.s32.totalorder %s46, %s60
    %p62 = scmp.eq.s32.totalorder %s15, 0
    %p63 = por %p61, %p62
    %s65 = sadd.s32 %s64, 1
    %p68 = scmp.eq.s32.totalorder %s9, 1
    %p69 = scmp.ne.s32.totalorder %s64, %s66
    %p70 = scmp.eq.s32.totalorder %s9, 0
    %p71 = por %p69, %p70
    %p72 = scmp.ne.s32.totalorder %s64, %s66
    %p73 = scmp.eq.s32.totalorder %s14, 1
    %p74 = por %p72, %p73
    %p75 = scmp.ne.s32.totalorder %s66, %s67
    %p76 = scmp.eq.s32.totalorder %s14, 0
    %p77 = por %p75, %p76
    %p78 = scmp.ne.s32.totalorder %s66, %s67
    %p79 = scmp.eq.s32.totalorder %s15, 1
    %p80 = por %p78, %p79
    %p82 = scmp.ne.s32.totalorder %s67, %s81
    %p83 = scmp.eq.s32.totalorder %s15, 0
    %p84 = por %p82, %p83
    %p85 = scmp.le.s32.totalorder 1, %s9
    %p86 = scmp.lt.s32.totalorder %s9, 3
    %p87 = pnand %p85, %p86
    %p88 = pneg %p87
    // Predicated region
    $region9: #{net3d_forward.33} parent=5 // pred_check
      _
    $region10: #{net3d_forward.33} parent=5 // pred_check_branch
      %90 = sbr.rel (%p87) target = $region12
    $region11: #{net3d_forward.33} parent=5 // pred_region
      %s91 = ssub.s32 %s9, 1
    $region12: #{net3d_forward.33} parent=5 // pred_fallthru
      _
    %p92 = scmp.lt.s32.totalorder %s9, 2
    // Predicated region
    $region13: #{net3d_forward.33} parent=5 // pred_check
      %p93 = pneg %p92
    $region14: #{net3d_forward.33} parent=5 // pred_check_branch
      %95 = sbr.rel (%p93) target = $region16
    $region15: #{net3d_forward.33} parent=5 // pred_region
      // Predicated region
      $region17: #{net3d_forward.33} parent=15 // pred_check
        %p96 = pneg %p29
      $region18: #{net3d_forward.33} parent=15 // pred_check_branch
        %98 = sbr.rel (%p96) target = $region20
      $region19: #{net3d_forward.33} parent=15 // pred_region
        %s99 = smul.u32 64, %s9
        %p100 = scmp.lt.s32.totalorder %s99, 127
        %s101 = scalar_select %p100, %s99, 127
        %s102 = smul.addr %s101, 4
        %s103 = scalar_lea.vmem %s0, %s102
        %s104 = smul.u32 64, %s9
      $region20: #{net3d_forward.33} parent=15 // pred_fallthru
        _
    $region16: #{net3d_forward.33} parent=5 // pred_fallthru
      _
    %p105 = scmp.le.s32.totalorder 1, %s9
    %p106 = scmp.lt.s32.totalorder %s9, 3
    %p107 = pnand %p105, %p106
    %p108 = pneg %p107
    // Predicated region
    $region21: #{net3d_forward.33} parent=5 // pred_check
      _
    $region22: #{net3d_forward.33} parent=5 // pred_check_branch
      %110 = sbr.rel (%p107) target = $region24
    $region23: #{net3d_forward.33} parent=5 // pred_region
      %s111 = ssub.s32 %s9, 1
      %s112 = smul.u32 64, %s14
      %p113 = scmp.lt.s32.totalorder %s112, 127
      %s114 = scalar_select %p113, %s112, 127
      %s115 = smul.addr %s114, 4
      %s116 = scalar_lea.vmem %s0, %s115
      %p117 = pneg %p35
      %p118 = pneg %p32
      %p119 = pneg %p56
      %p120 = pneg %p53
      %p121 = pneg %p77
      %p122 = pneg %p74
      %s123 = smul.u32 64, %s14
      %p124 = scmp.lt.s32.totalorder %s123, 127
      %s125 = scalar_select %p124, %s123, 127
      %s126 = smul.addr %s125, 4
      %s127 = scalar_lea.vmem %s0, %s126
      %s128 = smul.u32 64, %s14
      %p129 = scmp.eq.s32.totalorder %s14, 0
      // Predicated region
      $region25: #{net3d_forward.33} parent=23 // pred_check
        %p130 = pneg %p129
      $region26: #{net3d_forward.33} parent=23 // pred_check_branch
        %132 = sbr.rel (%p130) target = $region28
      $region27: #{net3d_forward.33} parent=23 // pred_region
        %vm133 = vcmask 57344
        %134 = vst.msk [vmem:[%s1] sm:$0x1] %vm133, 0.0
        %135 = vst.msk [vmem:[%s2] sm:$0x1] %vm133, 0.0
      $region28: #{net3d_forward.33} parent=23 // pred_fallthru
        _
      %v136 = vld [vmem:[%s127] sm:$0xf]
      %v137 = vld [vmem:[%s127 + $0x4] sm:$0xf]
      %v138 = vld [vmem:[%s127 + $0x8] sm:$0xf]
      %v139 = vld [vmem:[%s127 + $0xc] sm:$0xf]
      %v140 = vld [vmem:[%s127 + $0x10] sm:$0xf]
      %v141 = vld [vmem:[%s127 + $0x14] sm:$0xf]
      %v142 = vld [vmem:[%s127 + $0x18] sm:$0xf]
      %v143 = vld [vmem:[%s127 + $0x1c] sm:$0xf]
      %v144 = vld [vmem:[%s127 + $0x20] sm:$0xf]
      %v145 = vld [vmem:[%s127 + $0x24] sm:$0xf]
      %v146 = vld [vmem:[%s127 + $0x28] sm:$0xf]
      %v147 = vld [vmem:[%s127 + $0x2c] sm:$0xf]
      %v148 = vld [vmem:[%s127 + $0x30] sm:$0xf]
      %v149 = vld [vmem:[%s127 + $0x34] sm:$0xf]
      %v150 = vld [vmem:[%s127 + $0x38] sm:$0xf]
      %v151 = vld [vmem:[%s127 + $0x3c] sm:$0xf]
      %v152 = vld [vmem:[%s127 + $0x40] sm:$0xf]
      %v153 = vld [vmem:[%s127 + $0x44] sm:$0xf]
      %v154 = vld [vmem:[%s127 + $0x48] sm:$0xf]
      %v155 = vld [vmem:[%s127 + $0x4c] sm:$0xf]
      %v156 = vld [vmem:[%s127 + $0x50] sm:$0xf]
      %v157 = vld [vmem:[%s127 + $0x54] sm:$0xf]
      %v158 = vld [vmem:[%s127 + $0x58] sm:$0xf]
      %v159 = vld [vmem:[%s127 + $0x5c] sm:$0xf]
      %v160 = vld [vmem:[%s127 + $0x60] sm:$0xf]
      %v161 = vld [vmem:[%s127 + $0x64] sm:$0xf]
      %v162 = vld [vmem:[%s127 + $0x68] sm:$0xf]
      %v163 = vld [vmem:[%s127 + $0x6c] sm:$0xf]
      %v164 = vld [vmem:[%s127 + $0x70] sm:$0xf]
      %v165 = vld [vmem:[%s127 + $0x74] sm:$0xf]
      %v166 = vld [vmem:[%s127 + $0x78] sm:$0xf]
      %v167 = vld [vmem:[%s127 + $0x7c] sm:$0xf]
      %v168 = vld [vmem:[%s127 + $0x80] sm:$0xf]
      %v169 = vld [vmem:[%s127 + $0x84] sm:$0xf]
      %v170 = vld [vmem:[%s127 + $0x88] sm:$0xf]
      %v171 = vld [vmem:[%s127 + $0x8c] sm:$0xf]
      %v172 = vld [vmem:[%s127 + $0x90] sm:$0xf]
      %v173 = vld [vmem:[%s127 + $0x94] sm:$0xf]
      %v174 = vld [vmem:[%s127 + $0x98] sm:$0xf]
      %v175 = vld [vmem:[%s127 + $0x9c] sm:$0xf]
      %v176 = vld [vmem:[%s127 + $0xa0] sm:$0xf]
      %v177 = vld [vmem:[%s127 + $0xa4] sm:$0xf]
      %v178 = vld [vmem:[%s127 + $0xa8] sm:$0xf]
      %v179 = vld [vmem:[%s127 + $0xac] sm:$0xf]
      %v180 = vld [vmem:[%s127 + $0xb0] sm:$0xf]
      %v181 = vld [vmem:[%s127 + $0xb4] sm:$0xf]
      %v182 = vld [vmem:[%s127 + $0xb8] sm:$0xf]
      %v183 = vld [vmem:[%s127 + $0xbc] sm:$0xf]
      %v184 = vld [vmem:[%s127 + $0xc0] sm:$0xf]
      %v185 = vld [vmem:[%s127 + $0xc4] sm:$0xf]
      %v186 = vld [vmem:[%s127 + $0xc8] sm:$0xf]
      %v187 = vld [vmem:[%s127 + $0xcc] sm:$0xf]
      %v188 = vld [vmem:[%s127 + $0xd0] sm:$0xf]
      %v189 = vld [vmem:[%s127 + $0xd4] sm:$0xf]
      %v190 = vld [vmem:[%s127 + $0xd8] sm:$0xf]
      %v191 = vld [vmem:[%s127 + $0xdc] sm:$0xf]
      %v192 = vld [vmem:[%s127 + $0xe0] sm:$0xf]
      %v193 = vld [vmem:[%s127 + $0xe4] sm:$0xf]
      %v194 = vld [vmem:[%s127 + $0xe8] sm:$0xf]
      %v195 = vld [vmem:[%s127 + $0xec] sm:$0xf]
      %v196 = vld [vmem:[%s127 + $0xf0] sm:$0xf]
      %v197 = vld [vmem:[%s127 + $0xf4] sm:$0xf]
      %v198 = vld [vmem:[%s127 + $0xf8] sm:$0xf]
      %v199 = vld [vmem:[%s127 + $0xfc] sm:$0xf]
      %v200 = vunpack.c.l.bf16 %v136
      %v201 = vunpack.c.l.bf16 %v137
      %v202 = vunpack.c.l.bf16 %v138
      %v203 = vunpack.c.l.bf16 %v139
      %v204 = vunpack.c.l.bf16 %v140
      %v205 = vunpack.c.l.bf16 %v141
      %v206 = vunpack.c.l.bf16 %v142
      %v207 = vunpack.c.l.bf16 %v143
      %v208 = vunpack.c.l.bf16 %v144
      %v209 = vunpack.c.l.bf16 %v145
      %v210 = vunpack.c.l.bf16 %v146
      %v211 = vunpack.c.l.bf16 %v147
      %v212 = vunpack.c.l.bf16 %v148
      %v213 = vunpack.c.l.bf16 %v149
      %v214 = vunpack.c.l.bf16 %v150
      %v215 = vunpack.c.l.bf16 %v151
      %v216 = vunpack.c.l.bf16 %v152
      %v217 = vunpack.c.l.bf16 %v153
      %v218 = vunpack.c.l.bf16 %v154
      %v219 = vunpack.c.l.bf16 %v155
      %v220 = vunpack.c.l.bf16 %v156
      %v221 = vunpack.c.l.bf16 %v157
      %v222 = vunpack.c.l.bf16 %v158
      %v223 = vunpack.c.l.bf16 %v159
      %v224 = vunpack.c.l.bf16 %v160
      %v225 = vunpack.c.l.bf16 %v161
      %v226 = vunpack.c.l.bf16 %v162
      %v227 = vunpack.c.l.bf16 %v163
      %v228 = vunpack.c.l.bf16 %v164
      %v229 = vunpack.c.l.bf16 %v165
      %v230 = vunpack.c.l.bf16 %v166
      %v231 = vunpack.c.l.bf16 %v167
      %v232 = vunpack.c.l.bf16 %v168
      %v233 = vunpack.c.l.bf16 %v169
      %v234 = vunpack.c.l.bf16 %v170
      %v235 = vunpack.c.l.bf16 %v171
      %v236 = vunpack.c.l.bf16 %v172
      %v237 = vunpack.c.l.bf16 %v173
      %v238 = vunpack.c.l.bf16 %v174
      %v239 = vunpack.c.l.bf16 %v175
      %v240 = vunpack.c.l.bf16 %v176
      %v241 = vunpack.c.l.bf16 %v177
      %v242 = vunpack.c.l.bf16 %v178
      %v243 = vunpack.c.l.bf16 %v179
      %v244 = vunpack.c.l.bf16 %v180
      %v245 = vunpack.c.l.bf16 %v181
      %v246 = vunpack.c.l.bf16 %v182
      %v247 = vunpack.c.l.bf16 %v183
      %v248 = vunpack.c.l.bf16 %v184
      %v249 = vunpack.c.l.bf16 %v185
      %v250 = vunpack.c.l.bf16 %v186
      %v251 = vunpack.c.l.bf16 %v187
      %v252 = vunpack.c.l.bf16 %v188
      %v253 = vunpack.c.l.bf16 %v189
      %v254 = vunpack.c.l.bf16 %v190
      %v255 = vunpack.c.l.bf16 %v191
      %v256 = vunpack.c.l.bf16 %v192
      %v257 = vunpack.c.l.bf16 %v193
      %v258 = vunpack.c.l.bf16 %v194
      %v259 = vunpack.c.l.bf16 %v195
      %v260 = vunpack.c.l.bf16 %v196
      %v261 = vunpack.c.l.bf16 %v197
      %v262 = vunpack.c.l.bf16 %v198
      %v263 = vunpack.c.l.bf16 %v199
      %v264 = vld [vmem:[%s1] sm:$0x1]
      %vm265 = vcmask 64512
      %v266 = vsel %vm265, %v200, 0.0
      %v267 = vsel %vm265, %v201, 0.0
      %v268 = vadd.f32 %v266, %v267
      %v269 = vsel %vm265, %v202, 0.0
      %v270 = vadd.f32 %v268, %v269
      %v271 = vsel %vm265, %v203, 0.0
      %v272 = vadd.f32 %v270, %v271
      %v273 = vsel %vm265, %v204, 0.0
      %v274 = vadd.f32 %v272, %v273
      %v275 = vsel %vm265, %v205, 0.0
      %v276 = vadd.f32 %v274, %v275
      %v277 = vsel %vm265, %v206, 0.0
      %v278 = vadd.f32 %v276, %v277
      %v279 = vsel %vm265, %v207, 0.0
      %v280 = vadd.f32 %v278, %v279
      %v281 = vsel %vm265, %v208, 0.0
      %v282 = vadd.f32 %v280, %v281
      %v283 = vsel %vm265, %v209, 0.0
      %v284 = vadd.f32 %v282, %v283
      %v285 = vsel %vm265, %v210, 0.0
      %v286 = vadd.f32 %v284, %v285
      %v287 = vsel %vm265, %v211, 0.0
      %v288 = vadd.f32 %v286, %v287
      %v289 = vsel %vm265, %v212, 0.0
      %v290 = vadd.f32 %v288, %v289
      %v291 = vsel %vm265, %v213, 0.0
      %v292 = vadd.f32 %v290, %v291
      %v293 = vsel %vm265, %v214, 0.0
      %v294 = vadd.f32 %v292, %v293
      %v295 = vsel %vm265, %v215, 0.0
      %v296 = vadd.f32 %v294, %v295
      %v297 = vsel %vm265, %v216, 0.0
      %v298 = vadd.f32 %v296, %v297
      %v299 = vsel %vm265, %v217, 0.0
      %v300 = vadd.f32 %v298, %v299
      %v301 = vsel %vm265, %v218, 0.0
      %v302 = vadd.f32 %v300, %v301
      %v303 = vsel %vm265, %v219, 0.0
      %v304 = vadd.f32 %v302, %v303
      %v305 = vsel %vm265, %v220, 0.0
      %v306 = vadd.f32 %v304, %v305
      %v307 = vsel %vm265, %v221, 0.0
      %v308 = vadd.f32 %v306, %v307
      %v309 = vsel %vm265, %v222, 0.0
      %v310 = vadd.f32 %v308, %v309
      %v311 = vsel %vm265, %v223, 0.0
      %v312 = vadd.f32 %v310, %v311
      %v313 = vsel %vm265, %v224, 0.0
      %v314 = vadd.f32 %v312, %v313
      %v315 = vsel %vm265, %v225, 0.0
      %v316 = vadd.f32 %v314, %v315
      %v317 = vsel %vm265, %v226, 0.0
      %v318 = vadd.f32 %v316, %v317
      %v319 = vsel %vm265, %v227, 0.0
      %v320 = vadd.f32 %v318, %v319
      %v321 = vsel %vm265, %v228, 0.0
      %v322 = vadd.f32 %v320, %v321
      %v323 = vsel %vm265, %v229, 0.0
      %v324 = vadd.f32 %v322, %v323
      %v325 = vsel %vm265, %v230, 0.0
      %v326 = vadd.f32 %v324, %v325
      %v327 = vsel %vm265, %v231, 0.0
      %v328 = vadd.f32 %v326, %v327
      %v329 = vsel %vm265, %v232, 0.0
      %v330 = vadd.f32 %v328, %v329
      %v331 = vsel %vm265, %v233, 0.0
      %v332 = vadd.f32 %v330, %v331
      %v333 = vsel %vm265, %v234, 0.0
      %v334 = vadd.f32 %v332, %v333
      %v335 = vsel %vm265, %v235, 0.0
      %v336 = vadd.f32 %v334, %v335
      %v337 = vsel %vm265, %v236, 0.0
      %v338 = vadd.f32 %v336, %v337
      %v339 = vsel %vm265, %v237, 0.0
      %v340 = vadd.f32 %v338, %v339
      %v341 = vsel %vm265, %v238, 0.0
      %v342 = vadd.f32 %v340, %v341
      %v343 = vsel %vm265, %v239, 0.0
      %v344 = vadd.f32 %v342, %v343
      %v345 = vsel %vm265, %v240, 0.0
      %v346 = vadd.f32 %v344, %v345
      %v347 = vsel %vm265, %v241, 0.0
      %v348 = vadd.f32 %v346, %v347
      %v349 = vsel %vm265, %v242, 0.0
      %v350 = vadd.f32 %v348, %v349
      %v351 = vsel %vm265, %v243, 0.0
      %v352 = vadd.f32 %v350, %v351
      %v353 = vsel %vm265, %v244, 0.0
      %v354 = vadd.f32 %v352, %v353
      %v355 = vsel %vm265, %v245, 0.0
      %v356 = vadd.f32 %v354, %v355
      %v357 = vsel %vm265, %v246, 0.0
      %v358 = vadd.f32 %v356, %v357
      %v359 = vsel %vm265, %v247, 0.0
      %v360 = vadd.f32 %v358, %v359
      %v361 = vsel %vm265, %v248, 0.0
      %v362 = vadd.f32 %v360, %v361
      %v363 = vsel %vm265, %v249, 0.0
      %v364 = vadd.f32 %v362, %v363
      %v365 = vsel %vm265, %v250, 0.0
      %v366 = vadd.f32 %v364, %v365
      %v367 = vsel %vm265, %v251, 0.0
      %v368 = vadd.f32 %v366, %v367
      %v369 = vsel %vm265, %v252, 0.0
      %v370 = vadd.f32 %v368, %v369
      %v371 = vsel %vm265, %v253, 0.0
      %v372 = vadd.f32 %v370, %v371
      %v373 = vsel %vm265, %v254, 0.0
      %v374 = vadd.f32 %v372, %v373
      %v375 = vsel %vm265, %v255, 0.0
      %v376 = vadd.f32 %v374, %v375
      %v377 = vsel %vm265, %v256, 0.0
      %v378 = vadd.f32 %v376, %v377
      %v379 = vsel %vm265, %v257, 0.0
      %v380 = vadd.f32 %v378, %v379
      %v381 = vsel %vm265, %v258, 0.0
      %v382 = vadd.f32 %v380, %v381
      %v383 = vsel %vm265, %v259, 0.0
      %v384 = vadd.f32 %v382, %v383
      %v385 = vsel %vm265, %v260, 0.0
      %v386 = vadd.f32 %v384, %v385
      %v387 = vsel %vm265, %v261, 0.0
      %v388 = vadd.f32 %v386, %v387
      %v389 = vsel %vm265, %v262, 0.0
      %v390 = vadd.f32 %v388, %v389
      %v391 = vsel %vm265, %v263, 0.0
      %v392 = vadd.f32 %v390, %v391
      %v393 = vrot.slane %v392, 4
      %v394 = vadd.f32 %v392, %v393
      %v395 = vrot.slane %v394, 2
      %v396 = vadd.f32 %v394, %v395
      %v397 = vrot.slane %v396, 1
      %v398 = vadd.f32 %v396, %v397
      %v399 = vadd.f32 %v264, %v398
      %vm400 = vcmask 57344
      %401 = vst.msk [vmem:[%s1] sm:$0x1] %vm400, %v399
      %v402 = vld [vmem:[%s2] sm:$0x1]
      %v403 = vmul.f32 %v200, %v200
      %v404 = vmul.f32 %v201, %v201
      %v405 = vmul.f32 %v202, %v202
      %v406 = vmul.f32 %v203, %v203
      %v407 = vmul.f32 %v204, %v204
      %v408 = vmul.f32 %v205, %v205
      %v409 = vmul.f32 %v206, %v206
      %v410 = vmul.f32 %v207, %v207
      %v411 = vmul.f32 %v208, %v208
      %v412 = vmul.f32 %v209, %v209
      %v413 = vmul.f32 %v210, %v210
      %v414 = vmul.f32 %v211, %v211
      %v415 = vmul.f32 %v212, %v212
      %v416 = vmul.f32 %v213, %v213
      %v417 = vmul.f32 %v214, %v214
      %v418 = vmul.f32 %v215, %v215
      %v419 = vmul.f32 %v216, %v216
      %v420 = vmul.f32 %v217, %v217
      %v421 = vmul.f32 %v218, %v218
      %v422 = vmul.f32 %v219, %v219
      %v423 = vmul.f32 %v220, %v220
      %v424 = vmul.f32 %v221, %v221
      %v425 = vmul.f32 %v222, %v222
      %v426 = vmul.f32 %v223, %v223
      %v427 = vmul.f32 %v224, %v224
      %v428 = vmul.f32 %v225, %v225
      %v429 = vmul.f32 %v226, %v226
      %v430 = vmul.f32 %v227, %v227
      %v431 = vmul.f32 %v228, %v228
      %v432 = vmul.f32 %v229, %v229
      %v433 = vmul.f32 %v230, %v230
      %v434 = vmul.f32 %v231, %v231
      %v435 = vmul.f32 %v232, %v232
      %v436 = vmul.f32 %v233, %v233
      %v437 = vmul.f32 %v234, %v234
      %v438 = vmul.f32 %v235, %v235
      %v439 = vmul.f32 %v236, %v236
      %v440 = vmul.f32 %v237, %v237
      %v441 = vmul.f32 %v238, %v238
      %v442 = vmul.f32 %v239, %v239
      %v443 = vmul.f32 %v240, %v240
      %v444 = vmul.f32 %v241, %v241
      %v445 = vmul.f32 %v242, %v242
      %v446 = vmul.f32 %v243, %v243
      %v447 = vmul.f32 %v244, %v244
      %v448 = vmul.f32 %v245, %v245
      %v449 = vmul.f32 %v246, %v246
      %v450 = vmul.f32 %v247, %v247
      %v451 = vmul.f32 %v248, %v248
      %v452 = vmul.f32 %v249, %v249
      %v453 = vmul.f32 %v250, %v250
      %v454 = vmul.f32 %v251, %v251
      %v455 = vmul.f32 %v252, %v252
      %v456 = vmul.f32 %v253, %v253
      %v457 = vmul.f32 %v254, %v254
      %v458 = vmul.f32 %v255, %v255
      %v459 = vmul.f32 %v256, %v256
      %v460 = vmul.f32 %v257, %v257
      %v461 = vmul.f32 %v258, %v258
      %v462 = vmul.f32 %v259, %v259
      %v463 = vmul.f32 %v260, %v260
      %v464 = vmul.f32 %v261, %v261
      %v465 = vmul.f32 %v262, %v262
      %v466 = vmul.f32 %v263, %v263
      %v467 = vsel %vm265, %v403, 0.0
      %v468 = vsel %vm265, %v404, 0.0
      %v469 = vadd.f32 %v467, %v468
      %v470 = vsel %vm265, %v405, 0.0
      %v471 = vadd.f32 %v469, %v470
      %v472 = vsel %vm265, %v406, 0.0
      %v473 = vadd.f32 %v471, %v472
      %v474 = vsel %vm265, %v407, 0.0
      %v475 = vadd.f32 %v473, %v474
      %v476 = vsel %vm265, %v408, 0.0
      %v477 = vadd.f32 %v475, %v476
      %v478 = vsel %vm265, %v409, 0.0
      %v479 = vadd.f32 %v477, %v478
      %v480 = vsel %vm265, %v410, 0.0
      %v481 = vadd.f32 %v479, %v480
      %v482 = vsel %vm265, %v411, 0.0
      %v483 = vadd.f32 %v481, %v482
      %v484 = vsel %vm265, %v412, 0.0
      %v485 = vadd.f32 %v483, %v484
      %v486 = vsel %vm265, %v413, 0.0
      %v487 = vadd.f32 %v485, %v486
      %v488 = vsel %vm265, %v414, 0.0
      %v489 = vadd.f32 %v487, %v488
      %v490 = vsel %vm265, %v415, 0.0
      %v491 = vadd.f32 %v489, %v490
      %v492 = vsel %vm265, %v416, 0.0
      %v493 = vadd.f32 %v491, %v492
      %v494 = vsel %vm265, %v417, 0.0
      %v495 = vadd.f32 %v493, %v494
      %v496 = vsel %vm265, %v418, 0.0
      %v497 = vadd.f32 %v495, %v496
      %v498 = vsel %vm265, %v419, 0.0
      %v499 = vadd.f32 %v497, %v498
      %v500 = vsel %vm265, %v420, 0.0
      %v501 = vadd.f32 %v499, %v500
      %v502 = vsel %vm265, %v421, 0.0
      %v503 = vadd.f32 %v501, %v502
      %v504 = vsel %vm265, %v422, 0.0
      %v505 = vadd.f32 %v503, %v504
      %v506 = vsel %vm265, %v423, 0.0
      %v507 = vadd.f32 %v505, %v506
      %v508 = vsel %vm265, %v424, 0.0
      %v509 = vadd.f32 %v507, %v508
      %v510 = vsel %vm265, %v425, 0.0
      %v511 = vadd.f32 %v509, %v510
      %v512 = vsel %vm265, %v426, 0.0
      %v513 = vadd.f32 %v511, %v512
      %v514 = vsel %vm265, %v427, 0.0
      %v515 = vadd.f32 %v513, %v514
      %v516 = vsel %vm265, %v428, 0.0
      %v517 = vadd.f32 %v515, %v516
      %v518 = vsel %vm265, %v429, 0.0
      %v519 = vadd.f32 %v517, %v518
      %v520 = vsel %vm265, %v430, 0.0
      %v521 = vadd.f32 %v519, %v520
      %v522 = vsel %vm265, %v431, 0.0
      %v523 = vadd.f32 %v521, %v522
      %v524 = vsel %vm265, %v432, 0.0
      %v525 = vadd.f32 %v523, %v524
      %v526 = vsel %vm265, %v433, 0.0
      %v527 = vadd.f32 %v525, %v526
      %v528 = vsel %vm265, %v434, 0.0
      %v529 = vadd.f32 %v527, %v528
      %v530 = vsel %vm265, %v435, 0.0
      %v531 = vadd.f32 %v529, %v530
      %v532 = vsel %vm265, %v436, 0.0
      %v533 = vadd.f32 %v531, %v532
      %v534 = vsel %vm265, %v437, 0.0
      %v535 = vadd.f32 %v533, %v534
      %v536 = vsel %vm265, %v438, 0.0
      %v537 = vadd.f32 %v535, %v536
      %v538 = vsel %vm265, %v439, 0.0
      %v539 = vadd.f32 %v537, %v538
      %v540 = vsel %vm265, %v440, 0.0
      %v541 = vadd.f32 %v539, %v540
      %v542 = vsel %vm265, %v441, 0.0
      %v543 = vadd.f32 %v541, %v542
      %v544 = vsel %vm265, %v442, 0.0
      %v545 = vadd.f32 %v543, %v544
      %v546 = vsel %vm265, %v443, 0.0
      %v547 = vadd.f32 %v545, %v546
      %v548 = vsel %vm265, %v444, 0.0
      %v549 = vadd.f32 %v547, %v548
      %v550 = vsel %vm265, %v445, 0.0
      %v551 = vadd.f32 %v549, %v550
      %v552 = vsel %vm265, %v446, 0.0
      %v553 = vadd.f32 %v551, %v552
      %v554 = vsel %vm265, %v447, 0.0
      %v555 = vadd.f32 %v553, %v554
      %v556 = vsel %vm265, %v448, 0.0
      %v557 = vadd.f32 %v555, %v556
      %v558 = vsel %vm265, %v449, 0.0
      %v559 = vadd.f32 %v557, %v558
      %v560 = vsel %vm265, %v450, 0.0
      %v561 = vadd.f32 %v559, %v560
      %v562 = vsel %vm265, %v451, 0.0
      %v563 = vadd.f32 %v561, %v562
      %v564 = vsel %vm265, %v452, 0.0
      %v565 = vadd.f32 %v563, %v564
      %v566 = vsel %vm265, %v453, 0.0
      %v567 = vadd.f32 %v565, %v566
      %v568 = vsel %vm265, %v454, 0.0
      %v569 = vadd.f32 %v567, %v568
      %v570 = vsel %vm265, %v455, 0.0
      %v571 = vadd.f32 %v569, %v570
      %v572 = vsel %vm265, %v456, 0.0
      %v573 = vadd.f32 %v571, %v572
      %v574 = vsel %vm265, %v457, 0.0
      %v575 = vadd.f32 %v573, %v574
      %v576 = vsel %vm265, %v458, 0.0
      %v577 = vadd.f32 %v575, %v576
      %v578 = vsel %vm265, %v459, 0.0
      %v579 = vadd.f32 %v577, %v578
      %v580 = vsel %vm265, %v460, 0.0
      %v581 = vadd.f32 %v579, %v580
      %v582 = vsel %vm265, %v461, 0.0
      %v583 = vadd.f32 %v581, %v582
      %v584 = vsel %vm265, %v462, 0.0
      %v585 = vadd.f32 %v583, %v584
      %v586 = vsel %vm265, %v463, 0.0
      %v587 = vadd.f32 %v585, %v586
      %v588 = vsel %vm265, %v464, 0.0
      %v589 = vadd.f32 %v587, %v588
      %v590 = vsel %vm265, %v465, 0.0
      %v591 = vadd.f32 %v589, %v590
      %v592 = vsel %vm265, %v466, 0.0
      %v593 = vadd.f32 %v591, %v592
      %v594 = vrot.slane %v593, 4
      %v595 = vadd.f32 %v593, %v594
      %v596 = vrot.slane %v595, 2
      %v597 = vadd.f32 %v595, %v596
      %v598 = vrot.slane %v597, 1
      %v599 = vadd.f32 %v597, %v598
      %v600 = vadd.f32 %v402, %v599
      %601 = vst.msk [vmem:[%s2] sm:$0x1] %vm400, %v600
      // Predicated region
      $region29: #{net3d_forward.33} parent=23 // pred_check
        %p602 = pneg %p53
      $region30: #{net3d_forward.33} parent=23 // pred_check_branch
        %604 = sbr.rel (%p602) target = $region32
      $region31: #{net3d_forward.33} parent=23 // pred_region
        _
      $region32: #{net3d_forward.33} parent=23 // pred_fallthru
        _
      // Predicated region
      $region33: #{net3d_forward.33} parent=23 // pred_check
        %p605 = pneg %p74
      $region34: #{net3d_forward.33} parent=23 // pred_check_branch
        %607 = sbr.rel (%p605) target = $region36
      $region35: #{net3d_forward.33} parent=23 // pred_region
        _
      $region36: #{net3d_forward.33} parent=23 // pred_fallthru
        _
      // Predicated region
      $region37: #{net3d_forward.33} parent=23 // pred_check
        %p608 = pneg %p53
      $region38: #{net3d_forward.33} parent=23 // pred_check_branch
        %610 = sbr.rel (%p608) target = $region40
      $region39: #{net3d_forward.33} parent=23 // pred_region
        _
      $region40: #{net3d_forward.33} parent=23 // pred_fallthru
        _
      // Predicated region
      $region41: #{net3d_forward.33} parent=23 // pred_check
        %p611 = pneg %p74
      $region42: #{net3d_forward.33} parent=23 // pred_check_branch
        %613 = sbr.rel (%p611) target = $region44
      $region43: #{net3d_forward.33} parent=23 // pred_region
        _
      $region44: #{net3d_forward.33} parent=23 // pred_fallthru
        _
    $region24: #{net3d_forward.33} parent=5 // pred_fallthru
      _
    %p614 = scmp.le.s32.totalorder 2, %s9
    // Predicated region
    $region45: #{net3d_forward.33} parent=5 // pred_check
      %p615 = pneg %p614
    $region46: #{net3d_forward.33} parent=5 // pred_check_branch
      %617 = sbr.rel (%p615) target = $region48
    $region47: #{net3d_forward.33} parent=5 // pred_region
      %s618 = ssub.s32 %s9, 2
    $region48: #{net3d_forward.33} parent=5 // pred_fallthru
      _
  $region6: #{net3d_forward.33} parent=0 // loop_footer
    %s13 = sadd.s32 1, %s9
  $region7: #{net3d_forward.33} parent=0 // loop_footer_branch
    %8 = sbr.rel target = $region3
  $region8: #{net3d_forward.33} parent=0 // loop_exit
    _

// kernel: net3d_forward.19
$region0: #{net3d_forward.19}
  #allocation0 [shape = 'u32[]', space=smem, size = 0x4, offset = 0x4, fixed_abs, tag = 'smem constant byte address 0x4 - core index']
  #allocation1 [shape = 'u32[144,128]{1,0:T(1,128)}', space=vmem, size = 0x12000, scoped, tag = 'internal scratch']
  %s0 = inlined_call_operand.vmem [shape: f32[1024,8], index: 0, kind: input, shape index: {}]
  %s1 = inlined_call_operand.vmem [shape: f32[1,8], index: 1, kind: input, shape index: {}]
  %s2 = inlined_call_operand.vmem [shape: f32[1,8], index: 2, kind: input, shape index: {}]
  %s3 = inlined_call_operand.vmem [shape: bf16[1024,8], index: 3, kind: output, shape index: {}]
  %s4 = sld [smem:[#allocation0]]
  $region45: #{net3d_forward.19} parent=0
    _
  %s6 = ssub.s32 1, %s4
  %s7 = scalar_select 0, %s6, %s4
  loop: start=0, step=1, limit=4
  $region2: #{net3d_forward.19} parent=0 // loop_pre_header
    _
  $region3: #{net3d_forward.19} parent=0 // loop_header
    %s9 = sphi 0, %s13
    %p10 = scmp.ge.s32.totalorder %s9, 4
    %s19 = sphi 0, %s21
    %s22 = sphi 0, %s19
    %s23 = sphi 0, %s22
    %s39 = sphi 0, %s23
    %s43 = sphi 0, %s43
    %s45 = sphi 0, %s43
    %s46 = sphi 0, %s45
    %s60 = sphi 0, %s46
    %s64 = sphi 0, %s64
    %s66 = sphi 0, %s64
    %s67 = sphi 0, %s66
    %s81 = sphi 0, %s67
    %s87 = sphi 0, %s89
    %s90 = sphi 0, %s87
    %s91 = sphi 0, %s90
    %s107 = sphi 0, %s91
  $region4: #{net3d_forward.19} parent=0 // loop_header_branch
    %12 = sbr.rel (%p10) target = $region8
  $region5: #{net3d_forward.19} parent=0 // loop_body
    %s14 = ssub.s32 %s9, 1
    %s15 = ssub.s32 %s9, 2
    %s16 = sadd.s32 %s9, 1
    %s17 = ssub.s32 %s9, %s16
    %p18 = scmp.eq.s32.totalorder %s17, 0
    %s20 = sadd.s32 %s19, 1
    %s21 = scalar_select %p18, %s19, %s20
    %p24 = pneg %p18
    %p25 = scmp.eq.s32.totalorder %s9, 1
    %p26 = por %p24, %p25
    %p27 = scmp.ne.s32.totalorder %s19, %s22
    %p28 = scmp.eq.s32.totalorder %s9, 0
    %p29 = por %p27, %p28
    %p30 = scmp.ne.s32.totalorder %s19, %s22
    %p31 = scmp.eq.s32.totalorder %s14, 1
    %p32 = por %p30, %p31
    %p33 = scmp.ne.s32.totalorder %s22, %s23
    %p34 = scmp.eq.s32.totalorder %s14, 0
    %p35 = por %p33, %p34
    %p36 = scmp.ne.s32.totalorder %s22, %s23
    %p37 = scmp.eq.s32.totalorder %s15, 1
    %p38 = por %p36, %p37
    %p40 = scmp.ne.s32.totalorder %s23, %s39
    %p41 = scmp.eq.s32.totalorder %s15, 0
    %p42 = por %p40, %p41
    %s44 = sadd.s32 %s43, 1
    %p47 = scmp.eq.s32.totalorder %s9, 1
    %p48 = scmp.ne.s32.totalorder %s43, %s45
    %p49 = scmp.eq.s32.totalorder %s9, 0
    %p50 = por %p48, %p49
    %p51 = scmp.ne.s32.totalorder %s43, %s45
    %p52 = scmp.eq.s32.totalorder %s14, 1
    %p53 = por %p51, %p52
    %p54 = scmp.ne.s32.totalorder %s45, %s46
    %p55 = scmp.eq.s32.totalorder %s14, 0
    %p56 = por %p54, %p55
    %p57 = scmp.ne.s32.totalorder %s45, %s46
    %p58 = scmp.eq.s32.totalorder %s15, 1
    %p59 = por %p57, %p58
    %p61 = scmp.ne.s32.totalorder %s46, %s60
    %p62 = scmp.eq.s32.totalorder %s15, 0
    %p63 = por %p61, %p62
    %s65 = sadd.s32 %s64, 1
    %p68 = scmp.eq.s32.totalorder %s9, 1
    %p69 = scmp.ne.s32.totalorder %s64, %s66
    %p70 = scmp.eq.s32.totalorder %s9, 0
    %p71 = por %p69, %p70
    %p72 = scmp.ne.s32.totalorder %s64, %s66
    %p73 = scmp.eq.s32.totalorder %s14, 1
    %p74 = por %p72, %p73
    %p75 = scmp.ne.s32.totalorder %s66, %s67
    %p76 = scmp.eq.s32.totalorder %s14, 0
    %p77 = por %p75, %p76
    %p78 = scmp.ne.s32.totalorder %s66, %s67
    %p79 = scmp.eq.s32.totalorder %s15, 1
    %p80 = por %p78, %p79
    %p82 = scmp.ne.s32.totalorder %s67, %s81
    %p83 = scmp.eq.s32.totalorder %s15, 0
    %p84 = por %p82, %p83
    %s85 = ssub.s32 %s9, %s16
    %p86 = scmp.eq.s32.totalorder %s85, 0
    %s88 = sadd.s32 %s87, 1
    %s89 = scalar_select %p86, %s87, %s88
    %p92 = pneg %p86
    %p93 = scmp.eq.s32.totalorder %s9, 1
    %p94 = por %p92, %p93
    %p95 = scmp.ne.s32.totalorder %s87, %s90
    %p96 = scmp.eq.s32.totalorder %s9, 0
    %p97 = por %p95, %p96
    %p98 = scmp.ne.s32.totalorder %s87, %s90
    %p99 = scmp.eq.s32.totalorder %s14, 1
    %p100 = por %p98, %p99
    %p101 = scmp.ne.s32.totalorder %s90, %s91
    %p102 = scmp.eq.s32.totalorder %s14, 0
    %p103 = por %p101, %p102
    %p104 = scmp.ne.s32.totalorder %s90, %s91
    %p105 = scmp.eq.s32.totalorder %s15, 1
    %p106 = por %p104, %p105
    %p108 = scmp.ne.s32.totalorder %s91, %s107
    %p109 = scmp.eq.s32.totalorder %s15, 0
    %p110 = por %p108, %p109
    %p111 = scmp.le.s32.totalorder 1, %s9
    %p112 = scmp.lt.s32.totalorder %s9, 3
    %p113 = pnand %p111, %p112
    %p114 = pneg %p113
    // Predicated region
    $region9: #{net3d_forward.19} parent=5 // pred_check
      _
    $region10: #{net3d_forward.19} parent=5 // pred_check_branch
      %116 = sbr.rel (%p113) target = $region12
    $region11: #{net3d_forward.19} parent=5 // pred_region
      %s117 = ssub.s32 %s9, 1
      // Predicated region
      $region13: #{net3d_forward.19} parent=11 // pred_check
        %p118 = pneg %p56
      $region14: #{net3d_forward.19} parent=11 // pred_check_branch
        %120 = sbr.rel (%p118) target = $region16
      $region15: #{net3d_forward.19} parent=11 // pred_region
        _
      $region16: #{net3d_forward.19} parent=11 // pred_fallthru
        _
      // Predicated region
      $region17: #{net3d_forward.19} parent=11 // pred_check
        %p121 = pneg %p77
      $region18: #{net3d_forward.19} parent=11 // pred_check_branch
        %123 = sbr.rel (%p121) target = $region20
      $region19: #{net3d_forward.19} parent=11 // pred_region
        _
      $region20: #{net3d_forward.19} parent=11 // pred_fallthru
        _
    $region12: #{net3d_forward.19} parent=5 // pred_fallthru
      _
    %p124 = scmp.lt.s32.totalorder %s9, 2
    // Predicated region
    $region21: #{net3d_forward.19} parent=5 // pred_check
      %p125 = pneg %p124
    $region22: #{net3d_forward.19} parent=5 // pred_check_branch
      %127 = sbr.rel (%p125) target = $region24
    $region23: #{net3d_forward.19} parent=5 // pred_region
      // Predicated region
      $region25: #{net3d_forward.19} parent=23 // pred_check
        %p128 = pneg %p29
      $region26: #{net3d_forward.19} parent=23 // pred_check_branch
        %130 = sbr.rel (%p128) target = $region28
      $region27: #{net3d_forward.19} parent=23 // pred_region
        %s131 = smul.u32 64, %s9
        %p132 = scmp.lt.s32.totalorder %s131, 127
        %s133 = scalar_select %p132, %s131, 127
        %s134 = smul.addr %s133, 8
        %s135 = scalar_lea.vmem %s0, %s134
        %s136 = smul.u32 64, %s9
      $region28: #{net3d_forward.19} parent=23 // pred_fallthru
        _
    $region24: #{net3d_forward.19} parent=5 // pred_fallthru
      _
    %p137 = scmp.le.s32.totalorder 1, %s9
    %p138 = scmp.lt.s32.totalorder %s9, 3
    %p139 = pnand %p137, %p138
    %p140 = pneg %p139
    // Predicated region
    $region29: #{net3d_forward.19} parent=5 // pred_check
      _
    $region30: #{net3d_forward.19} parent=5 // pred_check_branch
      %142 = sbr.rel (%p139) target = $region32
    $region31: #{net3d_forward.19} parent=5 // pred_region
      %s143 = ssub.s32 %s9, 1
      %s144 = smul.u32 64, %s14
      %p145 = scmp.lt.s32.totalorder %s144, 127
      %s146 = scalar_select %p145, %s144, 127
      %s147 = smul.addr %s146, 8
      %s148 = scalar_lea.vmem %s0, %s147
      %p149 = pneg %p35
      %p150 = pneg %p32
      %p151 = pneg %p56
      %p152 = pneg %p53
      %p153 = pneg %p77
      %p154 = pneg %p74
      %p155 = pneg %p103
      %p156 = pneg %p100
      %s157 = smul.u32 64, %s14
      %p158 = scmp.lt.s32.totalorder %s157, 127
      %s159 = scalar_select %p158, %s157, 127
      %s160 = smul.addr %s159, 4
      %s161 = scalar_lea.vmem %s3, %s160
      %s162 = smul.u32 64, %s14
      %p163 = scmp.lt.s32.totalorder %s162, 127
      %s164 = scalar_select %p163, %s162, 127
      %s165 = smul.addr %s164, 8
      %s166 = scalar_lea.vmem %s0, %s165
      %s167 = smul.u32 64, %s14
      %s168 = smul.u32 64, %s14
      %p169 = scmp.lt.s32.totalorder %s168, 127
      %s170 = scalar_select %p169, %s168, 127
      %s171 = smul.addr %s170, 4
      %s172 = scalar_lea.vmem %s3, %s171
      %s173 = smul.u32 64, %s14
      %v174 = vld [vmem:[%s166] sm:$0xff]
      %v175 = vld [vmem:[%s166 + $0x8] sm:$0xff]
      %v176 = vld [vmem:[%s166 + $0x10] sm:$0xff]
      %v177 = vld [vmem:[%s166 + $0x18] sm:$0xff]
      %v178 = vld [vmem:[%s166 + $0x20] sm:$0xff]
      %v179 = vld [vmem:[%s166 + $0x28] sm:$0xff]
      %v180 = vld [vmem:[%s166 + $0x30] sm:$0xff]
      %v181 = vld [vmem:[%s166 + $0x38] sm:$0xff]
      %v182 = vld [vmem:[%s166 + $0x40] sm:$0xff]
      %v183 = vld [vmem:[%s166 + $0x48] sm:$0xff]
      %v184 = vld [vmem:[%s166 + $0x50] sm:$0xff]
      %v185 = vld [vmem:[%s166 + $0x58] sm:$0xff]
      %v186 = vld [vmem:[%s166 + $0x60] sm:$0xff]
      %v187 = vld [vmem:[%s166 + $0x68] sm:$0xff]
      %v188 = vld [vmem:[%s166 + $0x70] sm:$0xff]
      %v189 = vld [vmem:[%s166 + $0x78] sm:$0xff]
      %v190 = vld [vmem:[%s166 + $0x80] sm:$0xff]
      %v191 = vld [vmem:[%s166 + $0x88] sm:$0xff]
      %v192 = vld [vmem:[%s166 + $0x90] sm:$0xff]
      %v193 = vld [vmem:[%s166 + $0x98] sm:$0xff]
      %v194 = vld [vmem:[%s166 + $0xa0] sm:$0xff]
      %v195 = vld [vmem:[%s166 + $0xa8] sm:$0xff]
      %v196 = vld [vmem:[%s166 + $0xb0] sm:$0xff]
      %v197 = vld [vmem:[%s166 + $0xb8] sm:$0xff]
      %v198 = vld [vmem:[%s166 + $0xc0] sm:$0xff]
      %v199 = vld [vmem:[%s166 + $0xc8] sm:$0xff]
      %v200 = vld [vmem:[%s166 + $0xd0] sm:$0xff]
      %v201 = vld [vmem:[%s166 + $0xd8] sm:$0xff]
      %v202 = vld [vmem:[%s166 + $0xe0] sm:$0xff]
      %v203 = vld [vmem:[%s166 + $0xe8] sm:$0xff]
      %v204 = vld [vmem:[%s166 + $0xf0] sm:$0xff]
      %v205 = vld [vmem:[%s166 + $0xf8] sm:$0xff]
      %v206 = vld [vmem:[%s166 + $0x100] sm:$0xff]
      %v207 = vld [vmem:[%s166 + $0x108] sm:$0xff]
      %v208 = vld [vmem:[%s166 + $0x110] sm:$0xff]
      %v209 = vld [vmem:[%s166 + $0x118] sm:$0xff]
      %v210 = vld [vmem:[%s166 + $0x120] sm:$0xff]
      %v211 = vld [vmem:[%s166 + $0x128] sm:$0xff]
      %v212 = vld [vmem:[%s166 + $0x130] sm:$0xff]
      %v213 = vld [vmem:[%s166 + $0x138] sm:$0xff]
      %v214 = vld [vmem:[%s166 + $0x140] sm:$0xff]
      %v215 = vld [vmem:[%s166 + $0x148] sm:$0xff]
      %v216 = vld [vmem:[%s166 + $0x150] sm:$0xff]
      %v217 = vld [vmem:[%s166 + $0x158] sm:$0xff]
      %v218 = vld [vmem:[%s166 + $0x160] sm:$0xff]
      %v219 = vld [vmem:[%s166 + $0x168] sm:$0xff]
      %v220 = vld [vmem:[%s166 + $0x170] sm:$0xff]
      %v221 = vld [vmem:[%s166 + $0x178] sm:$0xff]
      %v222 = vld [vmem:[%s166 + $0x180] sm:$0xff]
      %v223 = vld [vmem:[%s166 + $0x188] sm:$0xff]
      %v224 = vld [vmem:[%s166 + $0x190] sm:$0xff]
      %v225 = vld [vmem:[%s166 + $0x198] sm:$0xff]
      %v226 = vld [vmem:[%s166 + $0x1a0] sm:$0xff]
      %v227 = vld [vmem:[%s166 + $0x1a8] sm:$0xff]
      %v228 = vld [vmem:[%s166 + $0x1b0] sm:$0xff]
      %v229 = vld [vmem:[%s166 + $0x1b8] sm:$0xff]
      %v230 = vld [vmem:[%s166 + $0x1c0] sm:$0xff]
      %v231 = vld [vmem:[%s166 + $0x1c8] sm:$0xff]
      %v232 = vld [vmem:[%s166 + $0x1d0] sm:$0xff]
      %v233 = vld [vmem:[%s166 + $0x1d8] sm:$0xff]
      %v234 = vld [vmem:[%s166 + $0x1e0] sm:$0xff]
      %v235 = vld [vmem:[%s166 + $0x1e8] sm:$0xff]
      %v236 = vld [vmem:[%s166 + $0x1f0] sm:$0xff]
      %v237 = vld [vmem:[%s166 + $0x1f8] sm:$0xff]
      %v238 = vld [vmem:[%s1] sm:$0x1]
      %v240 = vlaneseq
      %v241 = vshrl.u32 %v240, 7
      %v242 = vsub.s32 0, %v241
      %v243 = vrot.slane %v238, %v242
      %v245 = vmul.f32 %v174, %v243
      %v246 = vmul.f32 %v175, %v243
      %v247 = vmul.f32 %v176, %v243
      %v248 = vmul.f32 %v177, %v243
      %v249 = vmul.f32 %v178, %v243
      %v250 = vmul.f32 %v179, %v243
      %v251 = vmul.f32 %v180, %v243
      %v252 = vmul.f32 %v181, %v243
      %v253 = vmul.f32 %v182, %v243
      %v254 = vmul.f32 %v183, %v243
      %v255 = vmul.f32 %v184, %v243
      %v256 = vmul.f32 %v185, %v243
      %v257 = vmul.f32 %v186, %v243
      %v258 = vmul.f32 %v187, %v243
      %v259 = vmul.f32 %v188, %v243
      %v260 = vmul.f32 %v189, %v243
      %v261 = vmul.f32 %v190, %v243
      %v262 = vmul.f32 %v191, %v243
      %v263 = vmul.f32 %v192, %v243
      %v264 = vmul.f32 %v193, %v243
      %v265 = vmul.f32 %v194, %v243
      %v266 = vmul.f32 %v195, %v243
      %v267 = vmul.f32 %v196, %v243
      %v268 = vmul.f32 %v197, %v243
      %v269 = vmul.f32 %v198, %v243
      %v270 = vmul.f32 %v199, %v243
      %v271 = vmul.f32 %v200, %v243
      %v272 = vmul.f32 %v201, %v243
      %v273 = vmul.f32 %v202, %v243
      %v274 = vmul.f32 %v203, %v243
      %v275 = vmul.f32 %v204, %v243
      %v276 = vmul.f32 %v205, %v243
      %v277 = vmul.f32 %v206, %v243
      %v278 = vmul.f32 %v207, %v243
      %v279 = vmul.f32 %v208, %v243
      %v280 = vmul.f32 %v209, %v243
      %v281 = vmul.f32 %v210, %v243
      %v282 = vmul.f32 %v211, %v243
      %v283 = vmul.f32 %v212, %v243
      %v284 = vmul.f32 %v213, %v243
      %v285 = vmul.f32 %v214, %v243
      %v286 = vmul.f32 %v215, %v243
      %v287 = vmul.f32 %v216, %v243
      %v288 = vmul.f32 %v217, %v243
      %v289 = vmul.f32 %v218, %v243
      %v290 = vmul.f32 %v219, %v243
      %v291 = vmul.f32 %v220, %v243
      %v292 = vmul.f32 %v221, %v243
      %v293 = vmul.f32 %v222, %v243
      %v294 = vmul.f32 %v223, %v243
      %v295 = vmul.f32 %v224, %v243
      %v296 = vmul.f32 %v225, %v243
      %v297 = vmul.f32 %v226, %v243
      %v298 = vmul.f32 %v227, %v243
      %v299 = vmul.f32 %v228, %v243
      %v300 = vmul.f32 %v229, %v243
      %v301 = vmul.f32 %v230, %v243
      %v302 = vmul.f32 %v231, %v243
      %v303 = vmul.f32 %v232, %v243
      %v304 = vmul.f32 %v233, %v243
      %v305 = vmul.f32 %v234, %v243
      %v306 = vmul.f32 %v235, %v243
      %v307 = vmul.f32 %v236, %v243
      %v308 = vmul.f32 %v237, %v243
      %v309 = vld [vmem:[%s2] sm:$0x1]
      %v311 = vlaneseq
      %v312 = vshrl.u32 %v311, 7
      %v313 = vsub.s32 0, %v312
      %v314 = vrot.slane %v309, %v313
      %v316 = vadd.f32 %v245, %v314
      %v317 = vadd.f32 %v246, %v314
      %v318 = vadd.f32 %v247, %v314
      %v319 = vadd.f32 %v248, %v314
      %v320 = vadd.f32 %v249, %v314
      %v321 = vadd.f32 %v250, %v314
      %v322 = vadd.f32 %v251, %v314
      %v323 = vadd.f32 %v252, %v314
      %v324 = vadd.f32 %v253, %v314
      %v325 = vadd.f32 %v254, %v314
      %v326 = vadd.f32 %v255, %v314
      %v327 = vadd.f32 %v256, %v314
      %v328 = vadd.f32 %v257, %v314
      %v329 = vadd.f32 %v258, %v314
      %v330 = vadd.f32 %v259, %v314
      %v331 = vadd.f32 %v260, %v314
      %v332 = vadd.f32 %v261, %v314
      %v333 = vadd.f32 %v262, %v314
      %v334 = vadd.f32 %v263, %v314
      %v335 = vadd.f32 %v264, %v314
      %v336 = vadd.f32 %v265, %v314
      %v337 = vadd.f32 %v266, %v314
      %v338 = vadd.f32 %v267, %v314
      %v339 = vadd.f32 %v268, %v314
      %v340 = vadd.f32 %v269, %v314
      %v341 = vadd.f32 %v270, %v314
      %v342 = vadd.f32 %v271, %v314
      %v343 = vadd.f32 %v272, %v314
      %v344 = vadd.f32 %v273, %v314
      %v345 = vadd.f32 %v274, %v314
      %v346 = vadd.f32 %v275, %v314
      %v347 = vadd.f32 %v276, %v314
      %v348 = vadd.f32 %v277, %v314
      %v349 = vadd.f32 %v278, %v314
      %v350 = vadd.f32 %v279, %v314
      %v351 = vadd.f32 %v280, %v314
      %v352 = vadd.f32 %v281, %v314
      %v353 = vadd.f32 %v282, %v314
      %v354 = vadd.f32 %v283, %v314
      %v355 = vadd.f32 %v284, %v314
      %v356 = vadd.f32 %v285, %v314
      %v357 = vadd.f32 %v286, %v314
      %v358 = vadd.f32 %v287, %v314
      %v359 = vadd.f32 %v288, %v314
      %v360 = vadd.f32 %v289, %v314
      %v361 = vadd.f32 %v290, %v314
      %v362 = vadd.f32 %v291, %v314
      %v363 = vadd.f32 %v292, %v314
      %v364 = vadd.f32 %v293, %v314
      %v365 = vadd.f32 %v294, %v314
      %v366 = vadd.f32 %v295, %v314
      %v367 = vadd.f32 %v296, %v314
      %v368 = vadd.f32 %v297, %v314
      %v369 = vadd.f32 %v298, %v314
      %v370 = vadd.f32 %v299, %v314
      %v371 = vadd.f32 %v300, %v314
      %v372 = vadd.f32 %v301, %v314
      %v373 = vadd.f32 %v302, %v314
      %v374 = vadd.f32 %v303, %v314
      %v375 = vadd.f32 %v304, %v314
      %v376 = vadd.f32 %v305, %v314
      %v377 = vadd.f32 %v306, %v314
      %v378 = vadd.f32 %v307, %v314
      %v379 = vadd.f32 %v308, %v314
      %v380 = vpack.c.bf16 %v317, %v316
      %v381 = vpack.c.bf16 %v319, %v318
      %v382 = vpack.c.bf16 %v321, %v320
      %v383 = vpack.c.bf16 %v323, %v322
      %v384 = vpack.c.bf16 %v325, %v324
      %v385 = vpack.c.bf16 %v327, %v326
      %v386 = vpack.c.bf16 %v329, %v328
      %v387 = vpack.c.bf16 %v331, %v330
      %v388 = vpack.c.bf16 %v333, %v332
      %v389 = vpack.c.bf16 %v335, %v334
      %v390 = vpack.c.bf16 %v337, %v336
      %v391 = vpack.c.bf16 %v339, %v338
      %v392 = vpack.c.bf16 %v341, %v340
      %v393 = vpack.c.bf16 %v343, %v342
      %v394 = vpack.c.bf16 %v345, %v344
      %v395 = vpack.c.bf16 %v347, %v346
      %v396 = vpack.c.bf16 %v349, %v348
      %v397 = vpack.c.bf16 %v351, %v350
      %v398 = vpack.c.bf16 %v353, %v352
      %v399 = vpack.c.bf16 %v355, %v354
      %v400 = vpack.c.bf16 %v357, %v356
      %v401 = vpack.c.bf16 %v359, %v358
      %v402 = vpack.c.bf16 %v361, %v360
      %v403 = vpack.c.bf16 %v363, %v362
      %v404 = vpack.c.bf16 %v365, %v364
      %v405 = vpack.c.bf16 %v367, %v366
      %v406 = vpack.c.bf16 %v369, %v368
      %v407 = vpack.c.bf16 %v371, %v370
      %v408 = vpack.c.bf16 %v373, %v372
      %v409 = vpack.c.bf16 %v375, %v374
      %v410 = vpack.c.bf16 %v377, %v376
      %v411 = vpack.c.bf16 %v379, %v378
      %v444 = vunpack.c.l.b16 %v380
      %v445 = vunpack.c.h.b16 %v380
      %v446 = vunpack.c.l.b16 %v381
      %v447 = vunpack.c.h.b16 %v381
      %v448 = vunpack.c.l.b16 %v382
      %v449 = vunpack.c.h.b16 %v382
      %v450 = vunpack.c.l.b16 %v383
      %v451 = vunpack.c.h.b16 %v383
      %v452 = vunpack.c.l.b16 %v384
      %v453 = vunpack.c.h.b16 %v384
      %v454 = vunpack.c.l.b16 %v385
      %v455 = vunpack.c.h.b16 %v385
      %v456 = vunpack.c.l.b16 %v386
      %v457 = vunpack.c.h.b16 %v386
      %v458 = vunpack.c.l.b16 %v387
      %v459 = vunpack.c.h.b16 %v387
      %v460 = vunpack.c.l.b16 %v388
      %v461 = vunpack.c.h.b16 %v388
      %v462 = vunpack.c.l.b16 %v389
      %v463 = vunpack.c.h.b16 %v389
      %v464 = vunpack.c.l.b16 %v390
      %v465 = vunpack.c.h.b16 %v390
      %v466 = vunpack.c.l.b16 %v391
      %v467 = vunpack.c.h.b16 %v391
      %v468 = vunpack.c.l.b16 %v392
      %v469 = vunpack.c.h.b16 %v392
      %v470 = vunpack.c.l.b16 %v393
      %v471 = vunpack.c.h.b16 %v393
      %v472 = vunpack.c.l.b16 %v394
      %v473 = vunpack.c.h.b16 %v394
      %v474 = vunpack.c.l.b16 %v395
      %v475 = vunpack.c.h.b16 %v395
      %v476 = vunpack.c.l.b16 %v396
      %v477 = vunpack.c.h.b16 %v396
      %v478 = vunpack.c.l.b16 %v397
      %v479 = vunpack.c.h.b16 %v397
      %v480 = vunpack.c.l.b16 %v398
      %v481 = vunpack.c.h.b16 %v398
      %v482 = vunpack.c.l.b16 %v399
      %v483 = vunpack.c.h.b16 %v399
      %v484 = vunpack.c.l.b16 %v400
      %v485 = vunpack.c.h.b16 %v400
      %v486 = vunpack.c.l.b16 %v401
      %v487 = vunpack.c.h.b16 %v401
      %v488 = vunpack.c.l.b16 %v402
      %v489 = vunpack.c.h.b16 %v402
      %v490 = vunpack.c.l.b16 %v403
      %v491 = vunpack.c.h.b16 %v403
      %v492 = vunpack.c.l.b16 %v404
      %v493 = vunpack.c.h.b16 %v404
      %v494 = vunpack.c.l.b16 %v405
      %v495 = vunpack.c.h.b16 %v405
      %v496 = vunpack.c.l.b16 %v406
      %v497 = vunpack.c.h.b16 %v406
      %v498 = vunpack.c.l.b16 %v407
      %v499 = vunpack.c.h.b16 %v407
      %v500 = vunpack.c.l.b16 %v408
      %v501 = vunpack.c.h.b16 %v408
      %v502 = vunpack.c.l.b16 %v409
      %v503 = vunpack.c.h.b16 %v409
      %v504 = vunpack.c.l.b16 %v410
      %v505 = vunpack.c.h.b16 %v410
      %v506 = vunpack.c.l.b16 %v411
      %v507 = vunpack.c.h.b16 %v411
      %v508 = vpack.c.b16 %v444, %v444
      %v509 = vpack.c.b16 %v445, %v445
      %v510 = vpack.c.b16 %v446, %v446
      %v511 = vpack.c.b16 %v447, %v447
      %v512 = vpack.c.b16 %v448, %v448
      %v513 = vpack.c.b16 %v449, %v449
      %v514 = vpack.c.b16 %v450, %v450
      %v515 = vpack.c.b16 %v451, %v451
      %v516 = vpack.c.b16 %v452, %v452
      %v517 = vpack.c.b16 %v453, %v453
      %v518 = vpack.c.b16 %v454, %v454
      %v519 = vpack.c.b16 %v455, %v455
      %v520 = vpack.c.b16 %v456, %v456
      %v521 = vpack.c.b16 %v457, %v457
      %v522 = vpack.c.b16 %v458, %v458
      %v523 = vpack.c.b16 %v459, %v459
      %v524 = vpack.c.b16 %v460, %v460
      %v525 = vpack.c.b16 %v461, %v461
      %v526 = vpack.c.b16 %v462, %v462
      %v527 = vpack.c.b16 %v463, %v463
      %v528 = vpack.c.b16 %v464, %v464
      %v529 = vpack.c.b16 %v465, %v465
      %v530 = vpack.c.b16 %v466, %v466
      %v531 = vpack.c.b16 %v467, %v467
      %v532 = vpack.c.b16 %v468, %v468
      %v533 = vpack.c.b16 %v469, %v469
      %v534 = vpack.c.b16 %v470, %v470
      %v535 = vpack.c.b16 %v471, %v471
      %v536 = vpack.c.b16 %v472, %v472
      %v537 = vpack.c.b16 %v473, %v473
      %v538 = vpack.c.b16 %v474, %v474
      %v539 = vpack.c.b16 %v475, %v475
      %v540 = vpack.c.b16 %v476, %v476
      %v541 = vpack.c.b16 %v477, %v477
      %v542 = vpack.c.b16 %v478, %v478
      %v543 = vpack.c.b16 %v479, %v479
      %v544 = vpack.c.b16 %v480, %v480
      %v545 = vpack.c.b16 %v481, %v481
      %v546 = vpack.c.b16 %v482, %v482
      %v547 = vpack.c.b16 %v483, %v483
      %v548 = vpack.c.b16 %v484, %v484
      %v549 = vpack.c.b16 %v485, %v485
      %v550 = vpack.c.b16 %v486, %v486
      %v551 = vpack.c.b16 %v487, %v487
      %v552 = vpack.c.b16 %v488, %v488
      %v553 = vpack.c.b16 %v489, %v489
      %v554 = vpack.c.b16 %v490, %v490
      %v555 = vpack.c.b16 %v491, %v491
      %v556 = vpack.c.b16 %v492, %v492
      %v557 = vpack.c.b16 %v493, %v493
      %v558 = vpack.c.b16 %v494, %v494
      %v559 = vpack.c.b16 %v495, %v495
      %v560 = vpack.c.b16 %v496, %v496
      %v561 = vpack.c.b16 %v497, %v497
      %v562 = vpack.c.b16 %v498, %v498
      %v563 = vpack.c.b16 %v499, %v499
      %v564 = vpack.c.b16 %v500, %v500
      %v565 = vpack.c.b16 %v501, %v501
      %v566 = vpack.c.b16 %v502, %v502
      %v567 = vpack.c.b16 %v503, %v503
      %v568 = vpack.c.b16 %v504, %v504
      %v569 = vpack.c.b16 %v505, %v505
      %v570 = vpack.c.b16 %v506, %v506
      %v571 = vpack.c.b16 %v507, %v507
      %vm636 = vcmask 60416
      %637 = vst.msk [vmem:[%s172] sm:$0xf] %vm636, %v508
      %638 = vst.msk [vmem:[%s172 + $0x4] sm:$0xf] %vm636, %v509
      %639 = vst.msk [vmem:[%s172 + $0x8] sm:$0xf] %vm636, %v510
      %640 = vst.msk [vmem:[%s172 + $0xc] sm:$0xf] %vm636, %v511
      %641 = vst.msk [vmem:[%s172 + $0x10] sm:$0xf] %vm636, %v512
      %642 = vst.msk [vmem:[%s172 + $0x14] sm:$0xf] %vm636, %v513
      %643 = vst.msk [vmem:[%s172 + $0x18] sm:$0xf] %vm636, %v514
      %644 = vst.msk [vmem:[%s172 + $0x1c] sm:$0xf] %vm636, %v515
      %645 = vst.msk [vmem:[%s172 + $0x20] sm:$0xf] %vm636, %v516
      %646 = vst.msk [vmem:[%s172 + $0x24] sm:$0xf] %vm636, %v517
      %647 = vst.msk [vmem:[%s172 + $0x28] sm:$0xf] %vm636, %v518
      %648 = vst.msk [vmem:[%s172 + $0x2c] sm:$0xf] %vm636, %v519
      %649 = vst.msk [vmem:[%s172 + $0x30] sm:$0xf] %vm636, %v520
      %650 = vst.msk [vmem:[%s172 + $0x34] sm:$0xf] %vm636, %v521
      %651 = vst.msk [vmem:[%s172 + $0x38] sm:$0xf] %vm636, %v522
      %652 = vst.msk [vmem:[%s172 + $0x3c] sm:$0xf] %vm636, %v523
      %653 = vst.msk [vmem:[%s172 + $0x40] sm:$0xf] %vm636, %v524
      %654 = vst.msk [vmem:[%s172 + $0x44] sm:$0xf] %vm636, %v525
      %655 = vst.msk [vmem:[%s172 + $0x48] sm:$0xf] %vm636, %v526
      %656 = vst.msk [vmem:[%s172 + $0x4c] sm:$0xf] %vm636, %v527
      %657 = vst.msk [vmem:[%s172 + $0x50] sm:$0xf] %vm636, %v528
      %658 = vst.msk [vmem:[%s172 + $0x54] sm:$0xf] %vm636, %v529
      %659 = vst.msk [vmem:[%s172 + $0x58] sm:$0xf] %vm636, %v530
      %660 = vst.msk [vmem:[%s172 + $0x5c] sm:$0xf] %vm636, %v531
      %661 = vst.msk [vmem:[%s172 + $0x60] sm:$0xf] %vm636, %v532
      %662 = vst.msk [vmem:[%s172 + $0x64] sm:$0xf] %vm636, %v533
      %663 = vst.msk [vmem:[%s172 + $0x68] sm:$0xf] %vm636, %v534
      %664 = vst.msk [vmem:[%s172 + $0x6c] sm:$0xf] %vm636, %v535
      %665 = vst.msk [vmem:[%s172 + $0x70] sm:$0xf] %vm636, %v536
      %666 = vst.msk [vmem:[%s172 + $0x74] sm:$0xf] %vm636, %v537
      %667 = vst.msk [vmem:[%s172 + $0x78] sm:$0xf] %vm636, %v538
      %668 = vst.msk [vmem:[%s172 + $0x7c] sm:$0xf] %vm636, %v539
      %669 = vst.msk [vmem:[%s172 + $0x80] sm:$0xf] %vm636, %v540
      %670 = vst.msk [vmem:[%s172 + $0x84] sm:$0xf] %vm636, %v541
      %671 = vst.msk [vmem:[%s172 + $0x88] sm:$0xf] %vm636, %v542
      %672 = vst.msk [vmem:[%s172 + $0x8c] sm:$0xf] %vm636, %v543
      %673 = vst.msk [vmem:[%s172 + $0x90] sm:$0xf] %vm636, %v544
      %674 = vst.msk [vmem:[%s172 + $0x94] sm:$0xf] %vm636, %v545
      %675 = vst.msk [vmem:[%s172 + $0x98] sm:$0xf] %vm636, %v546
      %676 = vst.msk [vmem:[%s172 + $0x9c] sm:$0xf] %vm636, %v547
      %677 = vst.msk [vmem:[%s172 + $0xa0] sm:$0xf] %vm636, %v548
      %678 = vst.msk [vmem:[%s172 + $0xa4] sm:$0xf] %vm636, %v549
      %679 = vst.msk [vmem:[%s172 + $0xa8] sm:$0xf] %vm636, %v550
      %680 = vst.msk [vmem:[%s172 + $0xac] sm:$0xf] %vm636, %v551
      %681 = vst.msk [vmem:[%s172 + $0xb0] sm:$0xf] %vm636, %v552
      %682 = vst.msk [vmem:[%s172 + $0xb4] sm:$0xf] %vm636, %v553
      %683 = vst.msk [vmem:[%s172 + $0xb8] sm:$0xf] %vm636, %v554
      %684 = vst.msk [vmem:[%s172 + $0xbc] sm:$0xf] %vm636, %v555
      %685 = vst.msk [vmem:[%s172 + $0xc0] sm:$0xf] %vm636, %v556
      %686 = vst.msk [vmem:[%s172 + $0xc4] sm:$0xf] %vm636, %v557
      %687 = vst.msk [vmem:[%s172 + $0xc8] sm:$0xf] %vm636, %v558
      %688 = vst.msk [vmem:[%s172 + $0xcc] sm:$0xf] %vm636, %v559
      %689 = vst.msk [vmem:[%s172 + $0xd0] sm:$0xf] %vm636, %v560
      %690 = vst.msk [vmem:[%s172 + $0xd4] sm:$0xf] %vm636, %v561
      %691 = vst.msk [vmem:[%s172 + $0xd8] sm:$0xf] %vm636, %v562
      %692 = vst.msk [vmem:[%s172 + $0xdc] sm:$0xf] %vm636, %v563
      %693 = vst.msk [vmem:[%s172 + $0xe0] sm:$0xf] %vm636, %v564
      %694 = vst.msk [vmem:[%s172 + $0xe4] sm:$0xf] %vm636, %v565
      %695 = vst.msk [vmem:[%s172 + $0xe8] sm:$0xf] %vm636, %v566
      %696 = vst.msk [vmem:[%s172 + $0xec] sm:$0xf] %vm636, %v567
      %697 = vst.msk [vmem:[%s172 + $0xf0] sm:$0xf] %vm636, %v568
      %698 = vst.msk [vmem:[%s172 + $0xf4] sm:$0xf] %vm636, %v569
      %699 = vst.msk [vmem:[%s172 + $0xf8] sm:$0xf] %vm636, %v570
      %700 = vst.msk [vmem:[%s172 + $0xfc] sm:$0xf] %vm636, %v571
      %s701 = smul.u32 64, %s14
      %p702 = scmp.lt.s32.totalorder %s701, 127
      %s703 = scalar_select %p702, %s701, 127
      %s704 = smul.addr %s703, 4
      %s705 = scalar_lea.vmem %s3, %s704
      // Predicated region
      $region33: #{net3d_forward.19} parent=31 // pred_check
        %p706 = pneg %p100
      $region34: #{net3d_forward.19} parent=31 // pred_check_branch
        %708 = sbr.rel (%p706) target = $region36
      $region35: #{net3d_forward.19} parent=31 // pred_region
        %s709 = smul.u32 64, %s14
      $region36: #{net3d_forward.19} parent=31 // pred_fallthru
        _
    $region32: #{net3d_forward.19} parent=5 // pred_fallthru
      _
    %p710 = scmp.le.s32.totalorder 2, %s9
    // Predicated region
    $region37: #{net3d_forward.19} parent=5 // pred_check
      %p711 = pneg %p710
    $region38: #{net3d_forward.19} parent=5 // pred_check_branch
      %713 = sbr.rel (%p711) target = $region40
    $region39: #{net3d_forward.19} parent=5 // pred_region
      %s714 = ssub.s32 %s9, 2
      // Predicated region
      $region41: #{net3d_forward.19} parent=39 // pred_check
        %p715 = pneg %p106
      $region42: #{net3d_forward.19} parent=39 // pred_check_branch
        %717 = sbr.rel (%p715) target = $region44
      $region43: #{net3d_forward.19} parent=39 // pred_region
        %s718 = smul.u32 64, %s15
        %p719 = scmp.lt.s32.totalorder %s718, 127
        %s720 = scalar_select %p719, %s718, 127
        %s721 = smul.addr %s720, 4
        %s722 = scalar_lea.vmem %s3, %s721
      $region44: #{net3d_forward.19} parent=39 // pred_fallthru
        _
    $region40: #{net3d_forward.19} parent=5 // pred_fallthru
      _
  $region6: #{net3d_forward.19} parent=0 // loop_footer
    %s13 = sadd.s32 1, %s9
  $region7: #{net3d_forward.19} parent=0 // loop_footer_branch
    %8 = sbr.rel target = $region3
  $region8: #{net3d_forward.19} parent=0 // loop_exit
    _

// kernel: net3d_forward.20
$region0: #{net3d_forward.20}
  #allocation0 [shape = 'u32[]', space=smem, size = 0x4, offset = 0x4, fixed_abs, tag = 'smem constant byte address 0x4 - core index']
  #allocation1 [shape = 'u32[144,128]{1,0:T(1,128)}', space=vmem, size = 0x12000, scoped, tag = 'internal scratch']
  %s0 = inlined_call_operand.vmem [shape: bf16[128,512], index: 0, kind: input, shape index: {}]
  %s1 = inlined_call_operand.vmem [shape: bf16[512,16], index: 1, kind: input, shape index: {}]
  %s2 = inlined_call_operand.vmem [shape: f32[1,16], index: 2, kind: input, shape index: {}]
  %s3 = inlined_call_operand.vmem [shape: f32[128,16], index: 3, kind: output, shape index: {}]
  %s4 = sld [smem:[#allocation0]]
  $region22: #{net3d_forward.20} parent=0
    _
  %s6 = ssub.s32 1, %s4
  %s7 = scalar_select 0, %s6, %s4
  // Predicated region
  $region2: #{net3d_forward.20} parent=0 // pred_check
    _
  $region3: #{net3d_forward.20} parent=0 // pred_check_branch
    %9 = sbr.rel (0) target = $region5
  $region4: #{net3d_forward.20} parent=0 // pred_region
    _
  $region5: #{net3d_forward.20} parent=0 // pred_fallthru
    _
  // Predicated region
  $region6: #{net3d_forward.20} parent=0 // pred_check
    _
  $region7: #{net3d_forward.20} parent=0 // pred_check_branch
    %11 = sbr.rel (0) target = $region9
  $region8: #{net3d_forward.20} parent=0 // pred_region
    _
  $region9: #{net3d_forward.20} parent=0 // pred_fallthru
    _
  // Predicated region
  $region10: #{net3d_forward.20} parent=0 // pred_check
    _
  $region11: #{net3d_forward.20} parent=0 // pred_check_branch
    %13 = sbr.rel (0) target = $region13
  $region12: #{net3d_forward.20} parent=0 // pred_region
    _
  $region13: #{net3d_forward.20} parent=0 // pred_fallthru
    _
  %v15 = vld [vmem:[%s0] sm:$0xff]
  %v16 = vld [vmem:[%s0 + $0x8] sm:$0xff]
  %v17 = vld [vmem:[%s0 + $0x10] sm:$0xff]
  %v18 = vld [vmem:[%s0 + $0x18] sm:$0xff]
  %v19 = vld [vmem:[%s0 + $0x20] sm:$0xff]
  %v20 = vld [vmem:[%s0 + $0x28] sm:$0xff]
  %v21 = vld [vmem:[%s0 + $0x30] sm:$0xff]
  %v22 = vld [vmem:[%s0 + $0x38] sm:$0xff]
  %v23 = vld [vmem:[%s0 + $0x40] sm:$0xff]
  %v24 = vld [vmem:[%s0 + $0x48] sm:$0xff]
  %v25 = vld [vmem:[%s0 + $0x50] sm:$0xff]
  %v26 = vld [vmem:[%s0 + $0x58] sm:$0xff]
  %v27 = vld [vmem:[%s0 + $0x60] sm:$0xff]
  %v28 = vld [vmem:[%s0 + $0x68] sm:$0xff]
  %v29 = vld [vmem:[%s0 + $0x70] sm:$0xff]
  %v30 = vld [vmem:[%s0 + $0x78] sm:$0xff]
  %v31 = vld [vmem:[%s0 + $0x80] sm:$0xff]
  %v32 = vld [vmem:[%s0 + $0x88] sm:$0xff]
  %v33 = vld [vmem:[%s0 + $0x90] sm:$0xff]
  %v34 = vld [vmem:[%s0 + $0x98] sm:$0xff]
  %v35 = vld [vmem:[%s0 + $0xa0] sm:$0xff]
  %v36 = vld [vmem:[%s0 + $0xa8] sm:$0xff]
  %v37 = vld [vmem:[%s0 + $0xb0] sm:$0xff]
  %v38 = vld [vmem:[%s0 + $0xb8] sm:$0xff]
  %v39 = vld [vmem:[%s0 + $0xc0] sm:$0xff]
  %v40 = vld [vmem:[%s0 + $0xc8] sm:$0xff]
  %v41 = vld [vmem:[%s0 + $0xd0] sm:$0xff]
  %v42 = vld [vmem:[%s0 + $0xd8] sm:$0xff]
  %v43 = vld [vmem:[%s0 + $0xe0] sm:$0xff]
  %v44 = vld [vmem:[%s0 + $0xe8] sm:$0xff]
  %v45 = vld [vmem:[%s0 + $0xf0] sm:$0xff]
  %v46 = vld [vmem:[%s0 + $0xf8] sm:$0xff]
  %v47 = vld [vmem:[%s1] sm:$0xf]
  %v48 = vld [vmem:[%s1 + $0x4] sm:$0xf]
  %v49 = vld [vmem:[%s1 + $0x8] sm:$0xf]
  %v50 = vld [vmem:[%s1 + $0xc] sm:$0xf]
  %v51 = vld [vmem:[%s1 + $0x10] sm:$0xf]
  %v52 = vld [vmem:[%s1 + $0x14] sm:$0xf]
  %v53 = vld [vmem:[%s1 + $0x18] sm:$0xf]
  %v54 = vld [vmem:[%s1 + $0x1c] sm:$0xf]
  %v55 = vld [vmem:[%s1 + $0x20] sm:$0xf]
  %v56 = vld [vmem:[%s1 + $0x24] sm:$0xf]
  %v57 = vld [vmem:[%s1 + $0x28] sm:$0xf]
  %v58 = vld [vmem:[%s1 + $0x2c] sm:$0xf]
  %v59 = vld [vmem:[%s1 + $0x30] sm:$0xf]
  %v60 = vld [vmem:[%s1 + $0x34] sm:$0xf]
  %v61 = vld [vmem:[%s1 + $0x38] sm:$0xf]
  %v62 = vld [vmem:[%s1 + $0x3c] sm:$0xf]
  %v63 = vld [vmem:[%s1 + $0x40] sm:$0xf]
  %v64 = vld [vmem:[%s1 + $0x44] sm:$0xf]
  %v65 = vld [vmem:[%s1 + $0x48] sm:$0xf]
  %v66 = vld [vmem:[%s1 + $0x4c] sm:$0xf]
  %v67 = vld [vmem:[%s1 + $0x50] sm:$0xf]
  %v68 = vld [vmem:[%s1 + $0x54] sm:$0xf]
  %v69 = vld [vmem:[%s1 + $0x58] sm:$0xf]
  %v70 = vld [vmem:[%s1 + $0x5c] sm:$0xf]
  %v71 = vld [vmem:[%s1 + $0x60] sm:$0xf]
  %v72 = vld [vmem:[%s1 + $0x64] sm:$0xf]
  %v73 = vld [vmem:[%s1 + $0x68] sm:$0xf]
  %v74 = vld [vmem:[%s1 + $0x6c] sm:$0xf]
  %v75 = vld [vmem:[%s1 + $0x70] sm:$0xf]
  %v76 = vld [vmem:[%s1 + $0x74] sm:$0xf]
  %v77 = vld [vmem:[%s1 + $0x78] sm:$0xf]
  %v78 = vld [vmem:[%s1 + $0x7c] sm:$0xf]
  %v79 = vld [vmem:[%s1 + $0x80] sm:$0xf]
  %v80 = vld [vmem:[%s1 + $0x84] sm:$0xf]
  %v81 = vld [vmem:[%s1 + $0x88] sm:$0xf]
  %v82 = vld [vmem:[%s1 + $0x8c] sm:$0xf]
  %v83 = vld [vmem:[%s1 + $0x90] sm:$0xf]
  %v84 = vld [vmem:[%s1 + $0x94] sm:$0xf]
  %v85 = vld [vmem:[%s1 + $0x98] sm:$0xf]
  %v86 = vld [vmem:[%s1 + $0x9c] sm:$0xf]
  %v87 = vld [vmem:[%s1 + $0xa0] sm:$0xf]
  %v88 = vld [vmem:[%s1 + $0xa4] sm:$0xf]
  %v89 = vld [vmem:[%s1 + $0xa8] sm:$0xf]
  %v90 = vld [vmem:[%s1 + $0xac] sm:$0xf]
  %v91 = vld [vmem:[%s1 + $0xb0] sm:$0xf]
  %v92 = vld [vmem:[%s1 + $0xb4] sm:$0xf]
  %v93 = vld [vmem:[%s1 + $0xb8] sm:$0xf]
  %v94 = vld [vmem:[%s1 + $0xbc] sm:$0xf]
  %v95 = vld [vmem:[%s1 + $0xc0] sm:$0xf]
  %v96 = vld [vmem:[%s1 + $0xc4] sm:$0xf]
  %v97 = vld [vmem:[%s1 + $0xc8] sm:$0xf]
  %v98 = vld [vmem:[%s1 + $0xcc] sm:$0xf]
  %v99 = vld [vmem:[%s1 + $0xd0] sm:$0xf]
  %v100 = vld [vmem:[%s1 + $0xd4] sm:$0xf]
  %v101 = vld [vmem:[%s1 + $0xd8] sm:$0xf]
  %v102 = vld [vmem:[%s1 + $0xdc] sm:$0xf]
  %v103 = vld [vmem:[%s1 + $0xe0] sm:$0xf]
  %v104 = vld [vmem:[%s1 + $0xe4] sm:$0xf]
  %v105 = vld [vmem:[%s1 + $0xe8] sm:$0xf]
  %v106 = vld [vmem:[%s1 + $0xec] sm:$0xf]
  %v107 = vld [vmem:[%s1 + $0xf0] sm:$0xf]
  %v108 = vld [vmem:[%s1 + $0xf4] sm:$0xf]
  %v109 = vld [vmem:[%s1 + $0xf8] sm:$0xf]
  %v110 = vld [vmem:[%s1 + $0xfc] sm:$0xf]
  %v111 = vld [vmem:[%s2] sm:$0x1]
  %v113 = vlaneseq
  %v114 = vshrl.u32 %v113, 7
  %v115 = vsub.s32 0, %v114
  %v116 = vrot.slane %v111, %v115
  %v150 = vunpack.c.l.b16 %v15
  %v151 = vunpack.c.h.b16 %v15
  %v152 = vunpack.c.l.b16 %v16
  %v153 = vunpack.c.h.b16 %v16
  %v154 = vunpack.c.l.b16 %v17
  %v155 = vunpack.c.h.b16 %v17
  %v156 = vunpack.c.l.b16 %v18
  %v157 = vunpack.c.h.b16 %v18
  %v158 = vunpack.c.l.b16 %v19
  %v159 = vunpack.c.h.b16 %v19
  %v160 = vunpack.c.l.b16 %v20
  %v161 = vunpack.c.h.b16 %v20
  %v162 = vunpack.c.l.b16 %v21
  %v163 = vunpack.c.h.b16 %v21
  %v164 = vunpack.c.l.b16 %v22
  %v165 = vunpack.c.h.b16 %v22
  %v166 = vunpack.c.l.b16 %v23
  %v167 = vunpack.c.h.b16 %v23
  %v168 = vunpack.c.l.b16 %v24
  %v169 = vunpack.c.h.b16 %v24
  %v170 = vunpack.c.l.b16 %v25
  %v171 = vunpack.c.h.b16 %v25
  %v172 = vunpack.c.l.b16 %v26
  %v173 = vunpack.c.h.b16 %v26
  %v174 = vunpack.c.l.b16 %v27
  %v175 = vunpack.c.h.b16 %v27
  %v176 = vunpack.c.l.b16 %v28
  %v177 = vunpack.c.h.b16 %v28
  %v178 = vunpack.c.l.b16 %v29
  %v179 = vunpack.c.h.b16 %v29
  %v180 = vunpack.c.l.b16 %v30
  %v181 = vunpack.c.h.b16 %v30
  %v182 = vunpack.c.l.b16 %v31
  %v183 = vunpack.c.h.b16 %v31
  %v184 = vunpack.c.l.b16 %v32
  %v185 = vunpack.c.h.b16 %v32
  %v186 = vunpack.c.l.b16 %v33
  %v187 = vunpack.c.h.b16 %v33
  %v188 = vunpack.c.l.b16 %v34
  %v189 = vunpack.c.h.b16 %v34
  %v190 = vunpack.c.l.b16 %v35
  %v191 = vunpack.c.h.b16 %v35
  %v192 = vunpack.c.l.b16 %v36
  %v193 = vunpack.c.h.b16 %v36
  %v194 = vunpack.c.l.b16 %v37
  %v195 = vunpack.c.h.b16 %v37
  %v196 = vunpack.c.l.b16 %v38
  %v197 = vunpack.c.h.b16 %v38
  %v198 = vunpack.c.l.b16 %v39
  %v199 = vunpack.c.h.b16 %v39
  %v200 = vunpack.c.l.b16 %v40
  %v201 = vunpack.c.h.b16 %v40
  %v202 = vunpack.c.l.b16 %v41
  %v203 = vunpack.c.h.b16 %v41
  %v204 = vunpack.c.l.b16 %v42
  %v205 = vunpack.c.h.b16 %v42
  %v206 = vunpack.c.l.b16 %v43
  %v207 = vunpack.c.h.b16 %v43
  %v208 = vunpack.c.l.b16 %v44
  %v209 = vunpack.c.h.b16 %v44
  %v210 = vunpack.c.l.b16 %v45
  %v211 = vunpack.c.h.b16 %v45
  %v212 = vunpack.c.l.b16 %v46
  %v213 = vunpack.c.h.b16 %v46
  %v214 = vpack.c.b16 %v154, %v150
  %v215 = vpack.c.b16 %v155, %v151
  %v216 = vpack.c.b16 %v156, %v152
  %v217 = vpack.c.b16 %v157, %v153
  %v218 = vpack.c.b16 %v162, %v158
  %v219 = vpack.c.b16 %v163, %v159
  %v220 = vpack.c.b16 %v164, %v160
  %v221 = vpack.c.b16 %v165, %v161
  %v222 = vpack.c.b16 %v170, %v166
  %v223 = vpack.c.b16 %v171, %v167
  %v224 = vpack.c.b16 %v172, %v168
  %v225 = vpack.c.b16 %v173, %v169
  %v226 = vpack.c.b16 %v178, %v174
  %v227 = vpack.c.b16 %v179, %v175
  %v228 = vpack.c.b16 %v180, %v176
  %v229 = vpack.c.b16 %v181, %v177
  %v230 = vpack.c.b16 %v186, %v182
  %v231 = vpack.c.b16 %v187, %v183
  %v232 = vpack.c.b16 %v188, %v184
  %v233 = vpack.c.b16 %v189, %v185
  %v234 = vpack.c.b16 %v194, %v190
  %v235 = vpack.c.b16 %v195, %v191
  %v236 = vpack.c.b16 %v196, %v192
  %v237 = vpack.c.b16 %v197, %v193
  %v238 = vpack.c.b16 %v202, %v198
  %v239 = vpack.c.b16 %v203, %v199
  %v240 = vpack.c.b16 %v204, %v200
  %v241 = vpack.c.b16 %v205, %v201
  %v242 = vpack.c.b16 %v210, %v206
  %v243 = vpack.c.b16 %v211, %v207
  %v244 = vpack.c.b16 %v212, %v208
  %v245 = vpack.c.b16 %v213, %v209
  %v342 = vunpack.c.l.b16 %v47
  %v343 = vunpack.c.l.b16 %v48
  %v344 = vunpack.c.l.b16 %v49
  %v345 = vunpack.c.l.b16 %v50
  %v346 = vunpack.c.l.b16 %v51
  %v347 = vunpack.c.l.b16 %v52
  %v348 = vunpack.c.l.b16 %v53
  %v349 = vunpack.c.l.b16 %v54
  %v350 = vunpack.c.l.b16 %v55
  %v351 = vunpack.c.l.b16 %v56
  %v352 = vunpack.c.l.b16 %v57
  %v353 = vunpack.c.l.b16 %v58
  %v354 = vunpack.c.l.b16 %v59
  %v355 = vunpack.c.l.b16 %v60
  %v356 = vunpack.c.l.b16 %v61
  %v357 = vunpack.c.l.b16 %v62
  %v358 = vunpack.c.l.b16 %v63
  %v359 = vunpack.c.l.b16 %v64
  %v360 = vunpack.c.l.b16 %v65
  %v361 = vunpack.c.l.b16 %v66
  %v362 = vunpack.c.l.b16 %v67
  %v363 = vunpack.c.l.b16 %v68
  %v364 = vunpack.c.l.b16 %v69
  %v365 = vunpack.c.l.b16 %v70
  %v366 = vunpack.c.l.b16 %v71
  %v367 = vunpack.c.l.b16 %v72
  %v368 = vunpack.c.l.b16 %v73
  %v369 = vunpack.c.l.b16 %v74
  %v370 = vunpack.c.l.b16 %v75
  %v371 = vunpack.c.l.b16 %v76
  %v372 = vunpack.c.l.b16 %v77
  %v373 = vunpack.c.l.b16 %v78
  %v374 = vunpack.c.l.b16 %v79
  %v375 = vunpack.c.l.b16 %v80
  %v376 = vunpack.c.l.b16 %v81
  %v377 = vunpack.c.l.b16 %v82
  %v378 = vunpack.c.l.b16 %v83
  %v379 = vunpack.c.l.b16 %v84
  %v380 = vunpack.c.l.b16 %v85
  %v381 = vunpack.c.l.b16 %v86
  %v382 = vunpack.c.l.b16 %v87
  %v383 = vunpack.c.l.b16 %v88
  %v384 = vunpack.c.l.b16 %v89
  %v385 = vunpack.c.l.b16 %v90
  %v386 = vunpack.c.l.b16 %v91
  %v387 = vunpack.c.l.b16 %v92
  %v388 = vunpack.c.l.b16 %v93
  %v389 = vunpack.c.l.b16 %v94
  %v390 = vunpack.c.l.b16 %v95
  %v391 = vunpack.c.l.b16 %v96
  %v392 = vunpack.c.l.b16 %v97
  %v393 = vunpack.c.l.b16 %v98
  %v394 = vunpack.c.l.b16 %v99
  %v395 = vunpack.c.l.b16 %v100
  %v396 = vunpack.c.l.b16 %v101
  %v397 = vunpack.c.l.b16 %v102
  %v398 = vunpack.c.l.b16 %v103
  %v399 = vunpack.c.l.b16 %v104
  %v400 = vunpack.c.l.b16 %v105
  %v401 = vunpack.c.l.b16 %v106
  %v402 = vunpack.c.l.b16 %v107
  %v403 = vunpack.c.l.b16 %v108
  %v404 = vunpack.c.l.b16 %v109
  %v405 = vunpack.c.l.b16 %v110
  %v406 = vpack.c.b16 %v343, %v342
  %v407 = vpack.c.b16 %v345, %v344
  %v408 = vpack.c.b16 %v347, %v346
  %v409 = vpack.c.b16 %v349, %v348
  %v410 = vpack.c.b16 %v351, %v350
  %v411 = vpack.c.b16 %v353, %v352
  %v412 = vpack.c.b16 %v355, %v354
  %v413 = vpack.c.b16 %v357, %v356
  %v414 = vpack.c.b16 %v359, %v358
  %v415 = vpack.c.b16 %v361, %v360
  %v416 = vpack.c.b16 %v363, %v362
  %v417 = vpack.c.b16 %v365, %v364
  %v418 = vpack.c.b16 %v367, %v366
  %v419 = vpack.c.b16 %v369, %v368
  %v420 = vpack.c.b16 %v371, %v370
  %v421 = vpack.c.b16 %v373, %v372
  %v422 = vpack.c.b16 %v375, %v374
  %v423 = vpack.c.b16 %v377, %v376
  %v424 = vpack.c.b16 %v379, %v378
  %v425 = vpack.c.b16 %v381, %v380
  %v426 = vpack.c.b16 %v383, %v382
  %v427 = vpack.c.b16 %v385, %v384
  %v428 = vpack.c.b16 %v387, %v386
  %v429 = vpack.c.b16 %v389, %v388
  %v430 = vpack.c.b16 %v391, %v390
  %v431 = vpack.c.b16 %v393, %v392
  %v432 = vpack.c.b16 %v395, %v394
  %v433 = vpack.c.b16 %v397, %v396
  %v434 = vpack.c.b16 %v399, %v398
  %v435 = vpack.c.b16 %v401, %v400
  %v436 = vpack.c.b16 %v403, %v402
  %v437 = vpack.c.b16 %v405, %v404
  %470 = vmatprep.subr.bf16.mxu0 0
  %471 = vmatpush1.bf16.msra.mxu0 %v406
  %472 = vmatprep.subr.bf16.mxu0 0
  %473 = vmatpush1.bf16.msra.mxu0 %v407
  %474 = vmatprep.subr.bf16.mxu0 0
  %475 = vmatpush1.bf16.msra.mxu0 %v408
  %476 = vmatprep.subr.bf16.mxu0 0
  %477 = vmatpush1.bf16.msra.mxu0 %v409
  %478 = vmatprep.subr.bf16.mxu0 0
  %479 = vmatpush1.bf16.msra.mxu0 %v410
  %480 = vmatprep.subr.bf16.mxu0 0
  %481 = vmatpush1.bf16.msra.mxu0 %v411
  %482 = vmatprep.subr.bf16.mxu0 0
  %483 = vmatpush1.bf16.msra.mxu0 %v412
  %484 = vmatprep.subr.bf16.mxu0 0
  %485 = vmatpush1.bf16.msra.mxu0 %v413
  %486 = vmatprep.subr.bf16.mxu0 0
  %487 = vmatpush1.bf16.msra.mxu0 %v414
  %488 = vmatprep.subr.bf16.mxu0 0
  %489 = vmatpush1.bf16.msra.mxu0 %v415
  %490 = vmatprep.subr.bf16.mxu0 0
  %491 = vmatpush1.bf16.msra.mxu0 %v416
  %492 = vmatprep.subr.bf16.mxu0 0
  %493 = vmatpush1.bf16.msra.mxu0 %v417
  %494 = vmatprep.subr.bf16.mxu0 0
  %495 = vmatpush1.bf16.msra.mxu0 %v418
  %496 = vmatprep.subr.bf16.mxu0 0
  %497 = vmatpush1.bf16.msra.mxu0 %v419
  %498 = vmatprep.subr.bf16.mxu0 0
  %499 = vmatpush1.bf16.msra.mxu0 %v420
  %500 = vmatprep.subr.bf16.mxu0 0
  %501 = vmatpush1.bf16.msra.mxu0 %v421
  %502 = vmatprep.mubr.bf16.mxu0 %v215
  %503 = vmatmul.mubr.bf16.gmra.mrb[0].mxu0 %v214
  %v504 = vpop.f32.mrb[0].mxu0
  %v505 = vadd.f32 %v116, %v504
  %v506 = vpop.f32.mrb[0].mxu0
  %v507 = vpop.f32.mrb[0].mxu0
  %v508 = vadd.f32 %v116, %v507
  %v509 = vpop.f32.mrb[0].mxu0
  %510 = vmatprep.mubr.bf16.mxu0 %v219
  %511 = vmatmul.mubr.bf16.gmra.mrb[0].mxu0 %v218
  %v512 = vpop.f32.mrb[0].mxu0
  %v513 = vadd.f32 %v116, %v512
  %v514 = vpop.f32.mrb[0].mxu0
  %v515 = vpop.f32.mrb[0].mxu0
  %v516 = vadd.f32 %v116, %v515
  %v517 = vpop.f32.mrb[0].mxu0
  %518 = vmatprep.mubr.bf16.mxu0 %v223
  %519 = vmatmul.mubr.bf16.gmra.mrb[0].mxu0 %v222
  %v520 = vpop.f32.mrb[0].mxu0
  %v521 = vadd.f32 %v116, %v520
  %v522 = vpop.f32.mrb[0].mxu0
  %v523 = vpop.f32.mrb[0].mxu0
  %v524 = vadd.f32 %v116, %v523
  %v525 = vpop.f32.mrb[0].mxu0
  %526 = vmatprep.mubr.bf16.mxu0 %v227
  %527 = vmatmul.mubr.bf16.gmra.mrb[0].mxu0 %v226
  %v528 = vpop.f32.mrb[0].mxu0
  %v529 = vadd.f32 %v116, %v528
  %v530 = vpop.f32.mrb[0].mxu0
  %v531 = vpop.f32.mrb[0].mxu0
  %v532 = vadd.f32 %v116, %v531
  %v533 = vpop.f32.mrb[0].mxu0
  %534 = vmatprep.mubr.bf16.mxu0 %v231
  %535 = vmatmul.mubr.bf16.gmra.mrb[0].mxu0 %v230
  %v536 = vpop.f32.mrb[0].mxu0
  %v537 = vadd.f32 %v116, %v536
  %v538 = vpop.f32.mrb[0].mxu0
  %v539 = vpop.f32.mrb[0].mxu0
  %v540 = vadd.f32 %v116, %v539
  %v541 = vpop.f32.mrb[0].mxu0
  %542 = vmatprep.mubr.bf16.mxu0 %v235
  %543 = vmatmul.mubr.bf16.gmra.mrb[0].mxu0 %v234
  %v544 = vpop.f32.mrb[0].mxu0
  %v545 = vadd.f32 %v116, %v544
  %v546 = vpop.f32.mrb[0].mxu0
  %v547 = vpop.f32.mrb[0].mxu0
  %v548 = vadd.f32 %v116, %v547
  %v549 = vpop.f32.mrb[0].mxu0
  %550 = vmatprep.mubr.bf16.mxu0 %v239
  %551 = vmatmul.mubr.bf16.gmra.mrb[0].mxu0 %v238
  %v552 = vpop.f32.mrb[0].mxu0
  %v553 = vadd.f32 %v116, %v552
  %v554 = vpop.f32.mrb[0].mxu0
  %v555 = vpop.f32.mrb[0].mxu0
  %v556 = vadd.f32 %v116, %v555
  %v557 = vpop.f32.mrb[0].mxu0
  %558 = vmatprep.mubr.bf16.mxu0 %v243
  %559 = vmatmul.mubr.bf16.gmra.mrb[0].mxu0 %v242
  %v560 = vpop.f32.mrb[0].mxu0
  %v561 = vadd.f32 %v116, %v560
  %v562 = vpop.f32.mrb[0].mxu0
  %v563 = vpop.f32.mrb[0].mxu0
  %v564 = vadd.f32 %v116, %v563
  %v565 = vpop.f32.mrb[0].mxu0
  %566 = vdwg.mxu0
  %567 = vmatprep.subr.bf16.mxu0 0
  %568 = vmatpush1.bf16.msra.mxu0 %v422
  %569 = vmatprep.subr.bf16.mxu0 0
  %570 = vmatpush1.bf16.msra.mxu0 %v423
  %571 = vmatprep.subr.bf16.mxu0 0
  %572 = vmatpush1.bf16.msra.mxu0 %v424
  %573 = vmatprep.subr.bf16.mxu0 0
  %574 = vmatpush1.bf16.msra.mxu0 %v425
  %575 = vmatprep.subr.bf16.mxu0 0
  %576 = vmatpush1.bf16.msra.mxu0 %v426
  %577 = vmatprep.subr.bf16.mxu0 0
  %578 = vmatpush1.bf16.msra.mxu0 %v427
  %579 = vmatprep.subr.bf16.mxu0 0
  %580 = vmatpush1.bf16.msra.mxu0 %v428
  %581 = vmatprep.subr.bf16.mxu0 0
  %582 = vmatpush1.bf16.msra.mxu0 %v429
  %583 = vmatprep.subr.bf16.mxu0 0
  %584 = vmatpush1.bf16.msra.mxu0 %v430
  %585 = vmatprep.subr.bf16.mxu0 0
  %586 = vmatpush1.bf16.msra.mxu0 %v431
  %587 = vmatprep.subr.bf16.mxu0 0
  %588 = vmatpush1.bf16.msra.mxu0 %v432
  %589 = vmatprep.subr.bf16.mxu0 0
  %590 = vmatpush1.bf16.msra.mxu0 %v433
  %591 = vmatprep.subr.bf16.mxu0 0
  %592 = vmatpush1.bf16.msra.mxu0 %v434
  %593 = vmatprep.subr.bf16.mxu0 0
  %594 = vmatpush1.bf16.msra.mxu0 %v435
  %595 = vmatprep.subr.bf16.mxu0 0
  %596 = vmatpush1.bf16.msra.mxu0 %v436
  %597 = vmatprep.subr.bf16.mxu0 0
  %598 = vmatpush1.bf16.msra.mxu0 %v437
  %599 = vmatprep.mubr.bf16.mxu0 %v217
  %600 = vmatmul.mubr.bf16.gmra.mrb[0].mxu0 %v216
  %v601 = vpop.f32.mrb[0].mxu0
  %v602 = vadd.f32 %v505, %v601
  %v603 = vpop.f32.mrb[0].mxu0
  %v604 = vpop.f32.mrb[0].mxu0
  %v605 = vadd.f32 %v508, %v604
  %v606 = vpop.f32.mrb[0].mxu0
  %607 = vmatprep.mubr.bf16.mxu0 %v221
  %608 = vmatmul.mubr.bf16.gmra.mrb[0].mxu0 %v220
  %v609 = vpop.f32.mrb[0].mxu0
  %v610 = vadd.f32 %v513, %v609
  %v611 = vpop.f32.mrb[0].mxu0
  %v612 = vpop.f32.mrb[0].mxu0
  %v613 = vadd.f32 %v516, %v612
  %v614 = vpop.f32.mrb[0].mxu0
  %615 = vmatprep.mubr.bf16.mxu0 %v225
  %616 = vmatmul.mubr.bf16.gmra.mrb[0].mxu0 %v224
  %v617 = vpop.f32.mrb[0].mxu0
  %v618 = vadd.f32 %v521, %v617
  %v619 = vpop.f32.mrb[0].mxu0
  %v620 = vpop.f32.mrb[0].mxu0
  %v621 = vadd.f32 %v524, %v620
  %v622 = vpop.f32.mrb[0].mxu0
  %623 = vmatprep.mubr.bf16.mxu0 %v229
  %624 = vmatmul.mubr.bf16.gmra.mrb[0].mxu0 %v228
  %v625 = vpop.f32.mrb[0].mxu0
  %v626 = vadd.f32 %v529, %v625
  %v627 = vpop.f32.mrb[0].mxu0
  %v628 = vpop.f32.mrb[0].mxu0
  %v629 = vadd.f32 %v532, %v628
  %v630 = vpop.f32.mrb[0].mxu0
  %631 = vmatprep.mubr.bf16.mxu0 %v233
  %632 = vmatmul.mubr.bf16.gmra.mrb[0].mxu0 %v232
  %v633 = vpop.f32.mrb[0].mxu0
  %v634 = vadd.f32 %v537, %v633
  %v635 = vpop.f32.mrb[0].mxu0
  %v636 = vpop.f32.mrb[0].mxu0
  %v637 = vadd.f32 %v540, %v636
  %v638 = vpop.f32.mrb[0].mxu0
  %639 = vmatprep.mubr.bf16.mxu0 %v237
  %640 = vmatmul.mubr.bf16.gmra.mrb[0].mxu0 %v236
  %v641 = vpop.f32.mrb[0].mxu0
  %v642 = vadd.f32 %v545, %v641
  %v643 = vpop.f32.mrb[0].mxu0
  %v644 = vpop.f32.mrb[0].mxu0
  %v645 = vadd.f32 %v548, %v644
  %v646 = vpop.f32.mrb[0].mxu0
  %647 = vmatprep.mubr.bf16.mxu0 %v241
  %648 = vmatmul.mubr.bf16.gmra.mrb[0].mxu0 %v240
  %v649 = vpop.f32.mrb[0].mxu0
  %v650 = vadd.f32 %v553, %v649
  %v651 = vpop.f32.mrb[0].mxu0
  %v652 = vpop.f32.mrb[0].mxu0
  %v653 = vadd.f32 %v556, %v652
  %v654 = vpop.f32.mrb[0].mxu0
  %655 = vmatprep.mubr.bf16.mxu0 %v245
  %656 = vmatmul.mubr.bf16.gmra.mrb[0].mxu0 %v244
  %v657 = vpop.f32.mrb[0].mxu0
  %v658 = vadd.f32 %v561, %v657
  %v659 = vpop.f32.mrb[0].mxu0
  %v660 = vpop.f32.mrb[0].mxu0
  %v661 = vadd.f32 %v564, %v660
  %v662 = vpop.f32.mrb[0].mxu0
  %663 = vdwg.mxu0
  %vm664 = vcmp.ge.f32.partialorder %v602, 0.0
  %vm665 = vcmp.ge.f32.partialorder %v605, 0.0
  %vm666 = vcmp.ge.f32.partialorder %v610, 0.0
  %vm667 = vcmp.ge.f32.partialorder %v613, 0.0
  %vm668 = vcmp.ge.f32.partialorder %v618, 0.0
  %vm669 = vcmp.ge.f32.partialorder %v621, 0.0
  %vm670 = vcmp.ge.f32.partialorder %v626, 0.0
  %vm671 = vcmp.ge.f32.partialorder %v629, 0.0
  %vm672 = vcmp.ge.f32.partialorder %v634, 0.0
  %vm673 = vcmp.ge.f32.partialorder %v637, 0.0
  %vm674 = vcmp.ge.f32.partialorder %v642, 0.0
  %vm675 = vcmp.ge.f32.partialorder %v645, 0.0
  %vm676 = vcmp.ge.f32.partialorder %v650, 0.0
  %vm677 = vcmp.ge.f32.partialorder %v653, 0.0
  %vm678 = vcmp.ge.f32.partialorder %v658, 0.0
  %vm679 = vcmp.ge.f32.partialorder %v661, 0.0
  %v680 = vmul.f32 %v602, 0.01
  %v681 = vmul.f32 %v605, 0.01
  %v682 = vmul.f32 %v610, 0.01
  %v683 = vmul.f32 %v613, 0.01
  %v684 = vmul.f32 %v618, 0.01
  %v685 = vmul.f32 %v621, 0.01
  %v686 = vmul.f32 %v626, 0.01
  %v687 = vmul.f32 %v629, 0.01
  %v688 = vmul.f32 %v634, 0.01
  %v689 = vmul.f32 %v637, 0.01
  %v690 = vmul.f32 %v642, 0.01
  %v691 = vmul.f32 %v645, 0.01
  %v692 = vmul.f32 %v650, 0.01
  %v693 = vmul.f32 %v653, 0.01
  %v694 = vmul.f32 %v658, 0.01
  %v695 = vmul.f32 %v661, 0.01
  %v696 = vsel %vm664, %v602, %v680
  %v697 = vsel %vm665, %v605, %v681
  %v698 = vsel %vm666, %v610, %v682
  %v699 = vsel %vm667, %v613, %v683
  %v700 = vsel %vm668, %v618, %v684
  %v701 = vsel %vm669, %v621, %v685
  %v702 = vsel %vm670, %v626, %v686
  %v703 = vsel %vm671, %v629, %v687
  %v704 = vsel %vm672, %v634, %v688
  %v705 = vsel %vm673, %v637, %v689
  %v706 = vsel %vm674, %v642, %v690
  %v707 = vsel %vm675, %v645, %v691
  %v708 = vsel %vm676, %v650, %v692
  %v709 = vsel %vm677, %v653, %v693
  %v710 = vsel %vm678, %v658, %v694
  %v711 = vsel %vm679, %v661, %v695
  %vm712 = vcmask 130048
  %713 = vst.msk [vmem:[%s3] sm:$0xff] %vm712, %v696
  %714 = vst.msk [vmem:[%s3 + $0x8] sm:$0xff] %vm712, %v697
  %715 = vst.msk [vmem:[%s3 + $0x10] sm:$0xff] %vm712, %v698
  %716 = vst.msk [vmem:[%s3 + $0x18] sm:$0xff] %vm712, %v699
  %717 = vst.msk [vmem:[%s3 + $0x20] sm:$0xff] %vm712, %v700
  %718 = vst.msk [vmem:[%s3 + $0x28] sm:$0xff] %vm712, %v701
  %719 = vst.msk [vmem:[%s3 + $0x30] sm:$0xff] %vm712, %v702
  %720 = vst.msk [vmem:[%s3 + $0x38] sm:$0xff] %vm712, %v703
  %721 = vst.msk [vmem:[%s3 + $0x40] sm:$0xff] %vm712, %v704
  %722 = vst.msk [vmem:[%s3 + $0x48] sm:$0xff] %vm712, %v705
  %723 = vst.msk [vmem:[%s3 + $0x50] sm:$0xff] %vm712, %v706
  %724 = vst.msk [vmem:[%s3 + $0x58] sm:$0xff] %vm712, %v707
  %725 = vst.msk [vmem:[%s3 + $0x60] sm:$0xff] %vm712, %v708
  %726 = vst.msk [vmem:[%s3 + $0x68] sm:$0xff] %vm712, %v709
  %727 = vst.msk [vmem:[%s3 + $0x70] sm:$0xff] %vm712, %v710
  %728 = vst.msk [vmem:[%s3 + $0x78] sm:$0xff] %vm712, %v711
  // Predicated region
  $region14: #{net3d_forward.20} parent=0 // pred_check
    _
  $region15: #{net3d_forward.20} parent=0 // pred_check_branch
    %730 = sbr.rel (0) target = $region17
  $region16: #{net3d_forward.20} parent=0 // pred_region
    _
  $region17: #{net3d_forward.20} parent=0 // pred_fallthru
    _
  // Predicated region
  $region18: #{net3d_forward.20} parent=0 // pred_check
    _
  $region19: #{net3d_forward.20} parent=0 // pred_check_branch
    %732 = sbr.rel (0) target = $region21
  $region20: #{net3d_forward.20} parent=0 // pred_region
    _
  $region21: #{net3d_forward.20} parent=0 // pred_fallthru
    _

// kernel: net3d_forward.21
$region0: #{net3d_forward.21}
  #allocation0 [shape = 'u32[]', space=smem, size = 0x4, offset = 0x4, fixed_abs, tag = 'smem constant byte address 0x4 - core index']
  #allocation1 [shape = 'u32[144,128]{1,0:T(1,128)}', space=vmem, size = 0x12000, scoped, tag = 'internal scratch']
  %s0 = inlined_call_operand.vmem [shape: f32[128,16], index: 0, kind: input, shape index: {}]
  %s1 = inlined_call_operand.vmem [shape: f32[1,16], index: 1, kind: output, shape index: {0}]
  %s2 = inlined_call_operand.vmem [shape: f32[1,16], index: 2, kind: output, shape index: {1}]
  %3 = xla_tuple %s1, %s2
  %s4 = sld [smem:[#allocation0]]
  $region26: #{net3d_forward.21} parent=0
    _
  %s6 = ssub.s32 1, %s4
  %s7 = scalar_select 0, %s6, %s4
  // Predicated region
  $region2: #{net3d_forward.21} parent=0 // pred_check
    _
  $region3: #{net3d_forward.21} parent=0 // pred_check_branch
    %9 = sbr.rel (0) target = $region5
  $region4: #{net3d_forward.21} parent=0 // pred_region
    _
  $region5: #{net3d_forward.21} parent=0 // pred_fallthru
    _
  %p10 = scmp.eq.s32.totalorder 0, 0
  // Predicated region
  $region6: #{net3d_forward.21} parent=0 // pred_check
    %p11 = pneg %p10
  $region7: #{net3d_forward.21} parent=0 // pred_check_branch
    %13 = sbr.rel (%p11) target = $region9
  $region8: #{net3d_forward.21} parent=0 // pred_region
    %vm14 = vcmask 122880
    %15 = vst.msk [vmem:[%s1] sm:$0x1] %vm14, 0.0
    %16 = vst.msk [vmem:[%s2] sm:$0x1] %vm14, 0.0
  $region9: #{net3d_forward.21} parent=0 // pred_fallthru
    _
  %v17 = vld [vmem:[%s0] sm:$0xff]
  %v18 = vld [vmem:[%s0 + $0x8] sm:$0xff]
  %v19 = vld [vmem:[%s0 + $0x10] sm:$0xff]
  %v20 = vld [vmem:[%s0 + $0x18] sm:$0xff]
  %v21 = vld [vmem:[%s0 + $0x20] sm:$0xff]
  %v22 = vld [vmem:[%s0 + $0x28] sm:$0xff]
  %v23 = vld [vmem:[%s0 + $0x30] sm:$0xff]
  %v24 = vld [vmem:[%s0 + $0x38] sm:$0xff]
  %v25 = vld [vmem:[%s0 + $0x40] sm:$0xff]
  %v26 = vld [vmem:[%s0 + $0x48] sm:$0xff]
  %v27 = vld [vmem:[%s0 + $0x50] sm:$0xff]
  %v28 = vld [vmem:[%s0 + $0x58] sm:$0xff]
  %v29 = vld [vmem:[%s0 + $0x60] sm:$0xff]
  %v30 = vld [vmem:[%s0 + $0x68] sm:$0xff]
  %v31 = vld [vmem:[%s0 + $0x70] sm:$0xff]
  %v32 = vld [vmem:[%s0 + $0x78] sm:$0xff]
  %v33 = vld [vmem:[%s1] sm:$0x1]
  %vm34 = vcmask 130048
  %v35 = vsel %vm34, %v17, 0.0
  %v36 = vsel %vm34, %v18, 0.0
  %v37 = vadd.f32 %v35, %v36
  %v38 = vsel %vm34, %v19, 0.0
  %v39 = vadd.f32 %v37, %v38
  %v40 = vsel %vm34, %v20, 0.0
  %v41 = vadd.f32 %v39, %v40
  %v42 = vsel %vm34, %v21, 0.0
  %v43 = vadd.f32 %v41, %v42
  %v44 = vsel %vm34, %v22, 0.0
  %v45 = vadd.f32 %v43, %v44
  %v46 = vsel %vm34, %v23, 0.0
  %v47 = vadd.f32 %v45, %v46
  %v48 = vsel %vm34, %v24, 0.0
  %v49 = vadd.f32 %v47, %v48
  %v50 = vsel %vm34, %v25, 0.0
  %v51 = vadd.f32 %v49, %v50
  %v52 = vsel %vm34, %v26, 0.0
  %v53 = vadd.f32 %v51, %v52
  %v54 = vsel %vm34, %v27, 0.0
  %v55 = vadd.f32 %v53, %v54
  %v56 = vsel %vm34, %v28, 0.0
  %v57 = vadd.f32 %v55, %v56
  %v58 = vsel %vm34, %v29, 0.0
  %v59 = vadd.f32 %v57, %v58
  %v60 = vsel %vm34, %v30, 0.0
  %v61 = vadd.f32 %v59, %v60
  %v62 = vsel %vm34, %v31, 0.0
  %v63 = vadd.f32 %v61, %v62
  %v64 = vsel %vm34, %v32, 0.0
  %v65 = vadd.f32 %v63, %v64
  %v66 = vrot.slane %v65, 4
  %v67 = vadd.f32 %v65, %v66
  %v68 = vrot.slane %v67, 2
  %v69 = vadd.f32 %v67, %v68
  %v70 = vrot.slane %v69, 1
  %v71 = vadd.f32 %v69, %v70
  %v72 = vadd.f32 %v33, %v71
  %vm73 = vcmask 122880
  %74 = vst.msk [vmem:[%s1] sm:$0x1] %vm73, %v72
  %v75 = vld [vmem:[%s2] sm:$0x1]
  %v76 = vmul.f32 %v17, %v17
  %v77 = vmul.f32 %v18, %v18
  %v78 = vmul.f32 %v19, %v19
  %v79 = vmul.f32 %v20, %v20
  %v80 = vmul.f32 %v21, %v21
  %v81 = vmul.f32 %v22, %v22
  %v82 = vmul.f32 %v23, %v23
  %v83 = vmul.f32 %v24, %v24
  %v84 = vmul.f32 %v25, %v25
  %v85 = vmul.f32 %v26, %v26
  %v86 = vmul.f32 %v27, %v27
  %v87 = vmul.f32 %v28, %v28
  %v88 = vmul.f32 %v29, %v29
  %v89 = vmul.f32 %v30, %v30
  %v90 = vmul.f32 %v31, %v31
  %v91 = vmul.f32 %v32, %v32
  %v92 = vsel %vm34, %v76, 0.0
  %v93 = vsel %vm34, %v77, 0.0
  %v94 = vadd.f32 %v92, %v93
  %v95 = vsel %vm34, %v78, 0.0
  %v96 = vadd.f32 %v94, %v95
  %v97 = vsel %vm34, %v79, 0.0
  %v98 = vadd.f32 %v96, %v97
  %v99 = vsel %vm34, %v80, 0.0
  %v100 = vadd.f32 %v98, %v99
  %v101 = vsel %vm34, %v81, 0.0
  %v102 = vadd.f32 %v100, %v101
  %v103 = vsel %vm34, %v82, 0.0
  %v104 = vadd.f32 %v102, %v103
  %v105 = vsel %vm34, %v83, 0.0
  %v106 = vadd.f32 %v104, %v105
  %v107 = vsel %vm34, %v84, 0.0
  %v108 = vadd.f32 %v106, %v107
  %v109 = vsel %vm34, %v85, 0.0
  %v110 = vadd.f32 %v108, %v109
  %v111 = vsel %vm34, %v86, 0.0
  %v112 = vadd.f32 %v110, %v111
  %v113 = vsel %vm34, %v87, 0.0
  %v114 = vadd.f32 %v112, %v113
  %v115 = vsel %vm34, %v88, 0.0
  %v116 = vadd.f32 %v114, %v115
  %v117 = vsel %vm34, %v89, 0.0
  %v118 = vadd.f32 %v116, %v117
  %v119 = vsel %vm34, %v90, 0.0
  %v120 = vadd.f32 %v118, %v119
  %v121 = vsel %vm34, %v91, 0.0
  %v122 = vadd.f32 %v120, %v121
  %v123 = vrot.slane %v122, 4
  %v124 = vadd.f32 %v122, %v123
  %v125 = vrot.slane %v124, 2
  %v126 = vadd.f32 %v124, %v125
  %v127 = vrot.slane %v126, 1
  %v128 = vadd.f32 %v126, %v127
  %v129 = vadd.f32 %v75, %v128
  %130 = vst.msk [vmem:[%s2] sm:$0x1] %vm73, %v129
  // Predicated region
  $region10: #{net3d_forward.21} parent=0 // pred_check
    _
  $region11: #{net3d_forward.21} parent=0 // pred_check_branch
    %132 = sbr.rel (0) target = $region13
  $region12: #{net3d_forward.21} parent=0 // pred_region
    _
  $region13: #{net3d_forward.21} parent=0 // pred_fallthru
    _
  // Predicated region
  $region14: #{net3d_forward.21} parent=0 // pred_check
    _
  $region15: #{net3d_forward.21} parent=0 // pred_check_branch
    %134 = sbr.rel (0) target = $region17
  $region16: #{net3d_forward.21} parent=0 // pred_region
    _
  $region17: #{net3d_forward.21} parent=0 // pred_fallthru
    _
  // Predicated region
  $region18: #{net3d_forward.21} parent=0 // pred_check
    _
  $region19: #{net3d_forward.21} parent=0 // pred_check_branch
    %136 = sbr.rel (0) target = $region21
  $region20: #{net3d_forward.21} parent=0 // pred_region
    _
  $region21: #{net3d_forward.21} parent=0 // pred_fallthru
    _
  // Predicated region
  $region22: #{net3d_forward.21} parent=0 // pred_check
    _
  $region23: #{net3d_forward.21} parent=0 // pred_check_branch
    %138 = sbr.rel (0) target = $region25
  $region24: #{net3d_forward.21} parent=0 // pred_region
    _
  $region25: #{net3d_forward.21} parent=0 // pred_fallthru
    _

// kernel: net3d_forward.22
$region0: #{net3d_forward.22}
  #allocation0 [shape = 'u32[]', space=smem, size = 0x4, offset = 0x4, fixed_abs, tag = 'smem constant byte address 0x4 - core index']
  #allocation1 [shape = 'u32[144,128]{1,0:T(1,128)}', space=vmem, size = 0x12000, scoped, tag = 'internal scratch']
  %s0 = inlined_call_operand.vmem [shape: f32[128,16], index: 0, kind: input, shape index: {}]
  %s1 = inlined_call_operand.vmem [shape: f32[1,16], index: 1, kind: input, shape index: {}]
  %s2 = inlined_call_operand.vmem [shape: f32[1,16], index: 2, kind: input, shape index: {}]
  %s3 = inlined_call_operand.vmem [shape: bf16[128,16], index: 3, kind: output, shape index: {}]
  %s4 = sld [smem:[#allocation0]]
  $region22: #{net3d_forward.22} parent=0
    _
  %s6 = ssub.s32 1, %s4
  %s7 = scalar_select 0, %s6, %s4
  // Predicated region
  $region2: #{net3d_forward.22} parent=0 // pred_check
    _
  $region3: #{net3d_forward.22} parent=0 // pred_check_branch
    %9 = sbr.rel (0) target = $region5
  $region4: #{net3d_forward.22} parent=0 // pred_region
    _
  $region5: #{net3d_forward.22} parent=0 // pred_fallthru
    _
  // Predicated region
  $region6: #{net3d_forward.22} parent=0 // pred_check
    _
  $region7: #{net3d_forward.22} parent=0 // pred_check_branch
    %11 = sbr.rel (0) target = $region9
  $region8: #{net3d_forward.22} parent=0 // pred_region
    _
  $region9: #{net3d_forward.22} parent=0 // pred_fallthru
    _
  // Predicated region
  $region10: #{net3d_forward.22} parent=0 // pred_check
    _
  $region11: #{net3d_forward.22} parent=0 // pred_check_branch
    %13 = sbr.rel (0) target = $region13
  $region12: #{net3d_forward.22} parent=0 // pred_region
    _
  $region13: #{net3d_forward.22} parent=0 // pred_fallthru
    _
  %v14 = vld [vmem:[%s0] sm:$0xff]
  %v15 = vld [vmem:[%s0 + $0x8] sm:$0xff]
  %v16 = vld [vmem:[%s0 + $0x10] sm:$0xff]
  %v17 = vld [vmem:[%s0 + $0x18] sm:$0xff]
  %v18 = vld [vmem:[%s0 + $0x20] sm:$0xff]
  %v19 = vld [vmem:[%s0 + $0x28] sm:$0xff]
  %v20 = vld [vmem:[%s0 + $0x30] sm:$0xff]
  %v21 = vld [vmem:[%s0 + $0x38] sm:$0xff]
  %v22 = vld [vmem:[%s0 + $0x40] sm:$0xff]
  %v23 = vld [vmem:[%s0 + $0x48] sm:$0xff]
  %v24 = vld [vmem:[%s0 + $0x50] sm:$0xff]
  %v25 = vld [vmem:[%s0 + $0x58] sm:$0xff]
  %v26 = vld [vmem:[%s0 + $0x60] sm:$0xff]
  %v27 = vld [vmem:[%s0 + $0x68] sm:$0xff]
  %v28 = vld [vmem:[%s0 + $0x70] sm:$0xff]
  %v29 = vld [vmem:[%s0 + $0x78] sm:$0xff]
  %v30 = vld [vmem:[%s1] sm:$0x1]
  %v32 = vlaneseq
  %v33 = vshrl.u32 %v32, 7
  %v34 = vsub.s32 0, %v33
  %v35 = vrot.slane %v30, %v34
  %v37 = vmul.f32 %v14, %v35
  %v38 = vmul.f32 %v15, %v35
  %v39 = vmul.f32 %v16, %v35
  %v40 = vmul.f32 %v17, %v35
  %v41 = vmul.f32 %v18, %v35
  %v42 = vmul.f32 %v19, %v35
  %v43 = vmul.f32 %v20, %v35
  %v44 = vmul.f32 %v21, %v35
  %v45 = vmul.f32 %v22, %v35
  %v46 = vmul.f32 %v23, %v35
  %v47 = vmul.f32 %v24, %v35
  %v48 = vmul.f32 %v25, %v35
  %v49 = vmul.f32 %v26, %v35
  %v50 = vmul.f32 %v27, %v35
  %v51 = vmul.f32 %v28, %v35
  %v52 = vmul.f32 %v29, %v35
  %v53 = vld [vmem:[%s2] sm:$0x1]
  %v55 = vlaneseq
  %v56 = vshrl.u32 %v55, 7
  %v57 = vsub.s32 0, %v56
  %v58 = vrot.slane %v53, %v57
  %v60 = vadd.f32 %v37, %v58
  %v61 = vadd.f32 %v38, %v58
  %v62 = vadd.f32 %v39, %v58
  %v63 = vadd.f32 %v40, %v58
  %v64 = vadd.f32 %v41, %v58
  %v65 = vadd.f32 %v42, %v58
  %v66 = vadd.f32 %v43, %v58
  %v67 = vadd.f32 %v44, %v58
  %v68 = vadd.f32 %v45, %v58
  %v69 = vadd.f32 %v46, %v58
  %v70 = vadd.f32 %v47, %v58
  %v71 = vadd.f32 %v48, %v58
  %v72 = vadd.f32 %v49, %v58
  %v73 = vadd.f32 %v50, %v58
  %v74 = vadd.f32 %v51, %v58
  %v75 = vadd.f32 %v52, %v58
  %v76 = vpack.c.bf16 %v61, %v60
  %v77 = vpack.c.bf16 %v63, %v62
  %v78 = vpack.c.bf16 %v65, %v64
  %v79 = vpack.c.bf16 %v67, %v66
  %v80 = vpack.c.bf16 %v69, %v68
  %v81 = vpack.c.bf16 %v71, %v70
  %v82 = vpack.c.bf16 %v73, %v72
  %v83 = vpack.c.bf16 %v75, %v74
  %v92 = vunpack.c.l.b16 %v76
  %v93 = vunpack.c.h.b16 %v76
  %v94 = vunpack.c.l.b16 %v77
  %v95 = vunpack.c.h.b16 %v77
  %v96 = vunpack.c.l.b16 %v78
  %v97 = vunpack.c.h.b16 %v78
  %v98 = vunpack.c.l.b16 %v79
  %v99 = vunpack.c.h.b16 %v79
  %v100 = vunpack.c.l.b16 %v80
  %v101 = vunpack.c.h.b16 %v80
  %v102 = vunpack.c.l.b16 %v81
  %v103 = vunpack.c.h.b16 %v81
  %v104 = vunpack.c.l.b16 %v82
  %v105 = vunpack.c.h.b16 %v82
  %v106 = vunpack.c.l.b16 %v83
  %v107 = vunpack.c.h.b16 %v83
  %v108 = vpack.c.b16 %v92, %v92
  %v109 = vpack.c.b16 %v93, %v93
  %v110 = vpack.c.b16 %v94, %v94
  %v111 = vpack.c.b16 %v95, %v95
  %v112 = vpack.c.b16 %v96, %v96
  %v113 = vpack.c.b16 %v97, %v97
  %v114 = vpack.c.b16 %v98, %v98
  %v115 = vpack.c.b16 %v99, %v99
  %v116 = vpack.c.b16 %v100, %v100
  %v117 = vpack.c.b16 %v101, %v101
  %v118 = vpack.c.b16 %v102, %v102
  %v119 = vpack.c.b16 %v103, %v103
  %v120 = vpack.c.b16 %v104, %v104
  %v121 = vpack.c.b16 %v105, %v105
  %v122 = vpack.c.b16 %v106, %v106
  %v123 = vpack.c.b16 %v107, %v107
  %vm140 = vcmask 125952
  %141 = vst.msk [vmem:[%s3] sm:$0xf] %vm140, %v108
  %142 = vst.msk [vmem:[%s3 + $0x4] sm:$0xf] %vm140, %v109
  %143 = vst.msk [vmem:[%s3 + $0x8] sm:$0xf] %vm140, %v110
  %144 = vst.msk [vmem:[%s3 + $0xc] sm:$0xf] %vm140, %v111
  %145 = vst.msk [vmem:[%s3 + $0x10] sm:$0xf] %vm140, %v112
  %146 = vst.msk [vmem:[%s3 + $0x14] sm:$0xf] %vm140, %v113
  %147 = vst.msk [vmem:[%s3 + $0x18] sm:$0xf] %vm140, %v114
  %148 = vst.msk [vmem:[%s3 + $0x1c] sm:$0xf] %vm140, %v115
  %149 = vst.msk [vmem:[%s3 + $0x20] sm:$0xf] %vm140, %v116
  %150 = vst.msk [vmem:[%s3 + $0x24] sm:$0xf] %vm140, %v117
  %151 = vst.msk [vmem:[%s3 + $0x28] sm:$0xf] %vm140, %v118
  %152 = vst.msk [vmem:[%s3 + $0x2c] sm:$0xf] %vm140, %v119
  %153 = vst.msk [vmem:[%s3 + $0x30] sm:$0xf] %vm140, %v120
  %154 = vst.msk [vmem:[%s3 + $0x34] sm:$0xf] %vm140, %v121
  %155 = vst.msk [vmem:[%s3 + $0x38] sm:$0xf] %vm140, %v122
  %156 = vst.msk [vmem:[%s3 + $0x3c] sm:$0xf] %vm140, %v123
  // Predicated region
  $region14: #{net3d_forward.22} parent=0 // pred_check
    _
  $region15: #{net3d_forward.22} parent=0 // pred_check_branch
    %158 = sbr.rel (0) target = $region17
  $region16: #{net3d_forward.22} parent=0 // pred_region
    _
  $region17: #{net3d_forward.22} parent=0 // pred_fallthru
    _
  // Predicated region
  $region18: #{net3d_forward.22} parent=0 // pred_check
    _
  $region19: #{net3d_forward.22} parent=0 // pred_check_branch
    %160 = sbr.rel (0) target = $region21
  $region20: #{net3d_forward.22} parent=0 // pred_region
    _
  $region21: #{net3d_forward.22} parent=0 // pred_fallthru
    _

// kernel: net3d_forward.23
$region0: #{net3d_forward.23}
  #allocation0 [shape = 'u32[]', space=smem, size = 0x4, offset = 0x4, fixed_abs, tag = 'smem constant byte address 0x4 - core index']
  #allocation1 [shape = 'u32[144,128]{1,0:T(1,128)}', space=vmem, size = 0x12000, scoped, tag = 'internal scratch']
  %s0 = inlined_call_operand.vmem [shape: bf16[16,1024], index: 0, kind: input, shape index: {}]
  %s1 = inlined_call_operand.vmem [shape: bf16[1024,32], index: 1, kind: input, shape index: {}]
  %s2 = inlined_call_operand.vmem [shape: f32[1,32], index: 2, kind: input, shape index: {}]
  %s3 = inlined_call_operand.vmem [shape: f32[16,32], index: 3, kind: output, shape index: {}]
  %s4 = sld [smem:[#allocation0]]
  $region22: #{net3d_forward.23} parent=0
    _
  %s6 = ssub.s32 1, %s4
  %s7 = scalar_select 0, %s6, %s4
  // Predicated region
  $region2: #{net3d_forward.23} parent=0 // pred_check
    _
  $region3: #{net3d_forward.23} parent=0 // pred_check_branch
    %9 = sbr.rel (0) target = $region5
  $region4: #{net3d_forward.23} parent=0 // pred_region
    _
  $region5: #{net3d_forward.23} parent=0 // pred_fallthru
    _
  // Predicated region
  $region6: #{net3d_forward.23} parent=0 // pred_check
    _
  $region7: #{net3d_forward.23} parent=0 // pred_check_branch
    %11 = sbr.rel (0) target = $region9
  $region8: #{net3d_forward.23} parent=0 // pred_region
    _
  $region9: #{net3d_forward.23} parent=0 // pred_fallthru
    _
  // Predicated region
  $region10: #{net3d_forward.23} parent=0 // pred_check
    _
  $region11: #{net3d_forward.23} parent=0 // pred_check_branch
    %13 = sbr.rel (0) target = $region13
  $region12: #{net3d_forward.23} parent=0 // pred_region
    _
  $region13: #{net3d_forward.23} parent=0 // pred_fallthru
    _
  %v15 = vld [vmem:[%s0] sm:$0xff]
  %v16 = vld [vmem:[%s0 + $0x8] sm:$0xff]
  %v17 = vld [vmem:[%s0 + $0x10] sm:$0xff]
  %v18 = vld [vmem:[%s0 + $0x18] sm:$0xff]
  %v19 = vld [vmem:[%s0 + $0x20] sm:$0xff]
  %v20 = vld [vmem:[%s0 + $0x28] sm:$0xff]
  %v21 = vld [vmem:[%s0 + $0x30] sm:$0xff]
  %v22 = vld [vmem:[%s0 + $0x38] sm:$0xff]
  %v23 = vld [vmem:[%s1] sm:$0xf]
  %v24 = vld [vmem:[%s1 + $0x4] sm:$0xf]
  %v25 = vld [vmem:[%s1 + $0x8] sm:$0xf]
  %v26 = vld [vmem:[%s1 + $0xc] sm:$0xf]
  %v27 = vld [vmem:[%s1 + $0x10] sm:$0xf]
  %v28 = vld [vmem:[%s1 + $0x14] sm:$0xf]
  %v29 = vld [vmem:[%s1 + $0x18] sm:$0xf]
  %v30 = vld [vmem:[%s1 + $0x1c] sm:$0xf]
  %v31 = vld [vmem:[%s1 + $0x20] sm:$0xf]
  %v32 = vld [vmem:[%s1 + $0x24] sm:$0xf]
  %v33 = vld [vmem:[%s1 + $0x28] sm:$0xf]
  %v34 = vld [vmem:[%s1 + $0x2c] sm:$0xf]
  %v35 = vld [vmem:[%s1 + $0x30] sm:$0xf]
  %v36 = vld [vmem:[%s1 + $0x34] sm:$0xf]
  %v37 = vld [vmem:[%s1 + $0x38] sm:$0xf]
  %v38 = vld [vmem:[%s1 + $0x3c] sm:$0xf]
  %v39 = vld [vmem:[%s1 + $0x40] sm:$0xf]
  %v40 = vld [vmem:[%s1 + $0x44] sm:$0xf]
  %v41 = vld [vmem:[%s1 + $0x48] sm:$0xf]
  %v42 = vld [vmem:[%s1 + $0x4c] sm:$0xf]
  %v43 = vld [vmem:[%s1 + $0x50] sm:$0xf]
  %v44 = vld [vmem:[%s1 + $0x54] sm:$0xf]
  %v45 = vld [vmem:[%s1 + $0x58] sm:$0xf]
  %v46 = vld [vmem:[%s1 + $0x5c] sm:$0xf]
  %v47 = vld [vmem:[%s1 + $0x60] sm:$0xf]
  %v48 = vld [vmem:[%s1 + $0x64] sm:$0xf]
  %v49 = vld [vmem:[%s1 + $0x68] sm:$0xf]
  %v50 = vld [vmem:[%s1 + $0x6c] sm:$0xf]
  %v51 = vld [vmem:[%s1 + $0x70] sm:$0xf]
  %v52 = vld [vmem:[%s1 + $0x74] sm:$0xf]
  %v53 = vld [vmem:[%s1 + $0x78] sm:$0xf]
  %v54 = vld [vmem:[%s1 + $0x7c] sm:$0xf]
  %v55 = vld [vmem:[%s1 + $0x80] sm:$0xf]
  %v56 = vld [vmem:[%s1 + $0x84] sm:$0xf]
  %v57 = vld [vmem:[%s1 + $0x88] sm:$0xf]
  %v58 = vld [vmem:[%s1 + $0x8c] sm:$0xf]
  %v59 = vld [vmem:[%s1 + $0x90] sm:$0xf]
  %v60 = vld [vmem:[%s1 + $0x94] sm:$0xf]
  %v61 = vld [vmem:[%s1 + $0x98] sm:$0xf]
  %v62 = vld [vmem:[%s1 + $0x9c] sm:$0xf]
  %v63 = vld [vmem:[%s1 + $0xa0] sm:$0xf]
  %v64 = vld [vmem:[%s1 + $0xa4] sm:$0xf]
  %v65 = vld [vmem:[%s1 + $0xa8] sm:$0xf]
  %v66 = vld [vmem:[%s1 + $0xac] sm:$0xf]
  %v67 = vld [vmem:[%s1 + $0xb0] sm:$0xf]
  %v68 = vld [vmem:[%s1 + $0xb4] sm:$0xf]
  %v69 = vld [vmem:[%s1 + $0xb8] sm:$0xf]
  %v70 = vld [vmem:[%s1 + $0xbc] sm:$0xf]
  %v71 = vld [vmem:[%s1 + $0xc0] sm:$0xf]
  %v72 = vld [vmem:[%s1 + $0xc4] sm:$0xf]
  %v73 = vld [vmem:[%s1 + $0xc8] sm:$0xf]
  %v74 = vld [vmem:[%s1 + $0xcc] sm:$0xf]
  %v75 = vld [vmem:[%s1 + $0xd0] sm:$0xf]
  %v76 = vld [vmem:[%s1 + $0xd4] sm:$0xf]
  %v77 = vld [vmem:[%s1 + $0xd8] sm:$0xf]
  %v78 = vld [vmem:[%s1 + $0xdc] sm:$0xf]
  %v79 = vld [vmem:[%s1 + $0xe0] sm:$0xf]
  %v80 = vld [vmem:[%s1 + $0xe4] sm:$0xf]
  %v81 = vld [vmem:[%s1 + $0xe8] sm:$0xf]
  %v82 = vld [vmem:[%s1 + $0xec] sm:$0xf]
  %v83 = vld [vmem:[%s1 + $0xf0] sm:$0xf]
  %v84 = vld [vmem:[%s1 + $0xf4] sm:$0xf]
  %v85 = vld [vmem:[%s1 + $0xf8] sm:$0xf]
  %v86 = vld [vmem:[%s1 + $0xfc] sm:$0xf]
  %v87 = vld [vmem:[%s1 + $0x100] sm:$0xf]
  %v88 = vld [vmem:[%s1 + $0x104] sm:$0xf]
  %v89 = vld [vmem:[%s1 + $0x108] sm:$0xf]
  %v90 = vld [vmem:[%s1 + $0x10c] sm:$0xf]
  %v91 = vld [vmem:[%s1 + $0x110] sm:$0xf]
  %v92 = vld [vmem:[%s1 + $0x114] sm:$0xf]
  %v93 = vld [vmem:[%s1 + $0x118] sm:$0xf]
  %v94 = vld [vmem:[%s1 + $0x11c] sm:$0xf]
  %v95 = vld [vmem:[%s1 + $0x120] sm:$0xf]
  %v96 = vld [vmem:[%s1 + $0x124] sm:$0xf]
  %v97 = vld [vmem:[%s1 + $0x128] sm:$0xf]
  %v98 = vld [vmem:[%s1 + $0x12c] sm:$0xf]
  %v99 = vld [vmem:[%s1 + $0x130] sm:$0xf]
  %v100 = vld [vmem:[%s1 + $0x134] sm:$0xf]
  %v101 = vld [vmem:[%s1 + $0x138] sm:$0xf]
  %v102 = vld [vmem:[%s1 + $0x13c] sm:$0xf]
  %v103 = vld [vmem:[%s1 + $0x140] sm:$0xf]
  %v104 = vld [vmem:[%s1 + $0x144] sm:$0xf]
  %v105 = vld [vmem:[%s1 + $0x148] sm:$0xf]
  %v106 = vld [vmem:[%s1 + $0x14c] sm:$0xf]
  %v107 = vld [vmem:[%s1 + $0x150] sm:$0xf]
  %v108 = vld [vmem:[%s1 + $0x154] sm:$0xf]
  %v109 = vld [vmem:[%s1 + $0x158] sm:$0xf]
  %v110 = vld [vmem:[%s1 + $0x15c] sm:$0xf]
  %v111 = vld [vmem:[%s1 + $0x160] sm:$0xf]
  %v112 = vld [vmem:[%s1 + $0x164] sm:$0xf]
  %v113 = vld [vmem:[%s1 + $0x168] sm:$0xf]
  %v114 = vld [vmem:[%s1 + $0x16c] sm:$0xf]
  %v115 = vld [vmem:[%s1 + $0x170] sm:$0xf]
  %v116 = vld [vmem:[%s1 + $0x174] sm:$0xf]
  %v117 = vld [vmem:[%s1 + $0x178] sm:$0xf]
  %v118 = vld [vmem:[%s1 + $0x17c] sm:$0xf]
  %v119 = vld [vmem:[%s1 + $0x180] sm:$0xf]
  %v120 = vld [vmem:[%s1 + $0x184] sm:$0xf]
  %v121 = vld [vmem:[%s1 + $0x188] sm:$0xf]
  %v122 = vld [vmem:[%s1 + $0x18c] sm:$0xf]
  %v123 = vld [vmem:[%s1 + $0x190] sm:$0xf]
  %v124 = vld [vmem:[%s1 + $0x194] sm:$0xf]
  %v125 = vld [vmem:[%s1 + $0x198] sm:$0xf]
  %v126 = vld [vmem:[%s1 + $0x19c] sm:$0xf]
  %v127 = vld [vmem:[%s1 + $0x1a0] sm:$0xf]
  %v128 = vld [vmem:[%s1 + $0x1a4] sm:$0xf]
  %v129 = vld [vmem:[%s1 + $0x1a8] sm:$0xf]
  %v130 = vld [vmem:[%s1 + $0x1ac] sm:$0xf]
  %v131 = vld [vmem:[%s1 + $0x1b0] sm:$0xf]
  %v132 = vld [vmem:[%s1 + $0x1b4] sm:$0xf]
  %v133 = vld [vmem:[%s1 + $0x1b8] sm:$0xf]
  %v134 = vld [vmem:[%s1 + $0x1bc] sm:$0xf]
  %v135 = vld [vmem:[%s1 + $0x1c0] sm:$0xf]
  %v136 = vld [vmem:[%s1 + $0x1c4] sm:$0xf]
  %v137 = vld [vmem:[%s1 + $0x1c8] sm:$0xf]
  %v138 = vld [vmem:[%s1 + $0x1cc] sm:$0xf]
  %v139 = vld [vmem:[%s1 + $0x1d0] sm:$0xf]
  %v140 = vld [vmem:[%s1 + $0x1d4] sm:$0xf]
  %v141 = vld [vmem:[%s1 + $0x1d8] sm:$0xf]
  %v142 = vld [vmem:[%s1 + $0x1dc] sm:$0xf]
  %v143 = vld [vmem:[%s1 + $0x1e0] sm:$0xf]
  %v144 = vld [vmem:[%s1 + $0x1e4] sm:$0xf]
  %v145 = vld [vmem:[%s1 + $0x1e8] sm:$0xf]
  %v146 = vld [vmem:[%s1 + $0x1ec] sm:$0xf]
  %v147 = vld [vmem:[%s1 + $0x1f0] sm:$0xf]
  %v148 = vld [vmem:[%s1 + $0x1f4] sm:$0xf]
  %v149 = vld [vmem:[%s1 + $0x1f8] sm:$0xf]
  %v150 = vld [vmem:[%s1 + $0x1fc] sm:$0xf]
  %v151 = vld [vmem:[%s2] sm:$0x1]
  %v153 = vlaneseq
  %v154 = vshrl.u32 %v153, 7
  %v155 = vsub.s32 0, %v154
  %v156 = vrot.slane %v151, %v155
  %v166 = vunpack.c.l.b16 %v15
  %v167 = vunpack.c.h.b16 %v15
  %v168 = vunpack.c.l.b16 %v16
  %v169 = vunpack.c.h.b16 %v16
  %v170 = vunpack.c.l.b16 %v17
  %v171 = vunpack.c.h.b16 %v17
  %v172 = vunpack.c.l.b16 %v18
  %v173 = vunpack.c.h.b16 %v18
  %v174 = vunpack.c.l.b16 %v19
  %v175 = vunpack.c.h.b16 %v19
  %v176 = vunpack.c.l.b16 %v20
  %v177 = vunpack.c.h.b16 %v20
  %v178 = vunpack.c.l.b16 %v21
  %v179 = vunpack.c.h.b16 %v21
  %v180 = vunpack.c.l.b16 %v22
  %v181 = vunpack.c.h.b16 %v22
  %v182 = vpack.c.b16 %v174, %v166
  %v183 = vpack.c.b16 %v175, %v167
  %v184 = vpack.c.b16 %v176, %v168
  %v185 = vpack.c.b16 %v177, %v169
  %v186 = vpack.c.b16 %v178, %v170
  %v187 = vpack.c.b16 %v179, %v171
  %v188 = vpack.c.b16 %v180, %v172
  %v189 = vpack.c.b16 %v181, %v173
  %v326 = vunpack.c.l.b16 %v23
  %v327 = vunpack.c.l.b16 %v24
  %v328 = vunpack.c.l.b16 %v25
  %v329 = vunpack.c.l.b16 %v26
  %v330 = vunpack.c.l.b16 %v27
  %v331 = vunpack.c.l.b16 %v28
  %v332 = vunpack.c.l.b16 %v29
  %v333 = vunpack.c.l.b16 %v30
  %v334 = vunpack.c.l.b16 %v31
  %v335 = vunpack.c.l.b16 %v32
  %v336 = vunpack.c.l.b16 %v33
  %v337 = vunpack.c.l.b16 %v34
  %v338 = vunpack.c.l.b16 %v35
  %v339 = vunpack.c.l.b16 %v36
  %v340 = vunpack.c.l.b16 %v37
  %v341 = vunpack.c.l.b16 %v38
  %v342 = vunpack.c.l.b16 %v39
  %v343 = vunpack.c.l.b16 %v40
  %v344 = vunpack.c.l.b16 %v41
  %v345 = vunpack.c.l.b16 %v42
  %v346 = vunpack.c.l.b16 %v43
  %v347 = vunpack.c.l.b16 %v44
  %v348 = vunpack.c.l.b16 %v45
  %v349 = vunpack.c.l.b16 %v46
  %v350 = vunpack.c.l.b16 %v47
  %v351 = vunpack.c.l.b16 %v48
  %v352 = vunpack.c.l.b16 %v49
  %v353 = vunpack.c.l.b16 %v50
  %v354 = vunpack.c.l.b16 %v51
  %v355 = vunpack.c.l.b16 %v52
  %v356 = vunpack.c.l.b16 %v53
  %v357 = vunpack.c.l.b16 %v54
  %v358 = vunpack.c.l.b16 %v55
  %v359 = vunpack.c.l.b16 %v56
  %v360 = vunpack.c.l.b16 %v57
  %v361 = vunpack.c.l.b16 %v58
  %v362 = vunpack.c.l.b16 %v59
  %v363 = vunpack.c.l.b16 %v60
  %v364 = vunpack.c.l.b16 %v61
  %v365 = vunpack.c.l.b16 %v62
  %v366 = vunpack.c.l.b16 %v63
  %v367 = vunpack.c.l.b16 %v64
  %v368 = vunpack.c.l.b16 %v65
  %v369 = vunpack.c.l.b16 %v66
  %v370 = vunpack.c.l.b16 %v67
  %v371 = vunpack.c.l.b16 %v68
  %v372 = vunpack.c.l.b16 %v69
  %v373 = vunpack.c.l.b16 %v70
  %v374 = vunpack.c.l.b16 %v71
  %v375 = vunpack.c.l.b16 %v72
  %v376 = vunpack.c.l.b16 %v73
  %v377 = vunpack.c.l.b16 %v74
  %v378 = vunpack.c.l.b16 %v75
  %v379 = vunpack.c.l.b16 %v76
  %v380 = vunpack.c.l.b16 %v77
  %v381 = vunpack.c.l.b16 %v78
  %v382 = vunpack.c.l.b16 %v79
  %v383 = vunpack.c.l.b16 %v80
  %v384 = vunpack.c.l.b16 %v81
  %v385 = vunpack.c.l.b16 %v82
  %v386 = vunpack.c.l.b16 %v83
  %v387 = vunpack.c.l.b16 %v84
  %v388 = vunpack.c.l.b16 %v85
  %v389 = vunpack.c.l.b16 %v86
  %v390 = vunpack.c.l.b16 %v87
  %v391 = vunpack.c.l.b16 %v88
  %v392 = vunpack.c.l.b16 %v89
  %v393 = vunpack.c.l.b16 %v90
  %v394 = vunpack.c.l.b16 %v91
  %v395 = vunpack.c.l.b16 %v92
  %v396 = vunpack.c.l.b16 %v93
  %v397 = vunpack.c.l.b16 %v94
  %v398 = vunpack.c.l.b16 %v95
  %v399 = vunpack.c.l.b16 %v96
  %v400 = vunpack.c.l.b16 %v97
  %v401 = vunpack.c.l.b16 %v98
  %v402 = vunpack.c.l.b16 %v99
  %v403 = vunpack.c.l.b16 %v100
  %v404 = vunpack.c.l.b16 %v101
  %v405 = vunpack.c.l.b16 %v102
  %v406 = vunpack.c.l.b16 %v103
  %v407 = vunpack.c.l.b16 %v104
  %v408 = vunpack.c.l.b16 %v105
  %v409 = vunpack.c.l.b16 %v106
  %v410 = vunpack.c.l.b16 %v107
  %v411 = vunpack.c.l.b16 %v108
  %v412 = vunpack.c.l.b16 %v109
  %v413 = vunpack.c.l.b16 %v110
  %v414 = vunpack.c.l.b16 %v111
  %v415 = vunpack.c.l.b16 %v112
  %v416 = vunpack.c.l.b16 %v113
  %v417 = vunpack.c.l.b16 %v114
  %v418 = vunpack.c.l.b16 %v115
  %v419 = vunpack.c.l.b16 %v116
  %v420 = vunpack.c.l.b16 %v117
  %v421 = vunpack.c.l.b16 %v118
  %v422 = vunpack.c.l.b16 %v119
  %v423 = vunpack.c.l.b16 %v120
  %v424 = vunpack.c.l.b16 %v121
  %v425 = vunpack.c.l.b16 %v122
  %v426 = vunpack.c.l.b16 %v123
  %v427 = vunpack.c.l.b16 %v124
  %v428 = vunpack.c.l.b16 %v125
  %v429 = vunpack.c.l.b16 %v126
  %v430 = vunpack.c.l.b16 %v127
  %v431 = vunpack.c.l.b16 %v128
  %v432 = vunpack.c.l.b16 %v129
  %v433 = vunpack.c.l.b16 %v130
  %v434 = vunpack.c.l.b16 %v131
  %v435 = vunpack.c.l.b16 %v132
  %v436 = vunpack.c.l.b16 %v133
  %v437 = vunpack.c.l.b16 %v134
  %v438 = vunpack.c.l.b16 %v135
  %v439 = vunpack.c.l.b16 %v136
  %v440 = vunpack.c.l.b16 %v137
  %v441 = vunpack.c.l.b16 %v138
  %v442 = vunpack.c.l.b16 %v139
  %v443 = vunpack.c.l.b16 %v140
  %v444 = vunpack.c.l.b16 %v141
  %v445 = vunpack.c.l.b16 %v142
  %v446 = vunpack.c.l.b16 %v143
  %v447 = vunpack.c.l.b16 %v144
  %v448 = vunpack.c.l.b16 %v145
  %v449 = vunpack.c.l.b16 %v146
  %v450 = vunpack.c.l.b16 %v147
  %v451 = vunpack.c.l.b16 %v148
  %v452 = vunpack.c.l.b16 %v149
  %v453 = vunpack.c.l.b16 %v150
  %v454 = vpack.c.b16 %v327, %v326
  %v455 = vpack.c.b16 %v329, %v328
  %v456 = vpack.c.b16 %v331, %v330
  %v457 = vpack.c.b16 %v333, %v332
  %v458 = vpack.c.b16 %v335, %v334
  %v459 = vpack.c.b16 %v337, %v336
  %v460 = vpack.c.b16 %v339, %v338
  %v461 = vpack.c.b16 %v341, %v340
  %v462 = vpack.c.b16 %v343, %v342
  %v463 = vpack.c.b16 %v345, %v344
  %v464 = vpack.c.b16 %v347, %v346
  %v465 = vpack.c.b16 %v349, %v348
  %v466 = vpack.c.b16 %v351, %v350
  %v467 = vpack.c.b16 %v353, %v352
  %v468 = vpack.c.b16 %v355, %v354
  %v469 = vpack.c.b16 %v357, %v356
  %v470 = vpack.c.b16 %v359, %v358
  %v471 = vpack.c.b16 %v361, %v360
  %v472 = vpack.c.b16 %v363, %v362
  %v473 = vpack.c.b16 %v365, %v364
  %v474 = vpack.c.b16 %v367, %v366
  %v475 = vpack.c.b16 %v369, %v368
  %v476 = vpack.c.b16 %v371, %v370
  %v477 = vpack.c.b16 %v373, %v372
  %v478 = vpack.c.b16 %v375, %v374
  %v479 = vpack.c.b16 %v377, %v376
  %v480 = vpack.c.b16 %v379, %v378
  %v481 = vpack.c.b16 %v381, %v380
  %v482 = vpack.c.b16 %v383, %v382
  %v483 = vpack.c.b16 %v385, %v384
  %v484 = vpack.c.b16 %v387, %v386
  %v485 = vpack.c.b16 %v389, %v388
  %v486 = vpack.c.b16 %v391, %v390
  %v487 = vpack.c.b16 %v393, %v392
  %v488 = vpack.c.b16 %v395, %v394
  %v489 = vpack.c.b16 %v397, %v396
  %v490 = vpack.c.b16 %v399, %v398
  %v491 = vpack.c.b16 %v401, %v400
  %v492 = vpack.c.b16 %v403, %v402
  %v493 = vpack.c.b16 %v405, %v404
  %v494 = vpack.c.b16 %v407, %v406
  %v495 = vpack.c.b16 %v409, %v408
  %v496 = vpack.c.b16 %v411, %v410
  %v497 = vpack.c.b16 %v413, %v412
  %v498 = vpack.c.b16 %v415, %v414
  %v499 = vpack.c.b16 %v417, %v416
  %v500 = vpack.c.b16 %v419, %v418
  %v501 = vpack.c.b16 %v421, %v420
  %v502 = vpack.c.b16 %v423, %v422
  %v503 = vpack.c.b16 %v425, %v424
  %v504 = vpack.c.b16 %v427, %v426
  %v505 = vpack.c.b16 %v429, %v428
  %v506 = vpack.c.b16 %v431, %v430
  %v507 = vpack.c.b16 %v433, %v432
  %v508 = vpack.c.b16 %v435, %v434
  %v509 = vpack.c.b16 %v437, %v436
  %v510 = vpack.c.b16 %v439, %v438
  %v511 = vpack.c.b16 %v441, %v440
  %v512 = vpack.c.b16 %v443, %v442
  %v513 = vpack.c.b16 %v445, %v444
  %v514 = vpack.c.b16 %v447, %v446
  %v515 = vpack.c.b16 %v449, %v448
  %v516 = vpack.c.b16 %v451, %v450
  %v517 = vpack.c.b16 %v453, %v452
  %582 = vmatprep.subr.bf16.mxu0 0
  %583 = vmatpush1.bf16.msra.mxu0 %v454
  %584 = vmatprep.subr.bf16.mxu0 0
  %585 = vmatpush1.bf16.msra.mxu0 %v455
  %586 = vmatprep.subr.bf16.mxu0 0
  %587 = vmatpush1.bf16.msra.mxu0 %v456
  %588 = vmatprep.subr.bf16.mxu0 0
  %589 = vmatpush1.bf16.msra.mxu0 %v457
  %590 = vmatprep.subr.bf16.mxu0 0
  %591 = vmatpush1.bf16.msra.mxu0 %v458
  %592 = vmatprep.subr.bf16.mxu0 0
  %593 = vmatpush1.bf16.msra.mxu0 %v459
  %594 = vmatprep.subr.bf16.mxu0 0
  %595 = vmatpush1.bf16.msra.mxu0 %v460
  %596 = vmatprep.subr.bf16.mxu0 0
  %597 = vmatpush1.bf16.msra.mxu0 %v461
  %598 = vmatprep.subr.bf16.mxu0 0
  %599 = vmatpush1.bf16.msra.mxu0 %v462
  %600 = vmatprep.subr.bf16.mxu0 0
  %601 = vmatpush1.bf16.msra.mxu0 %v463
  %602 = vmatprep.subr.bf16.mxu0 0
  %603 = vmatpush1.bf16.msra.mxu0 %v464
  %604 = vmatprep.subr.bf16.mxu0 0
  %605 = vmatpush1.bf16.msra.mxu0 %v465
  %606 = vmatprep.subr.bf16.mxu0 0
  %607 = vmatpush1.bf16.msra.mxu0 %v466
  %608 = vmatprep.subr.bf16.mxu0 0
  %609 = vmatpush1.bf16.msra.mxu0 %v467
  %610 = vmatprep.subr.bf16.mxu0 0
  %611 = vmatpush1.bf16.msra.mxu0 %v468
  %612 = vmatprep.subr.bf16.mxu0 0
  %613 = vmatpush1.bf16.msra.mxu0 %v469
  %614 = vmatprep.mubr.bf16.mxu0 %v183
  %615 = vmatmul.mubr.bf16.gmra.mrb[0].mxu0 %v182
  %v616 = vpop.f32.mrb[0].mxu0
  %v617 = vadd.f32 %v156, %v616
  %v618 = vpop.f32.mrb[0].mxu0
  %v619 = vpop.f32.mrb[0].mxu0
  %v620 = vadd.f32 %v156, %v619
  %v621 = vpop.f32.mrb[0].mxu0
  %622 = vdwg.mxu0
  %623 = vmatprep.subr.bf16.mxu0 0
  %624 = vmatpush1.bf16.msra.mxu0 %v470
  %625 = vmatprep.subr.bf16.mxu0 0
  %626 = vmatpush1.bf16.msra.mxu0 %v471
  %627 = vmatprep.subr.bf16.mxu0 0
  %628 = vmatpush1.bf16.msra.mxu0 %v472
  %629 = vmatprep.subr.bf16.mxu0 0
  %630 = vmatpush1.bf16.msra.mxu0 %v473
  %631 = vmatprep.subr.bf16.mxu0 0
  %632 = vmatpush1.bf16.msra.mxu0 %v474
  %633 = vmatprep.subr.bf16.mxu0 0
  %634 = vmatpush1.bf16.msra.mxu0 %v475
  %635 = vmatprep.subr.bf16.mxu0 0
  %636 = vmatpush1.bf16.msra.mxu0 %v476
  %637 = vmatprep.subr.bf16.mxu0 0
  %638 = vmatpush1.bf16.msra.mxu0 %v477
  %639 = vmatprep.subr.bf16.mxu0 0
  %640 = vmatpush1.bf16.msra.mxu0 %v478
  %641 = vmatprep.subr.bf16.mxu0 0
  %642 = vmatpush1.bf16.msra.mxu0 %v479
  %643 = vmatprep.subr.bf16.mxu0 0
  %644 = vmatpush1.bf16.msra.mxu0 %v480
  %645 = vmatprep.subr.bf16.mxu0 0
  %646 = vmatpush1.bf16.msra.mxu0 %v481
  %647 = vmatprep.subr.bf16.mxu0 0
  %648 = vmatpush1.bf16.msra.mxu0 %v482
  %649 = vmatprep.subr.bf16.mxu0 0
  %650 = vmatpush1.bf16.msra.mxu0 %v483
  %651 = vmatprep.subr.bf16.mxu0 0
  %652 = vmatpush1.bf16.msra.mxu0 %v484
  %653 = vmatprep.subr.bf16.mxu0 0
  %654 = vmatpush1.bf16.msra.mxu0 %v485
  %655 = vmatprep.mubr.bf16.mxu0 %v185
  %656 = vmatmul.mubr.bf16.gmra.mrb[0].mxu0 %v184
  %v657 = vpop.f32.mrb[0].mxu0
  %v658 = vadd.f32 %v617, %v657
  %v659 = vpop.f32.mrb[0].mxu0
  %v660 = vpop.f32.mrb[0].mxu0
  %v661 = vadd.f32 %v620, %v660
  %v662 = vpop.f32.mrb[0].mxu0
  %663 = vdwg.mxu0
  %664 = vmatprep.subr.bf16.mxu0 0
  %665 = vmatpush1.bf16.msra.mxu0 %v486
  %666 = vmatprep.subr.bf16.mxu0 0
  %667 = vmatpush1.bf16.msra.mxu0 %v487
  %668 = vmatprep.subr.bf16.mxu0 0
  %669 = vmatpush1.bf16.msra.mxu0 %v488
  %670 = vmatprep.subr.bf16.mxu0 0
  %671 = vmatpush1.bf16.msra.mxu0 %v489
  %672 = vmatprep.subr.bf16.mxu0 0
  %673 = vmatpush1.bf16.msra.mxu0 %v490
  %674 = vmatprep.subr.bf16.mxu0 0
  %675 = vmatpush1.bf16.msra.mxu0 %v491
  %676 = vmatprep.subr.bf16.mxu0 0
  %677 = vmatpush1.bf16.msra.mxu0 %v492
  %678 = vmatprep.subr.bf16.mxu0 0
  %679 = vmatpush1.bf16.msra.mxu0 %v493
  %680 = vmatprep.subr.bf16.mxu0 0
  %681 = vmatpush1.bf16.msra.mxu0 %v494
  %682 = vmatprep.subr.bf16.mxu0 0
  %683 = vmatpush1.bf16.msra.mxu0 %v495
  %684 = vmatprep.subr.bf16.mxu0 0
  %685 = vmatpush1.bf16.msra.mxu0 %v496
  %686 = vmatprep.subr.bf16.mxu0 0
  %687 = vmatpush1.bf16.msra.mxu0 %v497
  %688 = vmatprep.subr.bf16.mxu0 0
  %689 = vmatpush1.bf16.msra.mxu0 %v498
  %690 = vmatprep.subr.bf16.mxu0 0
  %691 = vmatpush1.bf16.msra.mxu0 %v499
  %692 = vmatprep.subr.bf16.mxu0 0
  %693 = vmatpush1.bf16.msra.mxu0 %v500
  %694 = vmatprep.subr.bf16.mxu0 0
  %695 = vmatpush1.bf16.msra.mxu0 %v501
  %696 = vmatprep.mubr.bf16.mxu0 %v187
  %697 = vmatmul.mubr.bf16.gmra.mrb[0].mxu0 %v186
  %v698 = vpop.f32.mrb[0].mxu0
  %v699 = vadd.f32 %v658, %v698
  %v700 = vpop.f32.mrb[0].mxu0
  %v701 = vpop.f32.mrb[0].mxu0
  %v702 = vadd.f32 %v661, %v701
  %v703 = vpop.f32.mrb[0].mxu0
  %704 = vdwg.mxu0
  %705 = vmatprep.subr.bf16.mxu0 0
  %706 = vmatpush1.bf16.msra.mxu0 %v502
  %707 = vmatprep.subr.bf16.mxu0 0
  %708 = vmatpush1.bf16.msra.mxu0 %v503
  %709 = vmatprep.subr.bf16.mxu0 0
  %710 = vmatpush1.bf16.msra.mxu0 %v504
  %711 = vmatprep.subr.bf16.mxu0 0
  %712 = vmatpush1.bf16.msra.mxu0 %v505
  %713 = vmatprep.subr.bf16.mxu0 0
  %714 = vmatpush1.bf16.msra.mxu0 %v506
  %715 = vmatprep.subr.bf16.mxu0 0
  %716 = vmatpush1.bf16.msra.mxu0 %v507
  %717 = vmatprep.subr.bf16.mxu0 0
  %718 = vmatpush1.bf16.msra.mxu0 %v508
  %719 = vmatprep.subr.bf16.mxu0 0
  %720 = vmatpush1.bf16.msra.mxu0 %v509
  %721 = vmatprep.subr.bf16.mxu0 0
  %722 = vmatpush1.bf16.msra.mxu0 %v510
  %723 = vmatprep.subr.bf16.mxu0 0
  %724 = vmatpush1.bf16.msra.mxu0 %v511
  %725 = vmatprep.subr.bf16.mxu0 0
  %726 = vmatpush1.bf16.msra.mxu0 %v512
  %727 = vmatprep.subr.bf16.mxu0 0
  %728 = vmatpush1.bf16.msra.mxu0 %v513
  %729 = vmatprep.subr.bf16.mxu0 0
  %730 = vmatpush1.bf16.msra.mxu0 %v514
  %731 = vmatprep.subr.bf16.mxu0 0
  %732 = vmatpush1.bf16.msra.mxu0 %v515
  %733 = vmatprep.subr.bf16.mxu0 0
  %734 = vmatpush1.bf16.msra.mxu0 %v516
  %735 = vmatprep.subr.bf16.mxu0 0
  %736 = vmatpush1.bf16.msra.mxu0 %v517
  %737 = vmatprep.mubr.bf16.mxu0 %v189
  %738 = vmatmul.mubr.bf16.gmra.mrb[0].mxu0 %v188
  %v739 = vpop.f32.mrb[0].mxu0
  %v740 = vadd.f32 %v699, %v739
  %v741 = vpop.f32.mrb[0].mxu0
  %v742 = vpop.f32.mrb[0].mxu0
  %v743 = vadd.f32 %v702, %v742
  %v744 = vpop.f32.mrb[0].mxu0
  %745 = vdwg.mxu0
  %vm746 = vcmp.ge.f32.partialorder %v740, 0.0
  %vm747 = vcmp.ge.f32.partialorder %v743, 0.0
  %v748 = vmul.f32 %v740, 0.01
  %v749 = vmul.f32 %v743, 0.01
  %v750 = vsel %vm746, %v740, %v748
  %v751 = vsel %vm747, %v743, %v749
  %vm752 = vcmask 261120
  %753 = vst.msk [vmem:[%s3] sm:$0xff] %vm752, %v750
  %754 = vst.msk [vmem:[%s3 + $0x8] sm:$0xff] %vm752, %v751
  // Predicated region
  $region14: #{net3d_forward.23} parent=0 // pred_check
    _
  $region15: #{net3d_forward.23} parent=0 // pred_check_branch
    %756 = sbr.rel (0) target = $region17
  $region16: #{net3d_forward.23} parent=0 // pred_region
    _
  $region17: #{net3d_forward.23} parent=0 // pred_fallthru
    _
  // Predicated region
  $region18: #{net3d_forward.23} parent=0 // pred_check
    _
  $region19: #{net3d_forward.23} parent=0 // pred_check_branch
    %758 = sbr.rel (0) target = $region21
  $region20: #{net3d_forward.23} parent=0 // pred_region
    _
  $region21: #{net3d_forward.23} parent=0 // pred_fallthru
    _

// kernel: net3d_forward.24
$region0: #{net3d_forward.24}
  #allocation0 [shape = 'u32[]', space=smem, size = 0x4, offset = 0x4, fixed_abs, tag = 'smem constant byte address 0x4 - core index']
  #allocation1 [shape = 'u32[144,128]{1,0:T(1,128)}', space=vmem, size = 0x12000, scoped, tag = 'internal scratch']
  %s0 = inlined_call_operand.vmem [shape: f32[16,32], index: 0, kind: input, shape index: {}]
  %s1 = inlined_call_operand.vmem [shape: f32[1,32], index: 1, kind: output, shape index: {0}]
  %s2 = inlined_call_operand.vmem [shape: f32[1,32], index: 2, kind: output, shape index: {1}]
  %3 = xla_tuple %s1, %s2
  %s4 = sld [smem:[#allocation0]]
  $region26: #{net3d_forward.24} parent=0
    _
  %s6 = ssub.s32 1, %s4
  %s7 = scalar_select 0, %s6, %s4
  // Predicated region
  $region2: #{net3d_forward.24} parent=0 // pred_check
    _
  $region3: #{net3d_forward.24} parent=0 // pred_check_branch
    %9 = sbr.rel (0) target = $region5
  $region4: #{net3d_forward.24} parent=0 // pred_region
    _
  $region5: #{net3d_forward.24} parent=0 // pred_fallthru
    _
  %p10 = scmp.eq.s32.totalorder 0, 0
  // Predicated region
  $region6: #{net3d_forward.24} parent=0 // pred_check
    %p11 = pneg %p10
  $region7: #{net3d_forward.24} parent=0 // pred_check_branch
    %13 = sbr.rel (%p11) target = $region9
  $region8: #{net3d_forward.24} parent=0 // pred_region
    %vm14 = vcmask 253952
    %15 = vst.msk [vmem:[%s1] sm:$0x1] %vm14, 0.0
    %16 = vst.msk [vmem:[%s2] sm:$0x1] %vm14, 0.0
  $region9: #{net3d_forward.24} parent=0 // pred_fallthru
    _
  %v17 = vld [vmem:[%s0] sm:$0xff]
  %v18 = vld [vmem:[%s0 + $0x8] sm:$0xff]
  %v19 = vld [vmem:[%s1] sm:$0x1]
  %vm20 = vcmask 261120
  %v21 = vsel %vm20, %v17, 0.0
  %v22 = vsel %vm20, %v18, 0.0
  %v23 = vadd.f32 %v21, %v22
  %v24 = vrot.slane %v23, 4
  %v25 = vadd.f32 %v23, %v24
  %v26 = vrot.slane %v25, 2
  %v27 = vadd.f32 %v25, %v26
  %v28 = vrot.slane %v27, 1
  %v29 = vadd.f32 %v27, %v28
  %v30 = vadd.f32 %v19, %v29
  %vm31 = vcmask 253952
  %32 = vst.msk [vmem:[%s1] sm:$0x1] %vm31, %v30
  %v33 = vld [vmem:[%s2] sm:$0x1]
  %v34 = vmul.f32 %v17, %v17
  %v35 = vmul.f32 %v18, %v18
  %v36 = vsel %vm20, %v34, 0.0
  %v37 = vsel %vm20, %v35, 0.0
  %v38 = vadd.f32 %v36, %v37
  %v39 = vrot.slane %v38, 4
  %v40 = vadd.f32 %v38, %v39
  %v41 = vrot.slane %v40, 2
  %v42 = vadd.f32 %v40, %v41
  %v43 = vrot.slane %v42, 1
  %v44 = vadd.f32 %v42, %v43
  %v45 = vadd.f32 %v33, %v44
  %46 = vst.msk [vmem:[%s2] sm:$0x1] %vm31, %v45
  // Predicated region
  $region10: #{net3d_forward.24} parent=0 // pred_check
    _
  $region11: #{net3d_forward.24} parent=0 // pred_check_branch
    %48 = sbr.rel (0) target = $region13
  $region12: #{net3d_forward.24} parent=0 // pred_region
    _
  $region13: #{net3d_forward.24} parent=0 // pred_fallthru
    _
  // Predicated region
  $region14: #{net3d_forward.24} parent=0 // pred_check
    _
  $region15: #{net3d_forward.24} parent=0 // pred_check_branch
    %50 = sbr.rel (0) target = $region17
  $region16: #{net3d_forward.24} parent=0 // pred_region
    _
  $region17: #{net3d_forward.24} parent=0 // pred_fallthru
    _
  // Predicated region
  $region18: #{net3d_forward.24} parent=0 // pred_check
    _
  $region19: #{net3d_forward.24} parent=0 // pred_check_branch
    %52 = sbr.rel (0) target = $region21
  $region20: #{net3d_forward.24} parent=0 // pred_region
    _
  $region21: #{net3d_forward.24} parent=0 // pred_fallthru
    _
  // Predicated region
  $region22: #{net3d_forward.24} parent=0 // pred_check
    _
  $region23: #{net3d_forward.24} parent=0 // pred_check_branch
    %54 = sbr.rel (0) target = $region25
  $region24: #{net3d_forward.24} parent=0 // pred_region
    _
  $region25: #{net3d_forward.24} parent=0 // pred_fallthru
    _

// kernel: net3d_forward.25
$region0: #{net3d_forward.25}
  #allocation0 [shape = 'u32[]', space=smem, size = 0x4, offset = 0x4, fixed_abs, tag = 'smem constant byte address 0x4 - core index']
  #allocation1 [shape = 'u32[144,128]{1,0:T(1,128)}', space=vmem, size = 0x12000, scoped, tag = 'internal scratch']
  %s0 = inlined_call_operand.vmem [shape: f32[16,32], index: 0, kind: input, shape index: {}]
  %s1 = inlined_call_operand.vmem [shape: f32[1,32], index: 1, kind: input, shape index: {}]
  %s2 = inlined_call_operand.vmem [shape: f32[1,32], index: 2, kind: input, shape index: {}]
  %s3 = inlined_call_operand.vmem [shape: bf16[16,32], index: 3, kind: output, shape index: {}]
  %s4 = sld [smem:[#allocation0]]
  $region22: #{net3d_forward.25} parent=0
    _
  %s6 = ssub.s32 1, %s4
  %s7 = scalar_select 0, %s6, %s4
  // Predicated region
  $region2: #{net3d_forward.25} parent=0 // pred_check
    _
  $region3: #{net3d_forward.25} parent=0 // pred_check_branch
    %9 = sbr.rel (0) target = $region5
  $region4: #{net3d_forward.25} parent=0 // pred_region
    _
  $region5: #{net3d_forward.25} parent=0 // pred_fallthru
    _
  // Predicated region
  $region6: #{net3d_forward.25} parent=0 // pred_check
    _
  $region7: #{net3d_forward.25} parent=0 // pred_check_branch
    %11 = sbr.rel (0) target = $region9
  $region8: #{net3d_forward.25} parent=0 // pred_region
    _
  $region9: #{net3d_forward.25} parent=0 // pred_fallthru
    _
  // Predicated region
  $region10: #{net3d_forward.25} parent=0 // pred_check
    _
  $region11: #{net3d_forward.25} parent=0 // pred_check_branch
    %13 = sbr.rel (0) target = $region13
  $region12: #{net3d_forward.25} parent=0 // pred_region
    _
  $region13: #{net3d_forward.25} parent=0 // pred_fallthru
    _
  %v14 = vld [vmem:[%s0] sm:$0xff]
  %v15 = vld [vmem:[%s0 + $0x8] sm:$0xff]
  %v16 = vld [vmem:[%s1] sm:$0x1]
  %v18 = vlaneseq
  %v19 = vshrl.u32 %v18, 7
  %v20 = vsub.s32 0, %v19
  %v21 = vrot.slane %v16, %v20
  %v23 = vmul.f32 %v14, %v21
  %v24 = vmul.f32 %v15, %v21
  %v25 = vld [vmem:[%s2] sm:$0x1]
  %v27 = vlaneseq
  %v28 = vshrl.u32 %v27, 7
  %v29 = vsub.s32 0, %v28
  %v30 = vrot.slane %v25, %v29
  %v32 = vadd.f32 %v23, %v30
  %v33 = vadd.f32 %v24, %v30
  %v34 = vpack.c.bf16 %v33, %v32
  %v36 = vunpack.c.l.b16 %v34
  %v37 = vunpack.c.h.b16 %v34
  %v38 = vpack.c.b16 %v36, %v36
  %v39 = vpack.c.b16 %v37, %v37
  %vm42 = vcmask 257024
  %43 = vst.msk [vmem:[%s3] sm:$0xf] %vm42, %v38
  %44 = vst.msk [vmem:[%s3 + $0x4] sm:$0xf] %vm42, %v39
  // Predicated region
  $region14: #{net3d_forward.25} parent=0 // pred_check
    _
  $region15: #{net3d_forward.25} parent=0 // pred_check_branch
    %46 = sbr.rel (0) target = $region17
  $region16: #{net3d_forward.25} parent=0 // pred_region
    _
  $region17: #{net3d_forward.25} parent=0 // pred_fallthru
    _
  // Predicated region
  $region18: #{net3d_forward.25} parent=0 // pred_check
    _
  $region19: #{net3d_forward.25} parent=0 // pred_check_branch
    %48 = sbr.rel (0) target = $region21
  $region20: #{net3d_forward.25} parent=0 // pred_region
    _
  $region21: #{net3d_forward.25} parent=0 // pred_fallthru
    _

// kernel: tile.13
$region0: #{tile.13}
  #allocation0 [shape = 's32[1]{0}', space=sflag, size = 0x4, scoped, tag = 'scoped memory for tile.13']
  %s0 = inlined_call_operand.vmem [shape: f32[32], index: 0, kind: input, shape index: {}]
  %s1 = inlined_call_operand.vmem [shape: f32[8,32], index: 1, kind: output, shape index: {}]
  // Predicated region
  $region2: #{tile.13} parent=0 // pred_check
    _
  $region3: #{tile.13} parent=0 // pred_check_branch
    %3 = sbr.rel (0) target = $region5
  $region4: #{tile.13} parent=0 // pred_region
    _
  $region5: #{tile.13} parent=0 // pred_fallthru
    _
  %v4 = vld [vmem:[%s0] ss:$0 sm:$0xff]
  %5 = vst [vmem:[%s1] sm:$0xff] %v4

// kernel: tile.14
$region0: #{tile.14}
  %s0 = inlined_call_operand.vmem [shape: f32[8,32], index: 0, kind: input, shape index: {}]
  %s1 = inlined_call_operand.vmem [shape: f32[1,256], index: 1, kind: output, shape index: {}]
  $region1: #{tile.14} parent=0
    #allocation0 [shape = 'u8[8192]{0}', space=vmem, size = 0x2000, scoped, tag = 'scoped mem for output reshape']
    %s2 = smov 3
    %v3 = vld [vmem:[%s0] ss:$4 sm:%s2]
    %vm4 = vcmask 261120
    %5 = vst.msk [vmem:[#allocation0] ss:$8 sm:$0x3] %vm4, %v3
    %s6 = scalar_lea.vmem %s0, 3
    %s7 = smov 3
    %v8 = vld [vmem:[%s6] ss:$4 sm:%s7]
    %9 = vrot.lane.b32.xlu0 %v8, 96
    %v10 = vpop.permute.xlu0 %9
    %vm11 = vcmask 1048320
    %12 = vst.msk [vmem:[#allocation0] ss:$8 sm:$0x3] %vm11, %v10
    %s13 = scalar_lea.vmem %s0, 2
    %s14 = smov 3
    %v15 = vld [vmem:[%s13] ss:$4 sm:%s14]
    %16 = vrot.lane.b32.xlu0 %v15, 64
    %v17 = vpop.permute.xlu0 %16
    %vm18 = vcmask 785920
    %19 = vst.msk [vmem:[#allocation0] ss:$8 sm:$0x3] %vm18, %v17
    %s20 = scalar_lea.vmem %s0, 1
    %s21 = smov 3
    %v22 = vld [vmem:[%s20] ss:$4 sm:%s21]
    %23 = vrot.lane.b32.xlu0 %v22, 32
    %v24 = vpop.permute.xlu0 %23
    %vm25 = vcmask 523520
    %26 = vst.msk [vmem:[#allocation0] ss:$8 sm:$0x3] %vm25, %v24
    %s28 = sshllo.u32 0, 1
    %v30 = vld [vmem:[#allocation0] sm:%s28]
    %s31 = sshllo.u32 0, 1
    %32 = vst [vmem:[%s1] sm:%s31] %v30
    %s33 = scalar_lea.vmem [#allocation0], 8
    %v34 = vld [vmem:[%s33] sm:%s28]
    %s35 = sshllo.u32 0, 1
    %s36 = scalar_lea.vmem %s1, 1
    %37 = vst [vmem:[%s36] sm:%s35] %v34

// kernel: net3d_forward.26
$region0: #{net3d_forward.26}
  #allocation0 [shape = 'u32[]', space=smem, size = 0x4, offset = 0x4, fixed_abs, tag = 'smem constant byte address 0x4 - core index']
  #allocation1 [shape = 'u32[144,128]{1,0:T(1,128)}', space=vmem, size = 0x12000, scoped, tag = 'internal scratch']
  %s0 = inlined_call_operand.vmem [shape: bf16[16,864], index: 0, kind: input, shape index: {}]
  %s1 = inlined_call_operand.vmem [shape: bf16[864,256], index: 1, kind: input, shape index: {}]
  %s2 = inlined_call_operand.vmem [shape: f32[1,256], index: 2, kind: input, shape index: {}]
  %s3 = inlined_call_operand.vmem [shape: f32[16,256], index: 3, kind: output, shape index: {}]
  %s4 = sld [smem:[#allocation0]]
  $region22: #{net3d_forward.26} parent=0
    _
  %s6 = ssub.s32 1, %s4
  %s7 = scalar_select 0, %s6, %s4
  // Predicated region
  $region2: #{net3d_forward.26} parent=0 // pred_check
    _
  $region3: #{net3d_forward.26} parent=0 // pred_check_branch
    %9 = sbr.rel (0) target = $region5
  $region4: #{net3d_forward.26} parent=0 // pred_region
    _
  $region5: #{net3d_forward.26} parent=0 // pred_fallthru
    _
  // Predicated region
  $region6: #{net3d_forward.26} parent=0 // pred_check
    _
  $region7: #{net3d_forward.26} parent=0 // pred_check_branch
    %11 = sbr.rel (0) target = $region9
  $region8: #{net3d_forward.26} parent=0 // pred_region
    _
  $region9: #{net3d_forward.26} parent=0 // pred_fallthru
    _
  // Predicated region
  $region10: #{net3d_forward.26} parent=0 // pred_check
    _
  $region11: #{net3d_forward.26} parent=0 // pred_check_branch
    %13 = sbr.rel (0) target = $region13
  $region12: #{net3d_forward.26} parent=0 // pred_region
    _
  $region13: #{net3d_forward.26} parent=0 // pred_fallthru
    _
  %v15 = vld [vmem:[%s0] sm:$0xff]
  %v16 = vld [vmem:[%s0 + $0x8] sm:$0xff]
  %v17 = vld [vmem:[%s0 + $0x10] sm:$0xff]
  %v18 = vld [vmem:[%s0 + $0x18] sm:$0xf]
  %v19 = vld [vmem:[%s0 + $0x1c] sm:$0xff]
  %v20 = vld [vmem:[%s0 + $0x24] sm:$0xff]
  %v21 = vld [vmem:[%s0 + $0x2c] sm:$0xff]
  %v22 = vld [vmem:[%s0 + $0x34] sm:$0xf]
  %v23 = vld [vmem:[%s1] sm:$0xff]
  %v24 = vld [vmem:[%s1 + $0x8] sm:$0xff]
  %v25 = vld [vmem:[%s1 + $0x10] sm:$0xff]
  %v26 = vld [vmem:[%s1 + $0x18] sm:$0xff]
  %v27 = vld [vmem:[%s1 + $0x20] sm:$0xff]
  %v28 = vld [vmem:[%s1 + $0x28] sm:$0xff]
  %v29 = vld [vmem:[%s1 + $0x30] sm:$0xff]
  %v30 = vld [vmem:[%s1 + $0x38] sm:$0xff]
  %v31 = vld [vmem:[%s1 + $0x40] sm:$0xff]
  %v32 = vld [vmem:[%s1 + $0x48] sm:$0xff]
  %v33 = vld [vmem:[%s1 + $0x50] sm:$0xff]
  %v34 = vld [vmem:[%s1 + $0x58] sm:$0xff]
  %v35 = vld [vmem:[%s1 + $0x60] sm:$0xff]
  %v36 = vld [vmem:[%s1 + $0x68] sm:$0xff]
  %v37 = vld [vmem:[%s1 + $0x70] sm:$0xff]
  %v38 = vld [vmem:[%s1 + $0x78] sm:$0xff]
  %v39 = vld [vmem:[%s1 + $0x80] sm:$0xff]
  %v40 = vld [vmem:[%s1 + $0x88] sm:$0xff]
  %v41 = vld [vmem:[%s1 + $0x90] sm:$0xff]
  %v42 = vld [vmem:[%s1 + $0x98] sm:$0xff]
  %v43 = vld [vmem:[%s1 + $0xa0] sm:$0xff]
  %v44 = vld [vmem:[%s1 + $0xa8] sm:$0xff]
  %v45 = vld [vmem:[%s1 + $0xb0] sm:$0xff]
  %v46 = vld [vmem:[%s1 + $0xb8] sm:$0xff]
  %v47 = vld [vmem:[%s1 + $0xc0] sm:$0xff]
  %v48 = vld [vmem:[%s1 + $0xc8] sm:$0xff]
  %v49 = vld [vmem:[%s1 + $0xd0] sm:$0xff]
  %v50 = vld [vmem:[%s1 + $0xd8] sm:$0xff]
  %v51 = vld [vmem:[%s1 + $0xe0] sm:$0xff]
  %v52 = vld [vmem:[%s1 + $0xe8] sm:$0xff]
  %v53 = vld [vmem:[%s1 + $0xf0] sm:$0xff]
  %v54 = vld [vmem:[%s1 + $0xf8] sm:$0xff]
  %v55 = vld [vmem:[%s1 + $0x100] sm:$0xff]
  %v56 = vld [vmem:[%s1 + $0x108] sm:$0xff]
  %v57 = vld [vmem:[%s1 + $0x110] sm:$0xff]
  %v58 = vld [vmem:[%s1 + $0x118] sm:$0xff]
  %v59 = vld [vmem:[%s1 + $0x120] sm:$0xff]
  %v60 = vld [vmem:[%s1 + $0x128] sm:$0xff]
  %v61 = vld [vmem:[%s1 + $0x130] sm:$0xff]
  %v62 = vld [vmem:[%s1 + $0x138] sm:$0xff]
  %v63 = vld [vmem:[%s1 + $0x140] sm:$0xff]
  %v64 = vld [vmem:[%s1 + $0x148] sm:$0xff]
  %v65 = vld [vmem:[%s1 + $0x150] sm:$0xff]
  %v66 = vld [vmem:[%s1 + $0x158] sm:$0xff]
  %v67 = vld [vmem:[%s1 + $0x160] sm:$0xff]
  %v68 = vld [vmem:[%s1 + $0x168] sm:$0xff]
  %v69 = vld [vmem:[%s1 + $0x170] sm:$0xff]
  %v70 = vld [vmem:[%s1 + $0x178] sm:$0xff]
  %v71 = vld [vmem:[%s1 + $0x180] sm:$0xff]
  %v72 = vld [vmem:[%s1 + $0x188] sm:$0xff]
  %v73 = vld [vmem:[%s1 + $0x190] sm:$0xff]
  %v74 = vld [vmem:[%s1 + $0x198] sm:$0xff]
  %v75 = vld [vmem:[%s1 + $0x1a0] sm:$0xff]
  %v76 = vld [vmem:[%s1 + $0x1a8] sm:$0xff]
  %v77 = vld [vmem:[%s1 + $0x1b0] sm:$0xff]
  %v78 = vld [vmem:[%s1 + $0x1b8] sm:$0xff]
  %v79 = vld [vmem:[%s1 + $0x1c0] sm:$0xff]
  %v80 = vld [vmem:[%s1 + $0x1c8] sm:$0xff]
  %v81 = vld [vmem:[%s1 + $0x1d0] sm:$0xff]
  %v82 = vld [vmem:[%s1 + $0x1d8] sm:$0xff]
  %v83 = vld [vmem:[%s1 + $0x1e0] sm:$0xff]
  %v84 = vld [vmem:[%s1 + $0x1e8] sm:$0xff]
  %v85 = vld [vmem:[%s1 + $0x1f0] sm:$0xff]
  %v86 = vld [vmem:[%s1 + $0x1f8] sm:$0xff]
  %v87 = vld [vmem:[%s1 + $0x200] sm:$0xff]
  %v88 = vld [vmem:[%s1 + $0x208] sm:$0xff]
  %v89 = vld [vmem:[%s1 + $0x210] sm:$0xff]
  %v90 = vld [vmem:[%s1 + $0x218] sm:$0xff]
  %v91 = vld [vmem:[%s1 + $0x220] sm:$0xff]
  %v92 = vld [vmem:[%s1 + $0x228] sm:$0xff]
  %v93 = vld [vmem:[%s1 + $0x230] sm:$0xff]
  %v94 = vld [vmem:[%s1 + $0x238] sm:$0xff]
  %v95 = vld [vmem:[%s1 + $0x240] sm:$0xff]
  %v96 = vld [vmem:[%s1 + $0x248] sm:$0xff]
  %v97 = vld [vmem:[%s1 + $0x250] sm:$0xff]
  %v98 = vld [vmem:[%s1 + $0x258] sm:$0xff]
  %v99 = vld [vmem:[%s1 + $0x260] sm:$0xff]
  %v100 = vld [vmem:[%s1 + $0x268] sm:$0xff]
  %v101 = vld [vmem:[%s1 + $0x270] sm:$0xff]
  %v102 = vld [vmem:[%s1 + $0x278] sm:$0xff]
  %v103 = vld [vmem:[%s1 + $0x280] sm:$0xff]
  %v104 = vld [vmem:[%s1 + $0x288] sm:$0xff]
  %v105 = vld [vmem:[%s1 + $0x290] sm:$0xff]
  %v106 = vld [vmem:[%s1 + $0x298] sm:$0xff]
  %v107 = vld [vmem:[%s1 + $0x2a0] sm:$0xff]
  %v108 = vld [vmem:[%s1 + $0x2a8] sm:$0xff]
  %v109 = vld [vmem:[%s1 + $0x2b0] sm:$0xff]
  %v110 = vld [vmem:[%s1 + $0x2b8] sm:$0xff]
  %v111 = vld [vmem:[%s1 + $0x2c0] sm:$0xff]
  %v112 = vld [vmem:[%s1 + $0x2c8] sm:$0xff]
  %v113 = vld [vmem:[%s1 + $0x2d0] sm:$0xff]
  %v114 = vld [vmem:[%s1 + $0x2d8] sm:$0xff]
  %v115 = vld [vmem:[%s1 + $0x2e0] sm:$0xff]
  %v116 = vld [vmem:[%s1 + $0x2e8] sm:$0xff]
  %v117 = vld [vmem:[%s1 + $0x2f0] sm:$0xff]
  %v118 = vld [vmem:[%s1 + $0x2f8] sm:$0xff]
  %v119 = vld [vmem:[%s1 + $0x300] sm:$0xff]
  %v120 = vld [vmem:[%s1 + $0x308] sm:$0xff]
  %v121 = vld [vmem:[%s1 + $0x310] sm:$0xff]
  %v122 = vld [vmem:[%s1 + $0x318] sm:$0xff]
  %v123 = vld [vmem:[%s1 + $0x320] sm:$0xff]
  %v124 = vld [vmem:[%s1 + $0x328] sm:$0xff]
  %v125 = vld [vmem:[%s1 + $0x330] sm:$0xff]
  %v126 = vld [vmem:[%s1 + $0x338] sm:$0xff]
  %v127 = vld [vmem:[%s1 + $0x340] sm:$0xff]
  %v128 = vld [vmem:[%s1 + $0x348] sm:$0xff]
  %v129 = vld [vmem:[%s1 + $0x350] sm:$0xff]
  %v130 = vld [vmem:[%s1 + $0x358] sm:$0xff]
  %v131 = vld [vmem:[%s2] sm:$0x3]
  %v133 = vlaneseq
  %v134 = vshrl.u32 %v133, 7
  %v135 = vsub.s32 0, %v134
  %v136 = vrot.slane %v131, %v135
  %v137 = vlaneseq
  %v138 = vshrl.u32 %v137, 7
  %v139 = vsub.s32 1, %v138
  %v140 = vrot.slane %v131, %v139
  %v151 = vunpack.c.l.b16 %v15
  %v152 = vunpack.c.h.b16 %v15
  %v153 = vunpack.c.l.b16 %v16
  %v154 = vunpack.c.h.b16 %v16
  %v155 = vunpack.c.l.b16 %v17
  %v156 = vunpack.c.h.b16 %v17
  %v157 = vunpack.c.l.b16 %v18
  %v158 = vunpack.c.l.b16 %v19
  %v159 = vunpack.c.h.b16 %v19
  %v160 = vunpack.c.l.b16 %v20
  %v161 = vunpack.c.h.b16 %v20
  %v162 = vunpack.c.l.b16 %v21
  %v163 = vunpack.c.h.b16 %v21
  %v164 = vunpack.c.l.b16 %v22
  %v165 = vpack.c.b16 %v158, %v151
  %v166 = vpack.c.b16 %v159, %v152
  %v167 = vpack.c.b16 %v160, %v153
  %v168 = vpack.c.b16 %v161, %v154
  %v169 = vpack.c.b16 %v162, %v155
  %v170 = vpack.c.b16 %v163, %v156
  %v171 = vpack.c.b16 %v164, %v157
  %v286 = vunpack.c.l.b16 %v23
  %v287 = vunpack.c.h.b16 %v23
  %v288 = vunpack.c.l.b16 %v24
  %v289 = vunpack.c.h.b16 %v24
  %v290 = vunpack.c.l.b16 %v25
  %v291 = vunpack.c.h.b16 %v25
  %v292 = vunpack.c.l.b16 %v26
  %v293 = vunpack.c.h.b16 %v26
  %v294 = vunpack.c.l.b16 %v27
  %v295 = vunpack.c.h.b16 %v27
  %v296 = vunpack.c.l.b16 %v28
  %v297 = vunpack.c.h.b16 %v28
  %v298 = vunpack.c.l.b16 %v29
  %v299 = vunpack.c.h.b16 %v29
  %v300 = vunpack.c.l.b16 %v30
  %v301 = vunpack.c.h.b16 %v30
  %v302 = vunpack.c.l.b16 %v31
  %v303 = vunpack.c.h.b16 %v31
  %v304 = vunpack.c.l.b16 %v32
  %v305 = vunpack.c.h.b16 %v32
  %v306 = vunpack.c.l.b16 %v33
  %v307 = vunpack.c.h.b16 %v33
  %v308 = vunpack.c.l.b16 %v34
  %v309 = vunpack.c.h.b16 %v34
  %v310 = vunpack.c.l.b16 %v35
  %v311 = vunpack.c.h.b16 %v35
  %v312 = vunpack.c.l.b16 %v36
  %v313 = vunpack.c.h.b16 %v36
  %v314 = vunpack.c.l.b16 %v37
  %v315 = vunpack.c.h.b16 %v37
  %v316 = vunpack.c.l.b16 %v38
  %v317 = vunpack.c.h.b16 %v38
  %v318 = vunpack.c.l.b16 %v39
  %v319 = vunpack.c.h.b16 %v39
  %v320 = vunpack.c.l.b16 %v40
  %v321 = vunpack.c.h.b16 %v40
  %v322 = vunpack.c.l.b16 %v41
  %v323 = vunpack.c.h.b16 %v41
  %v324 = vunpack.c.l.b16 %v42
  %v325 = vunpack.c.h.b16 %v42
  %v326 = vunpack.c.l.b16 %v43
  %v327 = vunpack.c.h.b16 %v43
  %v328 = vunpack.c.l.b16 %v44
  %v329 = vunpack.c.h.b16 %v44
  %v330 = vunpack.c.l.b16 %v45
  %v331 = vunpack.c.h.b16 %v45
  %v332 = vunpack.c.l.b16 %v46
  %v333 = vunpack.c.h.b16 %v46
  %v334 = vunpack.c.l.b16 %v47
  %v335 = vunpack.c.h.b16 %v47
  %v336 = vunpack.c.l.b16 %v48
  %v337 = vunpack.c.h.b16 %v48
  %v338 = vunpack.c.l.b16 %v49
  %v339 = vunpack.c.h.b16 %v49
  %v340 = vunpack.c.l.b16 %v50
  %v341 = vunpack.c.h.b16 %v50
  %v342 = vunpack.c.l.b16 %v51
  %v343 = vunpack.c.h.b16 %v51
  %v344 = vunpack.c.l.b16 %v52
  %v345 = vunpack.c.h.b16 %v52
  %v346 = vunpack.c.l.b16 %v53
  %v347 = vunpack.c.h.b16 %v53
  %v348 = vunpack.c.l.b16 %v54
  %v349 = vunpack.c.h.b16 %v54
  %v350 = vunpack.c.l.b16 %v55
  %v351 = vunpack.c.h.b16 %v55
  %v352 = vunpack.c.l.b16 %v56
  %v353 = vunpack.c.h.b16 %v56
  %v354 = vunpack.c.l.b16 %v57
  %v355 = vunpack.c.h.b16 %v57
  %v356 = vunpack.c.l.b16 %v58
  %v357 = vunpack.c.h.b16 %v58
  %v358 = vunpack.c.l.b16 %v59
  %v359 = vunpack.c.h.b16 %v59
  %v360 = vunpack.c.l.b16 %v60
  %v361 = vunpack.c.h.b16 %v60
  %v362 = vunpack.c.l.b16 %v61
  %v363 = vunpack.c.h.b16 %v61
  %v364 = vunpack.c.l.b16 %v62
  %v365 = vunpack.c.h.b16 %v62
  %v366 = vunpack.c.l.b16 %v63
  %v367 = vunpack.c.h.b16 %v63
  %v368 = vunpack.c.l.b16 %v64
  %v369 = vunpack.c.h.b16 %v64
  %v370 = vunpack.c.l.b16 %v65
  %v371 = vunpack.c.h.b16 %v65
  %v372 = vunpack.c.l.b16 %v66
  %v373 = vunpack.c.h.b16 %v66
  %v374 = vunpack.c.l.b16 %v67
  %v375 = vunpack.c.h.b16 %v67
  %v376 = vunpack.c.l.b16 %v68
  %v377 = vunpack.c.h.b16 %v68
  %v378 = vunpack.c.l.b16 %v69
  %v379 = vunpack.c.h.b16 %v69
  %v380 = vunpack.c.l.b16 %v70
  %v381 = vunpack.c.h.b16 %v70
  %v382 = vunpack.c.l.b16 %v71
  %v383 = vunpack.c.h.b16 %v71
  %v384 = vunpack.c.l.b16 %v72
  %v385 = vunpack.c.h.b16 %v72
  %v386 = vunpack.c.l.b16 %v73
  %v387 = vunpack.c.h.b16 %v73
  %v388 = vunpack.c.l.b16 %v74
  %v389 = vunpack.c.h.b16 %v74
  %v390 = vunpack.c.l.b16 %v75
  %v391 = vunpack.c.h.b16 %v75
  %v392 = vunpack.c.l.b16 %v76
  %v393 = vunpack.c.h.b16 %v76
  %v394 = vunpack.c.l.b16 %v77
  %v395 = vunpack.c.h.b16 %v77
  %v396 = vunpack.c.l.b16 %v78
  %v397 = vunpack.c.h.b16 %v78
  %v398 = vunpack.c.l.b16 %v79
  %v399 = vunpack.c.h.b16 %v79
  %v400 = vunpack.c.l.b16 %v80
  %v401 = vunpack.c.h.b16 %v80
  %v402 = vunpack.c.l.b16 %v81
  %v403 = vunpack.c.h.b16 %v81
  %v404 = vunpack.c.l.b16 %v82
  %v405 = vunpack.c.h.b16 %v82
  %v406 = vunpack.c.l.b16 %v83
  %v407 = vunpack.c.h.b16 %v83
  %v408 = vunpack.c.l.b16 %v84
  %v409 = vunpack.c.h.b16 %v84
  %v410 = vunpack.c.l.b16 %v85
  %v411 = vunpack.c.h.b16 %v85
  %v412 = vunpack.c.l.b16 %v86
  %v413 = vunpack.c.h.b16 %v86
  %v414 = vunpack.c.l.b16 %v87
  %v415 = vunpack.c.h.b16 %v87
  %v416 = vunpack.c.l.b16 %v88
  %v417 = vunpack.c.h.b16 %v88
  %v418 = vunpack.c.l.b16 %v89
  %v419 = vunpack.c.h.b16 %v89
  %v420 = vunpack.c.l.b16 %v90
  %v421 = vunpack.c.h.b16 %v90
  %v422 = vunpack.c.l.b16 %v91
  %v423 = vunpack.c.h.b16 %v91
  %v424 = vunpack.c.l.b16 %v92
  %v425 = vunpack.c.h.b16 %v92
  %v426 = vunpack.c.l.b16 %v93
  %v427 = vunpack.c.h.b16 %v93
  %v428 = vunpack.c.l.b16 %v94
  %v429 = vunpack.c.h.b16 %v94
  %v430 = vunpack.c.l.b16 %v95
  %v431 = vunpack.c.h.b16 %v95
  %v432 = vunpack.c.l.b16 %v96
  %v433 = vunpack.c.h.b16 %v96
  %v434 = vunpack.c.l.b16 %v97
  %v435 = vunpack.c.h.b16 %v97
  %v436 = vunpack.c.l.b16 %v98
  %v437 = vunpack.c.h.b16 %v98
  %v438 = vunpack.c.l.b16 %v99
  %v439 = vunpack.c.h.b16 %v99
  %v440 = vunpack.c.l.b16 %v100
  %v441 = vunpack.c.h.b16 %v100
  %v442 = vunpack.c.l.b16 %v101
  %v443 = vunpack.c.h.b16 %v101
  %v444 = vunpack.c.l.b16 %v102
  %v445 = vunpack.c.h.b16 %v102
  %v446 = vunpack.c.l.b16 %v103
  %v447 = vunpack.c.h.b16 %v103
  %v448 = vunpack.c.l.b16 %v104
  %v449 = vunpack.c.h.b16 %v104
  %v450 = vunpack.c.l.b16 %v105
  %v451 = vunpack.c.h.b16 %v105
  %v452 = vunpack.c.l.b16 %v106
  %v453 = vunpack.c.h.b16 %v106
  %v454 = vunpack.c.l.b16 %v107
  %v455 = vunpack.c.h.b16 %v107
  %v456 = vunpack.c.l.b16 %v108
  %v457 = vunpack.c.h.b16 %v108
  %v458 = vunpack.c.l.b16 %v109
  %v459 = vunpack.c.h.b16 %v109
  %v460 = vunpack.c.l.b16 %v110
  %v461 = vunpack.c.h.b16 %v110
  %v462 = vunpack.c.l.b16 %v111
  %v463 = vunpack.c.h.b16 %v111
  %v464 = vunpack.c.l.b16 %v112
  %v465 = vunpack.c.h.b16 %v112
  %v466 = vunpack.c.l.b16 %v113
  %v467 = vunpack.c.h.b16 %v113
  %v468 = vunpack.c.l.b16 %v114
  %v469 = vunpack.c.h.b16 %v114
  %v470 = vunpack.c.l.b16 %v115
  %v471 = vunpack.c.h.b16 %v115
  %v472 = vunpack.c.l.b16 %v116
  %v473 = vunpack.c.h.b16 %v116
  %v474 = vunpack.c.l.b16 %v117
  %v475 = vunpack.c.h.b16 %v117
  %v476 = vunpack.c.l.b16 %v118
  %v477 = vunpack.c.h.b16 %v118
  %v478 = vunpack.c.l.b16 %v119
  %v479 = vunpack.c.h.b16 %v119
  %v480 = vunpack.c.l.b16 %v120
  %v481 = vunpack.c.h.b16 %v120
  %v482 = vunpack.c.l.b16 %v121
  %v483 = vunpack.c.h.b16 %v121
  %v484 = vunpack.c.l.b16 %v122
  %v485 = vunpack.c.h.b16 %v122
  %v486 = vunpack.c.l.b16 %v123
  %v487 = vunpack.c.h.b16 %v123
  %v488 = vunpack.c.l.b16 %v124
  %v489 = vunpack.c.h.b16 %v124
  %v490 = vunpack.c.l.b16 %v125
  %v491 = vunpack.c.h.b16 %v125
  %v492 = vunpack.c.l.b16 %v126
  %v493 = vunpack.c.h.b16 %v126
  %v494 = vunpack.c.l.b16 %v127
  %v495 = vunpack.c.h.b16 %v127
  %v496 = vunpack.c.l.b16 %v128
  %v497 = vunpack.c.h.b16 %v128
  %v498 = vunpack.c.l.b16 %v129
  %v499 = vunpack.c.h.b16 %v129
  %v500 = vunpack.c.l.b16 %v130
  %v501 = vunpack.c.h.b16 %v130
  %v502 = vpack.c.b16 %v288, %v286
  %v503 = vpack.c.b16 %v289, %v287
  %v504 = vpack.c.b16 %v292, %v290
  %v505 = vpack.c.b16 %v293, %v291
  %v506 = vpack.c.b16 %v296, %v294
  %v507 = vpack.c.b16 %v297, %v295
  %v508 = vpack.c.b16 %v300, %v298
  %v509 = vpack.c.b16 %v301, %v299
  %v510 = vpack.c.b16 %v304, %v302
  %v511 = vpack.c.b16 %v305, %v303
  %v512 = vpack.c.b16 %v308, %v306
  %v513 = vpack.c.b16 %v309, %v307
  %v514 = vpack.c.b16 %v312, %v310
  %v515 = vpack.c.b16 %v313, %v311
  %v516 = vpack.c.b16 %v316, %v314
  %v517 = vpack.c.b16 %v317, %v315
  %v518 = vpack.c.b16 %v320, %v318
  %v519 = vpack.c.b16 %v321, %v319
  %v520 = vpack.c.b16 %v324, %v322
  %v521 = vpack.c.b16 %v325, %v323
  %v522 = vpack.c.b16 %v328, %v326
  %v523 = vpack.c.b16 %v329, %v327
  %v524 = vpack.c.b16 %v332, %v330
  %v525 = vpack.c.b16 %v333, %v331
  %v526 = vpack.c.b16 %v336, %v334
  %v527 = vpack.c.b16 %v337, %v335
  %v528 = vpack.c.b16 %v340, %v338
  %v529 = vpack.c.b16 %v341, %v339
  %v530 = vpack.c.b16 %v344, %v342
  %v531 = vpack.c.b16 %v345, %v343
  %v532 = vpack.c.b16 %v348, %v346
  %v533 = vpack.c.b16 %v349, %v347
  %v534 = vpack.c.b16 %v352, %v350
  %v535 = vpack.c.b16 %v353, %v351
  %v536 = vpack.c.b16 %v356, %v354
  %v537 = vpack.c.b16 %v357, %v355
  %v538 = vpack.c.b16 %v360, %v358
  %v539 = vpack.c.b16 %v361, %v359
  %v540 = vpack.c.b16 %v364, %v362
  %v541 = vpack.c.b16 %v365, %v363
  %v542 = vpack.c.b16 %v368, %v366
  %v543 = vpack.c.b16 %v369, %v367
  %v544 = vpack.c.b16 %v372, %v370
  %v545 = vpack.c.b16 %v373, %v371
  %v546 = vpack.c.b16 %v376, %v374
  %v547 = vpack.c.b16 %v377, %v375
  %v548 = vpack.c.b16 %v380, %v378
  %v549 = vpack.c.b16 %v381, %v379
  %v550 = vpack.c.b16 %v384, %v382
  %v551 = vpack.c.b16 %v385, %v383
  %v552 = vpack.c.b16 %v388, %v386
  %v553 = vpack.c.b16 %v389, %v387
  %v554 = vpack.c.b16 %v392, %v390
  %v555 = vpack.c.b16 %v393, %v391
  %v556 = vpack.c.b16 %v396, %v394
  %v557 = vpack.c.b16 %v397, %v395
  %v558 = vpack.c.b16 %v400, %v398
  %v559 = vpack.c.b16 %v401, %v399
  %v560 = vpack.c.b16 %v404, %v402
  %v561 = vpack.c.b16 %v405, %v403
  %v562 = vpack.c.b16 %v408, %v406
  %v563 = vpack.c.b16 %v409, %v407
  %v564 = vpack.c.b16 %v412, %v410
  %v565 = vpack.c.b16 %v413, %v411
  %v566 = vpack.c.b16 %v416, %v414
  %v567 = vpack.c.b16 %v417, %v415
  %v568 = vpack.c.b16 %v420, %v418
  %v569 = vpack.c.b16 %v421, %v419
  %v570 = vpack.c.b16 %v424, %v422
  %v571 = vpack.c.b16 %v425, %v423
  %v572 = vpack.c.b16 %v428, %v426
  %v573 = vpack.c.b16 %v429, %v427
  %v574 = vpack.c.b16 %v432, %v430
  %v575 = vpack.c.b16 %v433, %v431
  %v576 = vpack.c.b16 %v436, %v434
  %v577 = vpack.c.b16 %v437, %v435
  %v578 = vpack.c.b16 %v440, %v438
  %v579 = vpack.c.b16 %v441, %v439
  %v580 = vpack.c.b16 %v444, %v442
  %v581 = vpack.c.b16 %v445, %v443
  %v582 = vpack.c.b16 %v448, %v446
  %v583 = vpack.c.b16 %v449, %v447
  %v584 = vpack.c.b16 %v452, %v450
  %v585 = vpack.c.b16 %v453, %v451
  %v586 = vpack.c.b16 %v456, %v454
  %v587 = vpack.c.b16 %v457, %v455
  %v588 = vpack.c.b16 %v460, %v458
  %v589 = vpack.c.b16 %v461, %v459
  %v590 = vpack.c.b16 %v464, %v462
  %v591 = vpack.c.b16 %v465, %v463
  %v592 = vpack.c.b16 %v468, %v466
  %v593 = vpack.c.b16 %v469, %v467
  %v594 = vpack.c.b16 %v472, %v470
  %v595 = vpack.c.b16 %v473, %v471
  %v596 = vpack.c.b16 %v476, %v474
  %v597 = vpack.c.b16 %v477, %v475
  %v598 = vpack.c.b16 %v480, %v478
  %v599 = vpack.c.b16 %v481, %v479
  %v600 = vpack.c.b16 %v484, %v482
  %v601 = vpack.c.b16 %v485, %v483
  %v602 = vpack.c.b16 %v488, %v486
  %v603 = vpack.c.b16 %v489, %v487
  %v604 = vpack.c.b16 %v492, %v490
  %v605 = vpack.c.b16 %v493, %v491
  %v606 = vpack.c.b16 %v496, %v494
  %v607 = vpack.c.b16 %v497, %v495
  %v608 = vpack.c.b16 %v500, %v498
  %v609 = vpack.c.b16 %v501, %v499
  %vm718 = vcmask 785408
  %v720 = vsel %vm718, %v171, 0
  %722 = vmatprep.subr.bf16.mxu0 %v503
  %723 = vmatpush1.bf16.msra.mxu0 %v502
  %724 = vmatprep.subr.bf16.mxu0 %v505
  %725 = vmatpush1.bf16.msra.mxu0 %v504
  %726 = vmatprep.subr.bf16.mxu0 %v507
  %727 = vmatpush1.bf16.msra.mxu0 %v506
  %728 = vmatprep.subr.bf16.mxu0 %v509
  %729 = vmatpush1.bf16.msra.mxu0 %v508
  %730 = vmatprep.subr.bf16.mxu0 %v511
  %731 = vmatpush1.bf16.msra.mxu0 %v510
  %732 = vmatprep.subr.bf16.mxu0 %v513
  %733 = vmatpush1.bf16.msra.mxu0 %v512
  %734 = vmatprep.subr.bf16.mxu0 %v515
  %735 = vmatpush1.bf16.msra.mxu0 %v514
  %736 = vmatprep.subr.bf16.mxu0 %v517
  %737 = vmatpush1.bf16.msra.mxu0 %v516
  %738 = vmatprep.subr.bf16.mxu0 %v519
  %739 = vmatpush1.bf16.msra.mxu0 %v518
  %740 = vmatprep.subr.bf16.mxu0 %v521
  %741 = vmatpush1.bf16.msra.mxu0 %v520
  %742 = vmatprep.subr.bf16.mxu0 %v523
  %743 = vmatpush1.bf16.msra.mxu0 %v522
  %744 = vmatprep.subr.bf16.mxu0 %v525
  %745 = vmatpush1.bf16.msra.mxu0 %v524
  %746 = vmatprep.subr.bf16.mxu0 %v527
  %747 = vmatpush1.bf16.msra.mxu0 %v526
  %748 = vmatprep.subr.bf16.mxu0 %v529
  %749 = vmatpush1.bf16.msra.mxu0 %v528
  %750 = vmatprep.subr.bf16.mxu0 %v531
  %751 = vmatpush1.bf16.msra.mxu0 %v530
  %752 = vmatprep.subr.bf16.mxu0 %v533
  %753 = vmatpush1.bf16.msra.mxu0 %v532
  %754 = vmatprep.mubr.bf16.mxu0 %v166
  %755 = vmatmul.mubr.bf16.gmra.mrb[0].mxu0 %v165
  %v756 = vpop.f32.mrb[0].mxu0
  %v757 = vadd.f32 %v136, %v756
  %v758 = vpop.f32.mrb[0].mxu0
  %v759 = vadd.f32 %v140, %v758
  %v760 = vpop.f32.mrb[0].mxu0
  %v761 = vadd.f32 %v136, %v760
  %v762 = vpop.f32.mrb[0].mxu0
  %v763 = vadd.f32 %v140, %v762
  %764 = vdwg.mxu0
  %765 = vmatprep.subr.bf16.mxu0 %v535
  %766 = vmatpush1.bf16.msra.mxu0 %v534
  %767 = vmatprep.subr.bf16.mxu0 %v537
  %768 = vmatpush1.bf16.msra.mxu0 %v536
  %769 = vmatprep.subr.bf16.mxu0 %v539
  %770 = vmatpush1.bf16.msra.mxu0 %v538
  %771 = vmatprep.subr.bf16.mxu0 %v541
  %772 = vmatpush1.bf16.msra.mxu0 %v540
  %773 = vmatprep.subr.bf16.mxu0 %v543
  %774 = vmatpush1.bf16.msra.mxu0 %v542
  %775 = vmatprep.subr.bf16.mxu0 %v545
  %776 = vmatpush1.bf16.msra.mxu0 %v544
  %777 = vmatprep.subr.bf16.mxu0 %v547
  %778 = vmatpush1.bf16.msra.mxu0 %v546
  %779 = vmatprep.subr.bf16.mxu0 %v549
  %780 = vmatpush1.bf16.msra.mxu0 %v548
  %781 = vmatprep.subr.bf16.mxu0 %v551
  %782 = vmatpush1.bf16.msra.mxu0 %v550
  %783 = vmatprep.subr.bf16.mxu0 %v553
  %784 = vmatpush1.bf16.msra.mxu0 %v552
  %785 = vmatprep.subr.bf16.mxu0 %v555
  %786 = vmatpush1.bf16.msra.mxu0 %v554
  %787 = vmatprep.subr.bf16.mxu0 %v557
  %788 = vmatpush1.bf16.msra.mxu0 %v556
  %789 = vmatprep.subr.bf16.mxu0 %v559
  %790 = vmatpush1.bf16.msra.mxu0 %v558
  %791 = vmatprep.subr.bf16.mxu0 %v561
  %792 = vmatpush1.bf16.msra.mxu0 %v560
  %793 = vmatprep.subr.bf16.mxu0 %v563
  %794 = vmatpush1.bf16.msra.mxu0 %v562
  %795 = vmatprep.subr.bf16.mxu0 %v565
  %796 = vmatpush1.bf16.msra.mxu0 %v564
  %797 = vmatprep.mubr.bf16.mxu0 %v168
  %798 = vmatmul.mubr.bf16.gmra.mrb[0].mxu0 %v167
  %v799 = vpop.f32.mrb[0].mxu0
  %v800 = vadd.f32 %v757, %v799
  %v801 = vpop.f32.mrb[0].mxu0
  %v802 = vadd.f32 %v759, %v801
  %v803 = vpop.f32.mrb[0].mxu0
  %v804 = vadd.f32 %v761, %v803
  %v805 = vpop.f32.mrb[0].mxu0
  %v806 = vadd.f32 %v763, %v805
  %807 = vdwg.mxu0
  %808 = vmatprep.subr.bf16.mxu0 %v567
  %809 = vmatpush1.bf16.msra.mxu0 %v566
  %810 = vmatprep.subr.bf16.mxu0 %v569
  %811 = vmatpush1.bf16.msra.mxu0 %v568
  %812 = vmatprep.subr.bf16.mxu0 %v571
  %813 = vmatpush1.bf16.msra.mxu0 %v570
  %814 = vmatprep.subr.bf16.mxu0 %v573
  %815 = vmatpush1.bf16.msra.mxu0 %v572
  %816 = vmatprep.subr.bf16.mxu0 %v575
  %817 = vmatpush1.bf16.msra.mxu0 %v574
  %818 = vmatprep.subr.bf16.mxu0 %v577
  %819 = vmatpush1.bf16.msra.mxu0 %v576
  %820 = vmatprep.subr.bf16.mxu0 %v579
  %821 = vmatpush1.bf16.msra.mxu0 %v578
  %822 = vmatprep.subr.bf16.mxu0 %v581
  %823 = vmatpush1.bf16.msra.mxu0 %v580
  %824 = vmatprep.subr.bf16.mxu0 %v583
  %825 = vmatpush1.bf16.msra.mxu0 %v582
  %826 = vmatprep.subr.bf16.mxu0 %v585
  %827 = vmatpush1.bf16.msra.mxu0 %v584
  %828 = vmatprep.subr.bf16.mxu0 %v587
  %829 = vmatpush1.bf16.msra.mxu0 %v586
  %830 = vmatprep.subr.bf16.mxu0 %v589
  %831 = vmatpush1.bf16.msra.mxu0 %v588
  %832 = vmatprep.subr.bf16.mxu0 %v591
  %833 = vmatpush1.bf16.msra.mxu0 %v590
  %834 = vmatprep.subr.bf16.mxu0 %v593
  %835 = vmatpush1.bf16.msra.mxu0 %v592
  %836 = vmatprep.subr.bf16.mxu0 %v595
  %837 = vmatpush1.bf16.msra.mxu0 %v594
  %838 = vmatprep.subr.bf16.mxu0 %v597
  %839 = vmatpush1.bf16.msra.mxu0 %v596
  %840 = vmatprep.mubr.bf16.mxu0 %v170
  %841 = vmatmul.mubr.bf16.gmra.mrb[0].mxu0 %v169
  %v842 = vpop.f32.mrb[0].mxu0
  %v843 = vadd.f32 %v800, %v842
  %v844 = vpop.f32.mrb[0].mxu0
  %v845 = vadd.f32 %v802, %v844
  %v846 = vpop.f32.mrb[0].mxu0
  %v847 = vadd.f32 %v804, %v846
  %v848 = vpop.f32.mrb[0].mxu0
  %v849 = vadd.f32 %v806, %v848
  %850 = vdwg.mxu0
  %851 = vmatprep.subr.bf16.mxu0 %v599
  %852 = vmatpush1.bf16.msra.mxu0 %v598
  %853 = vmatprep.subr.bf16.mxu0 %v601
  %854 = vmatpush1.bf16.msra.mxu0 %v600
  %855 = vmatprep.subr.bf16.mxu0 %v603
  %856 = vmatpush1.bf16.msra.mxu0 %v602
  %857 = vmatprep.subr.bf16.mxu0 %v605
  %858 = vmatpush1.bf16.msra.mxu0 %v604
  %859 = vmatprep.subr.bf16.mxu0 %v607
  %860 = vmatpush1.bf16.msra.mxu0 %v606
  %861 = vmatprep.subr.bf16.mxu0 %v609
  %862 = vmatpush1.bf16.msra.mxu0 %v608
  %863 = vmatprep.subr.bf16.mxu0 0
  %864 = vmatpush1.bf16.msra.mxu0 0
  %865 = vmatprep.subr.bf16.mxu0 0
  %866 = vmatpush1.bf16.msra.mxu0 0
  %867 = vmatprep.subr.bf16.mxu0 0
  %868 = vmatpush1.bf16.msra.mxu0 0
  %869 = vmatprep.subr.bf16.mxu0 0
  %870 = vmatpush1.bf16.msra.mxu0 0
  %871 = vmatprep.subr.bf16.mxu0 0
  %872 = vmatpush1.bf16.msra.mxu0 0
  %873 = vmatprep.subr.bf16.mxu0 0
  %874 = vmatpush1.bf16.msra.mxu0 0
  %875 = vmatprep.subr.bf16.mxu0 0
  %876 = vmatpush1.bf16.msra.mxu0 0
  %877 = vmatprep.subr.bf16.mxu0 0
  %878 = vmatpush1.bf16.msra.mxu0 0
  %879 = vmatprep.subr.bf16.mxu0 0
  %880 = vmatpush1.bf16.msra.mxu0 0
  %881 = vmatprep.subr.bf16.mxu0 0
  %882 = vmatpush1.bf16.msra.mxu0 0
  %883 = vmatprep.mubr.bf16.mxu0 0
  %884 = vmatmul.mubr.bf16.gmra.mrb[0].mxu0 %v720
  %v885 = vpop.f32.mrb[0].mxu0
  %v886 = vadd.f32 %v843, %v885
  %v887 = vpop.f32.mrb[0].mxu0
  %v888 = vadd.f32 %v845, %v887
  %v889 = vpop.f32.mrb[0].mxu0
  %v890 = vadd.f32 %v847, %v889
  %v891 = vpop.f32.mrb[0].mxu0
  %v892 = vadd.f32 %v849, %v891
  %893 = vdwg.mxu0
  %vm894 = vcmp.ge.f32.partialorder %v886, 0.0
  %vm895 = vcmp.ge.f32.partialorder %v888, 0.0
  %vm896 = vcmp.ge.f32.partialorder %v890, 0.0
  %vm897 = vcmp.ge.f32.partialorder %v892, 0.0
  %v898 = vmul.f32 %v886, 0.01
  %v899 = vmul.f32 %v888, 0.01
  %v900 = vmul.f32 %v890, 0.01
  %v901 = vmul.f32 %v892, 0.01
  %v902 = vsel %vm894, %v886, %v898
  %v903 = vsel %vm895, %v888, %v899
  %v904 = vsel %vm896, %v890, %v900
  %v905 = vsel %vm897, %v892, %v901
  %906 = vst [vmem:[%s3] sm:$0xff] %v902
  %907 = vst [vmem:[%s3 + $0x8] sm:$0xff] %v903
  %908 = vst [vmem:[%s3 + $0x10] sm:$0xff] %v904
  %909 = vst [vmem:[%s3 + $0x18] sm:$0xff] %v905
  // Predicated region
  $region14: #{net3d_forward.26} parent=0 // pred_check
    _
  $region15: #{net3d_forward.26} parent=0 // pred_check_branch
    %911 = sbr.rel (0) target = $region17
  $region16: #{net3d_forward.26} parent=0 // pred_region
    _
  $region17: #{net3d_forward.26} parent=0 // pred_fallthru
    _
  // Predicated region
  $region18: #{net3d_forward.26} parent=0 // pred_check
    _
  $region19: #{net3d_forward.26} parent=0 // pred_check_branch
    %913 = sbr.rel (0) target = $region21
  $region20: #{net3d_forward.26} parent=0 // pred_region
    _
  $region21: #{net3d_forward.26} parent=0 // pred_fallthru
    _

// kernel: net3d_forward.27
$region0: #{net3d_forward.27}
  #allocation0 [shape = 'u32[]', space=smem, size = 0x4, offset = 0x4, fixed_abs, tag = 'smem constant byte address 0x4 - core index']
  #allocation1 [shape = 'u32[144,128]{1,0:T(1,128)}', space=vmem, size = 0x12000, scoped, tag = 'internal scratch']
  %s0 = inlined_call_operand.vmem [shape: f32[128,32], index: 0, kind: input, shape index: {}]
  %s1 = inlined_call_operand.vmem [shape: f32[1,32], index: 1, kind: output, shape index: {0}]
  %s2 = inlined_call_operand.vmem [shape: f32[1,32], index: 2, kind: output, shape index: {1}]
  %3 = xla_tuple %s1, %s2
  %s4 = sld [smem:[#allocation0]]
  $region26: #{net3d_forward.27} parent=0
    _
  %s6 = ssub.s32 1, %s4
  %s7 = scalar_select 0, %s6, %s4
  // Predicated region
  $region2: #{net3d_forward.27} parent=0 // pred_check
    _
  $region3: #{net3d_forward.27} parent=0 // pred_check_branch
    %9 = sbr.rel (0) target = $region5
  $region4: #{net3d_forward.27} parent=0 // pred_region
    _
  $region5: #{net3d_forward.27} parent=0 // pred_fallthru
    _
  %p10 = scmp.eq.s32.totalorder 0, 0
  // Predicated region
  $region6: #{net3d_forward.27} parent=0 // pred_check
    %p11 = pneg %p10
  $region7: #{net3d_forward.27} parent=0 // pred_check_branch
    %13 = sbr.rel (%p11) target = $region9
  $region8: #{net3d_forward.27} parent=0 // pred_region
    %vm14 = vcmask 253952
    %15 = vst.msk [vmem:[%s1] sm:$0x1] %vm14, 0.0
    %16 = vst.msk [vmem:[%s2] sm:$0x1] %vm14, 0.0
  $region9: #{net3d_forward.27} parent=0 // pred_fallthru
    _
  %v17 = vld [vmem:[%s0] sm:$0xff]
  %v18 = vld [vmem:[%s0 + $0x8] sm:$0xff]
  %v19 = vld [vmem:[%s0 + $0x10] sm:$0xff]
  %v20 = vld [vmem:[%s0 + $0x18] sm:$0xff]
  %v21 = vld [vmem:[%s0 + $0x20] sm:$0xff]
  %v22 = vld [vmem:[%s0 + $0x28] sm:$0xff]
  %v23 = vld [vmem:[%s0 + $0x30] sm:$0xff]
  %v24 = vld [vmem:[%s0 + $0x38] sm:$0xff]
  %v25 = vld [vmem:[%s0 + $0x40] sm:$0xff]
  %v26 = vld [vmem:[%s0 + $0x48] sm:$0xff]
  %v27 = vld [vmem:[%s0 + $0x50] sm:$0xff]
  %v28 = vld [vmem:[%s0 + $0x58] sm:$0xff]
  %v29 = vld [vmem:[%s0 + $0x60] sm:$0xff]
  %v30 = vld [vmem:[%s0 + $0x68] sm:$0xff]
  %v31 = vld [vmem:[%s0 + $0x70] sm:$0xff]
  %v32 = vld [vmem:[%s0 + $0x78] sm:$0xff]
  %v33 = vld [vmem:[%s1] sm:$0x1]
  %vm34 = vcmask 261120
  %v35 = vsel %vm34, %v17, 0.0
  %v36 = vsel %vm34, %v18, 0.0
  %v37 = vadd.f32 %v35, %v36
  %v38 = vsel %vm34, %v19, 0.0
  %v39 = vadd.f32 %v37, %v38
  %v40 = vsel %vm34, %v20, 0.0
  %v41 = vadd.f32 %v39, %v40
  %v42 = vsel %vm34, %v21, 0.0
  %v43 = vadd.f32 %v41, %v42
  %v44 = vsel %vm34, %v22, 0.0
  %v45 = vadd.f32 %v43, %v44
  %v46 = vsel %vm34, %v23, 0.0
  %v47 = vadd.f32 %v45, %v46
  %v48 = vsel %vm34, %v24, 0.0
  %v49 = vadd.f32 %v47, %v48
  %v50 = vsel %vm34, %v25, 0.0
  %v51 = vadd.f32 %v49, %v50
  %v52 = vsel %vm34, %v26, 0.0
  %v53 = vadd.f32 %v51, %v52
  %v54 = vsel %vm34, %v27, 0.0
  %v55 = vadd.f32 %v53, %v54
  %v56 = vsel %vm34, %v28, 0.0
  %v57 = vadd.f32 %v55, %v56
  %v58 = vsel %vm34, %v29, 0.0
  %v59 = vadd.f32 %v57, %v58
  %v60 = vsel %vm34, %v30, 0.0
  %v61 = vadd.f32 %v59, %v60
  %v62 = vsel %vm34, %v31, 0.0
  %v63 = vadd.f32 %v61, %v62
  %v64 = vsel %vm34, %v32, 0.0
  %v65 = vadd.f32 %v63, %v64
  %v66 = vrot.slane %v65, 4
  %v67 = vadd.f32 %v65, %v66
  %v68 = vrot.slane %v67, 2
  %v69 = vadd.f32 %v67, %v68
  %v70 = vrot.slane %v69, 1
  %v71 = vadd.f32 %v69, %v70
  %v72 = vadd.f32 %v33, %v71
  %vm73 = vcmask 253952
  %74 = vst.msk [vmem:[%s1] sm:$0x1] %vm73, %v72
  %v75 = vld [vmem:[%s2] sm:$0x1]
  %v76 = vmul.f32 %v17, %v17
  %v77 = vmul.f32 %v18, %v18
  %v78 = vmul.f32 %v19, %v19
  %v79 = vmul.f32 %v20, %v20
  %v80 = vmul.f32 %v21, %v21
  %v81 = vmul.f32 %v22, %v22
  %v82 = vmul.f32 %v23, %v23
  %v83 = vmul.f32 %v24, %v24
  %v84 = vmul.f32 %v25, %v25
  %v85 = vmul.f32 %v26, %v26
  %v86 = vmul.f32 %v27, %v27
  %v87 = vmul.f32 %v28, %v28
  %v88 = vmul.f32 %v29, %v29
  %v89 = vmul.f32 %v30, %v30
  %v90 = vmul.f32 %v31, %v31
  %v91 = vmul.f32 %v32, %v32
  %v92 = vsel %vm34, %v76, 0.0
  %v93 = vsel %vm34, %v77, 0.0
  %v94 = vadd.f32 %v92, %v93
  %v95 = vsel %vm34, %v78, 0.0
  %v96 = vadd.f32 %v94, %v95
  %v97 = vsel %vm34, %v79, 0.0
  %v98 = vadd.f32 %v96, %v97
  %v99 = vsel %vm34, %v80, 0.0
  %v100 = vadd.f32 %v98, %v99
  %v101 = vsel %vm34, %v81, 0.0
  %v102 = vadd.f32 %v100, %v101
  %v103 = vsel %vm34, %v82, 0.0
  %v104 = vadd.f32 %v102, %v103
  %v105 = vsel %vm34, %v83, 0.0
  %v106 = vadd.f32 %v104, %v105
  %v107 = vsel %vm34, %v84, 0.0
  %v108 = vadd.f32 %v106, %v107
  %v109 = vsel %vm34, %v85, 0.0
  %v110 = vadd.f32 %v108, %v109
  %v111 = vsel %vm34, %v86, 0.0
  %v112 = vadd.f32 %v110, %v111
  %v113 = vsel %vm34, %v87, 0.0
  %v114 = vadd.f32 %v112, %v113
  %v115 = vsel %vm34, %v88, 0.0
  %v116 = vadd.f32 %v114, %v115
  %v117 = vsel %vm34, %v89, 0.0
  %v118 = vadd.f32 %v116, %v117
  %v119 = vsel %vm34, %v90, 0.0
  %v120 = vadd.f32 %v118, %v119
  %v121 = vsel %vm34, %v91, 0.0
  %v122 = vadd.f32 %v120, %v121
  %v123 = vrot.slane %v122, 4
  %v124 = vadd.f32 %v122, %v123
  %v125 = vrot.slane %v124, 2
  %v126 = vadd.f32 %v124, %v125
  %v127 = vrot.slane %v126, 1
  %v128 = vadd.f32 %v126, %v127
  %v129 = vadd.f32 %v75, %v128
  %130 = vst.msk [vmem:[%s2] sm:$0x1] %vm73, %v129
  // Predicated region
  $region10: #{net3d_forward.27} parent=0 // pred_check
    _
  $region11: #{net3d_forward.27} parent=0 // pred_check_branch
    %132 = sbr.rel (0) target = $region13
  $region12: #{net3d_forward.27} parent=0 // pred_region
    _
  $region13: #{net3d_forward.27} parent=0 // pred_fallthru
    _
  // Predicated region
  $region14: #{net3d_forward.27} parent=0 // pred_check
    _
  $region15: #{net3d_forward.27} parent=0 // pred_check_branch
    %134 = sbr.rel (0) target = $region17
  $region16: #{net3d_forward.27} parent=0 // pred_region
    _
  $region17: #{net3d_forward.27} parent=0 // pred_fallthru
    _
  // Predicated region
  $region18: #{net3d_forward.27} parent=0 // pred_check
    _
  $region19: #{net3d_forward.27} parent=0 // pred_check_branch
    %136 = sbr.rel (0) target = $region21
  $region20: #{net3d_forward.27} parent=0 // pred_region
    _
  $region21: #{net3d_forward.27} parent=0 // pred_fallthru
    _
  // Predicated region
  $region22: #{net3d_forward.27} parent=0 // pred_check
    _
  $region23: #{net3d_forward.27} parent=0 // pred_check_branch
    %138 = sbr.rel (0) target = $region25
  $region24: #{net3d_forward.27} parent=0 // pred_region
    _
  $region25: #{net3d_forward.27} parent=0 // pred_fallthru
    _

// kernel: net3d_forward.28
$region0: #{net3d_forward.28}
  #allocation0 [shape = 'u32[]', space=smem, size = 0x4, offset = 0x4, fixed_abs, tag = 'smem constant byte address 0x4 - core index']
  #allocation1 [shape = 'u32[144,128]{1,0:T(1,128)}', space=vmem, size = 0x12000, scoped, tag = 'internal scratch']
  %s0 = inlined_call_operand.vmem [shape: f32[128,32], index: 0, kind: input, shape index: {}]
  %s1 = inlined_call_operand.vmem [shape: f32[1,32], index: 1, kind: input, shape index: {}]
  %s2 = inlined_call_operand.vmem [shape: f32[1,32], index: 2, kind: input, shape index: {}]
  %s3 = inlined_call_operand.vmem [shape: bf16[128,32], index: 3, kind: output, shape index: {}]
  %s4 = sld [smem:[#allocation0]]
  $region22: #{net3d_forward.28} parent=0
    _
  %s6 = ssub.s32 1, %s4
  %s7 = scalar_select 0, %s6, %s4
  // Predicated region
  $region2: #{net3d_forward.28} parent=0 // pred_check
    _
  $region3: #{net3d_forward.28} parent=0 // pred_check_branch
    %9 = sbr.rel (0) target = $region5
  $region4: #{net3d_forward.28} parent=0 // pred_region
    _
  $region5: #{net3d_forward.28} parent=0 // pred_fallthru
    _
  // Predicated region
  $region6: #{net3d_forward.28} parent=0 // pred_check
    _
  $region7: #{net3d_forward.28} parent=0 // pred_check_branch
    %11 = sbr.rel (0) target = $region9
  $region8: #{net3d_forward.28} parent=0 // pred_region
    _
  $region9: #{net3d_forward.28} parent=0 // pred_fallthru
    _
  // Predicated region
  $region10: #{net3d_forward.28} parent=0 // pred_check
    _
  $region11: #{net3d_forward.28} parent=0 // pred_check_branch
    %13 = sbr.rel (0) target = $region13
  $region12: #{net3d_forward.28} parent=0 // pred_region
    _
  $region13: #{net3d_forward.28} parent=0 // pred_fallthru
    _
  %v14 = vld [vmem:[%s0] sm:$0xff]
  %v15 = vld [vmem:[%s0 + $0x8] sm:$0xff]
  %v16 = vld [vmem:[%s0 + $0x10] sm:$0xff]
  %v17 = vld [vmem:[%s0 + $0x18] sm:$0xff]
  %v18 = vld [vmem:[%s0 + $0x20] sm:$0xff]
  %v19 = vld [vmem:[%s0 + $0x28] sm:$0xff]
  %v20 = vld [vmem:[%s0 + $0x30] sm:$0xff]
  %v21 = vld [vmem:[%s0 + $0x38] sm:$0xff]
  %v22 = vld [vmem:[%s0 + $0x40] sm:$0xff]
  %v23 = vld [vmem:[%s0 + $0x48] sm:$0xff]
  %v24 = vld [vmem:[%s0 + $0x50] sm:$0xff]
  %v25 = vld [vmem:[%s0 + $0x58] sm:$0xff]
  %v26 = vld [vmem:[%s0 + $0x60] sm:$0xff]
  %v27 = vld [vmem:[%s0 + $0x68] sm:$0xff]
  %v28 = vld [vmem:[%s0 + $0x70] sm:$0xff]
  %v29 = vld [vmem:[%s0 + $0x78] sm:$0xff]
  %v30 = vld [vmem:[%s1] sm:$0x1]
  %v32 = vlaneseq
  %v33 = vshrl.u32 %v32, 7
  %v34 = vsub.s32 0, %v33
  %v35 = vrot.slane %v30, %v34
  %v37 = vmul.f32 %v14, %v35
  %v38 = vmul.f32 %v15, %v35
  %v39 = vmul.f32 %v16, %v35
  %v40 = vmul.f32 %v17, %v35
  %v41 = vmul.f32 %v18, %v35
  %v42 = vmul.f32 %v19, %v35
  %v43 = vmul.f32 %v20, %v35
  %v44 = vmul.f32 %v21, %v35
  %v45 = vmul.f32 %v22, %v35
  %v46 = vmul.f32 %v23, %v35
  %v47 = vmul.f32 %v24, %v35
  %v48 = vmul.f32 %v25, %v35
  %v49 = vmul.f32 %v26, %v35
  %v50 = vmul.f32 %v27, %v35
  %v51 = vmul.f32 %v28, %v35
  %v52 = vmul.f32 %v29, %v35
  %v53 = vld [vmem:[%s2] sm:$0x1]
  %v55 = vlaneseq
  %v56 = vshrl.u32 %v55, 7
  %v57 = vsub.s32 0, %v56
  %v58 = vrot.slane %v53, %v57
  %v60 = vadd.f32 %v37, %v58
  %v61 = vadd.f32 %v38, %v58
  %v62 = vadd.f32 %v39, %v58
  %v63 = vadd.f32 %v40, %v58
  %v64 = vadd.f32 %v41, %v58
  %v65 = vadd.f32 %v42, %v58
  %v66 = vadd.f32 %v43, %v58
  %v67 = vadd.f32 %v44, %v58
  %v68 = vadd.f32 %v45, %v58
  %v69 = vadd.f32 %v46, %v58
  %v70 = vadd.f32 %v47, %v58
  %v71 = vadd.f32 %v48, %v58
  %v72 = vadd.f32 %v49, %v58
  %v73 = vadd.f32 %v50, %v58
  %v74 = vadd.f32 %v51, %v58
  %v75 = vadd.f32 %v52, %v58
  %v76 = vpack.c.bf16 %v61, %v60
  %v77 = vpack.c.bf16 %v63, %v62
  %v78 = vpack.c.bf16 %v65, %v64
  %v79 = vpack.c.bf16 %v67, %v66
  %v80 = vpack.c.bf16 %v69, %v68
  %v81 = vpack.c.bf16 %v71, %v70
  %v82 = vpack.c.bf16 %v73, %v72
  %v83 = vpack.c.bf16 %v75, %v74
  %v92 = vunpack.c.l.b16 %v76
  %v93 = vunpack.c.h.b16 %v76
  %v94 = vunpack.c.l.b16 %v77
  %v95 = vunpack.c.h.b16 %v77
  %v96 = vunpack.c.l.b16 %v78
  %v97 = vunpack.c.h.b16 %v78
  %v98 = vunpack.c.l.b16 %v79
  %v99 = vunpack.c.h.b16 %v79
  %v100 = vunpack.c.l.b16 %v80
  %v101 = vunpack.c.h.b16 %v80
  %v102 = vunpack.c.l.b16 %v81
  %v103 = vunpack.c.h.b16 %v81
  %v104 = vunpack.c.l.b16 %v82
  %v105 = vunpack.c.h.b16 %v82
  %v106 = vunpack.c.l.b16 %v83
  %v107 = vunpack.c.h.b16 %v83
  %v108 = vpack.c.b16 %v92, %v92
  %v109 = vpack.c.b16 %v93, %v93
  %v110 = vpack.c.b16 %v94, %v94
  %v111 = vpack.c.b16 %v95, %v95
  %v112 = vpack.c.b16 %v96, %v96
  %v113 = vpack.c.b16 %v97, %v97
  %v114 = vpack.c.b16 %v98, %v98
  %v115 = vpack.c.b16 %v99, %v99
  %v116 = vpack.c.b16 %v100, %v100
  %v117 = vpack.c.b16 %v101, %v101
  %v118 = vpack.c.b16 %v102, %v102
  %v119 = vpack.c.b16 %v103, %v103
  %v120 = vpack.c.b16 %v104, %v104
  %v121 = vpack.c.b16 %v105, %v105
  %v122 = vpack.c.b16 %v106, %v106
  %v123 = vpack.c.b16 %v107, %v107
  %vm140 = vcmask 257024
  %141 = vst.msk [vmem:[%s3] sm:$0xf] %vm140, %v108
  %142 = vst.msk [vmem:[%s3 + $0x4] sm:$0xf] %vm140, %v109
  %143 = vst.msk [vmem:[%s3 + $0x8] sm:$0xf] %vm140, %v110
  %144 = vst.msk [vmem:[%s3 + $0xc] sm:$0xf] %vm140, %v111
  %145 = vst.msk [vmem:[%s3 + $0x10] sm:$0xf] %vm140, %v112
  %146 = vst.msk [vmem:[%s3 + $0x14] sm:$0xf] %vm140, %v113
  %147 = vst.msk [vmem:[%s3 + $0x18] sm:$0xf] %vm140, %v114
  %148 = vst.msk [vmem:[%s3 + $0x1c] sm:$0xf] %vm140, %v115
  %149 = vst.msk [vmem:[%s3 + $0x20] sm:$0xf] %vm140, %v116
  %150 = vst.msk [vmem:[%s3 + $0x24] sm:$0xf] %vm140, %v117
  %151 = vst.msk [vmem:[%s3 + $0x28] sm:$0xf] %vm140, %v118
  %152 = vst.msk [vmem:[%s3 + $0x2c] sm:$0xf] %vm140, %v119
  %153 = vst.msk [vmem:[%s3 + $0x30] sm:$0xf] %vm140, %v120
  %154 = vst.msk [vmem:[%s3 + $0x34] sm:$0xf] %vm140, %v121
  %155 = vst.msk [vmem:[%s3 + $0x38] sm:$0xf] %vm140, %v122
  %156 = vst.msk [vmem:[%s3 + $0x3c] sm:$0xf] %vm140, %v123
  // Predicated region
  $region14: #{net3d_forward.28} parent=0 // pred_check
    _
  $region15: #{net3d_forward.28} parent=0 // pred_check_branch
    %158 = sbr.rel (0) target = $region17
  $region16: #{net3d_forward.28} parent=0 // pred_region
    _
  $region17: #{net3d_forward.28} parent=0 // pred_fallthru
    _
  // Predicated region
  $region18: #{net3d_forward.28} parent=0 // pred_check
    _
  $region19: #{net3d_forward.28} parent=0 // pred_check_branch
    %160 = sbr.rel (0) target = $region21
  $region20: #{net3d_forward.28} parent=0 // pred_region
    _
  $region21: #{net3d_forward.28} parent=0 // pred_fallthru
    _

// kernel: net3d_forward.29
$region0: #{net3d_forward.29}
  #allocation0 [shape = 'u32[]', space=smem, size = 0x4, offset = 0x4, fixed_abs, tag = 'smem constant byte address 0x4 - core index']
  #allocation1 [shape = 'u32[144,128]{1,0:T(1,128)}', space=vmem, size = 0x12000, scoped, tag = 'internal scratch']
  %s0 = inlined_call_operand.vmem [shape: bf16[128,16], index: 0, kind: input, shape index: {}]
  %s1 = inlined_call_operand.vmem [shape: f32[1,16], index: 1, kind: output, shape index: {0}]
  %s2 = inlined_call_operand.vmem [shape: f32[1,16], index: 2, kind: output, shape index: {1}]
  %3 = xla_tuple %s1, %s2
  %s4 = sld [smem:[#allocation0]]
  $region26: #{net3d_forward.29} parent=0
    _
  %s6 = ssub.s32 1, %s4
  %s7 = scalar_select 0, %s6, %s4
  // Predicated region
  $region2: #{net3d_forward.29} parent=0 // pred_check
    _
  $region3: #{net3d_forward.29} parent=0 // pred_check_branch
    %9 = sbr.rel (0) target = $region5
  $region4: #{net3d_forward.29} parent=0 // pred_region
    _
  $region5: #{net3d_forward.29} parent=0 // pred_fallthru
    _
  %p10 = scmp.eq.s32.totalorder 0, 0
  // Predicated region
  $region6: #{net3d_forward.29} parent=0 // pred_check
    %p11 = pneg %p10
  $region7: #{net3d_forward.29} parent=0 // pred_check_branch
    %13 = sbr.rel (%p11) target = $region9
  $region8: #{net3d_forward.29} parent=0 // pred_region
    %vm14 = vcmask 122880
    %15 = vst.msk [vmem:[%s1] sm:$0x1] %vm14, 0.0
    %16 = vst.msk [vmem:[%s2] sm:$0x1] %vm14, 0.0
  $region9: #{net3d_forward.29} parent=0 // pred_fallthru
    _
  %v17 = vld [vmem:[%s0] sm:$0xf]
  %v18 = vld [vmem:[%s0 + $0x4] sm:$0xf]
  %v19 = vld [vmem:[%s0 + $0x8] sm:$0xf]
  %v20 = vld [vmem:[%s0 + $0xc] sm:$0xf]
  %v21 = vld [vmem:[%s0 + $0x10] sm:$0xf]
  %v22 = vld [vmem:[%s0 + $0x14] sm:$0xf]
  %v23 = vld [vmem:[%s0 + $0x18] sm:$0xf]
  %v24 = vld [vmem:[%s0 + $0x1c] sm:$0xf]
  %v25 = vld [vmem:[%s0 + $0x20] sm:$0xf]
  %v26 = vld [vmem:[%s0 + $0x24] sm:$0xf]
  %v27 = vld [vmem:[%s0 + $0x28] sm:$0xf]
  %v28 = vld [vmem:[%s0 + $0x2c] sm:$0xf]
  %v29 = vld [vmem:[%s0 + $0x30] sm:$0xf]
  %v30 = vld [vmem:[%s0 + $0x34] sm:$0xf]
  %v31 = vld [vmem:[%s0 + $0x38] sm:$0xf]
  %v32 = vld [vmem:[%s0 + $0x3c] sm:$0xf]
  %v33 = vunpack.c.l.bf16 %v17
  %v34 = vunpack.c.l.bf16 %v18
  %v35 = vunpack.c.l.bf16 %v19
  %v36 = vunpack.c.l.bf16 %v20
  %v37 = vunpack.c.l.bf16 %v21
  %v38 = vunpack.c.l.bf16 %v22
  %v39 = vunpack.c.l.bf16 %v23
  %v40 = vunpack.c.l.bf16 %v24
  %v41 = vunpack.c.l.bf16 %v25
  %v42 = vunpack.c.l.bf16 %v26
  %v43 = vunpack.c.l.bf16 %v27
  %v44 = vunpack.c.l.bf16 %v28
  %v45 = vunpack.c.l.bf16 %v29
  %v46 = vunpack.c.l.bf16 %v30
  %v47 = vunpack.c.l.bf16 %v31
  %v48 = vunpack.c.l.bf16 %v32
  %v49 = vld [vmem:[%s1] sm:$0x1]
  %vm50 = vcmask 130048
  %v51 = vsel %vm50, %v33, 0.0
  %v52 = vsel %vm50, %v34, 0.0
  %v53 = vadd.f32 %v51, %v52
  %v54 = vsel %vm50, %v35, 0.0
  %v55 = vadd.f32 %v53, %v54
  %v56 = vsel %vm50, %v36, 0.0
  %v57 = vadd.f32 %v55, %v56
  %v58 = vsel %vm50, %v37, 0.0
  %v59 = vadd.f32 %v57, %v58
  %v60 = vsel %vm50, %v38, 0.0
  %v61 = vadd.f32 %v59, %v60
  %v62 = vsel %vm50, %v39, 0.0
  %v63 = vadd.f32 %v61, %v62
  %v64 = vsel %vm50, %v40, 0.0
  %v65 = vadd.f32 %v63, %v64
  %v66 = vsel %vm50, %v41, 0.0
  %v67 = vadd.f32 %v65, %v66
  %v68 = vsel %vm50, %v42, 0.0
  %v69 = vadd.f32 %v67, %v68
  %v70 = vsel %vm50, %v43, 0.0
  %v71 = vadd.f32 %v69, %v70
  %v72 = vsel %vm50, %v44, 0.0
  %v73 = vadd.f32 %v71, %v72
  %v74 = vsel %vm50, %v45, 0.0
  %v75 = vadd.f32 %v73, %v74
  %v76 = vsel %vm50, %v46, 0.0
  %v77 = vadd.f32 %v75, %v76
  %v78 = vsel %vm50, %v47, 0.0
  %v79 = vadd.f32 %v77, %v78
  %v80 = vsel %vm50, %v48, 0.0
  %v81 = vadd.f32 %v79, %v80
  %v82 = vrot.slane %v81, 4
  %v83 = vadd.f32 %v81, %v82
  %v84 = vrot.slane %v83, 2
  %v85 = vadd.f32 %v83, %v84
  %v86 = vrot.slane %v85, 1
  %v87 = vadd.f32 %v85, %v86
  %v88 = vadd.f32 %v49, %v87
  %vm89 = vcmask 122880
  %90 = vst.msk [vmem:[%s1] sm:$0x1] %vm89, %v88
  %v91 = vld [vmem:[%s2] sm:$0x1]
  %v92 = vmul.f32 %v33, %v33
  %v93 = vmul.f32 %v34, %v34
  %v94 = vmul.f32 %v35, %v35
  %v95 = vmul.f32 %v36, %v36
  %v96 = vmul.f32 %v37, %v37
  %v97 = vmul.f32 %v38, %v38
  %v98 = vmul.f32 %v39, %v39
  %v99 = vmul.f32 %v40, %v40
  %v100 = vmul.f32 %v41, %v41
  %v101 = vmul.f32 %v42, %v42
  %v102 = vmul.f32 %v43, %v43
  %v103 = vmul.f32 %v44, %v44
  %v104 = vmul.f32 %v45, %v45
  %v105 = vmul.f32 %v46, %v46
  %v106 = vmul.f32 %v47, %v47
  %v107 = vmul.f32 %v48, %v48
  %v108 = vsel %vm50, %v92, 0.0
  %v109 = vsel %vm50, %v93, 0.0
  %v110 = vadd.f32 %v108, %v109
  %v111 = vsel %vm50, %v94, 0.0
  %v112 = vadd.f32 %v110, %v111
  %v113 = vsel %vm50, %v95, 0.0
  %v114 = vadd.f32 %v112, %v113
  %v115 = vsel %vm50, %v96, 0.0
  %v116 = vadd.f32 %v114, %v115
  %v117 = vsel %vm50, %v97, 0.0
  %v118 = vadd.f32 %v116, %v117
  %v119 = vsel %vm50, %v98, 0.0
  %v120 = vadd.f32 %v118, %v119
  %v121 = vsel %vm50, %v99, 0.0
  %v122 = vadd.f32 %v120, %v121
  %v123 = vsel %vm50, %v100, 0.0
  %v124 = vadd.f32 %v122, %v123
  %v125 = vsel %vm50, %v101, 0.0
  %v126 = vadd.f32 %v124, %v125
  %v127 = vsel %vm50, %v102, 0.0
  %v128 = vadd.f32 %v126, %v127
  %v129 = vsel %vm50, %v103, 0.0
  %v130 = vadd.f32 %v128, %v129
  %v131 = vsel %vm50, %v104, 0.0
  %v132 = vadd.f32 %v130, %v131
  %v133 = vsel %vm50, %v105, 0.0
  %v134 = vadd.f32 %v132, %v133
  %v135 = vsel %vm50, %v106, 0.0
  %v136 = vadd.f32 %v134, %v135
  %v137 = vsel %vm50, %v107, 0.0
  %v138 = vadd.f32 %v136, %v137
  %v139 = vrot.slane %v138, 4
  %v140 = vadd.f32 %v138, %v139
  %v141 = vrot.slane %v140, 2
  %v142 = vadd.f32 %v140, %v141
  %v143 = vrot.slane %v142, 1
  %v144 = vadd.f32 %v142, %v143
  %v145 = vadd.f32 %v91, %v144
  %146 = vst.msk [vmem:[%s2] sm:$0x1] %vm89, %v145
  // Predicated region
  $region10: #{net3d_forward.29} parent=0 // pred_check
    _
  $region11: #{net3d_forward.29} parent=0 // pred_check_branch
    %148 = sbr.rel (0) target = $region13
  $region12: #{net3d_forward.29} parent=0 // pred_region
    _
  $region13: #{net3d_forward.29} parent=0 // pred_fallthru
    _
  // Predicated region
  $region14: #{net3d_forward.29} parent=0 // pred_check
    _
  $region15: #{net3d_forward.29} parent=0 // pred_check_branch
    %150 = sbr.rel (0) target = $region17
  $region16: #{net3d_forward.29} parent=0 // pred_region
    _
  $region17: #{net3d_forward.29} parent=0 // pred_fallthru
    _
  // Predicated region
  $region18: #{net3d_forward.29} parent=0 // pred_check
    _
  $region19: #{net3d_forward.29} parent=0 // pred_check_branch
    %152 = sbr.rel (0) target = $region21
  $region20: #{net3d_forward.29} parent=0 // pred_region
    _
  $region21: #{net3d_forward.29} parent=0 // pred_fallthru
    _
  // Predicated region
  $region22: #{net3d_forward.29} parent=0 // pred_check
    _
  $region23: #{net3d_forward.29} parent=0 // pred_check_branch
    %154 = sbr.rel (0) target = $region25
  $region24: #{net3d_forward.29} parent=0 // pred_region
    _
  $region25: #{net3d_forward.29} parent=0 // pred_fallthru
    _

// kernel: net3d_forward.30
$region0: #{net3d_forward.30}
  #allocation0 [shape = 'u32[]', space=smem, size = 0x4, offset = 0x4, fixed_abs, tag = 'smem constant byte address 0x4 - core index']
  #allocation1 [shape = 'u32[144,128]{1,0:T(1,128)}', space=vmem, size = 0x12000, scoped, tag = 'internal scratch']
  %s0 = inlined_call_operand.vmem [shape: bf16[128,16], index: 0, kind: input, shape index: {}]
  %s1 = inlined_call_operand.vmem [shape: f32[1,16], index: 1, kind: input, shape index: {}]
  %s2 = inlined_call_operand.vmem [shape: f32[1,16], index: 2, kind: input, shape index: {}]
  %s3 = inlined_call_operand.vmem [shape: bf16[128,16], index: 3, kind: output, shape index: {}]
  %s4 = sld [smem:[#allocation0]]
  $region22: #{net3d_forward.30} parent=0
    _
  %s6 = ssub.s32 1, %s4
  %s7 = scalar_select 0, %s6, %s4
  // Predicated region
  $region2: #{net3d_forward.30} parent=0 // pred_check
    _
  $region3: #{net3d_forward.30} parent=0 // pred_check_branch
    %9 = sbr.rel (0) target = $region5
  $region4: #{net3d_forward.30} parent=0 // pred_region
    _
  $region5: #{net3d_forward.30} parent=0 // pred_fallthru
    _
  // Predicated region
  $region6: #{net3d_forward.30} parent=0 // pred_check
    _
  $region7: #{net3d_forward.30} parent=0 // pred_check_branch
    %11 = sbr.rel (0) target = $region9
  $region8: #{net3d_forward.30} parent=0 // pred_region
    _
  $region9: #{net3d_forward.30} parent=0 // pred_fallthru
    _
  // Predicated region
  $region10: #{net3d_forward.30} parent=0 // pred_check
    _
  $region11: #{net3d_forward.30} parent=0 // pred_check_branch
    %13 = sbr.rel (0) target = $region13
  $region12: #{net3d_forward.30} parent=0 // pred_region
    _
  $region13: #{net3d_forward.30} parent=0 // pred_fallthru
    _
  %v14 = vld [vmem:[%s0] sm:$0xf]
  %v15 = vld [vmem:[%s0 + $0x4] sm:$0xf]
  %v16 = vld [vmem:[%s0 + $0x8] sm:$0xf]
  %v17 = vld [vmem:[%s0 + $0xc] sm:$0xf]
  %v18 = vld [vmem:[%s0 + $0x10] sm:$0xf]
  %v19 = vld [vmem:[%s0 + $0x14] sm:$0xf]
  %v20 = vld [vmem:[%s0 + $0x18] sm:$0xf]
  %v21 = vld [vmem:[%s0 + $0x1c] sm:$0xf]
  %v22 = vld [vmem:[%s0 + $0x20] sm:$0xf]
  %v23 = vld [vmem:[%s0 + $0x24] sm:$0xf]
  %v24 = vld [vmem:[%s0 + $0x28] sm:$0xf]
  %v25 = vld [vmem:[%s0 + $0x2c] sm:$0xf]
  %v26 = vld [vmem:[%s0 + $0x30] sm:$0xf]
  %v27 = vld [vmem:[%s0 + $0x34] sm:$0xf]
  %v28 = vld [vmem:[%s0 + $0x38] sm:$0xf]
  %v29 = vld [vmem:[%s0 + $0x3c] sm:$0xf]
  %v30 = vunpack.c.l.bf16 %v14
  %v31 = vunpack.c.l.bf16 %v15
  %v32 = vunpack.c.l.bf16 %v16
  %v33 = vunpack.c.l.bf16 %v17
  %v34 = vunpack.c.l.bf16 %v18
  %v35 = vunpack.c.l.bf16 %v19
  %v36 = vunpack.c.l.bf16 %v20
  %v37 = vunpack.c.l.bf16 %v21
  %v38 = vunpack.c.l.bf16 %v22
  %v39 = vunpack.c.l.bf16 %v23
  %v40 = vunpack.c.l.bf16 %v24
  %v41 = vunpack.c.l.bf16 %v25
  %v42 = vunpack.c.l.bf16 %v26
  %v43 = vunpack.c.l.bf16 %v27
  %v44 = vunpack.c.l.bf16 %v28
  %v45 = vunpack.c.l.bf16 %v29
  %v46 = vld [vmem:[%s1] sm:$0x1]
  %v48 = vlaneseq
  %v49 = vshrl.u32 %v48, 7
  %v50 = vsub.s32 0, %v49
  %v51 = vrot.slane %v46, %v50
  %v53 = vmul.f32 %v30, %v51
  %v54 = vmul.f32 %v31, %v51
  %v55 = vmul.f32 %v32, %v51
  %v56 = vmul.f32 %v33, %v51
  %v57 = vmul.f32 %v34, %v51
  %v58 = vmul.f32 %v35, %v51
  %v59 = vmul.f32 %v36, %v51
  %v60 = vmul.f32 %v37, %v51
  %v61 = vmul.f32 %v38, %v51
  %v62 = vmul.f32 %v39, %v51
  %v63 = vmul.f32 %v40, %v51
  %v64 = vmul.f32 %v41, %v51
  %v65 = vmul.f32 %v42, %v51
  %v66 = vmul.f32 %v43, %v51
  %v67 = vmul.f32 %v44, %v51
  %v68 = vmul.f32 %v45, %v51
  %v69 = vld [vmem:[%s2] sm:$0x1]
  %v71 = vlaneseq
  %v72 = vshrl.u32 %v71, 7
  %v73 = vsub.s32 0, %v72
  %v74 = vrot.slane %v69, %v73
  %v76 = vadd.f32 %v53, %v74
  %v77 = vadd.f32 %v54, %v74
  %v78 = vadd.f32 %v55, %v74
  %v79 = vadd.f32 %v56, %v74
  %v80 = vadd.f32 %v57, %v74
  %v81 = vadd.f32 %v58, %v74
  %v82 = vadd.f32 %v59, %v74
  %v83 = vadd.f32 %v60, %v74
  %v84 = vadd.f32 %v61, %v74
  %v85 = vadd.f32 %v62, %v74
  %v86 = vadd.f32 %v63, %v74
  %v87 = vadd.f32 %v64, %v74
  %v88 = vadd.f32 %v65, %v74
  %v89 = vadd.f32 %v66, %v74
  %v90 = vadd.f32 %v67, %v74
  %v91 = vadd.f32 %v68, %v74
  %v92 = vpack.c.bf16 %v77, %v76
  %v93 = vpack.c.bf16 %v79, %v78
  %v94 = vpack.c.bf16 %v81, %v80
  %v95 = vpack.c.bf16 %v83, %v82
  %v96 = vpack.c.bf16 %v85, %v84
  %v97 = vpack.c.bf16 %v87, %v86
  %v98 = vpack.c.bf16 %v89, %v88
  %v99 = vpack.c.bf16 %v91, %v90
  %v108 = vunpack.c.l.b16 %v92
  %v109 = vunpack.c.h.b16 %v92
  %v110 = vunpack.c.l.b16 %v93
  %v111 = vunpack.c.h.b16 %v93
  %v112 = vunpack.c.l.b16 %v94
  %v113 = vunpack.c.h.b16 %v94
  %v114 = vunpack.c.l.b16 %v95
  %v115 = vunpack.c.h.b16 %v95
  %v116 = vunpack.c.l.b16 %v96
  %v117 = vunpack.c.h.b16 %v96
  %v118 = vunpack.c.l.b16 %v97
  %v119 = vunpack.c.h.b16 %v97
  %v120 = vunpack.c.l.b16 %v98
  %v121 = vunpack.c.h.b16 %v98
  %v122 = vunpack.c.l.b16 %v99
  %v123 = vunpack.c.h.b16 %v99
  %v124 = vpack.c.b16 %v108, %v108
  %v125 = vpack.c.b16 %v109, %v109
  %v126 = vpack.c.b16 %v110, %v110
  %v127 = vpack.c.b16 %v111, %v111
  %v128 = vpack.c.b16 %v112, %v112
  %v129 = vpack.c.b16 %v113, %v113
  %v130 = vpack.c.b16 %v114, %v114
  %v131 = vpack.c.b16 %v115, %v115
  %v132 = vpack.c.b16 %v116, %v116
  %v133 = vpack.c.b16 %v117, %v117
  %v134 = vpack.c.b16 %v118, %v118
  %v135 = vpack.c.b16 %v119, %v119
  %v136 = vpack.c.b16 %v120, %v120
  %v137 = vpack.c.b16 %v121, %v121
  %v138 = vpack.c.b16 %v122, %v122
  %v139 = vpack.c.b16 %v123, %v123
  %vm156 = vcmask 125952
  %157 = vst.msk [vmem:[%s3] sm:$0xf] %vm156, %v124
  %158 = vst.msk [vmem:[%s3 + $0x4] sm:$0xf] %vm156, %v125
  %159 = vst.msk [vmem:[%s3 + $0x8] sm:$0xf] %vm156, %v126
  %160 = vst.msk [vmem:[%s3 + $0xc] sm:$0xf] %vm156, %v127
  %161 = vst.msk [vmem:[%s3 + $0x10] sm:$0xf] %vm156, %v128
  %162 = vst.msk [vmem:[%s3 + $0x14] sm:$0xf] %vm156, %v129
  %163 = vst.msk [vmem:[%s3 + $0x18] sm:$0xf] %vm156, %v130
  %164 = vst.msk [vmem:[%s3 + $0x1c] sm:$0xf] %vm156, %v131
  %165 = vst.msk [vmem:[%s3 + $0x20] sm:$0xf] %vm156, %v132
  %166 = vst.msk [vmem:[%s3 + $0x24] sm:$0xf] %vm156, %v133
  %167 = vst.msk [vmem:[%s3 + $0x28] sm:$0xf] %vm156, %v134
  %168 = vst.msk [vmem:[%s3 + $0x2c] sm:$0xf] %vm156, %v135
  %169 = vst.msk [vmem:[%s3 + $0x30] sm:$0xf] %vm156, %v136
  %170 = vst.msk [vmem:[%s3 + $0x34] sm:$0xf] %vm156, %v137
  %171 = vst.msk [vmem:[%s3 + $0x38] sm:$0xf] %vm156, %v138
  %172 = vst.msk [vmem:[%s3 + $0x3c] sm:$0xf] %vm156, %v139
  // Predicated region
  $region14: #{net3d_forward.30} parent=0 // pred_check
    _
  $region15: #{net3d_forward.30} parent=0 // pred_check_branch
    %174 = sbr.rel (0) target = $region17
  $region16: #{net3d_forward.30} parent=0 // pred_region
    _
  $region17: #{net3d_forward.30} parent=0 // pred_fallthru
    _
  // Predicated region
  $region18: #{net3d_forward.30} parent=0 // pred_check
    _
  $region19: #{net3d_forward.30} parent=0 // pred_check_branch
    %176 = sbr.rel (0) target = $region21
  $region20: #{net3d_forward.30} parent=0 // pred_region
    _
  $region21: #{net3d_forward.30} parent=0 // pred_fallthru
    _

// kernel: tile.18
$region0: #{tile.18}
  #allocation0 [shape = 's32[1]{0}', space=sflag, size = 0x4, scoped, tag = 'scoped memory for tile.18']
  %s0 = inlined_call_operand.vmem [shape: f32[16], index: 0, kind: input, shape index: {}]
  %s1 = inlined_call_operand.vmem [shape: f32[8,16], index: 1, kind: output, shape index: {}]
  // Predicated region
  $region2: #{tile.18} parent=0 // pred_check
    _
  $region3: #{tile.18} parent=0 // pred_check_branch
    %3 = sbr.rel (0) target = $region5
  $region4: #{tile.18} parent=0 // pred_region
    _
  $region5: #{tile.18} parent=0 // pred_fallthru
    _
  %v4 = vld [vmem:[%s0] ss:$0 sm:$0xff]
  %5 = vst [vmem:[%s1] sm:$0xff] %v4

// kernel: tile.19
$region0: #{tile.19}
  %s0 = inlined_call_operand.vmem [shape: f32[8,16], index: 0, kind: input, shape index: {}]
  %s1 = inlined_call_operand.vmem [shape: f32[1,128], index: 1, kind: output, shape index: {}]
  $region1: #{tile.19} parent=0
    #allocation0 [shape = 'u8[4096]{0}', space=vmem, size = 0x1000, scoped, tag = 'scoped mem for output reshape']
    %v2 = vld [vmem:[%s0] sm:$0x1]
    %vm3 = vcmask 130048
    %4 = vst.msk [vmem:[#allocation0] sm:$0x1] %vm3, %v2
    %s5 = scalar_lea.vmem %s0, 7
    %v6 = vld [vmem:[%s5] sm:$0x1]
    %7 = vrot.lane.b32.xlu0 %v6, 112
    %v8 = vpop.permute.xlu0 %7
    %vm9 = vcmask 1048448
    %10 = vst.msk [vmem:[#allocation0] sm:$0x1] %vm9, %v8
    %s11 = scalar_lea.vmem %s0, 6
    %v12 = vld [vmem:[%s11] sm:$0x1]
    %13 = vrot.lane.b32.xlu0 %v12, 96
    %v14 = vpop.permute.xlu0 %13
    %vm15 = vcmask 917248
    %16 = vst.msk [vmem:[#allocation0] sm:$0x1] %vm15, %v14
    %s17 = scalar_lea.vmem %s0, 5
    %v18 = vld [vmem:[%s17] sm:$0x1]
    %19 = vrot.lane.b32.xlu0 %v18, 80
    %v20 = vpop.permute.xlu0 %19
    %vm21 = vcmask 786048
    %22 = vst.msk [vmem:[#allocation0] sm:$0x1] %vm21, %v20
    %s23 = scalar_lea.vmem %s0, 4
    %v24 = vld [vmem:[%s23] sm:$0x1]
    %25 = vrot.lane.b32.xlu0 %v24, 64
    %v26 = vpop.permute.xlu0 %25
    %vm27 = vcmask 654848
    %28 = vst.msk [vmem:[#allocation0] sm:$0x1] %vm27, %v26
    %s29 = scalar_lea.vmem %s0, 3
    %v30 = vld [vmem:[%s29] sm:$0x1]
    %31 = vrot.lane.b32.xlu0 %v30, 48
    %v32 = vpop.permute.xlu0 %31
    %vm33 = vcmask 523648
    %34 = vst.msk [vmem:[#allocation0] sm:$0x1] %vm33, %v32
    %s35 = scalar_lea.vmem %s0, 2
    %v36 = vld [vmem:[%s35] sm:$0x1]
    %37 = vrot.lane.b32.xlu0 %v36, 32
    %v38 = vpop.permute.xlu0 %37
    %vm39 = vcmask 392448
    %40 = vst.msk [vmem:[#allocation0] sm:$0x1] %vm39, %v38
    %s41 = scalar_lea.vmem %s0, 1
    %v42 = vld [vmem:[%s41] sm:$0x1]
    %43 = vrot.lane.b32.xlu0 %v42, 16
    %v44 = vpop.permute.xlu0 %43
    %vm45 = vcmask 261248
    %46 = vst.msk [vmem:[#allocation0] sm:$0x1] %vm45, %v44
    %s48 = sshllo.u32 0, 1
    %v50 = vld [vmem:[#allocation0] sm:%s48]
    %s51 = sshllo.u32 0, 1
    %52 = vst [vmem:[%s1] sm:%s51] %v50

// kernel: net3d_forward.31
$region0: #{net3d_forward.31}
  #allocation0 [shape = 'u32[]', space=smem, size = 0x4, offset = 0x4, fixed_abs, tag = 'smem constant byte address 0x4 - core index']
  #allocation1 [shape = 'u32[144,128]{1,0:T(1,128)}', space=vmem, size = 0x12000, scoped, tag = 'internal scratch']
  %s0 = inlined_call_operand.vmem [shape: bf16[128,1296], index: 0, kind: input, shape index: {}]
  %s1 = inlined_call_operand.vmem [shape: bf16[1296,128], index: 1, kind: input, shape index: {}]
  %s2 = inlined_call_operand.vmem [shape: f32[1,128], index: 2, kind: input, shape index: {}]
  %s3 = inlined_call_operand.vmem [shape: f32[128,128], index: 3, kind: output, shape index: {}]
  %s4 = sld [smem:[#allocation0]]
  $region22: #{net3d_forward.31} parent=0
    _
  %s6 = ssub.s32 1, %s4
  %s7 = scalar_select 0, %s6, %s4
  // Predicated region
  $region2: #{net3d_forward.31} parent=0 // pred_check
    _
  $region3: #{net3d_forward.31} parent=0 // pred_check_branch
    %9 = sbr.rel (0) target = $region5
  $region4: #{net3d_forward.31} parent=0 // pred_region
    _
  $region5: #{net3d_forward.31} parent=0 // pred_fallthru
    _
  // Predicated region
  $region6: #{net3d_forward.31} parent=0 // pred_check
    _
  $region7: #{net3d_forward.31} parent=0 // pred_check_branch
    %11 = sbr.rel (0) target = $region9
  $region8: #{net3d_forward.31} parent=0 // pred_region
    _
  $region9: #{net3d_forward.31} parent=0 // pred_fallthru
    _
  // Predicated region
  $region10: #{net3d_forward.31} parent=0 // pred_check
    _
  $region11: #{net3d_forward.31} parent=0 // pred_check_branch
    %13 = sbr.rel (0) target = $region13
  $region12: #{net3d_forward.31} parent=0 // pred_region
    _
  $region13: #{net3d_forward.31} parent=0 // pred_fallthru
    _
  %v15 = vld [vmem:[%s0] sm:$0xff]
  %v16 = vld [vmem:[%s0 + $0x8] sm:$0xff]
  %v17 = vld [vmem:[%s0 + $0x10] sm:$0xff]
  %v18 = vld [vmem:[%s0 + $0x18] sm:$0xff]
  %v19 = vld [vmem:[%s0 + $0x20] sm:$0xff]
  %v20 = vld [vmem:[%s0 + $0x28] sm:$0xf]
  %v21 = vld [vmem:[%s0 + $0x2c] sm:$0xff]
  %v22 = vld [vmem:[%s0 + $0x34] sm:$0xff]
  %v23 = vld [vmem:[%s0 + $0x3c] sm:$0xff]
  %v24 = vld [vmem:[%s0 + $0x44] sm:$0xff]
  %v25 = vld [vmem:[%s0 + $0x4c] sm:$0xff]
  %v26 = vld [vmem:[%s0 + $0x54] sm:$0xf]
  %v27 = vld [vmem:[%s0 + $0x58] sm:$0xff]
  %v28 = vld [vmem:[%s0 + $0x60] sm:$0xff]
  %v29 = vld [vmem:[%s0 + $0x68] sm:$0xff]
  %v30 = vld [vmem:[%s0 + $0x70] sm:$0xff]
  %v31 = vld [vmem:[%s0 + $0x78] sm:$0xff]
  %v32 = vld [vmem:[%s0 + $0x80] sm:$0xf]
  %v33 = vld [vmem:[%s0 + $0x84] sm:$0xff]
  %v34 = vld [vmem:[%s0 + $0x8c] sm:$0xff]
  %v35 = vld [vmem:[%s0 + $0x94] sm:$0xff]
  %v36 = vld [vmem:[%s0 + $0x9c] sm:$0xff]
  %v37 = vld [vmem:[%s0 + $0xa4] sm:$0xff]
  %v38 = vld [vmem:[%s0 + $0xac] sm:$0xf]
  %v39 = vld [vmem:[%s0 + $0xb0] sm:$0xff]
  %v40 = vld [vmem:[%s0 + $0xb8] sm:$0xff]
  %v41 = vld [vmem:[%s0 + $0xc0] sm:$0xff]
  %v42 = vld [vmem:[%s0 + $0xc8] sm:$0xff]
  %v43 = vld [vmem:[%s0 + $0xd0] sm:$0xff]
  %v44 = vld [vmem:[%s0 + $0xd8] sm:$0xf]
  %v45 = vld [vmem:[%s0 + $0xdc] sm:$0xff]
  %v46 = vld [vmem:[%s0 + $0xe4] sm:$0xff]
  %v47 = vld [vmem:[%s0 + $0xec] sm:$0xff]
  %v48 = vld [vmem:[%s0 + $0xf4] sm:$0xff]
  %v49 = vld [vmem:[%s0 + $0xfc] sm:$0xff]
  %v50 = vld [vmem:[%s0 + $0x104] sm:$0xf]
  %v51 = vld [vmem:[%s0 + $0x108] sm:$0xff]
  %v52 = vld [vmem:[%s0 + $0x110] sm:$0xff]
  %v53 = vld [vmem:[%s0 + $0x118] sm:$0xff]
  %v54 = vld [vmem:[%s0 + $0x120] sm:$0xff]
  %v55 = vld [vmem:[%s0 + $0x128] sm:$0xff]
  %v56 = vld [vmem:[%s0 + $0x130] sm:$0xf]
  %v57 = vld [vmem:[%s0 + $0x134] sm:$0xff]
  %v58 = vld [vmem:[%s0 + $0x13c] sm:$0xff]
  %v59 = vld [vmem:[%s0 + $0x144] sm:$0xff]
  %v60 = vld [vmem:[%s0 + $0x14c] sm:$0xff]
  %v61 = vld [vmem:[%s0 + $0x154] sm:$0xff]
  %v62 = vld [vmem:[%s0 + $0x15c] sm:$0xf]
  %v63 = vld [vmem:[%s0 + $0x160] sm:$0xff]
  %v64 = vld [vmem:[%s0 + $0x168] sm:$0xff]
  %v65 = vld [vmem:[%s0 + $0x170] sm:$0xff]
  %v66 = vld [vmem:[%s0 + $0x178] sm:$0xff]
  %v67 = vld [vmem:[%s0 + $0x180] sm:$0xff]
  %v68 = vld [vmem:[%s0 + $0x188] sm:$0xf]
  %v69 = vld [vmem:[%s0 + $0x18c] sm:$0xff]
  %v70 = vld [vmem:[%s0 + $0x194] sm:$0xff]
  %v71 = vld [vmem:[%s0 + $0x19c] sm:$0xff]
  %v72 = vld [vmem:[%s0 + $0x1a4] sm:$0xff]
  %v73 = vld [vmem:[%s0 + $0x1ac] sm:$0xff]
  %v74 = vld [vmem:[%s0 + $0x1b4] sm:$0xf]
  %v75 = vld [vmem:[%s0 + $0x1b8] sm:$0xff]
  %v76 = vld [vmem:[%s0 + $0x1c0] sm:$0xff]
  %v77 = vld [vmem:[%s0 + $0x1c8] sm:$0xff]
  %v78 = vld [vmem:[%s0 + $0x1d0] sm:$0xff]
  %v79 = vld [vmem:[%s0 + $0x1d8] sm:$0xff]
  %v80 = vld [vmem:[%s0 + $0x1e0] sm:$0xf]
  %v81 = vld [vmem:[%s0 + $0x1e4] sm:$0xff]
  %v82 = vld [vmem:[%s0 + $0x1ec] sm:$0xff]
  %v83 = vld [vmem:[%s0 + $0x1f4] sm:$0xff]
  %v84 = vld [vmem:[%s0 + $0x1fc] sm:$0xff]
  %v85 = vld [vmem:[%s0 + $0x204] sm:$0xff]
  %v86 = vld [vmem:[%s0 + $0x20c] sm:$0xf]
  %v87 = vld [vmem:[%s0 + $0x210] sm:$0xff]
  %v88 = vld [vmem:[%s0 + $0x218] sm:$0xff]
  %v89 = vld [vmem:[%s0 + $0x220] sm:$0xff]
  %v90 = vld [vmem:[%s0 + $0x228] sm:$0xff]
  %v91 = vld [vmem:[%s0 + $0x230] sm:$0xff]
  %v92 = vld [vmem:[%s0 + $0x238] sm:$0xf]
  %v93 = vld [vmem:[%s0 + $0x23c] sm:$0xff]
  %v94 = vld [vmem:[%s0 + $0x244] sm:$0xff]
  %v95 = vld [vmem:[%s0 + $0x24c] sm:$0xff]
  %v96 = vld [vmem:[%s0 + $0x254] sm:$0xff]
  %v97 = vld [vmem:[%s0 + $0x25c] sm:$0xff]
  %v98 = vld [vmem:[%s0 + $0x264] sm:$0xf]
  %v99 = vld [vmem:[%s0 + $0x268] sm:$0xff]
  %v100 = vld [vmem:[%s0 + $0x270] sm:$0xff]
  %v101 = vld [vmem:[%s0 + $0x278] sm:$0xff]
  %v102 = vld [vmem:[%s0 + $0x280] sm:$0xff]
  %v103 = vld [vmem:[%s0 + $0x288] sm:$0xff]
  %v104 = vld [vmem:[%s0 + $0x290] sm:$0xf]
  %v105 = vld [vmem:[%s0 + $0x294] sm:$0xff]
  %v106 = vld [vmem:[%s0 + $0x29c] sm:$0xff]
  %v107 = vld [vmem:[%s0 + $0x2a4] sm:$0xff]
  %v108 = vld [vmem:[%s0 + $0x2ac] sm:$0xff]
  %v109 = vld [vmem:[%s0 + $0x2b4] sm:$0xff]
  %v110 = vld [vmem:[%s0 + $0x2bc] sm:$0xf]
  %v111 = vld [vmem:[%s1] sm:$0xf]
  %v112 = vld [vmem:[%s1 + $0x4] sm:$0xf]
  %v113 = vld [vmem:[%s1 + $0x8] sm:$0xf]
  %v114 = vld [vmem:[%s1 + $0xc] sm:$0xf]
  %v115 = vld [vmem:[%s1 + $0x10] sm:$0xf]
  %v116 = vld [vmem:[%s1 + $0x14] sm:$0xf]
  %v117 = vld [vmem:[%s1 + $0x18] sm:$0xf]
  %v118 = vld [vmem:[%s1 + $0x1c] sm:$0xf]
  %v119 = vld [vmem:[%s1 + $0x20] sm:$0xf]
  %v120 = vld [vmem:[%s1 + $0x24] sm:$0xf]
  %v121 = vld [vmem:[%s1 + $0x28] sm:$0xf]
  %v122 = vld [vmem:[%s1 + $0x2c] sm:$0xf]
  %v123 = vld [vmem:[%s1 + $0x30] sm:$0xf]
  %v124 = vld [vmem:[%s1 + $0x34] sm:$0xf]
  %v125 = vld [vmem:[%s1 + $0x38] sm:$0xf]
  %v126 = vld [vmem:[%s1 + $0x3c] sm:$0xf]
  %v127 = vld [vmem:[%s1 + $0x40] sm:$0xf]
  %v128 = vld [vmem:[%s1 + $0x44] sm:$0xf]
  %v129 = vld [vmem:[%s1 + $0x48] sm:$0xf]
  %v130 = vld [vmem:[%s1 + $0x4c] sm:$0xf]
  %v131 = vld [vmem:[%s1 + $0x50] sm:$0xf]
  %v132 = vld [vmem:[%s1 + $0x54] sm:$0xf]
  %v133 = vld [vmem:[%s1 + $0x58] sm:$0xf]
  %v134 = vld [vmem:[%s1 + $0x5c] sm:$0xf]
  %v135 = vld [vmem:[%s1 + $0x60] sm:$0xf]
  %v136 = vld [vmem:[%s1 + $0x64] sm:$0xf]
  %v137 = vld [vmem:[%s1 + $0x68] sm:$0xf]
  %v138 = vld [vmem:[%s1 + $0x6c] sm:$0xf]
  %v139 = vld [vmem:[%s1 + $0x70] sm:$0xf]
  %v140 = vld [vmem:[%s1 + $0x74] sm:$0xf]
  %v141 = vld [vmem:[%s1 + $0x78] sm:$0xf]
  %v142 = vld [vmem:[%s1 + $0x7c] sm:$0xf]
  %v143 = vld [vmem:[%s1 + $0x80] sm:$0xf]
  %v144 = vld [vmem:[%s1 + $0x84] sm:$0xf]
  %v145 = vld [vmem:[%s1 + $0x88] sm:$0xf]
  %v146 = vld [vmem:[%s1 + $0x8c] sm:$0xf]
  %v147 = vld [vmem:[%s1 + $0x90] sm:$0xf]
  %v148 = vld [vmem:[%s1 + $0x94] sm:$0xf]
  %v149 = vld [vmem:[%s1 + $0x98] sm:$0xf]
  %v150 = vld [vmem:[%s1 + $0x9c] sm:$0xf]
  %v151 = vld [vmem:[%s1 + $0xa0] sm:$0xf]
  %v152 = vld [vmem:[%s1 + $0xa4] sm:$0xf]
  %v153 = vld [vmem:[%s1 + $0xa8] sm:$0xf]
  %v154 = vld [vmem:[%s1 + $0xac] sm:$0xf]
  %v155 = vld [vmem:[%s1 + $0xb0] sm:$0xf]
  %v156 = vld [vmem:[%s1 + $0xb4] sm:$0xf]
  %v157 = vld [vmem:[%s1 + $0xb8] sm:$0xf]
  %v158 = vld [vmem:[%s1 + $0xbc] sm:$0xf]
  %v159 = vld [vmem:[%s1 + $0xc0] sm:$0xf]
  %v160 = vld [vmem:[%s1 + $0xc4] sm:$0xf]
  %v161 = vld [vmem:[%s1 + $0xc8] sm:$0xf]
  %v162 = vld [vmem:[%s1 + $0xcc] sm:$0xf]
  %v163 = vld [vmem:[%s1 + $0xd0] sm:$0xf]
  %v164 = vld [vmem:[%s1 + $0xd4] sm:$0xf]
  %v165 = vld [vmem:[%s1 + $0xd8] sm:$0xf]
  %v166 = vld [vmem:[%s1 + $0xdc] sm:$0xf]
  %v167 = vld [vmem:[%s1 + $0xe0] sm:$0xf]
  %v168 = vld [vmem:[%s1 + $0xe4] sm:$0xf]
  %v169 = vld [vmem:[%s1 + $0xe8] sm:$0xf]
  %v170 = vld [vmem:[%s1 + $0xec] sm:$0xf]
  %v171 = vld [vmem:[%s1 + $0xf0] sm:$0xf]
  %v172 = vld [vmem:[%s1 + $0xf4] sm:$0xf]
  %v173 = vld [vmem:[%s1 + $0xf8] sm:$0xf]
  %v174 = vld [vmem:[%s1 + $0xfc] sm:$0xf]
  %v175 = vld [vmem:[%s1 + $0x100] sm:$0xf]
  %v176 = vld [vmem:[%s1 + $0x104] sm:$0xf]
  %v177 = vld [vmem:[%s1 + $0x108] sm:$0xf]
  %v178 = vld [vmem:[%s1 + $0x10c] sm:$0xf]
  %v179 = vld [vmem:[%s1 + $0x110] sm:$0xf]
  %v180 = vld [vmem:[%s1 + $0x114] sm:$0xf]
  %v181 = vld [vmem:[%s1 + $0x118] sm:$0xf]
  %v182 = vld [vmem:[%s1 + $0x11c] sm:$0xf]
  %v183 = vld [vmem:[%s1 + $0x120] sm:$0xf]
  %v184 = vld [vmem:[%s1 + $0x124] sm:$0xf]
  %v185 = vld [vmem:[%s1 + $0x128] sm:$0xf]
  %v186 = vld [vmem:[%s1 + $0x12c] sm:$0xf]
  %v187 = vld [vmem:[%s1 + $0x130] sm:$0xf]
  %v188 = vld [vmem:[%s1 + $0x134] sm:$0xf]
  %v189 = vld [vmem:[%s1 + $0x138] sm:$0xf]
  %v190 = vld [vmem:[%s1 + $0x13c] sm:$0xf]
  %v191 = vld [vmem:[%s1 + $0x140] sm:$0xf]
  %v192 = vld [vmem:[%s1 + $0x144] sm:$0xf]
  %v193 = vld [vmem:[%s1 + $0x148] sm:$0xf]
  %v194 = vld [vmem:[%s1 + $0x14c] sm:$0xf]
  %v195 = vld [vmem:[%s1 + $0x150] sm:$0xf]
  %v196 = vld [vmem:[%s1 + $0x154] sm:$0xf]
  %v197 = vld [vmem:[%s1 + $0x158] sm:$0xf]
  %v198 = vld [vmem:[%s1 + $0x15c] sm:$0xf]
  %v199 = vld [vmem:[%s1 + $0x160] sm:$0xf]
  %v200 = vld [vmem:[%s1 + $0x164] sm:$0xf]
  %v201 = vld [vmem:[%s1 + $0x168] sm:$0xf]
  %v202 = vld [vmem:[%s1 + $0x16c] sm:$0xf]
  %v203 = vld [vmem:[%s1 + $0x170] sm:$0xf]
  %v204 = vld [vmem:[%s1 + $0x174] sm:$0xf]
  %v205 = vld [vmem:[%s1 + $0x178] sm:$0xf]
  %v206 = vld [vmem:[%s1 + $0x17c] sm:$0xf]
  %v207 = vld [vmem:[%s1 + $0x180] sm:$0xf]
  %v208 = vld [vmem:[%s1 + $0x184] sm:$0xf]
  %v209 = vld [vmem:[%s1 + $0x188] sm:$0xf]
  %v210 = vld [vmem:[%s1 + $0x18c] sm:$0xf]
  %v211 = vld [vmem:[%s1 + $0x190] sm:$0xf]
  %v212 = vld [vmem:[%s1 + $0x194] sm:$0xf]
  %v213 = vld [vmem:[%s1 + $0x198] sm:$0xf]
  %v214 = vld [vmem:[%s1 + $0x19c] sm:$0xf]
  %v215 = vld [vmem:[%s1 + $0x1a0] sm:$0xf]
  %v216 = vld [vmem:[%s1 + $0x1a4] sm:$0xf]
  %v217 = vld [vmem:[%s1 + $0x1a8] sm:$0xf]
  %v218 = vld [vmem:[%s1 + $0x1ac] sm:$0xf]
  %v219 = vld [vmem:[%s1 + $0x1b0] sm:$0xf]
  %v220 = vld [vmem:[%s1 + $0x1b4] sm:$0xf]
  %v221 = vld [vmem:[%s1 + $0x1b8] sm:$0xf]
  %v222 = vld [vmem:[%s1 + $0x1bc] sm:$0xf]
  %v223 = vld [vmem:[%s1 + $0x1c0] sm:$0xf]
  %v224 = vld [vmem:[%s1 + $0x1c4] sm:$0xf]
  %v225 = vld [vmem:[%s1 + $0x1c8] sm:$0xf]
  %v226 = vld [vmem:[%s1 + $0x1cc] sm:$0xf]
  %v227 = vld [vmem:[%s1 + $0x1d0] sm:$0xf]
  %v228 = vld [vmem:[%s1 + $0x1d4] sm:$0xf]
  %v229 = vld [vmem:[%s1 + $0x1d8] sm:$0xf]
  %v230 = vld [vmem:[%s1 + $0x1dc] sm:$0xf]
  %v231 = vld [vmem:[%s1 + $0x1e0] sm:$0xf]
  %v232 = vld [vmem:[%s1 + $0x1e4] sm:$0xf]
  %v233 = vld [vmem:[%s1 + $0x1e8] sm:$0xf]
  %v234 = vld [vmem:[%s1 + $0x1ec] sm:$0xf]
  %v235 = vld [vmem:[%s1 + $0x1f0] sm:$0xf]
  %v236 = vld [vmem:[%s1 + $0x1f4] sm:$0xf]
  %v237 = vld [vmem:[%s1 + $0x1f8] sm:$0xf]
  %v238 = vld [vmem:[%s1 + $0x1fc] sm:$0xf]
  %v239 = vld [vmem:[%s1 + $0x200] sm:$0xf]
  %v240 = vld [vmem:[%s1 + $0x204] sm:$0xf]
  %v241 = vld [vmem:[%s1 + $0x208] sm:$0xf]
  %v242 = vld [vmem:[%s1 + $0x20c] sm:$0xf]
  %v243 = vld [vmem:[%s1 + $0x210] sm:$0xf]
  %v244 = vld [vmem:[%s1 + $0x214] sm:$0xf]
  %v245 = vld [vmem:[%s1 + $0x218] sm:$0xf]
  %v246 = vld [vmem:[%s1 + $0x21c] sm:$0xf]
  %v247 = vld [vmem:[%s1 + $0x220] sm:$0xf]
  %v248 = vld [vmem:[%s1 + $0x224] sm:$0xf]
  %v249 = vld [vmem:[%s1 + $0x228] sm:$0xf]
  %v250 = vld [vmem:[%s1 + $0x22c] sm:$0xf]
  %v251 = vld [vmem:[%s1 + $0x230] sm:$0xf]
  %v252 = vld [vmem:[%s1 + $0x234] sm:$0xf]
  %v253 = vld [vmem:[%s1 + $0x238] sm:$0xf]
  %v254 = vld [vmem:[%s1 + $0x23c] sm:$0xf]
  %v255 = vld [vmem:[%s1 + $0x240] sm:$0xf]
  %v256 = vld [vmem:[%s1 + $0x244] sm:$0xf]
  %v257 = vld [vmem:[%s1 + $0x248] sm:$0xf]
  %v258 = vld [vmem:[%s1 + $0x24c] sm:$0xf]
  %v259 = vld [vmem:[%s1 + $0x250] sm:$0xf]
  %v260 = vld [vmem:[%s1 + $0x254] sm:$0xf]
  %v261 = vld [vmem:[%s1 + $0x258] sm:$0xf]
  %v262 = vld [vmem:[%s1 + $0x25c] sm:$0xf]
  %v263 = vld [vmem:[%s1 + $0x260] sm:$0xf]
  %v264 = vld [vmem:[%s1 + $0x264] sm:$0xf]
  %v265 = vld [vmem:[%s1 + $0x268] sm:$0xf]
  %v266 = vld [vmem:[%s1 + $0x26c] sm:$0xf]
  %v267 = vld [vmem:[%s1 + $0x270] sm:$0xf]
  %v268 = vld [vmem:[%s1 + $0x274] sm:$0xf]
  %v269 = vld [vmem:[%s1 + $0x278] sm:$0xf]
  %v270 = vld [vmem:[%s1 + $0x27c] sm:$0xf]
  %v271 = vld [vmem:[%s1 + $0x280] sm:$0xf]
  %v272 = vld [vmem:[%s1 + $0x284] sm:$0xf]
  %v273 = vld [vmem:[%s2] sm:$0x1]
  %v275 = vlaneseq
  %v276 = vshrl.u32 %v275, 7
  %v277 = vsub.s32 0, %v276
  %v278 = vrot.slane %v273, %v277
  %v376 = vunpack.c.l.b16 %v15
  %v377 = vunpack.c.h.b16 %v15
  %v378 = vunpack.c.l.b16 %v16
  %v379 = vunpack.c.h.b16 %v16
  %v380 = vunpack.c.l.b16 %v17
  %v381 = vunpack.c.h.b16 %v17
  %v382 = vunpack.c.l.b16 %v18
  %v383 = vunpack.c.h.b16 %v18
  %v384 = vunpack.c.l.b16 %v19
  %v385 = vunpack.c.h.b16 %v19
  %v386 = vunpack.c.l.b16 %v20
  %v387 = vunpack.c.l.b16 %v21
  %v388 = vunpack.c.h.b16 %v21
  %v389 = vunpack.c.l.b16 %v22
  %v390 = vunpack.c.h.b16 %v22
  %v391 = vunpack.c.l.b16 %v23
  %v392 = vunpack.c.h.b16 %v23
  %v393 = vunpack.c.l.b16 %v24
  %v394 = vunpack.c.h.b16 %v24
  %v395 = vunpack.c.l.b16 %v25
  %v396 = vunpack.c.h.b16 %v25
  %v397 = vunpack.c.l.b16 %v26
  %v398 = vunpack.c.l.b16 %v27
  %v399 = vunpack.c.h.b16 %v27
  %v400 = vunpack.c.l.b16 %v28
  %v401 = vunpack.c.h.b16 %v28
  %v402 = vunpack.c.l.b16 %v29
  %v403 = vunpack.c.h.b16 %v29
  %v404 = vunpack.c.l.b16 %v30
  %v405 = vunpack.c.h.b16 %v30
  %v406 = vunpack.c.l.b16 %v31
  %v407 = vunpack.c.h.b16 %v31
  %v408 = vunpack.c.l.b16 %v32
  %v409 = vunpack.c.l.b16 %v33
  %v410 = vunpack.c.h.b16 %v33
  %v411 = vunpack.c.l.b16 %v34
  %v412 = vunpack.c.h.b16 %v34
  %v413 = vunpack.c.l.b16 %v35
  %v414 = vunpack.c.h.b16 %v35
  %v415 = vunpack.c.l.b16 %v36
  %v416 = vunpack.c.h.b16 %v36
  %v417 = vunpack.c.l.b16 %v37
  %v418 = vunpack.c.h.b16 %v37
  %v419 = vunpack.c.l.b16 %v38
  %v420 = vunpack.c.l.b16 %v39
  %v421 = vunpack.c.h.b16 %v39
  %v422 = vunpack.c.l.b16 %v40
  %v423 = vunpack.c.h.b16 %v40
  %v424 = vunpack.c.l.b16 %v41
  %v425 = vunpack.c.h.b16 %v41
  %v426 = vunpack.c.l.b16 %v42
  %v427 = vunpack.c.h.b16 %v42
  %v428 = vunpack.c.l.b16 %v43
  %v429 = vunpack.c.h.b16 %v43
  %v430 = vunpack.c.l.b16 %v44
  %v431 = vunpack.c.l.b16 %v45
  %v432 = vunpack.c.h.b16 %v45
  %v433 = vunpack.c.l.b16 %v46
  %v434 = vunpack.c.h.b16 %v46
  %v435 = vunpack.c.l.b16 %v47
  %v436 = vunpack.c.h.b16 %v47
  %v437 = vunpack.c.l.b16 %v48
  %v438 = vunpack.c.h.b16 %v48
  %v439 = vunpack.c.l.b16 %v49
  %v440 = vunpack.c.h.b16 %v49
  %v441 = vunpack.c.l.b16 %v50
  %v442 = vunpack.c.l.b16 %v51
  %v443 = vunpack.c.h.b16 %v51
  %v444 = vunpack.c.l.b16 %v52
  %v445 = vunpack.c.h.b16 %v52
  %v446 = vunpack.c.l.b16 %v53
  %v447 = vunpack.c.h.b16 %v53
  %v448 = vunpack.c.l.b16 %v54
  %v449 = vunpack.c.h.b16 %v54
  %v450 = vunpack.c.l.b16 %v55
  %v451 = vunpack.c.h.b16 %v55
  %v452 = vunpack.c.l.b16 %v56
  %v453 = vunpack.c.l.b16 %v57
  %v454 = vunpack.c.h.b16 %v57
  %v455 = vunpack.c.l.b16 %v58
  %v456 = vunpack.c.h.b16 %v58
  %v457 = vunpack.c.l.b16 %v59
  %v458 = vunpack.c.h.b16 %v59
  %v459 = vunpack.c.l.b16 %v60
  %v460 = vunpack.c.h.b16 %v60
  %v461 = vunpack.c.l.b16 %v61
  %v462 = vunpack.c.h.b16 %v61
  %v463 = vunpack.c.l.b16 %v62
  %v464 = vunpack.c.l.b16 %v63
  %v465 = vunpack.c.h.b16 %v63
  %v466 = vunpack.c.l.b16 %v64
  %v467 = vunpack.c.h.b16 %v64
  %v468 = vunpack.c.l.b16 %v65
  %v469 = vunpack.c.h.b16 %v65
  %v470 = vunpack.c.l.b16 %v66
  %v471 = vunpack.c.h.b16 %v66
  %v472 = vunpack.c.l.b16 %v67
  %v473 = vunpack.c.h.b16 %v67
  %v474 = vunpack.c.l.b16 %v68
  %v475 = vunpack.c.l.b16 %v69
  %v476 = vunpack.c.h.b16 %v69
  %v477 = vunpack.c.l.b16 %v70
  %v478 = vunpack.c.h.b16 %v70
  %v479 = vunpack.c.l.b16 %v71
  %v480 = vunpack.c.h.b16 %v71
  %v481 = vunpack.c.l.b16 %v72
  %v482 = vunpack.c.h.b16 %v72
  %v483 = vunpack.c.l.b16 %v73
  %v484 = vunpack.c.h.b16 %v73
  %v485 = vunpack.c.l.b16 %v74
  %v486 = vunpack.c.l.b16 %v75
  %v487 = vunpack.c.h.b16 %v75
  %v488 = vunpack.c.l.b16 %v76
  %v489 = vunpack.c.h.b16 %v76
  %v490 = vunpack.c.l.b16 %v77
  %v491 = vunpack.c.h.b16 %v77
  %v492 = vunpack.c.l.b16 %v78
  %v493 = vunpack.c.h.b16 %v78
  %v494 = vunpack.c.l.b16 %v79
  %v495 = vunpack.c.h.b16 %v79
  %v496 = vunpack.c.l.b16 %v80
  %v497 = vunpack.c.l.b16 %v81
  %v498 = vunpack.c.h.b16 %v81
  %v499 = vunpack.c.l.b16 %v82
  %v500 = vunpack.c.h.b16 %v82
  %v501 = vunpack.c.l.b16 %v83
  %v502 = vunpack.c.h.b16 %v83
  %v503 = vunpack.c.l.b16 %v84
  %v504 = vunpack.c.h.b16 %v84
  %v505 = vunpack.c.l.b16 %v85
  %v506 = vunpack.c.h.b16 %v85
  %v507 = vunpack.c.l.b16 %v86
  %v508 = vunpack.c.l.b16 %v87
  %v509 = vunpack.c.h.b16 %v87
  %v510 = vunpack.c.l.b16 %v88
  %v511 = vunpack.c.h.b16 %v88
  %v512 = vunpack.c.l.b16 %v89
  %v513 = vunpack.c.h.b16 %v89
  %v514 = vunpack.c.l.b16 %v90
  %v515 = vunpack.c.h.b16 %v90
  %v516 = vunpack.c.l.b16 %v91
  %v517 = vunpack.c.h.b16 %v91
  %v518 = vunpack.c.l.b16 %v92
  %v519 = vunpack.c.l.b16 %v93
  %v520 = vunpack.c.h.b16 %v93
  %v521 = vunpack.c.l.b16 %v94
  %v522 = vunpack.c.h.b16 %v94
  %v523 = vunpack.c.l.b16 %v95
  %v524 = vunpack.c.h.b16 %v95
  %v525 = vunpack.c.l.b16 %v96
  %v526 = vunpack.c.h.b16 %v96
  %v527 = vunpack.c.l.b16 %v97
  %v528 = vunpack.c.h.b16 %v97
  %v529 = vunpack.c.l.b16 %v98
  %v530 = vunpack.c.l.b16 %v99
  %v531 = vunpack.c.h.b16 %v99
  %v532 = vunpack.c.l.b16 %v100
  %v533 = vunpack.c.h.b16 %v100
  %v534 = vunpack.c.l.b16 %v101
  %v535 = vunpack.c.h.b16 %v101
  %v536 = vunpack.c.l.b16 %v102
  %v537 = vunpack.c.h.b16 %v102
  %v538 = vunpack.c.l.b16 %v103
  %v539 = vunpack.c.h.b16 %v103
  %v540 = vunpack.c.l.b16 %v104
  %v541 = vunpack.c.l.b16 %v105
  %v542 = vunpack.c.h.b16 %v105
  %v543 = vunpack.c.l.b16 %v106
  %v544 = vunpack.c.h.b16 %v106
  %v545 = vunpack.c.l.b16 %v107
  %v546 = vunpack.c.h.b16 %v107
  %v547 = vunpack.c.l.b16 %v108
  %v548 = vunpack.c.h.b16 %v108
  %v549 = vunpack.c.l.b16 %v109
  %v550 = vunpack.c.h.b16 %v109
  %v551 = vunpack.c.l.b16 %v110
  %v552 = vpack.c.b16 %v387, %v376
  %v553 = vpack.c.b16 %v388, %v377
  %v554 = vpack.c.b16 %v389, %v378
  %v555 = vpack.c.b16 %v390, %v379
  %v556 = vpack.c.b16 %v391, %v380
  %v557 = vpack.c.b16 %v392, %v381
  %v558 = vpack.c.b16 %v393, %v382
  %v559 = vpack.c.b16 %v394, %v383
  %v560 = vpack.c.b16 %v395, %v384
  %v561 = vpack.c.b16 %v396, %v385
  %v562 = vpack.c.b16 %v397, %v386
  %v563 = vpack.c.b16 %v409, %v398
  %v564 = vpack.c.b16 %v410, %v399
  %v565 = vpack.c.b16 %v411, %v400
  %v566 = vpack.c.b16 %v412, %v401
  %v567 = vpack.c.b16 %v413, %v402
  %v568 = vpack.c.b16 %v414, %v403
  %v569 = vpack.c.b16 %v415, %v404
  %v570 = vpack.c.b16 %v416, %v405
  %v571 = vpack.c.b16 %v417, %v406
  %v572 = vpack.c.b16 %v418, %v407
  %v573 = vpack.c.b16 %v419, %v408
  %v574 = vpack.c.b16 %v431, %v420
  %v575 = vpack.c.b16 %v432, %v421
  %v576 = vpack.c.b16 %v433, %v422
  %v577 = vpack.c.b16 %v434, %v423
  %v578 = vpack.c.b16 %v435, %v424
  %v579 = vpack.c.b16 %v436, %v425
  %v580 = vpack.c.b16 %v437, %v426
  %v581 = vpack.c.b16 %v438, %v427
  %v582 = vpack.c.b16 %v439, %v428
  %v583 = vpack.c.b16 %v440, %v429
  %v584 = vpack.c.b16 %v441, %v430
  %v585 = vpack.c.b16 %v453, %v442
  %v586 = vpack.c.b16 %v454, %v443
  %v587 = vpack.c.b16 %v455, %v444
  %v588 = vpack.c.b16 %v456, %v445
  %v589 = vpack.c.b16 %v457, %v446
  %v590 = vpack.c.b16 %v458, %v447
  %v591 = vpack.c.b16 %v459, %v448
  %v592 = vpack.c.b16 %v460, %v449
  %v593 = vpack.c.b16 %v461, %v450
  %v594 = vpack.c.b16 %v462, %v451
  %v595 = vpack.c.b16 %v463, %v452
  %v596 = vpack.c.b16 %v475, %v464
  %v597 = vpack.c.b16 %v476, %v465
  %v598 = vpack.c.b16 %v477, %v466
  %v599 = vpack.c.b16 %v478, %v467
  %v600 = vpack.c.b16 %v479, %v468
  %v601 = vpack.c.b16 %v480, %v469
  %v602 = vpack.c.b16 %v481, %v470
  %v603 = vpack.c.b16 %v482, %v471
  %v604 = vpack.c.b16 %v483, %v472
  %v605 = vpack.c.b16 %v484, %v473
  %v606 = vpack.c.b16 %v485, %v474
  %v607 = vpack.c.b16 %v497, %v486
  %v608 = vpack.c.b16 %v498, %v487
  %v609 = vpack.c.b16 %v499, %v488
  %v610 = vpack.c.b16 %v500, %v489
  %v611 = vpack.c.b16 %v501, %v490
  %v612 = vpack.c.b16 %v502, %v491
  %v613 = vpack.c.b16 %v503, %v492
  %v614 = vpack.c.b16 %v504, %v493
  %v615 = vpack.c.b16 %v505, %v494
  %v616 = vpack.c.b16 %v506, %v495
  %v617 = vpack.c.b16 %v507, %v496
  %v618 = vpack.c.b16 %v519, %v508
  %v619 = vpack.c.b16 %v520, %v509
  %v620 = vpack.c.b16 %v521, %v510
  %v621 = vpack.c.b16 %v522, %v511
  %v622 = vpack.c.b16 %v523, %v512
  %v623 = vpack.c.b16 %v524, %v513
  %v624 = vpack.c.b16 %v525, %v514
  %v625 = vpack.c.b16 %v526, %v515
  %v626 = vpack.c.b16 %v527, %v516
  %v627 = vpack.c.b16 %v528, %v517
  %v628 = vpack.c.b16 %v529, %v518
  %v629 = vpack.c.b16 %v541, %v530
  %v630 = vpack.c.b16 %v542, %v531
  %v631 = vpack.c.b16 %v543, %v532
  %v632 = vpack.c.b16 %v544, %v533
  %v633 = vpack.c.b16 %v545, %v534
  %v634 = vpack.c.b16 %v546, %v535
  %v635 = vpack.c.b16 %v547, %v536
  %v636 = vpack.c.b16 %v548, %v537
  %v637 = vpack.c.b16 %v549, %v538
  %v638 = vpack.c.b16 %v550, %v539
  %v639 = vpack.c.b16 %v551, %v540
  %v882 = vunpack.c.l.b16 %v111
  %v883 = vunpack.c.l.b16 %v112
  %v884 = vunpack.c.l.b16 %v113
  %v885 = vunpack.c.l.b16 %v114
  %v886 = vunpack.c.l.b16 %v115
  %v887 = vunpack.c.l.b16 %v116
  %v888 = vunpack.c.l.b16 %v117
  %v889 = vunpack.c.l.b16 %v118
  %v890 = vunpack.c.l.b16 %v119
  %v891 = vunpack.c.l.b16 %v120
  %v892 = vunpack.c.l.b16 %v121
  %v893 = vunpack.c.l.b16 %v122
  %v894 = vunpack.c.l.b16 %v123
  %v895 = vunpack.c.l.b16 %v124
  %v896 = vunpack.c.l.b16 %v125
  %v897 = vunpack.c.l.b16 %v126
  %v898 = vunpack.c.l.b16 %v127
  %v899 = vunpack.c.l.b16 %v128
  %v900 = vunpack.c.l.b16 %v129
  %v901 = vunpack.c.l.b16 %v130
  %v902 = vunpack.c.l.b16 %v131
  %v903 = vunpack.c.l.b16 %v132
  %v904 = vunpack.c.l.b16 %v133
  %v905 = vunpack.c.l.b16 %v134
  %v906 = vunpack.c.l.b16 %v135
  %v907 = vunpack.c.l.b16 %v136
  %v908 = vunpack.c.l.b16 %v137
  %v909 = vunpack.c.l.b16 %v138
  %v910 = vunpack.c.l.b16 %v139
  %v911 = vunpack.c.l.b16 %v140
  %v912 = vunpack.c.l.b16 %v141
  %v913 = vunpack.c.l.b16 %v142
  %v914 = vunpack.c.l.b16 %v143
  %v915 = vunpack.c.l.b16 %v144
  %v916 = vunpack.c.l.b16 %v145
  %v917 = vunpack.c.l.b16 %v146
  %v918 = vunpack.c.l.b16 %v147
  %v919 = vunpack.c.l.b16 %v148
  %v920 = vunpack.c.l.b16 %v149
  %v921 = vunpack.c.l.b16 %v150
  %v922 = vunpack.c.l.b16 %v151
  %v923 = vunpack.c.l.b16 %v152
  %v924 = vunpack.c.l.b16 %v153
  %v925 = vunpack.c.l.b16 %v154
  %v926 = vunpack.c.l.b16 %v155
  %v927 = vunpack.c.l.b16 %v156
  %v928 = vunpack.c.l.b16 %v157
  %v929 = vunpack.c.l.b16 %v158
  %v930 = vunpack.c.l.b16 %v159
  %v931 = vunpack.c.l.b16 %v160
  %v932 = vunpack.c.l.b16 %v161
  %v933 = vunpack.c.l.b16 %v162
  %v934 = vunpack.c.l.b16 %v163
  %v935 = vunpack.c.l.b16 %v164
  %v936 = vunpack.c.l.b16 %v165
  %v937 = vunpack.c.l.b16 %v166
  %v938 = vunpack.c.l.b16 %v167
  %v939 = vunpack.c.l.b16 %v168
  %v940 = vunpack.c.l.b16 %v169
  %v941 = vunpack.c.l.b16 %v170
  %v942 = vunpack.c.l.b16 %v171
  %v943 = vunpack.c.l.b16 %v172
  %v944 = vunpack.c.l.b16 %v173
  %v945 = vunpack.c.l.b16 %v174
  %v946 = vunpack.c.l.b16 %v175
  %v947 = vunpack.c.l.b16 %v176
  %v948 = vunpack.c.l.b16 %v177
  %v949 = vunpack.c.l.b16 %v178
  %v950 = vunpack.c.l.b16 %v179
  %v951 = vunpack.c.l.b16 %v180
  %v952 = vunpack.c.l.b16 %v181
  %v953 = vunpack.c.l.b16 %v182
  %v954 = vunpack.c.l.b16 %v183
  %v955 = vunpack.c.l.b16 %v184
  %v956 = vunpack.c.l.b16 %v185
  %v957 = vunpack.c.l.b16 %v186
  %v958 = vunpack.c.l.b16 %v187
  %v959 = vunpack.c.l.b16 %v188
  %v960 = vunpack.c.l.b16 %v189
  %v961 = vunpack.c.l.b16 %v190
  %v962 = vunpack.c.l.b16 %v191
  %v963 = vunpack.c.l.b16 %v192
  %v964 = vunpack.c.l.b16 %v193
  %v965 = vunpack.c.l.b16 %v194
  %v966 = vunpack.c.l.b16 %v195
  %v967 = vunpack.c.l.b16 %v196
  %v968 = vunpack.c.l.b16 %v197
  %v969 = vunpack.c.l.b16 %v198
  %v970 = vunpack.c.l.b16 %v199
  %v971 = vunpack.c.l.b16 %v200
  %v972 = vunpack.c.l.b16 %v201
  %v973 = vunpack.c.l.b16 %v202
  %v974 = vunpack.c.l.b16 %v203
  %v975 = vunpack.c.l.b16 %v204
  %v976 = vunpack.c.l.b16 %v205
  %v977 = vunpack.c.l.b16 %v206
  %v978 = vunpack.c.l.b16 %v207
  %v979 = vunpack.c.l.b16 %v208
  %v980 = vunpack.c.l.b16 %v209
  %v981 = vunpack.c.l.b16 %v210
  %v982 = vunpack.c.l.b16 %v211
  %v983 = vunpack.c.l.b16 %v212
  %v984 = vunpack.c.l.b16 %v213
  %v985 = vunpack.c.l.b16 %v214
  %v986 = vunpack.c.l.b16 %v215
  %v987 = vunpack.c.l.b16 %v216
  %v988 = vunpack.c.l.b16 %v217
  %v989 = vunpack.c.l.b16 %v218
  %v990 = vunpack.c.l.b16 %v219
  %v991 = vunpack.c.l.b16 %v220
  %v992 = vunpack.c.l.b16 %v221
  %v993 = vunpack.c.l.b16 %v222
  %v994 = vunpack.c.l.b16 %v223
  %v995 = vunpack.c.l.b16 %v224
  %v996 = vunpack.c.l.b16 %v225
  %v997 = vunpack.c.l.b16 %v226
  %v998 = vunpack.c.l.b16 %v227
  %v999 = vunpack.c.l.b16 %v228
  %v1000 = vunpack.c.l.b16 %v229
  %v1001 = vunpack.c.l.b16 %v230
  %v1002 = vunpack.c.l.b16 %v231
  %v1003 = vunpack.c.l.b16 %v232
  %v1004 = vunpack.c.l.b16 %v233
  %v1005 = vunpack.c.l.b16 %v234
  %v1006 = vunpack.c.l.b16 %v235
  %v1007 = vunpack.c.l.b16 %v236
  %v1008 = vunpack.c.l.b16 %v237
  %v1009 = vunpack.c.l.b16 %v238
  %v1010 = vunpack.c.l.b16 %v239
  %v1011 = vunpack.c.l.b16 %v240
  %v1012 = vunpack.c.l.b16 %v241
  %v1013 = vunpack.c.l.b16 %v242
  %v1014 = vunpack.c.l.b16 %v243
  %v1015 = vunpack.c.l.b16 %v244
  %v1016 = vunpack.c.l.b16 %v245
  %v1017 = vunpack.c.l.b16 %v246
  %v1018 = vunpack.c.l.b16 %v247
  %v1019 = vunpack.c.l.b16 %v248
  %v1020 = vunpack.c.l.b16 %v249
  %v1021 = vunpack.c.l.b16 %v250
  %v1022 = vunpack.c.l.b16 %v251
  %v1023 = vunpack.c.l.b16 %v252
  %v1024 = vunpack.c.l.b16 %v253
  %v1025 = vunpack.c.l.b16 %v254
  %v1026 = vunpack.c.l.b16 %v255
  %v1027 = vunpack.c.l.b16 %v256
  %v1028 = vunpack.c.l.b16 %v257
  %v1029 = vunpack.c.l.b16 %v258
  %v1030 = vunpack.c.l.b16 %v259
  %v1031 = vunpack.c.l.b16 %v260
  %v1032 = vunpack.c.l.b16 %v261
  %v1033 = vunpack.c.l.b16 %v262
  %v1034 = vunpack.c.l.b16 %v263
  %v1035 = vunpack.c.l.b16 %v264
  %v1036 = vunpack.c.l.b16 %v265
  %v1037 = vunpack.c.l.b16 %v266
  %v1038 = vunpack.c.l.b16 %v267
  %v1039 = vunpack.c.l.b16 %v268
  %v1040 = vunpack.c.l.b16 %v269
  %v1041 = vunpack.c.l.b16 %v270
  %v1042 = vunpack.c.l.b16 %v271
  %v1043 = vunpack.c.l.b16 %v272
  %v1044 = vpack.c.b16 %v883, %v882
  %v1045 = vpack.c.b16 %v885, %v884
  %v1046 = vpack.c.b16 %v887, %v886
  %v1047 = vpack.c.b16 %v889, %v888
  %v1048 = vpack.c.b16 %v891, %v890
  %v1049 = vpack.c.b16 %v893, %v892
  %v1050 = vpack.c.b16 %v895, %v894
  %v1051 = vpack.c.b16 %v897, %v896
  %v1052 = vpack.c.b16 %v899, %v898
  %v1053 = vpack.c.b16 %v901, %v900
  %v1054 = vpack.c.b16 %v903, %v902
  %v1055 = vpack.c.b16 %v905, %v904
  %v1056 = vpack.c.b16 %v907, %v906
  %v1057 = vpack.c.b16 %v909, %v908
  %v1058 = vpack.c.b16 %v911, %v910
  %v1059 = vpack.c.b16 %v913, %v912
  %v1060 = vpack.c.b16 %v915, %v914
  %v1061 = vpack.c.b16 %v917, %v916
  %v1062 = vpack.c.b16 %v919, %v918
  %v1063 = vpack.c.b16 %v921, %v920
  %v1064 = vpack.c.b16 %v923, %v922
  %v1065 = vpack.c.b16 %v925, %v924
  %v1066 = vpack.c.b16 %v927, %v926
  %v1067 = vpack.c.b16 %v929, %v928
  %v1068 = vpack.c.b16 %v931, %v930
  %v1069 = vpack.c.b16 %v933, %v932
  %v1070 = vpack.c.b16 %v935, %v934
  %v1071 = vpack.c.b16 %v937, %v936
  %v1072 = vpack.c.b16 %v939, %v938
  %v1073 = vpack.c.b16 %v941, %v940
  %v1074 = vpack.c.b16 %v943, %v942
  %v1075 = vpack.c.b16 %v945, %v944
  %v1076 = vpack.c.b16 %v947, %v946
  %v1077 = vpack.c.b16 %v949, %v948
  %v1078 = vpack.c.b16 %v951, %v950
  %v1079 = vpack.c.b16 %v953, %v952
  %v1080 = vpack.c.b16 %v955, %v954
  %v1081 = vpack.c.b16 %v957, %v956
  %v1082 = vpack.c.b16 %v959, %v958
  %v1083 = vpack.c.b16 %v961, %v960
  %v1084 = vpack.c.b16 %v963, %v962
  %v1085 = vpack.c.b16 %v965, %v964
  %v1086 = vpack.c.b16 %v967, %v966
  %v1087 = vpack.c.b16 %v969, %v968
  %v1088 = vpack.c.b16 %v971, %v970
  %v1089 = vpack.c.b16 %v973, %v972
  %v1090 = vpack.c.b16 %v975, %v974
  %v1091 = vpack.c.b16 %v977, %v976
  %v1092 = vpack.c.b16 %v979, %v978
  %v1093 = vpack.c.b16 %v981, %v980
  %v1094 = vpack.c.b16 %v983, %v982
  %v1095 = vpack.c.b16 %v985, %v984
  %v1096 = vpack.c.b16 %v987, %v986
  %v1097 = vpack.c.b16 %v989, %v988
  %v1098 = vpack.c.b16 %v991, %v990
  %v1099 = vpack.c.b16 %v993, %v992
  %v1100 = vpack.c.b16 %v995, %v994
  %v1101 = vpack.c.b16 %v997, %v996
  %v1102 = vpack.c.b16 %v999, %v998
  %v1103 = vpack.c.b16 %v1001, %v1000
  %v1104 = vpack.c.b16 %v1003, %v1002
  %v1105 = vpack.c.b16 %v1005, %v1004
  %v1106 = vpack.c.b16 %v1007, %v1006
  %v1107 = vpack.c.b16 %v1009, %v1008
  %v1108 = vpack.c.b16 %v1011, %v1010
  %v1109 = vpack.c.b16 %v1013, %v1012
  %v1110 = vpack.c.b16 %v1015, %v1014
  %v1111 = vpack.c.b16 %v1017, %v1016
  %v1112 = vpack.c.b16 %v1019, %v1018
  %v1113 = vpack.c.b16 %v1021, %v1020
  %v1114 = vpack.c.b16 %v1023, %v1022
  %v1115 = vpack.c.b16 %v1025, %v1024
  %v1116 = vpack.c.b16 %v1027, %v1026
  %v1117 = vpack.c.b16 %v1029, %v1028
  %v1118 = vpack.c.b16 %v1031, %v1030
  %v1119 = vpack.c.b16 %v1033, %v1032
  %v1120 = vpack.c.b16 %v1035, %v1034
  %v1121 = vpack.c.b16 %v1037, %v1036
  %v1122 = vpack.c.b16 %v1039, %v1038
  %v1123 = vpack.c.b16 %v1041, %v1040
  %v1124 = vpack.c.b16 %v1043, %v1042
  %vm1206 = vcmask 130048
  %v1208 = vsel %vm1206, %v562, 0
  %v1211 = vsel %vm1206, %v573, 0
  %v1214 = vsel %vm1206, %v584, 0
  %v1217 = vsel %vm1206, %v595, 0
  %v1220 = vsel %vm1206, %v606, 0
  %v1223 = vsel %vm1206, %v617, 0
  %v1226 = vsel %vm1206, %v628, 0
  %v1229 = vsel %vm1206, %v639, 0
  %1231 = vmatprep.subr.bf16.mxu0 0
  %1232 = vmatpush1.bf16.msra.mxu0 %v1044
  %1233 = vmatprep.subr.bf16.mxu0 0
  %1234 = vmatpush1.bf16.msra.mxu0 %v1045
  %1235 = vmatprep.subr.bf16.mxu0 0
  %1236 = vmatpush1.bf16.msra.mxu0 %v1046
  %1237 = vmatprep.subr.bf16.mxu0 0
  %1238 = vmatpush1.bf16.msra.mxu0 %v1047
  %1239 = vmatprep.subr.bf16.mxu0 0
  %1240 = vmatpush1.bf16.msra.mxu0 %v1048
  %1241 = vmatprep.subr.bf16.mxu0 0
  %1242 = vmatpush1.bf16.msra.mxu0 %v1049
  %1243 = vmatprep.subr.bf16.mxu0 0
  %1244 = vmatpush1.bf16.msra.mxu0 %v1050
  %1245 = vmatprep.subr.bf16.mxu0 0
  %1246 = vmatpush1.bf16.msra.mxu0 %v1051
  %1247 = vmatprep.subr.bf16.mxu0 0
  %1248 = vmatpush1.bf16.msra.mxu0 %v1052
  %1249 = vmatprep.subr.bf16.mxu0 0
  %1250 = vmatpush1.bf16.msra.mxu0 %v1053
  %1251 = vmatprep.subr.bf16.mxu0 0
  %1252 = vmatpush1.bf16.msra.mxu0 %v1054
  %1253 = vmatprep.subr.bf16.mxu0 0
  %1254 = vmatpush1.bf16.msra.mxu0 %v1055
  %1255 = vmatprep.subr.bf16.mxu0 0
  %1256 = vmatpush1.bf16.msra.mxu0 %v1056
  %1257 = vmatprep.subr.bf16.mxu0 0
  %1258 = vmatpush1.bf16.msra.mxu0 %v1057
  %1259 = vmatprep.subr.bf16.mxu0 0
  %1260 = vmatpush1.bf16.msra.mxu0 %v1058
  %1261 = vmatprep.subr.bf16.mxu0 0
  %1262 = vmatpush1.bf16.msra.mxu0 %v1059
  %1263 = vmatprep.mubr.bf16.mxu0 %v553
  %1264 = vmatmul.mubr.bf16.gmra.mrb[0].mxu0 %v552
  %v1265 = vpop.f32.mrb[0].mxu0
  %v1266 = vadd.f32 %v278, %v1265
  %v1267 = vpop.f32.mrb[0].mxu0
  %v1268 = vpop.f32.mrb[0].mxu0
  %v1269 = vadd.f32 %v278, %v1268
  %v1270 = vpop.f32.mrb[0].mxu0
  %1271 = vmatprep.mubr.bf16.mxu0 %v564
  %1272 = vmatmul.mubr.bf16.gmra.mrb[0].mxu0 %v563
  %v1273 = vpop.f32.mrb[0].mxu0
  %v1274 = vadd.f32 %v278, %v1273
  %v1275 = vpop.f32.mrb[0].mxu0
  %v1276 = vpop.f32.mrb[0].mxu0
  %v1277 = vadd.f32 %v278, %v1276
  %v1278 = vpop.f32.mrb[0].mxu0
  %1279 = vmatprep.mubr.bf16.mxu0 %v575
  %1280 = vmatmul.mubr.bf16.gmra.mrb[0].mxu0 %v574
  %v1281 = vpop.f32.mrb[0].mxu0
  %v1282 = vadd.f32 %v278, %v1281
  %v1283 = vpop.f32.mrb[0].mxu0
  %v1284 = vpop.f32.mrb[0].mxu0
  %v1285 = vadd.f32 %v278, %v1284
  %v1286 = vpop.f32.mrb[0].mxu0
  %1287 = vmatprep.mubr.bf16.mxu0 %v586
  %1288 = vmatmul.mubr.bf16.gmra.mrb[0].mxu0 %v585
  %v1289 = vpop.f32.mrb[0].mxu0
  %v1290 = vadd.f32 %v278, %v1289
  %v1291 = vpop.f32.mrb[0].mxu0
  %v1292 = vpop.f32.mrb[0].mxu0
  %v1293 = vadd.f32 %v278, %v1292
  %v1294 = vpop.f32.mrb[0].mxu0
  %1295 = vmatprep.mubr.bf16.mxu0 %v597
  %1296 = vmatmul.mubr.bf16.gmra.mrb[0].mxu0 %v596
  %v1297 = vpop.f32.mrb[0].mxu0
  %v1298 = vadd.f32 %v278, %v1297
  %v1299 = vpop.f32.mrb[0].mxu0
  %v1300 = vpop.f32.mrb[0].mxu0
  %v1301 = vadd.f32 %v278, %v1300
  %v1302 = vpop.f32.mrb[0].mxu0
  %1303 = vmatprep.mubr.bf16.mxu0 %v608
  %1304 = vmatmul.mubr.bf16.gmra.mrb[0].mxu0 %v607
  %v1305 = vpop.f32.mrb[0].mxu0
  %v1306 = vadd.f32 %v278, %v1305
  %v1307 = vpop.f32.mrb[0].mxu0
  %v1308 = vpop.f32.mrb[0].mxu0
  %v1309 = vadd.f32 %v278, %v1308
  %v1310 = vpop.f32.mrb[0].mxu0
  %1311 = vmatprep.mubr.bf16.mxu0 %v619
  %1312 = vmatmul.mubr.bf16.gmra.mrb[0].mxu0 %v618
  %v1313 = vpop.f32.mrb[0].mxu0
  %v1314 = vadd.f32 %v278, %v1313
  %v1315 = vpop.f32.mrb[0].mxu0
  %v1316 = vpop.f32.mrb[0].mxu0
  %v1317 = vadd.f32 %v278, %v1316
  %v1318 = vpop.f32.mrb[0].mxu0
  %1319 = vmatprep.mubr.bf16.mxu0 %v630
  %1320 = vmatmul.mubr.bf16.gmra.mrb[0].mxu0 %v629
  %v1321 = vpop.f32.mrb[0].mxu0
  %v1322 = vadd.f32 %v278, %v1321
  %v1323 = vpop.f32.mrb[0].mxu0
  %v1324 = vpop.f32.mrb[0].mxu0
  %v1325 = vadd.f32 %v278, %v1324
  %v1326 = vpop.f32.mrb[0].mxu0
  %1327 = vdwg.mxu0
  %1328 = vmatprep.subr.bf16.mxu0 0
  %1329 = vmatpush1.bf16.msra.mxu0 %v1060
  %1330 = vmatprep.subr.bf16.mxu0 0
  %1331 = vmatpush1.bf16.msra.mxu0 %v1061
  %1332 = vmatprep.subr.bf16.mxu0 0
  %1333 = vmatpush1.bf16.msra.mxu0 %v1062
  %1334 = vmatprep.subr.bf16.mxu0 0
  %1335 = vmatpush1.bf16.msra.mxu0 %v1063
  %1336 = vmatprep.subr.bf16.mxu0 0
  %1337 = vmatpush1.bf16.msra.mxu0 %v1064
  %1338 = vmatprep.subr.bf16.mxu0 0
  %1339 = vmatpush1.bf16.msra.mxu0 %v1065
  %1340 = vmatprep.subr.bf16.mxu0 0
  %1341 = vmatpush1.bf16.msra.mxu0 %v1066
  %1342 = vmatprep.subr.bf16.mxu0 0
  %1343 = vmatpush1.bf16.msra.mxu0 %v1067
  %1344 = vmatprep.subr.bf16.mxu0 0
  %1345 = vmatpush1.bf16.msra.mxu0 %v1068
  %1346 = vmatprep.subr.bf16.mxu0 0
  %1347 = vmatpush1.bf16.msra.mxu0 %v1069
  %1348 = vmatprep.subr.bf16.mxu0 0
  %1349 = vmatpush1.bf16.msra.mxu0 %v1070
  %1350 = vmatprep.subr.bf16.mxu0 0
  %1351 = vmatpush1.bf16.msra.mxu0 %v1071
  %1352 = vmatprep.subr.bf16.mxu0 0
  %1353 = vmatpush1.bf16.msra.mxu0 %v1072
  %1354 = vmatprep.subr.bf16.mxu0 0
  %1355 = vmatpush1.bf16.msra.mxu0 %v1073
  %1356 = vmatprep.subr.bf16.mxu0 0
  %1357 = vmatpush1.bf16.msra.mxu0 %v1074
  %1358 = vmatprep.subr.bf16.mxu0 0
  %1359 = vmatpush1.bf16.msra.mxu0 %v1075
  %1360 = vmatprep.mubr.bf16.mxu0 %v555
  %1361 = vmatmul.mubr.bf16.gmra.mrb[0].mxu0 %v554
  %v1362 = vpop.f32.mrb[0].mxu0
  %v1363 = vadd.f32 %v1266, %v1362
  %v1364 = vpop.f32.mrb[0].mxu0
  %v1365 = vpop.f32.mrb[0].mxu0
  %v1366 = vadd.f32 %v1269, %v1365
  %v1367 = vpop.f32.mrb[0].mxu0
  %1368 = vmatprep.mubr.bf16.mxu0 %v566
  %1369 = vmatmul.mubr.bf16.gmra.mrb[0].mxu0 %v565
  %v1370 = vpop.f32.mrb[0].mxu0
  %v1371 = vadd.f32 %v1274, %v1370
  %v1372 = vpop.f32.mrb[0].mxu0
  %v1373 = vpop.f32.mrb[0].mxu0
  %v1374 = vadd.f32 %v1277, %v1373
  %v1375 = vpop.f32.mrb[0].mxu0
  %1376 = vmatprep.mubr.bf16.mxu0 %v577
  %1377 = vmatmul.mubr.bf16.gmra.mrb[0].mxu0 %v576
  %v1378 = vpop.f32.mrb[0].mxu0
  %v1379 = vadd.f32 %v1282, %v1378
  %v1380 = vpop.f32.mrb[0].mxu0
  %v1381 = vpop.f32.mrb[0].mxu0
  %v1382 = vadd.f32 %v1285, %v1381
  %v1383 = vpop.f32.mrb[0].mxu0
  %1384 = vmatprep.mubr.bf16.mxu0 %v588
  %1385 = vmatmul.mubr.bf16.gmra.mrb[0].mxu0 %v587
  %v1386 = vpop.f32.mrb[0].mxu0
  %v1387 = vadd.f32 %v1290, %v1386
  %v1388 = vpop.f32.mrb[0].mxu0
  %v1389 = vpop.f32.mrb[0].mxu0
  %v1390 = vadd.f32 %v1293, %v1389
  %v1391 = vpop.f32.mrb[0].mxu0
  %1392 = vmatprep.mubr.bf16.mxu0 %v599
  %1393 = vmatmul.mubr.bf16.gmra.mrb[0].mxu0 %v598
  %v1394 = vpop.f32.mrb[0].mxu0
  %v1395 = vadd.f32 %v1298, %v1394
  %v1396 = vpop.f32.mrb[0].mxu0
  %v1397 = vpop.f32.mrb[0].mxu0
  %v1398 = vadd.f32 %v1301, %v1397
  %v1399 = vpop.f32.mrb[0].mxu0
  %1400 = vmatprep.mubr.bf16.mxu0 %v610
  %1401 = vmatmul.mubr.bf16.gmra.mrb[0].mxu0 %v609
  %v1402 = vpop.f32.mrb[0].mxu0
  %v1403 = vadd.f32 %v1306, %v1402
  %v1404 = vpop.f32.mrb[0].mxu0
  %v1405 = vpop.f32.mrb[0].mxu0
  %v1406 = vadd.f32 %v1309, %v1405
  %v1407 = vpop.f32.mrb[0].mxu0
  %1408 = vmatprep.mubr.bf16.mxu0 %v621
  %1409 = vmatmul.mubr.bf16.gmra.mrb[0].mxu0 %v620
  %v1410 = vpop.f32.mrb[0].mxu0
  %v1411 = vadd.f32 %v1314, %v1410
  %v1412 = vpop.f32.mrb[0].mxu0
  %v1413 = vpop.f32.mrb[0].mxu0
  %v1414 = vadd.f32 %v1317, %v1413
  %v1415 = vpop.f32.mrb[0].mxu0
  %1416 = vmatprep.mubr.bf16.mxu0 %v632
  %1417 = vmatmul.mubr.bf16.gmra.mrb[0].mxu0 %v631
  %v1418 = vpop.f32.mrb[0].mxu0
  %v1419 = vadd.f32 %v1322, %v1418
  %v1420 = vpop.f32.mrb[0].mxu0
  %v1421 = vpop.f32.mrb[0].mxu0
  %v1422 = vadd.f32 %v1325, %v1421
  %v1423 = vpop.f32.mrb[0].mxu0
  %1424 = vdwg.mxu0
  %1425 = vmatprep.subr.bf16.mxu0 0
  %1426 = vmatpush1.bf16.msra.mxu0 %v1076
  %1427 = vmatprep.subr.bf16.mxu0 0
  %1428 = vmatpush1.bf16.msra.mxu0 %v1077
  %1429 = vmatprep.subr.bf16.mxu0 0
  %1430 = vmatpush1.bf16.msra.mxu0 %v1078
  %1431 = vmatprep.subr.bf16.mxu0 0
  %1432 = vmatpush1.bf16.msra.mxu0 %v1079
  %1433 = vmatprep.subr.bf16.mxu0 0
  %1434 = vmatpush1.bf16.msra.mxu0 %v1080
  %1435 = vmatprep.subr.bf16.mxu0 0
  %1436 = vmatpush1.bf16.msra.mxu0 %v1081
  %1437 = vmatprep.subr.bf16.mxu0 0
  %1438 = vmatpush1.bf16.msra.mxu0 %v1082
  %1439 = vmatprep.subr.bf16.mxu0 0
  %1440 = vmatpush1.bf16.msra.mxu0 %v1083
  %1441 = vmatprep.subr.bf16.mxu0 0
  %1442 = vmatpush1.bf16.msra.mxu0 %v1084
  %1443 = vmatprep.subr.bf16.mxu0 0
  %1444 = vmatpush1.bf16.msra.mxu0 %v1085
  %1445 = vmatprep.subr.bf16.mxu0 0
  %1446 = vmatpush1.bf16.msra.mxu0 %v1086
  %1447 = vmatprep.subr.bf16.mxu0 0
  %1448 = vmatpush1.bf16.msra.mxu0 %v1087
  %1449 = vmatprep.subr.bf16.mxu0 0
  %1450 = vmatpush1.bf16.msra.mxu0 %v1088
  %1451 = vmatprep.subr.bf16.mxu0 0
  %1452 = vmatpush1.bf16.msra.mxu0 %v1089
  %1453 = vmatprep.subr.bf16.mxu0 0
  %1454 = vmatpush1.bf16.msra.mxu0 %v1090
  %1455 = vmatprep.subr.bf16.mxu0 0
  %1456 = vmatpush1.bf16.msra.mxu0 %v1091
  %1457 = vmatprep.mubr.bf16.mxu0 %v557
  %1458 = vmatmul.mubr.bf16.gmra.mrb[0].mxu0 %v556
  %v1459 = vpop.f32.mrb[0].mxu0
  %v1460 = vadd.f32 %v1363, %v1459
  %v1461 = vpop.f32.mrb[0].mxu0
  %v1462 = vpop.f32.mrb[0].mxu0
  %v1463 = vadd.f32 %v1366, %v1462
  %v1464 = vpop.f32.mrb[0].mxu0
  %1465 = vmatprep.mubr.bf16.mxu0 %v568
  %1466 = vmatmul.mubr.bf16.gmra.mrb[0].mxu0 %v567
  %v1467 = vpop.f32.mrb[0].mxu0
  %v1468 = vadd.f32 %v1371, %v1467
  %v1469 = vpop.f32.mrb[0].mxu0
  %v1470 = vpop.f32.mrb[0].mxu0
  %v1471 = vadd.f32 %v1374, %v1470
  %v1472 = vpop.f32.mrb[0].mxu0
  %1473 = vmatprep.mubr.bf16.mxu0 %v579
  %1474 = vmatmul.mubr.bf16.gmra.mrb[0].mxu0 %v578
  %v1475 = vpop.f32.mrb[0].mxu0
  %v1476 = vadd.f32 %v1379, %v1475
  %v1477 = vpop.f32.mrb[0].mxu0
  %v1478 = vpop.f32.mrb[0].mxu0
  %v1479 = vadd.f32 %v1382, %v1478
  %v1480 = vpop.f32.mrb[0].mxu0
  %1481 = vmatprep.mubr.bf16.mxu0 %v590
  %1482 = vmatmul.mubr.bf16.gmra.mrb[0].mxu0 %v589
  %v1483 = vpop.f32.mrb[0].mxu0
  %v1484 = vadd.f32 %v1387, %v1483
  %v1485 = vpop.f32.mrb[0].mxu0
  %v1486 = vpop.f32.mrb[0].mxu0
  %v1487 = vadd.f32 %v1390, %v1486
  %v1488 = vpop.f32.mrb[0].mxu0
  %1489 = vmatprep.mubr.bf16.mxu0 %v601
  %1490 = vmatmul.mubr.bf16.gmra.mrb[0].mxu0 %v600
  %v1491 = vpop.f32.mrb[0].mxu0
  %v1492 = vadd.f32 %v1395, %v1491
  %v1493 = vpop.f32.mrb[0].mxu0
  %v1494 = vpop.f32.mrb[0].mxu0
  %v1495 = vadd.f32 %v1398, %v1494
  %v1496 = vpop.f32.mrb[0].mxu0
  %1497 = vmatprep.mubr.bf16.mxu0 %v612
  %1498 = vmatmul.mubr.bf16.gmra.mrb[0].mxu0 %v611
  %v1499 = vpop.f32.mrb[0].mxu0
  %v1500 = vadd.f32 %v1403, %v1499
  %v1501 = vpop.f32.mrb[0].mxu0
  %v1502 = vpop.f32.mrb[0].mxu0
  %v1503 = vadd.f32 %v1406, %v1502
  %v1504 = vpop.f32.mrb[0].mxu0
  %1505 = vmatprep.mubr.bf16.mxu0 %v623
  %1506 = vmatmul.mubr.bf16.gmra.mrb[0].mxu0 %v622
  %v1507 = vpop.f32.mrb[0].mxu0
  %v1508 = vadd.f32 %v1411, %v1507
  %v1509 = vpop.f32.mrb[0].mxu0
  %v1510 = vpop.f32.mrb[0].mxu0
  %v1511 = vadd.f32 %v1414, %v1510
  %v1512 = vpop.f32.mrb[0].mxu0
  %1513 = vmatprep.mubr.bf16.mxu0 %v634
  %1514 = vmatmul.mubr.bf16.gmra.mrb[0].mxu0 %v633
  %v1515 = vpop.f32.mrb[0].mxu0
  %v1516 = vadd.f32 %v1419, %v1515
  %v1517 = vpop.f32.mrb[0].mxu0
  %v1518 = vpop.f32.mrb[0].mxu0
  %v1519 = vadd.f32 %v1422, %v1518
  %v1520 = vpop.f32.mrb[0].mxu0
  %1521 = vdwg.mxu0
  %1522 = vmatprep.subr.bf16.mxu0 0
  %1523 = vmatpush1.bf16.msra.mxu0 %v1092
  %1524 = vmatprep.subr.bf16.mxu0 0
  %1525 = vmatpush1.bf16.msra.mxu0 %v1093
  %1526 = vmatprep.subr.bf16.mxu0 0
  %1527 = vmatpush1.bf16.msra.mxu0 %v1094
  %1528 = vmatprep.subr.bf16.mxu0 0
  %1529 = vmatpush1.bf16.msra.mxu0 %v1095
  %1530 = vmatprep.subr.bf16.mxu0 0
  %1531 = vmatpush1.bf16.msra.mxu0 %v1096
  %1532 = vmatprep.subr.bf16.mxu0 0
  %1533 = vmatpush1.bf16.msra.mxu0 %v1097
  %1534 = vmatprep.subr.bf16.mxu0 0
  %1535 = vmatpush1.bf16.msra.mxu0 %v1098
  %1536 = vmatprep.subr.bf16.mxu0 0
  %1537 = vmatpush1.bf16.msra.mxu0 %v1099
  %1538 = vmatprep.subr.bf16.mxu0 0
  %1539 = vmatpush1.bf16.msra.mxu0 %v1100
  %1540 = vmatprep.subr.bf16.mxu0 0
  %1541 = vmatpush1.bf16.msra.mxu0 %v1101
  %1542 = vmatprep.subr.bf16.mxu0 0
  %1543 = vmatpush1.bf16.msra.mxu0 %v1102
  %1544 = vmatprep.subr.bf16.mxu0 0
  %1545 = vmatpush1.bf16.msra.mxu0 %v1103
  %1546 = vmatprep.subr.bf16.mxu0 0
  %1547 = vmatpush1.bf16.msra.mxu0 %v1104
  %1548 = vmatprep.subr.bf16.mxu0 0
  %1549 = vmatpush1.bf16.msra.mxu0 %v1105
  %1550 = vmatprep.subr.bf16.mxu0 0
  %1551 = vmatpush1.bf16.msra.mxu0 %v1106
  %1552 = vmatprep.subr.bf16.mxu0 0
  %1553 = vmatpush1.bf16.msra.mxu0 %v1107
  %1554 = vmatprep.mubr.bf16.mxu0 %v559
  %1555 = vmatmul.mubr.bf16.gmra.mrb[0].mxu0 %v558
  %v1556 = vpop.f32.mrb[0].mxu0
  %v1557 = vadd.f32 %v1460, %v1556
  %v1558 = vpop.f32.mrb[0].mxu0
  %v1559 = vpop.f32.mrb[0].mxu0
  %v1560 = vadd.f32 %v1463, %v1559
  %v1561 = vpop.f32.mrb[0].mxu0
  %1562 = vmatprep.mubr.bf16.mxu0 %v570
  %1563 = vmatmul.mubr.bf16.gmra.mrb[0].mxu0 %v569
  %v1564 = vpop.f32.mrb[0].mxu0
  %v1565 = vadd.f32 %v1468, %v1564
  %v1566 = vpop.f32.mrb[0].mxu0
  %v1567 = vpop.f32.mrb[0].mxu0
  %v1568 = vadd.f32 %v1471, %v1567
  %v1569 = vpop.f32.mrb[0].mxu0
  %1570 = vmatprep.mubr.bf16.mxu0 %v581
  %1571 = vmatmul.mubr.bf16.gmra.mrb[0].mxu0 %v580
  %v1572 = vpop.f32.mrb[0].mxu0
  %v1573 = vadd.f32 %v1476, %v1572
  %v1574 = vpop.f32.mrb[0].mxu0
  %v1575 = vpop.f32.mrb[0].mxu0
  %v1576 = vadd.f32 %v1479, %v1575
  %v1577 = vpop.f32.mrb[0].mxu0
  %1578 = vmatprep.mubr.bf16.mxu0 %v592
  %1579 = vmatmul.mubr.bf16.gmra.mrb[0].mxu0 %v591
  %v1580 = vpop.f32.mrb[0].mxu0
  %v1581 = vadd.f32 %v1484, %v1580
  %v1582 = vpop.f32.mrb[0].mxu0
  %v1583 = vpop.f32.mrb[0].mxu0
  %v1584 = vadd.f32 %v1487, %v1583
  %v1585 = vpop.f32.mrb[0].mxu0
  %1586 = vmatprep.mubr.bf16.mxu0 %v603
  %1587 = vmatmul.mubr.bf16.gmra.mrb[0].mxu0 %v602
  %v1588 = vpop.f32.mrb[0].mxu0
  %v1589 = vadd.f32 %v1492, %v1588
  %v1590 = vpop.f32.mrb[0].mxu0
  %v1591 = vpop.f32.mrb[0].mxu0
  %v1592 = vadd.f32 %v1495, %v1591
  %v1593 = vpop.f32.mrb[0].mxu0
  %1594 = vmatprep.mubr.bf16.mxu0 %v614
  %1595 = vmatmul.mubr.bf16.gmra.mrb[0].mxu0 %v613
  %v1596 = vpop.f32.mrb[0].mxu0
  %v1597 = vadd.f32 %v1500, %v1596
  %v1598 = vpop.f32.mrb[0].mxu0
  %v1599 = vpop.f32.mrb[0].mxu0
  %v1600 = vadd.f32 %v1503, %v1599
  %v1601 = vpop.f32.mrb[0].mxu0
  %1602 = vmatprep.mubr.bf16.mxu0 %v625
  %1603 = vmatmul.mubr.bf16.gmra.mrb[0].mxu0 %v624
  %v1604 = vpop.f32.mrb[0].mxu0
  %v1605 = vadd.f32 %v1508, %v1604
  %v1606 = vpop.f32.mrb[0].mxu0
  %v1607 = vpop.f32.mrb[0].mxu0
  %v1608 = vadd.f32 %v1511, %v1607
  %v1609 = vpop.f32.mrb[0].mxu0
  %1610 = vmatprep.mubr.bf16.mxu0 %v636
  %1611 = vmatmul.mubr.bf16.gmra.mrb[0].mxu0 %v635
  %v1612 = vpop.f32.mrb[0].mxu0
  %v1613 = vadd.f32 %v1516, %v1612
  %v1614 = vpop.f32.mrb[0].mxu0
  %v1615 = vpop.f32.mrb[0].mxu0
  %v1616 = vadd.f32 %v1519, %v1615
  %v1617 = vpop.f32.mrb[0].mxu0
  %1618 = vdwg.mxu0
  %1619 = vmatprep.subr.bf16.mxu0 0
  %1620 = vmatpush1.bf16.msra.mxu0 %v1108
  %1621 = vmatprep.subr.bf16.mxu0 0
  %1622 = vmatpush1.bf16.msra.mxu0 %v1109
  %1623 = vmatprep.subr.bf16.mxu0 0
  %1624 = vmatpush1.bf16.msra.mxu0 %v1110
  %1625 = vmatprep.subr.bf16.mxu0 0
  %1626 = vmatpush1.bf16.msra.mxu0 %v1111
  %1627 = vmatprep.subr.bf16.mxu0 0
  %1628 = vmatpush1.bf16.msra.mxu0 %v1112
  %1629 = vmatprep.subr.bf16.mxu0 0
  %1630 = vmatpush1.bf16.msra.mxu0 %v1113
  %1631 = vmatprep.subr.bf16.mxu0 0
  %1632 = vmatpush1.bf16.msra.mxu0 %v1114
  %1633 = vmatprep.subr.bf16.mxu0 0
  %1634 = vmatpush1.bf16.msra.mxu0 %v1115
  %1635 = vmatprep.subr.bf16.mxu0 0
  %1636 = vmatpush1.bf16.msra.mxu0 %v1116
  %1637 = vmatprep.subr.bf16.mxu0 0
  %1638 = vmatpush1.bf16.msra.mxu0 %v1117
  %1639 = vmatprep.subr.bf16.mxu0 0
  %1640 = vmatpush1.bf16.msra.mxu0 %v1118
  %1641 = vmatprep.subr.bf16.mxu0 0
  %1642 = vmatpush1.bf16.msra.mxu0 %v1119
  %1643 = vmatprep.subr.bf16.mxu0 0
  %1644 = vmatpush1.bf16.msra.mxu0 %v1120
  %1645 = vmatprep.subr.bf16.mxu0 0
  %1646 = vmatpush1.bf16.msra.mxu0 %v1121
  %1647 = vmatprep.subr.bf16.mxu0 0
  %1648 = vmatpush1.bf16.msra.mxu0 %v1122
  %1649 = vmatprep.subr.bf16.mxu0 0
  %1650 = vmatpush1.bf16.msra.mxu0 %v1123
  %1651 = vmatprep.mubr.bf16.mxu0 %v561
  %1652 = vmatmul.mubr.bf16.gmra.mrb[0].mxu0 %v560
  %v1653 = vpop.f32.mrb[0].mxu0
  %v1654 = vadd.f32 %v1557, %v1653
  %v1655 = vpop.f32.mrb[0].mxu0
  %v1656 = vpop.f32.mrb[0].mxu0
  %v1657 = vadd.f32 %v1560, %v1656
  %v1658 = vpop.f32.mrb[0].mxu0
  %1659 = vmatprep.mubr.bf16.mxu0 %v572
  %1660 = vmatmul.mubr.bf16.gmra.mrb[0].mxu0 %v571
  %v1661 = vpop.f32.mrb[0].mxu0
  %v1662 = vadd.f32 %v1565, %v1661
  %v1663 = vpop.f32.mrb[0].mxu0
  %v1664 = vpop.f32.mrb[0].mxu0
  %v1665 = vadd.f32 %v1568, %v1664
  %v1666 = vpop.f32.mrb[0].mxu0
  %1667 = vmatprep.mubr.bf16.mxu0 %v583
  %1668 = vmatmul.mubr.bf16.gmra.mrb[0].mxu0 %v582
  %v1669 = vpop.f32.mrb[0].mxu0
  %v1670 = vadd.f32 %v1573, %v1669
  %v1671 = vpop.f32.mrb[0].mxu0
  %v1672 = vpop.f32.mrb[0].mxu0
  %v1673 = vadd.f32 %v1576, %v1672
  %v1674 = vpop.f32.mrb[0].mxu0
  %1675 = vmatprep.mubr.bf16.mxu0 %v594
  %1676 = vmatmul.mubr.bf16.gmra.mrb[0].mxu0 %v593
  %v1677 = vpop.f32.mrb[0].mxu0
  %v1678 = vadd.f32 %v1581, %v1677
  %v1679 = vpop.f32.mrb[0].mxu0
  %v1680 = vpop.f32.mrb[0].mxu0
  %v1681 = vadd.f32 %v1584, %v1680
  %v1682 = vpop.f32.mrb[0].mxu0
  %1683 = vmatprep.mubr.bf16.mxu0 %v605
  %1684 = vmatmul.mubr.bf16.gmra.mrb[0].mxu0 %v604
  %v1685 = vpop.f32.mrb[0].mxu0
  %v1686 = vadd.f32 %v1589, %v1685
  %v1687 = vpop.f32.mrb[0].mxu0
  %v1688 = vpop.f32.mrb[0].mxu0
  %v1689 = vadd.f32 %v1592, %v1688
  %v1690 = vpop.f32.mrb[0].mxu0
  %1691 = vmatprep.mubr.bf16.mxu0 %v616
  %1692 = vmatmul.mubr.bf16.gmra.mrb[0].mxu0 %v615
  %v1693 = vpop.f32.mrb[0].mxu0
  %v1694 = vadd.f32 %v1597, %v1693
  %v1695 = vpop.f32.mrb[0].mxu0
  %v1696 = vpop.f32.mrb[0].mxu0
  %v1697 = vadd.f32 %v1600, %v1696
  %v1698 = vpop.f32.mrb[0].mxu0
  %1699 = vmatprep.mubr.bf16.mxu0 %v627
  %1700 = vmatmul.mubr.bf16.gmra.mrb[0].mxu0 %v626
  %v1701 = vpop.f32.mrb[0].mxu0
  %v1702 = vadd.f32 %v1605, %v1701
  %v1703 = vpop.f32.mrb[0].mxu0
  %v1704 = vpop.f32.mrb[0].mxu0
  %v1705 = vadd.f32 %v1608, %v1704
  %v1706 = vpop.f32.mrb[0].mxu0
  %1707 = vmatprep.mubr.bf16.mxu0 %v638
  %1708 = vmatmul.mubr.bf16.gmra.mrb[0].mxu0 %v637
  %v1709 = vpop.f32.mrb[0].mxu0
  %v1710 = vadd.f32 %v1613, %v1709
  %v1711 = vpop.f32.mrb[0].mxu0
  %v1712 = vpop.f32.mrb[0].mxu0
  %v1713 = vadd.f32 %v1616, %v1712
  %v1714 = vpop.f32.mrb[0].mxu0
  %1715 = vdwg.mxu0
  %1716 = vmatprep.subr.bf16.mxu0 0
  %1717 = vmatpush1.bf16.msra.mxu0 %v1124
  %1718 = vmatprep.subr.bf16.mxu0 0
  %1719 = vmatpush1.bf16.msra.mxu0 0
  %1720 = vmatprep.subr.bf16.mxu0 0
  %1721 = vmatpush1.bf16.msra.mxu0 0
  %1722 = vmatprep.subr.bf16.mxu0 0
  %1723 = vmatpush1.bf16.msra.mxu0 0
  %1724 = vmatprep.subr.bf16.mxu0 0
  %1725 = vmatpush1.bf16.msra.mxu0 0
  %1726 = vmatprep.subr.bf16.mxu0 0
  %1727 = vmatpush1.bf16.msra.mxu0 0
  %1728 = vmatprep.subr.bf16.mxu0 0
  %1729 = vmatpush1.bf16.msra.mxu0 0
  %1730 = vmatprep.subr.bf16.mxu0 0
  %1731 = vmatpush1.bf16.msra.mxu0 0
  %1732 = vmatprep.subr.bf16.mxu0 0
  %1733 = vmatpush1.bf16.msra.mxu0 0
  %1734 = vmatprep.subr.bf16.mxu0 0
  %1735 = vmatpush1.bf16.msra.mxu0 0
  %1736 = vmatprep.subr.bf16.mxu0 0
  %1737 = vmatpush1.bf16.msra.mxu0 0
  %1738 = vmatprep.subr.bf16.mxu0 0
  %1739 = vmatpush1.bf16.msra.mxu0 0
  %1740 = vmatprep.subr.bf16.mxu0 0
  %1741 = vmatpush1.bf16.msra.mxu0 0
  %1742 = vmatprep.subr.bf16.mxu0 0
  %1743 = vmatpush1.bf16.msra.mxu0 0
  %1744 = vmatprep.subr.bf16.mxu0 0
  %1745 = vmatpush1.bf16.msra.mxu0 0
  %1746 = vmatprep.subr.bf16.mxu0 0
  %1747 = vmatpush1.bf16.msra.mxu0 0
  %1748 = vmatprep.mubr.bf16.mxu0 0
  %1749 = vmatmul.mubr.bf16.gmra.mrb[0].mxu0 %v1208
  %v1750 = vpop.f32.mrb[0].mxu0
  %v1751 = vadd.f32 %v1654, %v1750
  %v1752 = vpop.f32.mrb[0].mxu0
  %v1753 = vpop.f32.mrb[0].mxu0
  %v1754 = vadd.f32 %v1657, %v1753
  %v1755 = vpop.f32.mrb[0].mxu0
  %1756 = vmatprep.mubr.bf16.mxu0 0
  %1757 = vmatmul.mubr.bf16.gmra.mrb[0].mxu0 %v1211
  %v1758 = vpop.f32.mrb[0].mxu0
  %v1759 = vadd.f32 %v1662, %v1758
  %v1760 = vpop.f32.mrb[0].mxu0
  %v1761 = vpop.f32.mrb[0].mxu0
  %v1762 = vadd.f32 %v1665, %v1761
  %v1763 = vpop.f32.mrb[0].mxu0
  %1764 = vmatprep.mubr.bf16.mxu0 0
  %1765 = vmatmul.mubr.bf16.gmra.mrb[0].mxu0 %v1214
  %v1766 = vpop.f32.mrb[0].mxu0
  %v1767 = vadd.f32 %v1670, %v1766
  %v1768 = vpop.f32.mrb[0].mxu0
  %v1769 = vpop.f32.mrb[0].mxu0
  %v1770 = vadd.f32 %v1673, %v1769
  %v1771 = vpop.f32.mrb[0].mxu0
  %1772 = vmatprep.mubr.bf16.mxu0 0
  %1773 = vmatmul.mubr.bf16.gmra.mrb[0].mxu0 %v1217
  %v1774 = vpop.f32.mrb[0].mxu0
  %v1775 = vadd.f32 %v1678, %v1774
  %v1776 = vpop.f32.mrb[0].mxu0
  %v1777 = vpop.f32.mrb[0].mxu0
  %v1778 = vadd.f32 %v1681, %v1777
  %v1779 = vpop.f32.mrb[0].mxu0
  %1780 = vmatprep.mubr.bf16.mxu0 0
  %1781 = vmatmul.mubr.bf16.gmra.mrb[0].mxu0 %v1220
  %v1782 = vpop.f32.mrb[0].mxu0
  %v1783 = vadd.f32 %v1686, %v1782
  %v1784 = vpop.f32.mrb[0].mxu0
  %v1785 = vpop.f32.mrb[0].mxu0
  %v1786 = vadd.f32 %v1689, %v1785
  %v1787 = vpop.f32.mrb[0].mxu0
  %1788 = vmatprep.mubr.bf16.mxu0 0
  %1789 = vmatmul.mubr.bf16.gmra.mrb[0].mxu0 %v1223
  %v1790 = vpop.f32.mrb[0].mxu0
  %v1791 = vadd.f32 %v1694, %v1790
  %v1792 = vpop.f32.mrb[0].mxu0
  %v1793 = vpop.f32.mrb[0].mxu0
  %v1794 = vadd.f32 %v1697, %v1793
  %v1795 = vpop.f32.mrb[0].mxu0
  %1796 = vmatprep.mubr.bf16.mxu0 0
  %1797 = vmatmul.mubr.bf16.gmra.mrb[0].mxu0 %v1226
  %v1798 = vpop.f32.mrb[0].mxu0
  %v1799 = vadd.f32 %v1702, %v1798
  %v1800 = vpop.f32.mrb[0].mxu0
  %v1801 = vpop.f32.mrb[0].mxu0
  %v1802 = vadd.f32 %v1705, %v1801
  %v1803 = vpop.f32.mrb[0].mxu0
  %1804 = vmatprep.mubr.bf16.mxu0 0
  %1805 = vmatmul.mubr.bf16.gmra.mrb[0].mxu0 %v1229
  %v1806 = vpop.f32.mrb[0].mxu0
  %v1807 = vadd.f32 %v1710, %v1806
  %v1808 = vpop.f32.mrb[0].mxu0
  %v1809 = vpop.f32.mrb[0].mxu0
  %v1810 = vadd.f32 %v1713, %v1809
  %v1811 = vpop.f32.mrb[0].mxu0
  %1812 = vdwg.mxu0
  %vm1813 = vcmp.ge.f32.partialorder %v1751, 0.0
  %vm1814 = vcmp.ge.f32.partialorder %v1754, 0.0
  %vm1815 = vcmp.ge.f32.partialorder %v1759, 0.0
  %vm1816 = vcmp.ge.f32.partialorder %v1762, 0.0
  %vm1817 = vcmp.ge.f32.partialorder %v1767, 0.0
  %vm1818 = vcmp.ge.f32.partialorder %v1770, 0.0
  %vm1819 = vcmp.ge.f32.partialorder %v1775, 0.0
  %vm1820 = vcmp.ge.f32.partialorder %v1778, 0.0
  %vm1821 = vcmp.ge.f32.partialorder %v1783, 0.0
  %vm1822 = vcmp.ge.f32.partialorder %v1786, 0.0
  %vm1823 = vcmp.ge.f32.partialorder %v1791, 0.0
  %vm1824 = vcmp.ge.f32.partialorder %v1794, 0.0
  %vm1825 = vcmp.ge.f32.partialorder %v1799, 0.0
  %vm1826 = vcmp.ge.f32.partialorder %v1802, 0.0
  %vm1827 = vcmp.ge.f32.partialorder %v1807, 0.0
  %vm1828 = vcmp.ge.f32.partialorder %v1810, 0.0
  %v1829 = vmul.f32 %v1751, 0.01
  %v1830 = vmul.f32 %v1754, 0.01
  %v1831 = vmul.f32 %v1759, 0.01
  %v1832 = vmul.f32 %v1762, 0.01
  %v1833 = vmul.f32 %v1767, 0.01
  %v1834 = vmul.f32 %v1770, 0.01
  %v1835 = vmul.f32 %v1775, 0.01
  %v1836 = vmul.f32 %v1778, 0.01
  %v1837 = vmul.f32 %v1783, 0.01
  %v1838 = vmul.f32 %v1786, 0.01
  %v1839 = vmul.f32 %v1791, 0.01
  %v1840 = vmul.f32 %v1794, 0.01
  %v1841 = vmul.f32 %v1799, 0.01
  %v1842 = vmul.f32 %v1802, 0.01
  %v1843 = vmul.f32 %v1807, 0.01
  %v1844 = vmul.f32 %v1810, 0.01
  %v1845 = vsel %vm1813, %v1751, %v1829
  %v1846 = vsel %vm1814, %v1754, %v1830
  %v1847 = vsel %vm1815, %v1759, %v1831
  %v1848 = vsel %vm1816, %v1762, %v1832
  %v1849 = vsel %vm1817, %v1767, %v1833
  %v1850 = vsel %vm1818, %v1770, %v1834
  %v1851 = vsel %vm1819, %v1775, %v1835
  %v1852 = vsel %vm1820, %v1778, %v1836
  %v1853 = vsel %vm1821, %v1783, %v1837
  %v1854 = vsel %vm1822, %v1786, %v1838
  %v1855 = vsel %vm1823, %v1791, %v1839
  %v1856 = vsel %vm1824, %v1794, %v1840
  %v1857 = vsel %vm1825, %v1799, %v1841
  %v1858 = vsel %vm1826, %v1802, %v1842
  %v1859 = vsel %vm1827, %v1807, %v1843
  %v1860 = vsel %vm1828, %v1810, %v1844
  %1861 = vst [vmem:[%s3] sm:$0xff] %v1845
  %1862 = vst [vmem:[%s3 + $0x8] sm:$0xff] %v1846
  %1863 = vst [vmem:[%s3 + $0x10] sm:$0xff] %v1847
  %1864 = vst [vmem:[%s3 + $0x18] sm:$0xff] %v1848
  %1865 = vst [vmem:[%s3 + $0x20] sm:$0xff] %v1849
  %1866 = vst [vmem:[%s3 + $0x28] sm:$0xff] %v1850
  %1867 = vst [vmem:[%s3 + $0x30] sm:$0xff] %v1851
  %1868 = vst [vmem:[%s3 + $0x38] sm:$0xff] %v1852
  %1869 = vst [vmem:[%s3 + $0x40] sm:$0xff] %v1853
  %1870 = vst [vmem:[%s3 + $0x48] sm:$0xff] %v1854
  %1871 = vst [vmem:[%s3 + $0x50] sm:$0xff] %v1855
  %1872 = vst [vmem:[%s3 + $0x58] sm:$0xff] %v1856
  %1873 = vst [vmem:[%s3 + $0x60] sm:$0xff] %v1857
  %1874 = vst [vmem:[%s3 + $0x68] sm:$0xff] %v1858
  %1875 = vst [vmem:[%s3 + $0x70] sm:$0xff] %v1859
  %1876 = vst [vmem:[%s3 + $0x78] sm:$0xff] %v1860
  // Predicated region
  $region14: #{net3d_forward.31} parent=0 // pred_check
    _
  $region15: #{net3d_forward.31} parent=0 // pred_check_branch
    %1878 = sbr.rel (0) target = $region17
  $region16: #{net3d_forward.31} parent=0 // pred_region
    _
  $region17: #{net3d_forward.31} parent=0 // pred_fallthru
    _
  // Predicated region
  $region18: #{net3d_forward.31} parent=0 // pred_check
    _
  $region19: #{net3d_forward.31} parent=0 // pred_check_branch
    %1880 = sbr.rel (0) target = $region21
  $region20: #{net3d_forward.31} parent=0 // pred_region
    _
  $region21: #{net3d_forward.31} parent=0 // pred_fallthru
    _

// kernel: net3d_forward.32
$region0: #{net3d_forward.32}
  #allocation0 [shape = 'u32[]', space=smem, size = 0x4, offset = 0x4, fixed_abs, tag = 'smem constant byte address 0x4 - core index']
  #allocation1 [shape = 'u32[144,128]{1,0:T(1,128)}', space=vmem, size = 0x12000, scoped, tag = 'internal scratch']
  %s0 = inlined_call_operand.vmem [shape: f32[1024,16], index: 0, kind: input, shape index: {}]
  %s1 = inlined_call_operand.vmem [shape: f32[1,16], index: 1, kind: output, shape index: {0}]
  %s2 = inlined_call_operand.vmem [shape: f32[1,16], index: 2, kind: output, shape index: {1}]
  %3 = xla_tuple %s1, %s2
  %s4 = sld [smem:[#allocation0]]
  $region49: #{net3d_forward.32} parent=0
    _
  %s6 = ssub.s32 1, %s4
  %s7 = scalar_select 0, %s6, %s4
  loop: start=0, step=1, limit=4
  $region2: #{net3d_forward.32} parent=0 // loop_pre_header
    _
  $region3: #{net3d_forward.32} parent=0 // loop_header
    %s9 = sphi 0, %s13
    %p10 = scmp.ge.s32.totalorder %s9, 4
    %s19 = sphi 0, %s21
    %s22 = sphi 0, %s19
    %s23 = sphi 0, %s22
    %s39 = sphi 0, %s23
    %s43 = sphi 0, %s43
    %s45 = sphi 0, %s43
    %s46 = sphi 0, %s45
    %s60 = sphi 0, %s46
    %s64 = sphi 0, %s64
    %s66 = sphi 0, %s64
    %s67 = sphi 0, %s66
    %s81 = sphi 0, %s67
  $region4: #{net3d_forward.32} parent=0 // loop_header_branch
    %12 = sbr.rel (%p10) target = $region8
  $region5: #{net3d_forward.32} parent=0 // loop_body
    %s14 = ssub.s32 %s9, 1
    %s15 = ssub.s32 %s9, 2
    %s16 = sadd.s32 %s9, 1
    %s17 = ssub.s32 %s9, %s16
    %p18 = scmp.eq.s32.totalorder %s17, 0
    %s20 = sadd.s32 %s19, 1
    %s21 = scalar_select %p18, %s19, %s20
    %p24 = pneg %p18
    %p25 = scmp.eq.s32.totalorder %s9, 1
    %p26 = por %p24, %p25
    %p27 = scmp.ne.s32.totalorder %s19, %s22
    %p28 = scmp.eq.s32.totalorder %s9, 0
    %p29 = por %p27, %p28
    %p30 = scmp.ne.s32.totalorder %s19, %s22
    %p31 = scmp.eq.s32.totalorder %s14, 1
    %p32 = por %p30, %p31
    %p33 = scmp.ne.s32.totalorder %s22, %s23
    %p34 = scmp.eq.s32.totalorder %s14, 0
    %p35 = por %p33, %p34
    %p36 = scmp.ne.s32.totalorder %s22, %s23
    %p37 = scmp.eq.s32.totalorder %s15, 1
    %p38 = por %p36, %p37
    %p40 = scmp.ne.s32.totalorder %s23, %s39
    %p41 = scmp.eq.s32.totalorder %s15, 0
    %p42 = por %p40, %p41
    %s44 = sadd.s32 %s43, 1
    %p47 = scmp.eq.s32.totalorder %s9, 1
    %p48 = scmp.ne.s32.totalorder %s43, %s45
    %p49 = scmp.eq.s32.totalorder %s9, 0
    %p50 = por %p48, %p49
    %p51 = scmp.ne.s32.totalorder %s43, %s45
    %p52 = scmp.eq.s32.totalorder %s14, 1
    %p53 = por %p51, %p52
    %p54 = scmp.ne.s32.totalorder %s45, %s46
    %p55 = scmp.eq.s32.totalorder %s14, 0
    %p56 = por %p54, %p55
    %p57 = scmp.ne.s32.totalorder %s45, %s46
    %p58 = scmp.eq.s32.totalorder %s15, 1
    %p59 = por %p57, %p58
    %p61 = scmp.ne.s32.totalorder %s46, %s60
    %p62 = scmp.eq.s32.totalorder %s15, 0
    %p63 = por %p61, %p62
    %s65 = sadd.s32 %s64, 1
    %p68 = scmp.eq.s32.totalorder %s9, 1
    %p69 = scmp.ne.s32.totalorder %s64, %s66
    %p70 = scmp.eq.s32.totalorder %s9, 0
    %p71 = por %p69, %p70
    %p72 = scmp.ne.s32.totalorder %s64, %s66
    %p73 = scmp.eq.s32.totalorder %s14, 1
    %p74 = por %p72, %p73
    %p75 = scmp.ne.s32.totalorder %s66, %s67
    %p76 = scmp.eq.s32.totalorder %s14, 0
    %p77 = por %p75, %p76
    %p78 = scmp.ne.s32.totalorder %s66, %s67
    %p79 = scmp.eq.s32.totalorder %s15, 1
    %p80 = por %p78, %p79
    %p82 = scmp.ne.s32.totalorder %s67, %s81
    %p83 = scmp.eq.s32.totalorder %s15, 0
    %p84 = por %p82, %p83
    %p85 = scmp.le.s32.totalorder 1, %s9
    %p86 = scmp.lt.s32.totalorder %s9, 3
    %p87 = pnand %p85, %p86
    %p88 = pneg %p87
    // Predicated region
    $region9: #{net3d_forward.32} parent=5 // pred_check
      _
    $region10: #{net3d_forward.32} parent=5 // pred_check_branch
      %90 = sbr.rel (%p87) target = $region12
    $region11: #{net3d_forward.32} parent=5 // pred_region
      %s91 = ssub.s32 %s9, 1
    $region12: #{net3d_forward.32} parent=5 // pred_fallthru
      _
    %p92 = scmp.lt.s32.totalorder %s9, 2
    // Predicated region
    $region13: #{net3d_forward.32} parent=5 // pred_check
      %p93 = pneg %p92
    $region14: #{net3d_forward.32} parent=5 // pred_check_branch
      %95 = sbr.rel (%p93) target = $region16
    $region15: #{net3d_forward.32} parent=5 // pred_region
      // Predicated region
      $region17: #{net3d_forward.32} parent=15 // pred_check
        %p96 = pneg %p29
      $region18: #{net3d_forward.32} parent=15 // pred_check_branch
        %98 = sbr.rel (%p96) target = $region20
      $region19: #{net3d_forward.32} parent=15 // pred_region
        %s99 = smul.u32 64, %s9
        %p100 = scmp.lt.s32.totalorder %s99, 127
        %s101 = scalar_select %p100, %s99, 127
        %s102 = smul.addr %s101, 8
        %s103 = scalar_lea.vmem %s0, %s102
        %s104 = smul.u32 64, %s9
      $region20: #{net3d_forward.32} parent=15 // pred_fallthru
        _
    $region16: #{net3d_forward.32} parent=5 // pred_fallthru
      _
    %p105 = scmp.le.s32.totalorder 1, %s9
    %p106 = scmp.lt.s32.totalorder %s9, 3
    %p107 = pnand %p105, %p106
    %p108 = pneg %p107
    // Predicated region
    $region21: #{net3d_forward.32} parent=5 // pred_check
      _
    $region22: #{net3d_forward.32} parent=5 // pred_check_branch
      %110 = sbr.rel (%p107) target = $region24
    $region23: #{net3d_forward.32} parent=5 // pred_region
      %s111 = ssub.s32 %s9, 1
      %s112 = smul.u32 64, %s14
      %p113 = scmp.lt.s32.totalorder %s112, 127
      %s114 = scalar_select %p113, %s112, 127
      %s115 = smul.addr %s114, 8
      %s116 = scalar_lea.vmem %s0, %s115
      %p117 = pneg %p35
      %p118 = pneg %p32
      %p119 = pneg %p56
      %p120 = pneg %p53
      %p121 = pneg %p77
      %p122 = pneg %p74
      %s123 = smul.u32 64, %s14
      %p124 = scmp.lt.s32.totalorder %s123, 127
      %s125 = scalar_select %p124, %s123, 127
      %s126 = smul.addr %s125, 8
      %s127 = scalar_lea.vmem %s0, %s126
      %s128 = smul.u32 64, %s14
      %p129 = scmp.eq.s32.totalorder %s14, 0
      // Predicated region
      $region25: #{net3d_forward.32} parent=23 // pred_check
        %p130 = pneg %p129
      $region26: #{net3d_forward.32} parent=23 // pred_check_branch
        %132 = sbr.rel (%p130) target = $region28
      $region27: #{net3d_forward.32} parent=23 // pred_region
        %vm133 = vcmask 122880
        %134 = vst.msk [vmem:[%s1] sm:$0x1] %vm133, 0.0
        %135 = vst.msk [vmem:[%s2] sm:$0x1] %vm133, 0.0
      $region28: #{net3d_forward.32} parent=23 // pred_fallthru
        _
      %v136 = vld [vmem:[%s127] sm:$0xff]
      %v137 = vld [vmem:[%s127 + $0x8] sm:$0xff]
      %v138 = vld [vmem:[%s127 + $0x10] sm:$0xff]
      %v139 = vld [vmem:[%s127 + $0x18] sm:$0xff]
      %v140 = vld [vmem:[%s127 + $0x20] sm:$0xff]
      %v141 = vld [vmem:[%s127 + $0x28] sm:$0xff]
      %v142 = vld [vmem:[%s127 + $0x30] sm:$0xff]
      %v143 = vld [vmem:[%s127 + $0x38] sm:$0xff]
      %v144 = vld [vmem:[%s127 + $0x40] sm:$0xff]
      %v145 = vld [vmem:[%s127 + $0x48] sm:$0xff]
      %v146 = vld [vmem:[%s127 + $0x50] sm:$0xff]
      %v147 = vld [vmem:[%s127 + $0x58] sm:$0xff]
      %v148 = vld [vmem:[%s127 + $0x60] sm:$0xff]
      %v149 = vld [vmem:[%s127 + $0x68] sm:$0xff]
      %v150 = vld [vmem:[%s127 + $0x70] sm:$0xff]
      %v151 = vld [vmem:[%s127 + $0x78] sm:$0xff]
      %v152 = vld [vmem:[%s127 + $0x80] sm:$0xff]
      %v153 = vld [vmem:[%s127 + $0x88] sm:$0xff]
      %v154 = vld [vmem:[%s127 + $0x90] sm:$0xff]
      %v155 = vld [vmem:[%s127 + $0x98] sm:$0xff]
      %v156 = vld [vmem:[%s127 + $0xa0] sm:$0xff]
      %v157 = vld [vmem:[%s127 + $0xa8] sm:$0xff]
      %v158 = vld [vmem:[%s127 + $0xb0] sm:$0xff]
      %v159 = vld [vmem:[%s127 + $0xb8] sm:$0xff]
      %v160 = vld [vmem:[%s127 + $0xc0] sm:$0xff]
      %v161 = vld [vmem:[%s127 + $0xc8] sm:$0xff]
      %v162 = vld [vmem:[%s127 + $0xd0] sm:$0xff]
      %v163 = vld [vmem:[%s127 + $0xd8] sm:$0xff]
      %v164 = vld [vmem:[%s127 + $0xe0] sm:$0xff]
      %v165 = vld [vmem:[%s127 + $0xe8] sm:$0xff]
      %v166 = vld [vmem:[%s127 + $0xf0] sm:$0xff]
      %v167 = vld [vmem:[%s127 + $0xf8] sm:$0xff]
      %v168 = vld [vmem:[%s127 + $0x100] sm:$0xff]
      %v169 = vld [vmem:[%s127 + $0x108] sm:$0xff]
      %v170 = vld [vmem:[%s127 + $0x110] sm:$0xff]
      %v171 = vld [vmem:[%s127 + $0x118] sm:$0xff]
      %v172 = vld [vmem:[%s127 + $0x120] sm:$0xff]
      %v173 = vld [vmem:[%s127 + $0x128] sm:$0xff]
      %v174 = vld [vmem:[%s127 + $0x130] sm:$0xff]
      %v175 = vld [vmem:[%s127 + $0x138] sm:$0xff]
      %v176 = vld [vmem:[%s127 + $0x140] sm:$0xff]
      %v177 = vld [vmem:[%s127 + $0x148] sm:$0xff]
      %v178 = vld [vmem:[%s127 + $0x150] sm:$0xff]
      %v179 = vld [vmem:[%s127 + $0x158] sm:$0xff]
      %v180 = vld [vmem:[%s127 + $0x160] sm:$0xff]
      %v181 = vld [vmem:[%s127 + $0x168] sm:$0xff]
      %v182 = vld [vmem:[%s127 + $0x170] sm:$0xff]
      %v183 = vld [vmem:[%s127 + $0x178] sm:$0xff]
      %v184 = vld [vmem:[%s127 + $0x180] sm:$0xff]
      %v185 = vld [vmem:[%s127 + $0x188] sm:$0xff]
      %v186 = vld [vmem:[%s127 + $0x190] sm:$0xff]
      %v187 = vld [vmem:[%s127 + $0x198] sm:$0xff]
      %v188 = vld [vmem:[%s127 + $0x1a0] sm:$0xff]
      %v189 = vld [vmem:[%s127 + $0x1a8] sm:$0xff]
      %v190 = vld [vmem:[%s127 + $0x1b0] sm:$0xff]
      %v191 = vld [vmem:[%s127 + $0x1b8] sm:$0xff]
      %v192 = vld [vmem:[%s127 + $0x1c0] sm:$0xff]
      %v193 = vld [vmem:[%s127 + $0x1c8] sm:$0xff]
      %v194 = vld [vmem:[%s127 + $0x1d0] sm:$0xff]
      %v195 = vld [vmem:[%s127 + $0x1d8] sm:$0xff]
      %v196 = vld [vmem:[%s127 + $0x1e0] sm:$0xff]
      %v197 = vld [vmem:[%s127 + $0x1e8] sm:$0xff]
      %v198 = vld [vmem:[%s127 + $0x1f0] sm:$0xff]
      %v199 = vld [vmem:[%s127 + $0x1f8] sm:$0xff]
      %v200 = vld [vmem:[%s1] sm:$0x1]
      %vm201 = vcmask 130048
      %v202 = vsel %vm201, %v136, 0.0
      %v203 = vsel %vm201, %v137, 0.0
      %v204 = vadd.f32 %v202, %v203
      %v205 = vsel %vm201, %v138, 0.0
      %v206 = vadd.f32 %v204, %v205
      %v207 = vsel %vm201, %v139, 0.0
      %v208 = vadd.f32 %v206, %v207
      %v209 = vsel %vm201, %v140, 0.0
      %v210 = vadd.f32 %v208, %v209
      %v211 = vsel %vm201, %v141, 0.0
      %v212 = vadd.f32 %v210, %v211
      %v213 = vsel %vm201, %v142, 0.0
      %v214 = vadd.f32 %v212, %v213
      %v215 = vsel %vm201, %v143, 0.0
      %v216 = vadd.f32 %v214, %v215
      %v217 = vsel %vm201, %v144, 0.0
      %v218 = vadd.f32 %v216, %v217
      %v219 = vsel %vm201, %v145, 0.0
      %v220 = vadd.f32 %v218, %v219
      %v221 = vsel %vm201, %v146, 0.0
      %v222 = vadd.f32 %v220, %v221
      %v223 = vsel %vm201, %v147, 0.0
      %v224 = vadd.f32 %v222, %v223
      %v225 = vsel %vm201, %v148, 0.0
      %v226 = vadd.f32 %v224, %v225
      %v227 = vsel %vm201, %v149, 0.0
      %v228 = vadd.f32 %v226, %v227
      %v229 = vsel %vm201, %v150, 0.0
      %v230 = vadd.f32 %v228, %v229
      %v231 = vsel %vm201, %v151, 0.0
      %v232 = vadd.f32 %v230, %v231
      %v233 = vsel %vm201, %v152, 0.0
      %v234 = vadd.f32 %v232, %v233
      %v235 = vsel %vm201, %v153, 0.0
      %v236 = vadd.f32 %v234, %v235
      %v237 = vsel %vm201, %v154, 0.0
      %v238 = vadd.f32 %v236, %v237
      %v239 = vsel %vm201, %v155, 0.0
      %v240 = vadd.f32 %v238, %v239
      %v241 = vsel %vm201, %v156, 0.0
      %v242 = vadd.f32 %v240, %v241
      %v243 = vsel %vm201, %v157, 0.0
      %v244 = vadd.f32 %v242, %v243
      %v245 = vsel %vm201, %v158, 0.0
      %v246 = vadd.f32 %v244, %v245
      %v247 = vsel %vm201, %v159, 0.0
      %v248 = vadd.f32 %v246, %v247
      %v249 = vsel %vm201, %v160, 0.0
      %v250 = vadd.f32 %v248, %v249
      %v251 = vsel %vm201, %v161, 0.0
      %v252 = vadd.f32 %v250, %v251
      %v253 = vsel %vm201, %v162, 0.0
      %v254 = vadd.f32 %v252, %v253
      %v255 = vsel %vm201, %v163, 0.0
      %v256 = vadd.f32 %v254, %v255
      %v257 = vsel %vm201, %v164, 0.0
      %v258 = vadd.f32 %v256, %v257
      %v259 = vsel %vm201, %v165, 0.0
      %v260 = vadd.f32 %v258, %v259
      %v261 = vsel %vm201, %v166, 0.0
      %v262 = vadd.f32 %v260, %v261
      %v263 = vsel %vm201, %v167, 0.0
      %v264 = vadd.f32 %v262, %v263
      %v265 = vsel %vm201, %v168, 0.0
      %v266 = vadd.f32 %v264, %v265
      %v267 = vsel %vm201, %v169, 0.0
      %v268 = vadd.f32 %v266, %v267
      %v269 = vsel %vm201, %v170, 0.0
      %v270 = vadd.f32 %v268, %v269
      %v271 = vsel %vm201, %v171, 0.0
      %v272 = vadd.f32 %v270, %v271
      %v273 = vsel %vm201, %v172, 0.0
      %v274 = vadd.f32 %v272, %v273
      %v275 = vsel %vm201, %v173, 0.0
      %v276 = vadd.f32 %v274, %v275
      %v277 = vsel %vm201, %v174, 0.0
      %v278 = vadd.f32 %v276, %v277
      %v279 = vsel %vm201, %v175, 0.0
      %v280 = vadd.f32 %v278, %v279
      %v281 = vsel %vm201, %v176, 0.0
      %v282 = vadd.f32 %v280, %v281
      %v283 = vsel %vm201, %v177, 0.0
      %v284 = vadd.f32 %v282, %v283
      %v285 = vsel %vm201, %v178, 0.0
      %v286 = vadd.f32 %v284, %v285
      %v287 = vsel %vm201, %v179, 0.0
      %v288 = vadd.f32 %v286, %v287
      %v289 = vsel %vm201, %v180, 0.0
      %v290 = vadd.f32 %v288, %v289
      %v291 = vsel %vm201, %v181, 0.0
      %v292 = vadd.f32 %v290, %v291
      %v293 = vsel %vm201, %v182, 0.0
      %v294 = vadd.f32 %v292, %v293
      %v295 = vsel %vm201, %v183, 0.0
      %v296 = vadd.f32 %v294, %v295
      %v297 = vsel %vm201, %v184, 0.0
      %v298 = vadd.f32 %v296, %v297
      %v299 = vsel %vm201, %v185, 0.0
      %v300 = vadd.f32 %v298, %v299
      %v301 = vsel %vm201, %v186, 0.0
      %v302 = vadd.f32 %v300, %v301
      %v303 = vsel %vm201, %v187, 0.0
      %v304 = vadd.f32 %v302, %v303
      %v305 = vsel %vm201, %v188, 0.0
      %v306 = vadd.f32 %v304, %v305
      %v307 = vsel %vm201, %v189, 0.0
      %v308 = vadd.f32 %v306, %v307
      %v309 = vsel %vm201, %v190, 0.0
      %v310 = vadd.f32 %v308, %v309
      %v311 = vsel %vm201, %v191, 0.0
      %v312 = vadd.f32 %v310, %v311
      %v313 = vsel %vm201, %v192, 0.0
      %v314 = vadd.f32 %v312, %v313
      %v315 = vsel %vm201, %v193, 0.0
      %v316 = vadd.f32 %v314, %v315
      %v317 = vsel %vm201, %v194, 0.0
      %v318 = vadd.f32 %v316, %v317
      %v319 = vsel %vm201, %v195, 0.0
      %v320 = vadd.f32 %v318, %v319
      %v321 = vsel %vm201, %v196, 0.0
      %v322 = vadd.f32 %v320, %v321
      %v323 = vsel %vm201, %v197, 0.0
      %v324 = vadd.f32 %v322, %v323
      %v325 = vsel %vm201, %v198, 0.0
      %v326 = vadd.f32 %v324, %v325
      %v327 = vsel %vm201, %v199, 0.0
      %v328 = vadd.f32 %v326, %v327
      %v329 = vrot.slane %v328, 4
      %v330 = vadd.f32 %v328, %v329
      %v331 = vrot.slane %v330, 2
      %v332 = vadd.f32 %v330, %v331
      %v333 = vrot.slane %v332, 1
      %v334 = vadd.f32 %v332, %v333
      %v335 = vadd.f32 %v200, %v334
      %vm336 = vcmask 122880
      %337 = vst.msk [vmem:[%s1] sm:$0x1] %vm336, %v335
      %v338 = vld [vmem:[%s2] sm:$0x1]
      %v339 = vmul.f32 %v136, %v136
      %v340 = vmul.f32 %v137, %v137
      %v341 = vmul.f32 %v138, %v138
      %v342 = vmul.f32 %v139, %v139
      %v343 = vmul.f32 %v140, %v140
      %v344 = vmul.f32 %v141, %v141
      %v345 = vmul.f32 %v142, %v142
      %v346 = vmul.f32 %v143, %v143
      %v347 = vmul.f32 %v144, %v144
      %v348 = vmul.f32 %v145, %v145
      %v349 = vmul.f32 %v146, %v146
      %v350 = vmul.f32 %v147, %v147
      %v351 = vmul.f32 %v148, %v148
      %v352 = vmul.f32 %v149, %v149
      %v353 = vmul.f32 %v150, %v150
      %v354 = vmul.f32 %v151, %v151
      %v355 = vmul.f32 %v152, %v152
      %v356 = vmul.f32 %v153, %v153
      %v357 = vmul.f32 %v154, %v154
      %v358 = vmul.f32 %v155, %v155
      %v359 = vmul.f32 %v156, %v156
      %v360 = vmul.f32 %v157, %v157
      %v361 = vmul.f32 %v158, %v158
      %v362 = vmul.f32 %v159, %v159
      %v363 = vmul.f32 %v160, %v160
      %v364 = vmul.f32 %v161, %v161
      %v365 = vmul.f32 %v162, %v162
      %v366 = vmul.f32 %v163, %v163
      %v367 = vmul.f32 %v164, %v164
      %v368 = vmul.f32 %v165, %v165
      %v369 = vmul.f32 %v166, %v166
      %v370 = vmul.f32 %v167, %v167
      %v371 = vmul.f32 %v168, %v168
      %v372 = vmul.f32 %v169, %v169
      %v373 = vmul.f32 %v170, %v170
      %v374 = vmul.f32 %v171, %v171
      %v375 = vmul.f32 %v172, %v172
      %v376 = vmul.f32 %v173, %v173
      %v377 = vmul.f32 %v174, %v174
      %v378 = vmul.f32 %v175, %v175
      %v379 = vmul.f32 %v176, %v176
      %v380 = vmul.f32 %v177, %v177
      %v381 = vmul.f32 %v178, %v178
      %v382 = vmul.f32 %v179, %v179
      %v383 = vmul.f32 %v180, %v180
      %v384 = vmul.f32 %v181, %v181
      %v385 = vmul.f32 %v182, %v182
      %v386 = vmul.f32 %v183, %v183
      %v387 = vmul.f32 %v184, %v184
      %v388 = vmul.f32 %v185, %v185
      %v389 = vmul.f32 %v186, %v186
      %v390 = vmul.f32 %v187, %v187
      %v391 = vmul.f32 %v188, %v188
      %v392 = vmul.f32 %v189, %v189
      %v393 = vmul.f32 %v190, %v190
      %v394 = vmul.f32 %v191, %v191
      %v395 = vmul.f32 %v192, %v192
      %v396 = vmul.f32 %v193, %v193
      %v397 = vmul.f32 %v194, %v194
      %v398 = vmul.f32 %v195, %v195
      %v399 = vmul.f32 %v196, %v196
      %v400 = vmul.f32 %v197, %v197
      %v401 = vmul.f32 %v198, %v198
      %v402 = vmul.f32 %v199, %v199
      %v403 = vsel %vm201, %v339, 0.0
      %v404 = vsel %vm201, %v340, 0.0
      %v405 = vadd.f32 %v403, %v404
      %v406 = vsel %vm201, %v341, 0.0
      %v407 = vadd.f32 %v405, %v406
      %v408 = vsel %vm201, %v342, 0.0
      %v409 = vadd.f32 %v407, %v408
      %v410 = vsel %vm201, %v343, 0.0
      %v411 = vadd.f32 %v409, %v410
      %v412 = vsel %vm201, %v344, 0.0
      %v413 = vadd.f32 %v411, %v412
      %v414 = vsel %vm201, %v345, 0.0
      %v415 = vadd.f32 %v413, %v414
      %v416 = vsel %vm201, %v346, 0.0
      %v417 = vadd.f32 %v415, %v416
      %v418 = vsel %vm201, %v347, 0.0
      %v419 = vadd.f32 %v417, %v418
      %v420 = vsel %vm201, %v348, 0.0
      %v421 = vadd.f32 %v419, %v420
      %v422 = vsel %vm201, %v349, 0.0
      %v423 = vadd.f32 %v421, %v422
      %v424 = vsel %vm201, %v350, 0.0
      %v425 = vadd.f32 %v423, %v424
      %v426 = vsel %vm201, %v351, 0.0
      %v427 = vadd.f32 %v425, %v426
      %v428 = vsel %vm201, %v352, 0.0
      %v429 = vadd.f32 %v427, %v428
      %v430 = vsel %vm201, %v353, 0.0
      %v431 = vadd.f32 %v429, %v430
      %v432 = vsel %vm201, %v354, 0.0
      %v433 = vadd.f32 %v431, %v432
      %v434 = vsel %vm201, %v355, 0.0
      %v435 = vadd.f32 %v433, %v434
      %v436 = vsel %vm201, %v356, 0.0
      %v437 = vadd.f32 %v435, %v436
      %v438 = vsel %vm201, %v357, 0.0
      %v439 = vadd.f32 %v437, %v438
      %v440 = vsel %vm201, %v358, 0.0
      %v441 = vadd.f32 %v439, %v440
      %v442 = vsel %vm201, %v359, 0.0
      %v443 = vadd.f32 %v441, %v442
      %v444 = vsel %vm201, %v360, 0.0
      %v445 = vadd.f32 %v443, %v444
      %v446 = vsel %vm201, %v361, 0.0
      %v447 = vadd.f32 %v445, %v446
      %v448 = vsel %vm201, %v362, 0.0
      %v449 = vadd.f32 %v447, %v448
      %v450 = vsel %vm201, %v363, 0.0
      %v451 = vadd.f32 %v449, %v450
      %v452 = vsel %vm201, %v364, 0.0
      %v453 = vadd.f32 %v451, %v452
      %v454 = vsel %vm201, %v365, 0.0
      %v455 = vadd.f32 %v453, %v454
      %v456 = vsel %vm201, %v366, 0.0
      %v457 = vadd.f32 %v455, %v456
      %v458 = vsel %vm201, %v367, 0.0
      %v459 = vadd.f32 %v457, %v458
      %v460 = vsel %vm201, %v368, 0.0
      %v461 = vadd.f32 %v459, %v460
      %v462 = vsel %vm201, %v369, 0.0
      %v463 = vadd.f32 %v461, %v462
      %v464 = vsel %vm201, %v370, 0.0
      %v465 = vadd.f32 %v463, %v464
      %v466 = vsel %vm201, %v371, 0.0
      %v467 = vadd.f32 %v465, %v466
      %v468 = vsel %vm201, %v372, 0.0
      %v469 = vadd.f32 %v467, %v468
      %v470 = vsel %vm201, %v373, 0.0
      %v471 = vadd.f32 %v469, %v470
      %v472 = vsel %vm201, %v374, 0.0
      %v473 = vadd.f32 %v471, %v472
      %v474 = vsel %vm201, %v375, 0.0
      %v475 = vadd.f32 %v473, %v474
      %v476 = vsel %vm201, %v376, 0.0
      %v477 = vadd.f32 %v475, %v476
      %v478 = vsel %vm201, %v377, 0.0
      %v479 = vadd.f32 %v477, %v478
      %v480 = vsel %vm201, %v378, 0.0
      %v481 = vadd.f32 %v479, %v480
      %v482 = vsel %vm201, %v379, 0.0
      %v483 = vadd.f32 %v481, %v482
      %v484 = vsel %vm201, %v380, 0.0
      %v485 = vadd.f32 %v483, %v484
      %v486 = vsel %vm201, %v381, 0.0
      %v487 = vadd.f32 %v485, %v486
      %v488 = vsel %vm201, %v382, 0.0
      %v489 = vadd.f32 %v487, %v488
      %v490 = vsel %vm201, %v383, 0.0
      %v491 = vadd.f32 %v489, %v490
      %v492 = vsel %vm201, %v384, 0.0
      %v493 = vadd.f32 %v491, %v492
      %v494 = vsel %vm201, %v385, 0.0
      %v495 = vadd.f32 %v493, %v494
      %v496 = vsel %vm201, %v386, 0.0
      %v497 = vadd.f32 %v495, %v496
      %v498 = vsel %vm201, %v387, 0.0
      %v499 = vadd.f32 %v497, %v498
      %v500 = vsel %vm201, %v388, 0.0
      %v501 = vadd.f32 %v499, %v500
      %v502 = vsel %vm201, %v389, 0.0
      %v503 = vadd.f32 %v501, %v502
      %v504 = vsel %vm201, %v390, 0.0
      %v505 = vadd.f32 %v503, %v504
      %v506 = vsel %vm201, %v391, 0.0
      %v507 = vadd.f32 %v505, %v506
      %v508 = vsel %vm201, %v392, 0.0
      %v509 = vadd.f32 %v507, %v508
      %v510 = vsel %vm201, %v393, 0.0
      %v511 = vadd.f32 %v509, %v510
      %v512 = vsel %vm201, %v394, 0.0
      %v513 = vadd.f32 %v511, %v512
      %v514 = vsel %vm201, %v395, 0.0
      %v515 = vadd.f32 %v513, %v514
      %v516 = vsel %vm201, %v396, 0.0
      %v517 = vadd.f32 %v515, %v516
      %v518 = vsel %vm201, %v397, 0.0
      %v519 = vadd.f32 %v517, %v518
      %v520 = vsel %vm201, %v398, 0.0
      %v521 = vadd.f32 %v519, %v520
      %v522 = vsel %vm201, %v399, 0.0
      %v523 = vadd.f32 %v521, %v522
      %v524 = vsel %vm201, %v400, 0.0
      %v525 = vadd.f32 %v523, %v524
      %v526 = vsel %vm201, %v401, 0.0
      %v527 = vadd.f32 %v525, %v526
      %v528 = vsel %vm201, %v402, 0.0
      %v529 = vadd.f32 %v527, %v528
      %v530 = vrot.slane %v529, 4
      %v531 = vadd.f32 %v529, %v530
      %v532 = vrot.slane %v531, 2
      %v533 = vadd.f32 %v531, %v532
      %v534 = vrot.slane %v533, 1
      %v535 = vadd.f32 %v533, %v534
      %v536 = vadd.f32 %v338, %v535
      %537 = vst.msk [vmem:[%s2] sm:$0x1] %vm336, %v536
      // Predicated region
      $region29: #{net3d_forward.32} parent=23 // pred_check
        %p538 = pneg %p53
      $region30: #{net3d_forward.32} parent=23 // pred_check_branch
        %540 = sbr.rel (%p538) target = $region32
      $region31: #{net3d_forward.32} parent=23 // pred_region
        _
      $region32: #{net3d_forward.32} parent=23 // pred_fallthru
        _
      // Predicated region
      $region33: #{net3d_forward.32} parent=23 // pred_check
        %p541 = pneg %p74
      $region34: #{net3d_forward.32} parent=23 // pred_check_branch
        %543 = sbr.rel (%p541) target = $region36
      $region35: #{net3d_forward.32} parent=23 // pred_region
        _
      $region36: #{net3d_forward.32} parent=23 // pred_fallthru
        _
      // Predicated region
      $region37: #{net3d_forward.32} parent=23 // pred_check
        %p544 = pneg %p53
      $region38: #{net3d_forward.32} parent=23 // pred_check_branch
        %546 = sbr.rel (%p544) target = $region40
      $region39: #{net3d_forward.32} parent=23 // pred_region
        _
      $region40: #{net3d_forward.32} parent=23 // pred_fallthru
        _
      // Predicated region
      $region41: #{net3d_forward.32} parent=23 // pred_check
        %p547 = pneg %p74
      $region42: #{net3d_forward.32} parent=23 // pred_check_branch
        %549 = sbr.rel (%p547) target = $region44
      $region43: #{net3d_forward.32} parent=23 // pred_region
        _
      $region44: #{net3d_forward.32} parent=23 // pred_fallthru
        _
    $region24: #{net3d_forward.32} parent=5 // pred_fallthru
      _
    %p550 = scmp.le.s32.totalorder 2, %s9
    // Predicated region
    $region45: #{net3d_forward.32} parent=5 // pred_check
      %p551 = pneg %p550
    $region46: #{net3d_forward.32} parent=5 // pred_check_branch
      %553 = sbr.rel (%p551) target = $region48
    $region47: #{net3d_forward.32} parent=5 // pred_region
      %s554 = ssub.s32 %s9, 2
    $region48: #{net3d_forward.32} parent=5 // pred_fallthru
      _
  $region6: #{net3d_forward.32} parent=0 // loop_footer
    %s13 = sadd.s32 1, %s9
  $region7: #{net3d_forward.32} parent=0 // loop_footer_branch
    %8 = sbr.rel target = $region3
  $region8: #{net3d_forward.32} parent=0 // loop_exit
    _

</llo_original>
